<compile_context>
chip_gen: v6e
topology: v6e:2x2x1
jax: 0.10.0
libtpu: 0.0.40
codegen_flags: <defaults>
</compile_context>

<pallas_src>
import jax
import jax.numpy as jnp
from jax import lax
from jax.experimental import pallas as pl
from jax.experimental.pallas import tpu as pltpu


def _round_up(x, m):
    return ((x + m - 1) // m) * m


def _vmem_budget_bytes():
    """Generation-aware VMEM budget (v7x: 64 MiB phys -> 48 MiB; v5e/v6e: 96 MiB)."""
    cap = 64 * 1024 * 1024
    try:
        info = pltpu.get_tpu_info()
        cap = int(getattr(info, "vmem_capacity_bytes", cap))
    except Exception:
        pass
    return int(min(cap * 3 // 4, 96 * 1024 * 1024))


_VMEM_BUDGET = _vmem_budget_bytes()


def _choose_tm(M, K, N):
    """Row-tile size: fill the VMEM budget, cap at 8192, keep >=2 grid blocks."""
    resident = K * N * 2 + 2 * N * 4 + (2 << 20)       # bf16 weights + f32 bias/alpha + slack
    per_row = 2 * 2 * (K + N)                          # double-buffered bf16 A row + out row
    tm_max = max(8, min(8192, (_VMEM_BUDGET - resident) // per_row))
    tm_max = (tm_max // 8) * 8
    Mp8 = _round_up(M, 8)
    half = _round_up(-(-Mp8 // 2), 8)                  # cdiv(Mp8, 2) rounded up to 8
    return max(8, min(tm_max, half))                   # >=2 blocks whenever Mp8 > 8


# ----------------------------- Pallas kernels -----------------------------

def _mm_bias_prelu_kernel(a_ref, w_ref, b_ref, alpha_ref, o_ref):
    # y = A @ W + b ; PReLU(y) with per-output-channel alpha.  f32 epilogue,
    # bf16 store (halves writeback + downstream re-reads; monotonic rounding
    # commutes with the following max-pool).
    y = jnp.dot(a_ref[...], w_ref[...], preferred_element_type=jnp.float32)
    y = y + b_ref[...]                                  # (1, N) broadcast over rows
    y = jnp.where(y > 0, y, alpha_ref[...] * y)
    o_ref[...] = y.astype(o_ref.dtype)


def _tail_kernel(x_ref, w5_ref, b5_ref, a5_ref, w6_ref, b6_ref, o_ref):
    # fc5 (1152->256) + PReLU(256); Dropout(0.25) is inference identity.
    h = jnp.dot(x_ref[...], w5_ref[...], preferred_element_type=jnp.float32)
    h = h + b5_ref[...]
    h = jnp.where(h > 0, h, a5_ref[...] * h)
    # concatenated heads: columns [0:2]=cls, [2:6]=box, [6:16]=landmarks
    y = jnp.dot(h.astype(w6_ref.dtype), w6_ref[...],
                preferred_element_type=jnp.float32) + b6_ref[...]
    # stable softmax on the 2 classification columns only (masked, lane-dense)
    col = lax.broadcasted_iota(jnp.int32, y.shape, 1)
    is_cls = col < 2
    z = jnp.where(is_cls, y, -jnp.inf)
    z = z - jnp.max(z, axis=-1, keepdims=True)
    e = jnp.exp(z)                                      # 0 on non-cls columns
    denom = jnp.sum(e, axis=-1, keepdims=True)
    probs = e * pl.reciprocal(denom, approx=True)       # EUP slot, not VALU divide
    o_ref[...] = jnp.where(is_cls, probs, y)


# --------------------------- Pallas call wrappers ---------------------------

def mm_bias_prelu(a, w, b, alpha, tm):
    """Row-gridded (A @ W + b) -> PReLU.  a:(Mp,K) bf16 (pre-padded), w:(K,N) bf16."""
    Mp, K = a.shape
    N = w.shape[1]
    return pl.pallas_call(
        _mm_bias_prelu_kernel,
        out_shape=jax.ShapeDtypeStruct((Mp, N), jnp.bfloat16),
        grid_spec=pltpu.PrefetchScalarGridSpec(
            num_scalar_prefetch=0,
            grid=(Mp // tm,),
            in_specs=[
                pl.BlockSpec((tm, K), lambda i: (i, 0)),   # row tile of A
                pl.BlockSpec((K, N), lambda i: (0, 0)),    # resident weights
                pl.BlockSpec((1, N), lambda i: (0, 0)),    # bias (f32)
                pl.BlockSpec((1, N), lambda i: (0, 0)),    # PReLU alpha (f32)
            ],
            out_specs=pl.BlockSpec((tm, N), lambda i: (i, 0)),
        ),
        compiler_params=pltpu.CompilerParams(
            dimension_semantics=("parallel",),
            vmem_limit_bytes=_VMEM_BUDGET,
        ),
    )(a, w, b, alpha)


def tail(x, w5, b5, a5, w6, b6):
    """Fused fc5 + Dropout(identity) + PReLU + (cls|box|landmark) heads + softmax(cls)."""
    M, K = x.shape
    tm = _choose_tm(M, K, 256 + 16)
    Mp = _round_up(_round_up(M, 8), tm)
    if Mp != M:
        x = jnp.pad(x, ((0, Mp - M), (0, 0)))
    x = x.astype(jnp.bfloat16)                          # no-op if already bf16

    out = pl.pallas_call(
        _tail_kernel,
        out_shape=jax.ShapeDtypeStruct((Mp, 16), jnp.float32),
        grid_spec=pltpu.PrefetchScalarGridSpec(
            num_scalar_prefetch=0,
            grid=(Mp // tm,),
            in_specs=[
                pl.BlockSpec((tm, K), lambda i: (i, 0)),
                pl.BlockSpec((K, 256), lambda i: (0, 0)),
                pl.BlockSpec((1, 256), lambda i: (0, 0)),
                pl.BlockSpec((1, 256), lambda i: (0, 0)),
                pl.BlockSpec((256, 16), lambda i: (0, 0)),
                pl.BlockSpec((1, 16), lambda i: (0, 0)),
            ],
            out_specs=pl.BlockSpec((tm, 16), lambda i: (i, 0)),
        ),
        compiler_params=pltpu.CompilerParams(
            dimension_semantics=("parallel",),
            vmem_limit_bytes=_VMEM_BUDGET,
        ),
    )(x, w5, b5, a5, w6, b6)
    return out[:M] if Mp != M else out


# ------------------------------- JAX glue ----------------------------------

def im2col_nhwc(x, kh, kw, k_pad, m_pad):
    """Valid-conv patch extraction on NHWC; column order = (kh, kw, cin).

    Emits a single, already-padded bf16 (m_pad, k_pad) matrix so the Pallas
    matmul input is materialized exactly once in HBM.
    """
    N, H, W, C = x.shape
    Ho, Wo = H - kh + 1, W - kw + 1
    cols = []
    for i in range(kh):
        for j in range(kw):
            cols.append(x[:, i:i + Ho, j:j + Wo, :])        # (N, Ho, Wo, C)
    p = jnp.stack(cols, axis=3)                             # (N, Ho, Wo, kh*kw, C)
    p = p.reshape(N * Ho * Wo, kh * kw * C).astype(jnp.bfloat16)
    M, K = p.shape
    if m_pad != M or k_pad != K:
        p = jnp.pad(p, ((0, m_pad - M), (0, k_pad - K)))
    return p, N, Ho, Wo


def conv_prelu(x_nhwc, wm, b, alpha, kh, kw):
    """Conv2d(stride=1, no pad) + PReLU; matmul/bias/PReLU inside one Pallas kernel."""
    Kp, Cout = wm.shape
    N, H, W, _ = x_nhwc.shape
    Ho, Wo = H - kh + 1, W - kw + 1
    M = N * Ho * Wo
    tm = _choose_tm(M, Kp, Cout)
    Mp = _round_up(_round_up(M, 8), tm)
    p, N, Ho, Wo = im2col_nhwc(x_nhwc, kh, kw, Kp, Mp)      # (Mp, Kp) bf16
    y = mm_bias_prelu(p, wm, b, alpha, tm)                  # (Mp, Cout) bf16
    return y[:M].reshape(N, Ho, Wo, Cout)                   # stays NHWC, bf16


def maxpool_ceil_nhwc(x, k, s):
    """MaxPool2d(kernel=k, stride=s, ceil_mode=True) on NHWC (bf16)."""
    # TODO(synk): fuse into the conv epilogue once the windowed in-kernel conv lands.
    _, H, W, _ = x.shape

    def pad_amt(L):
        out = -(-(L - k) // s) + 1          # ceil((L-k)/s) + 1
        if (out - 1) * s >= L:              # PyTorch: last window starts in-bounds
            out -= 1
        return max(0, (out - 1) * s + k - L)

    ph, pw = pad_amt(H), pad_amt(W)
    return lax.reduce_window(
        x, jnp.array(-jnp.inf, x.dtype), lax.max,
        (1, k, k, 1), (1, s, s, 1),
        [(0, 0), (0, ph), (0, pw), (0, 0)])


# ----------------------------- parameters -----------------------------------

def init_params(key):
    ks = jax.random.split(key, 16)

    def nrm(k, shape, scale=0.05):
        return scale * jax.random.normal(k, shape, dtype=jnp.float32)

    def conv_prep(w, b, alpha):
        # torch (Cout, Cin, kh, kw) -> (kh*kw*Cin, Cout) matching NHWC im2col,
        # contraction dim zero-padded to a multiple of 8 only, cast to bf16.
        Cout, Cin, kh, kw = w.shape
        K = Cin * kh * kw
        Kp = _round_up(K, 8)
        wm = w.transpose(2, 3, 1, 0).reshape(K, Cout)
        wm = jnp.pad(wm, ((0, Kp - K), (0, 0))).astype(jnp.bfloat16)
        return wm, b.reshape(1, Cout), alpha.reshape(1, Cout)

    c1w, c1b, p1 = conv_prep(nrm(ks[0], (32, 3, 3, 3)), nrm(ks[1], (32,)),
                             jnp.full((32,), 0.25, jnp.float32))
    c2w, c2b, p2 = conv_prep(nrm(ks[2], (64, 32, 3, 3)), nrm(ks[3], (64,)),
                             jnp.full((64,), 0.25, jnp.float32))
    c3w, c3b, p3 = conv_prep(nrm(ks[4], (64, 64, 3, 3)), nrm(ks[5], (64,)),
                             jnp.full((64,), 0.25, jnp.float32))
    c4w, c4b, p4 = conv_prep(nrm(ks[6], (128, 64, 2, 2)), nrm(ks[7], (128,)),
                             jnp.full((128,), 0.25, jnp.float32))

    # fc5 weight defined in PyTorch NCHW-flatten column order (C=128,H=3,W=3),
    # permuted once to NHWC-flatten column order (H,W,C) so the NHWC forward
    # reproduces the NCHW flatten exactly.
    # TODO(synk): upstream MTCNN's Flatten sometimes permutes (0,3,2,1) first;
    # the Flatten class body isn't given, so plain NCHW-flatten semantics are used.
    fc5_w = nrm(ks[8], (256, 1152))
    fc5_w_nhwc = fc5_w.reshape(256, 128, 3, 3).transpose(0, 2, 3, 1).reshape(256, 1152)

    # heads concatenated into one (256, 16) matrix: [cls(2) | box(4) | landmarks(10)]
    w6_1, b6_1 = nrm(ks[10], (2, 256)), nrm(ks[11], (2,))
    w6_2, b6_2 = nrm(ks[12], (4, 256)), nrm(ks[13], (4,))
    w6_3, b6_3 = nrm(ks[14], (10, 256)), nrm(ks[15], (10,))

    p = {
        "conv1_w": c1w, "conv1_b": c1b, "prelu1": p1,
        "conv2_w": c2w, "conv2_b": c2b, "prelu2": p2,
        "conv3_w": c3w, "conv3_b": c3b, "prelu3": p3,
        "conv4_w": c4w, "conv4_b": c4b, "prelu4": p4,
        "fc5_w": fc5_w_nhwc.T.astype(jnp.bfloat16),          # (1152, 256)
        "fc5_b": nrm(ks[9], (256,)).reshape(1, 256),
        "prelu5": jnp.full((1, 256), 0.25, jnp.float32),
        "fc6_w": jnp.concatenate([w6_1, w6_2, w6_3], axis=0).T.astype(jnp.bfloat16),
        "fc6_b": jnp.concatenate([b6_1, b6_2, b6_3]).reshape(1, 16),
    }
    return p


# ------------------------------ forward pass --------------------------------

@jax.jit
def onet_forward(x_nchw, p):
    # single NCHW->NHWC transpose + bf16 cast; everything downstream stays NHWC/bf16
    x = jnp.transpose(x_nchw, (0, 2, 3, 1)).astype(jnp.bfloat16)
    x = conv_prelu(x, p["conv1_w"], p["conv1_b"], p["prelu1"], 3, 3)  # (N,46,46,32)
    x = maxpool_ceil_nhwc(x, 3, 2)                                    # (N,23,23,32)
    x = conv_prelu(x, p["conv2_w"], p["conv2_b"], p["prelu2"], 3, 3)  # (N,21,21,64)
    x = maxpool_ceil_nhwc(x, 3, 2)                                    # (N,10,10,64)
    x = conv_prelu(x, p["conv3_w"], p["conv3_b"], p["prelu3"], 3, 3)  # (N,8,8,64)
    x = maxpool_ceil_nhwc(x, 2, 2)                                    # (N,4,4,64)
    x = conv_prelu(x, p["conv4_w"], p["conv4_b"], p["prelu4"], 2, 2)  # (N,3,3,128)

    N = x.shape[0]
    x = x.reshape(N, -1)        # NHWC flatten; fc5 columns permuted at init to match

    # fused: fc5 + Dropout(identity) + PReLU + three heads + softmax(cls)
    out = tail(x, p["fc5_w"], p["fc5_b"], p["prelu5"], p["fc6_w"], p["fc6_b"])
    a = out[:, 0:2]             # softmaxed classification probs
    b = out[:, 2:6]             # box regression
    c = out[:, 6:16]            # landmarks
    return c, b, a              # matches PyTorch return order (c, b, a)


# --------------------------------- main --------------------------------------

if __name__ == "__main__":
    key = jax.random.PRNGKey(0)
    kx, kp = jax.random.split(key)
    # ONet canonical input: 48x48 RGB crops (required by Linear(1152, 256))
    x = jax.random.normal(kx, (2, 3, 48, 48), dtype=jnp.float32)
    params = init_params(kp)

    c, b, a = onet_forward(x, params)
    jax.block_until_ready((c, b, a))

    assert c.shape == (2, 10) and b.shape == (2, 4) and a.shape == (2, 2)
    assert bool(jnp.all(jnp.isfinite(c))) and bool(jnp.all(jnp.isfinite(b)))
    # approx reciprocal (EUP) used for the softmax denom -> allow ~1e-2 slack
    assert bool(jnp.allclose(jnp.sum(a, axis=-1), 1.0, atol=1e-2))
    print("KERNEL_OK")
</pallas_src>

<mosaic_0001>
module attributes {stable_mosaic.version = 11 : i64} {
  func.func @_mm_bias_prelu_kernel(%arg0: i32, %arg1: memref<2120x32xbf16, #tpu.memory_space<vmem>>, %arg2: memref<32x32xbf16, #tpu.memory_space<vmem>>, %arg3: memref<1x32xf32, #tpu.memory_space<vmem>>, %arg4: memref<1x32xf32, #tpu.memory_space<vmem>>, %arg5: memref<2120x32xbf16, #tpu.memory_space<vmem>>) attributes {dimension_semantics = [#tpu.dimension_semantics<parallel>], iteration_bounds = array<i64: 2>, scalar_prefetch = 0 : i64, scratch_operands = 0 : i64, tpu.core_type = #tpu.core_type<tc>, window_params = [{transform_indices = @transform_0, window_bounds = array<i64: 2120, 32>}, {pipeline_mode = #tpu.pipeline_mode<synchronous>, transform_indices = @transform_1, window_bounds = array<i64: 32, 32>}, {pipeline_mode = #tpu.pipeline_mode<synchronous>, transform_indices = @transform_2, window_bounds = array<i64: 1, 32>}, {pipeline_mode = #tpu.pipeline_mode<synchronous>, transform_indices = @transform_3, window_bounds = array<i64: 1, 32>}, {transform_indices = @transform_4, window_bounds = array<i64: 2120, 32>}]} {
    %c0 = arith.constant 0 : index
    %c0_0 = arith.constant 0 : index
    %0 = vector.load %arg1[%c0, %c0_0] : memref<2120x32xbf16, #tpu.memory_space<vmem>>, vector<2120x32xbf16>
    %c0_1 = arith.constant 0 : index
    %c0_2 = arith.constant 0 : index
    %1 = vector.load %arg2[%c0_1, %c0_2] : memref<32x32xbf16, #tpu.memory_space<vmem>>, vector<32x32xbf16>
    %cst = arith.constant dense<0.000000e+00> : vector<2120x32xf32>
    %2 = tpu.matmul %0, %1, %cst {dimension_numbers = #tpu.dot_dimension_numbers<[1], [0], [0], [1], [0, 0, 1, 1], [], []>} : vector<2120x32xbf16>, vector<32x32xbf16>, vector<2120x32xf32> -> vector<2120x32xf32>
    %c0_3 = arith.constant 0 : index
    %c0_4 = arith.constant 0 : index
    %3 = vector.load %arg3[%c0_3, %c0_4] : memref<1x32xf32, #tpu.memory_space<vmem>>, vector<1x32xf32>
    %4 = vector.broadcast %3 : vector<1x32xf32> to vector<2120x32xf32>
    %5 = arith.addf %2, %4 : vector<2120x32xf32>
    %cst_5 = arith.constant 0.000000e+00 : f32
    %6 = vector.broadcast %cst_5 : f32 to vector<2120x32xf32>
    %7 = arith.cmpf ogt, %5, %6 : vector<2120x32xf32>
    %c0_6 = arith.constant 0 : index
    %c0_7 = arith.constant 0 : index
    %8 = vector.load %arg4[%c0_6, %c0_7] : memref<1x32xf32, #tpu.memory_space<vmem>>, vector<1x32xf32>
    %9 = vector.broadcast %8 : vector<1x32xf32> to vector<2120x32xf32>
    %10 = arith.mulf %9, %5 : vector<2120x32xf32>
    %11 = arith.select %7, %5, %10 : vector<2120x32xi1>, vector<2120x32xf32>
    %12 = arith.truncf %11 : vector<2120x32xf32> to vector<2120x32xbf16>
    %c0_8 = arith.constant 0 : index
    %c0_9 = arith.constant 0 : index
    %13 = vector.load %arg5[%c0_8, %c0_9] : memref<2120x32xbf16, #tpu.memory_space<vmem>>, vector<2120x32xbf16>
    tpu.vector_store %arg5[%c0_8, %c0_9], %12 {strides = array<i32>} : memref<2120x32xbf16, #tpu.memory_space<vmem>>, vector<2120x32xbf16>,
    return
  }
  func.func @transform_0(%arg0: i32) -> (i32, i32) {
    %c0_i32 = arith.constant 0 : i32
    %c0_i32_0 = arith.constant 0 : i32
    return %arg0, %c0_i32 : i32, i32
  }
  func.func @transform_1(%arg0: i32) -> (i32, i32) {
    %c0_i32 = arith.constant 0 : i32
    %c0_i32_0 = arith.constant 0 : i32
    %c0_i32_1 = arith.constant 0 : i32
    return %c0_i32, %c0_i32_0 : i32, i32
  }
  func.func @transform_2(%arg0: i32) -> (i32, i32) {
    %c0_i32 = arith.constant 0 : i32
    %c0_i32_0 = arith.constant 0 : i32
    %c0_i32_1 = arith.constant 0 : i32
    return %c0_i32, %c0_i32_0 : i32, i32
  }
  func.func @transform_3(%arg0: i32) -> (i32, i32) {
    %c0_i32 = arith.constant 0 : i32
    %c0_i32_0 = arith.constant 0 : i32
    %c0_i32_1 = arith.constant 0 : i32
    return %c0_i32, %c0_i32_0 : i32, i32
  }
  func.func @transform_4(%arg0: i32) -> (i32, i32) {
    %c0_i32 = arith.constant 0 : i32
    %c0_i32_0 = arith.constant 0 : i32
    return %arg0, %c0_i32 : i32, i32
  }
}

module attributes {stable_mosaic.version = 11 : i64} {
  func.func @_mm_bias_prelu_kernel(%arg0: i32, %arg1: memref<448x288xbf16, #tpu.memory_space<vmem>>, %arg2: memref<288x64xbf16, #tpu.memory_space<vmem>>, %arg3: memref<1x64xf32, #tpu.memory_space<vmem>>, %arg4: memref<1x64xf32, #tpu.memory_space<vmem>>, %arg5: memref<448x64xbf16, #tpu.memory_space<vmem>>) attributes {dimension_semantics = [#tpu.dimension_semantics<parallel>], iteration_bounds = array<i64: 2>, scalar_prefetch = 0 : i64, scratch_operands = 0 : i64, tpu.core_type = #tpu.core_type<tc>, window_params = [{transform_indices = @transform_0, window_bounds = array<i64: 448, 288>}, {pipeline_mode = #tpu.pipeline_mode<synchronous>, transform_indices = @transform_1, window_bounds = array<i64: 288, 64>}, {pipeline_mode = #tpu.pipeline_mode<synchronous>, transform_indices = @transform_2, window_bounds = array<i64: 1, 64>}, {pipeline_mode = #tpu.pipeline_mode<synchronous>, transform_indices = @transform_3, window_bounds = array<i64: 1, 64>}, {transform_indices = @transform_4, window_bounds = array<i64: 448, 64>}]} {
    %c0 = arith.constant 0 : index
    %c0_0 = arith.constant 0 : index
    %0 = vector.load %arg1[%c0, %c0_0] : memref<448x288xbf16, #tpu.memory_space<vmem>>, vector<448x288xbf16>
    %c0_1 = arith.constant 0 : index
    %c0_2 = arith.constant 0 : index
    %1 = vector.load %arg2[%c0_1, %c0_2] : memref<288x64xbf16, #tpu.memory_space<vmem>>, vector<288x64xbf16>
    %cst = arith.constant dense<0.000000e+00> : vector<448x64xf32>
    %2 = tpu.matmul %0, %1, %cst {dimension_numbers = #tpu.dot_dimension_numbers<[1], [0], [0], [1], [0, 0, 1, 1], [], []>} : vector<448x288xbf16>, vector<288x64xbf16>, vector<448x64xf32> -> vector<448x64xf32>
    %c0_3 = arith.constant 0 : index
    %c0_4 = arith.constant 0 : index
    %3 = vector.load %arg3[%c0_3, %c0_4] : memref<1x64xf32, #tpu.memory_space<vmem>>, vector<1x64xf32>
    %4 = vector.broadcast %3 : vector<1x64xf32> to vector<448x64xf32>
    %5 = arith.addf %2, %4 : vector<448x64xf32>
    %cst_5 = arith.constant 0.000000e+00 : f32
    %6 = vector.broadcast %cst_5 : f32 to vector<448x64xf32>
    %7 = arith.cmpf ogt, %5, %6 : vector<448x64xf32>
    %c0_6 = arith.constant 0 : index
    %c0_7 = arith.constant 0 : index
    %8 = vector.load %arg4[%c0_6, %c0_7] : memref<1x64xf32, #tpu.memory_space<vmem>>, vector<1x64xf32>
    %9 = vector.broadcast %8 : vector<1x64xf32> to vector<448x64xf32>
    %10 = arith.mulf %9, %5 : vector<448x64xf32>
    %11 = arith.select %7, %5, %10 : vector<448x64xi1>, vector<448x64xf32>
    %12 = arith.truncf %11 : vector<448x64xf32> to vector<448x64xbf16>
    %c0_8 = arith.constant 0 : index
    %c0_9 = arith.constant 0 : index
    %13 = vector.load %arg5[%c0_8, %c0_9] : memref<448x64xbf16, #tpu.memory_space<vmem>>, vector<448x64xbf16>
    tpu.vector_store %arg5[%c0_8, %c0_9], %12 {strides = array<i32>} : memref<448x64xbf16, #tpu.memory_space<vmem>>, vector<448x64xbf16>,
    return
  }
  func.func @transform_0(%arg0: i32) -> (i32, i32) {
    %c0_i32 = arith.constant 0 : i32
    %c0_i32_0 = arith.constant 0 : i32
    return %arg0, %c0_i32 : i32, i32
  }
  func.func @transform_1(%arg0: i32) -> (i32, i32) {
    %c0_i32 = arith.constant 0 : i32
    %c0_i32_0 = arith.constant 0 : i32
    %c0_i32_1 = arith.constant 0 : i32
    return %c0_i32, %c0_i32_0 : i32, i32
  }
  func.func @transform_2(%arg0: i32) -> (i32, i32) {
    %c0_i32 = arith.constant 0 : i32
    %c0_i32_0 = arith.constant 0 : i32
    %c0_i32_1 = arith.constant 0 : i32
    return %c0_i32, %c0_i32_0 : i32, i32
  }
  func.func @transform_3(%arg0: i32) -> (i32, i32) {
    %c0_i32 = arith.constant 0 : i32
    %c0_i32_0 = arith.constant 0 : i32
    %c0_i32_1 = arith.constant 0 : i32
    return %c0_i32, %c0_i32_0 : i32, i32
  }
  func.func @transform_4(%arg0: i32) -> (i32, i32) {
    %c0_i32 = arith.constant 0 : i32
    %c0_i32_0 = arith.constant 0 : i32
    return %arg0, %c0_i32 : i32, i32
  }
}

module attributes {stable_mosaic.version = 11 : i64} {
  func.func @_mm_bias_prelu_kernel(%arg0: i32, %arg1: memref<64x576xbf16, #tpu.memory_space<vmem>>, %arg2: memref<576x64xbf16, #tpu.memory_space<vmem>>, %arg3: memref<1x64xf32, #tpu.memory_space<vmem>>, %arg4: memref<1x64xf32, #tpu.memory_space<vmem>>, %arg5: memref<64x64xbf16, #tpu.memory_space<vmem>>) attributes {dimension_semantics = [#tpu.dimension_semantics<parallel>], iteration_bounds = array<i64: 2>, scalar_prefetch = 0 : i64, scratch_operands = 0 : i64, tpu.core_type = #tpu.core_type<tc>, window_params = [{transform_indices = @transform_0, window_bounds = array<i64: 64, 576>}, {pipeline_mode = #tpu.pipeline_mode<synchronous>, transform_indices = @transform_1, window_bounds = array<i64: 576, 64>}, {pipeline_mode = #tpu.pipeline_mode<synchronous>, transform_indices = @transform_2, window_bounds = array<i64: 1, 64>}, {pipeline_mode = #tpu.pipeline_mode<synchronous>, transform_indices = @transform_3, window_bounds = array<i64: 1, 64>}, {transform_indices = @transform_4, window_bounds = array<i64: 64, 64>}]} {
    %c0 = arith.constant 0 : index
    %c0_0 = arith.constant 0 : index
    %0 = vector.load %arg1[%c0, %c0_0] : memref<64x576xbf16, #tpu.memory_space<vmem>>, vector<64x576xbf16>
    %c0_1 = arith.constant 0 : index
    %c0_2 = arith.constant 0 : index
    %1 = vector.load %arg2[%c0_1, %c0_2] : memref<576x64xbf16, #tpu.memory_space<vmem>>, vector<576x64xbf16>
    %cst = arith.constant dense<0.000000e+00> : vector<64x64xf32>
    %2 = tpu.matmul %0, %1, %cst {dimension_numbers = #tpu.dot_dimension_numbers<[1], [0], [0], [1], [0, 0, 1, 1], [], []>} : vector<64x576xbf16>, vector<576x64xbf16>, vector<64x64xf32> -> vector<64x64xf32>
    %c0_3 = arith.constant 0 : index
    %c0_4 = arith.constant 0 : index
    %3 = vector.load %arg3[%c0_3, %c0_4] : memref<1x64xf32, #tpu.memory_space<vmem>>, vector<1x64xf32>
    %4 = vector.broadcast %3 : vector<1x64xf32> to vector<64x64xf32>
    %5 = arith.addf %2, %4 : vector<64x64xf32>
    %cst_5 = arith.constant 0.000000e+00 : f32
    %6 = vector.broadcast %cst_5 : f32 to vector<64x64xf32>
    %7 = arith.cmpf ogt, %5, %6 : vector<64x64xf32>
    %c0_6 = arith.constant 0 : index
    %c0_7 = arith.constant 0 : index
    %8 = vector.load %arg4[%c0_6, %c0_7] : memref<1x64xf32, #tpu.memory_space<vmem>>, vector<1x64xf32>
    %9 = vector.broadcast %8 : vector<1x64xf32> to vector<64x64xf32>
    %10 = arith.mulf %9, %5 : vector<64x64xf32>
    %11 = arith.select %7, %5, %10 : vector<64x64xi1>, vector<64x64xf32>
    %12 = arith.truncf %11 : vector<64x64xf32> to vector<64x64xbf16>
    %c0_8 = arith.constant 0 : index
    %c0_9 = arith.constant 0 : index
    %13 = vector.load %arg5[%c0_8, %c0_9] : memref<64x64xbf16, #tpu.memory_space<vmem>>, vector<64x64xbf16>
    tpu.vector_store %arg5[%c0_8, %c0_9], %12 {strides = array<i32>} : memref<64x64xbf16, #tpu.memory_space<vmem>>, vector<64x64xbf16>,
    return
  }
  func.func @transform_0(%arg0: i32) -> (i32, i32) {
    %c0_i32 = arith.constant 0 : i32
    %c0_i32_0 = arith.constant 0 : i32
    return %arg0, %c0_i32 : i32, i32
  }
  func.func @transform_1(%arg0: i32) -> (i32, i32) {
    %c0_i32 = arith.constant 0 : i32
    %c0_i32_0 = arith.constant 0 : i32
    %c0_i32_1 = arith.constant 0 : i32
    return %c0_i32, %c0_i32_0 : i32, i32
  }
  func.func @transform_2(%arg0: i32) -> (i32, i32) {
    %c0_i32 = arith.constant 0 : i32
    %c0_i32_0 = arith.constant 0 : i32
    %c0_i32_1 = arith.constant 0 : i32
    return %c0_i32, %c0_i32_0 : i32, i32
  }
  func.func @transform_3(%arg0: i32) -> (i32, i32) {
    %c0_i32 = arith.constant 0 : i32
    %c0_i32_0 = arith.constant 0 : i32
    %c0_i32_1 = arith.constant 0 : i32
    return %c0_i32, %c0_i32_0 : i32, i32
  }
  func.func @transform_4(%arg0: i32) -> (i32, i32) {
    %c0_i32 = arith.constant 0 : i32
    %c0_i32_0 = arith.constant 0 : i32
    return %arg0, %c0_i32 : i32, i32
  }
}

module attributes {stable_mosaic.version = 11 : i64} {
  func.func @_mm_bias_prelu_kernel(%arg0: i32, %arg1: memref<16x256xbf16, #tpu.memory_space<vmem>>, %arg2: memref<256x128xbf16, #tpu.memory_space<vmem>>, %arg3: memref<1x128xf32, #tpu.memory_space<vmem>>, %arg4: memref<1x128xf32, #tpu.memory_space<vmem>>, %arg5: memref<16x128xbf16, #tpu.memory_space<vmem>>) attributes {dimension_semantics = [#tpu.dimension_semantics<parallel>], iteration_bounds = array<i64: 2>, scalar_prefetch = 0 : i64, scratch_operands = 0 : i64, tpu.core_type = #tpu.core_type<tc>, window_params = [{transform_indices = @transform_0, window_bounds = array<i64: 16, 256>}, {pipeline_mode = #tpu.pipeline_mode<synchronous>, transform_indices = @transform_1, window_bounds = array<i64: 256, 128>}, {pipeline_mode = #tpu.pipeline_mode<synchronous>, transform_indices = @transform_2, window_bounds = array<i64: 1, 128>}, {pipeline_mode = #tpu.pipeline_mode<synchronous>, transform_indices = @transform_3, window_bounds = array<i64: 1, 128>}, {transform_indices = @transform_4, window_bounds = array<i64: 16, 128>}]} {
    %c0 = arith.constant 0 : index
    %c0_0 = arith.constant 0 : index
    %0 = vector.load %arg1[%c0, %c0_0] : memref<16x256xbf16, #tpu.memory_space<vmem>>, vector<16x256xbf16>
    %c0_1 = arith.constant 0 : index
    %c0_2 = arith.constant 0 : index
    %1 = vector.load %arg2[%c0_1, %c0_2] : memref<256x128xbf16, #tpu.memory_space<vmem>>, vector<256x128xbf16>
    %cst = arith.constant dense<0.000000e+00> : vector<16x128xf32>
    %2 = tpu.matmul %0, %1, %cst {dimension_numbers = #tpu.dot_dimension_numbers<[1], [0], [0], [1], [0, 0, 1, 1], [], []>} : vector<16x256xbf16>, vector<256x128xbf16>, vector<16x128xf32> -> vector<16x128xf32>
    %c0_3 = arith.constant 0 : index
    %c0_4 = arith.constant 0 : index
    %3 = vector.load %arg3[%c0_3, %c0_4] : memref<1x128xf32, #tpu.memory_space<vmem>>, vector<1x128xf32>
    %4 = vector.broadcast %3 : vector<1x128xf32> to vector<16x128xf32>
    %5 = arith.addf %2, %4 : vector<16x128xf32>
    %cst_5 = arith.constant 0.000000e+00 : f32
    %6 = vector.broadcast %cst_5 : f32 to vector<16x128xf32>
    %7 = arith.cmpf ogt, %5, %6 : vector<16x128xf32>
    %c0_6 = arith.constant 0 : index
    %c0_7 = arith.constant 0 : index
    %8 = vector.load %arg4[%c0_6, %c0_7] : memref<1x128xf32, #tpu.memory_space<vmem>>, vector<1x128xf32>
    %9 = vector.broadcast %8 : vector<1x128xf32> to vector<16x128xf32>
    %10 = arith.mulf %9, %5 : vector<16x128xf32>
    %11 = arith.select %7, %5, %10 : vector<16x128xi1>, vector<16x128xf32>
    %12 = arith.truncf %11 : vector<16x128xf32> to vector<16x128xbf16>
    %c0_8 = arith.constant 0 : index
    %c0_9 = arith.constant 0 : index
    %13 = vector.load %arg5[%c0_8, %c0_9] : memref<16x128xbf16, #tpu.memory_space<vmem>>, vector<16x128xbf16>
    tpu.vector_store %arg5[%c0_8, %c0_9], %12 {strides = array<i32>} : memref<16x128xbf16, #tpu.memory_space<vmem>>, vector<16x128xbf16>,
    return
  }
  func.func @transform_0(%arg0: i32) -> (i32, i32) {
    %c0_i32 = arith.constant 0 : i32
    %c0_i32_0 = arith.constant 0 : i32
    return %arg0, %c0_i32 : i32, i32
  }
  func.func @transform_1(%arg0: i32) -> (i32, i32) {
    %c0_i32 = arith.constant 0 : i32
    %c0_i32_0 = arith.constant 0 : i32
    %c0_i32_1 = arith.constant 0 : i32
    return %c0_i32, %c0_i32_0 : i32, i32
  }
  func.func @transform_2(%arg0: i32) -> (i32, i32) {
    %c0_i32 = arith.constant 0 : i32
    %c0_i32_0 = arith.constant 0 : i32
    %c0_i32_1 = arith.constant 0 : i32
    return %c0_i32, %c0_i32_0 : i32, i32
  }
  func.func @transform_3(%arg0: i32) -> (i32, i32) {
    %c0_i32 = arith.constant 0 : i32
    %c0_i32_0 = arith.constant 0 : i32
    %c0_i32_1 = arith.constant 0 : i32
    return %c0_i32, %c0_i32_0 : i32, i32
  }
  func.func @transform_4(%arg0: i32) -> (i32, i32) {
    %c0_i32 = arith.constant 0 : i32
    %c0_i32_0 = arith.constant 0 : i32
    return %arg0, %c0_i32 : i32, i32
  }
}

module attributes {stable_mosaic.version = 11 : i64} {
  func.func @_tail_kernel(%arg0: i32, %arg1: memref<8x1152xbf16, #tpu.memory_space<vmem>>, %arg2: memref<1152x256xbf16, #tpu.memory_space<vmem>>, %arg3: memref<1x256xf32, #tpu.memory_space<vmem>>, %arg4: memref<1x256xf32, #tpu.memory_space<vmem>>, %arg5: memref<256x16xbf16, #tpu.memory_space<vmem>>, %arg6: memref<1x16xf32, #tpu.memory_space<vmem>>, %arg7: memref<8x16xf32, #tpu.memory_space<vmem>>) attributes {dimension_semantics = [#tpu.dimension_semantics<parallel>], iteration_bounds = array<i64: 1>, scalar_prefetch = 0 : i64, scratch_operands = 0 : i64, tpu.core_type = #tpu.core_type<tc>, window_params = [{transform_indices = @transform_0, window_bounds = array<i64: 8, 1152>}, {pipeline_mode = #tpu.pipeline_mode<synchronous>, transform_indices = @transform_1, window_bounds = array<i64: 1152, 256>}, {pipeline_mode = #tpu.pipeline_mode<synchronous>, transform_indices = @transform_2, window_bounds = array<i64: 1, 256>}, {pipeline_mode = #tpu.pipeline_mode<synchronous>, transform_indices = @transform_3, window_bounds = array<i64: 1, 256>}, {pipeline_mode = #tpu.pipeline_mode<synchronous>, transform_indices = @transform_4, window_bounds = array<i64: 256, 16>}, {pipeline_mode = #tpu.pipeline_mode<synchronous>, transform_indices = @transform_5, window_bounds = array<i64: 1, 16>}, {transform_indices = @transform_6, window_bounds = array<i64: 8, 16>}]} {
    %c0 = arith.constant 0 : index
    %c0_0 = arith.constant 0 : index
    %0 = vector.load %arg1[%c0, %c0_0] : memref<8x1152xbf16, #tpu.memory_space<vmem>>, vector<8x1152xbf16>
    %c0_1 = arith.constant 0 : index
    %c0_2 = arith.constant 0 : index
    %1 = vector.load %arg2[%c0_1, %c0_2] : memref<1152x256xbf16, #tpu.memory_space<vmem>>, vector<1152x256xbf16>
    %cst = arith.constant dense<0.000000e+00> : vector<8x256xf32>
    %2 = tpu.matmul %0, %1, %cst {dimension_numbers = #tpu.dot_dimension_numbers<[1], [0], [0], [1], [0, 0, 1, 1], [], []>} : vector<8x1152xbf16>, vector<1152x256xbf16>, vector<8x256xf32> -> vector<8x256xf32>
    %c0_3 = arith.constant 0 : index
    %c0_4 = arith.constant 0 : index
    %3 = vector.load %arg3[%c0_3, %c0_4] : memref<1x256xf32, #tpu.memory_space<vmem>>, vector<1x256xf32>
    %4 = vector.broadcast %3 : vector<1x256xf32> to vector<8x256xf32>
    %5 = arith.addf %2, %4 : vector<8x256xf32>
    %cst_5 = arith.constant 0.000000e+00 : f32
    %6 = vector.broadcast %cst_5 : f32 to vector<8x256xf32>
    %7 = arith.cmpf ogt, %5, %6 : vector<8x256xf32>
    %c0_6 = arith.constant 0 : index
    %c0_7 = arith.constant 0 : index
    %8 = vector.load %arg4[%c0_6, %c0_7] : memref<1x256xf32, #tpu.memory_space<vmem>>, vector<1x256xf32>
    %9 = vector.broadcast %8 : vector<1x256xf32> to vector<8x256xf32>
    %10 = arith.mulf %9, %5 : vector<8x256xf32>
    %11 = arith.select %7, %5, %10 : vector<8x256xi1>, vector<8x256xf32>
    %12 = arith.truncf %11 : vector<8x256xf32> to vector<8x256xbf16>
    %c0_8 = arith.constant 0 : index
    %c0_9 = arith.constant 0 : index
    %13 = vector.load %arg5[%c0_8, %c0_9] : memref<256x16xbf16, #tpu.memory_space<vmem>>, vector<256x16xbf16>
    %cst_10 = arith.constant dense<0.000000e+00> : vector<8x16xf32>
    %14 = tpu.matmul %12, %13, %cst_10 {dimension_numbers = #tpu.dot_dimension_numbers<[1], [0], [0], [1], [0, 0, 1, 1], [], []>} : vector<8x256xbf16>, vector<256x16xbf16>, vector<8x16xf32> -> vector<8x16xf32>
    %c0_11 = arith.constant 0 : index
    %c0_12 = arith.constant 0 : index
    %15 = vector.load %arg6[%c0_11, %c0_12] : memref<1x16xf32, #tpu.memory_space<vmem>>, vector<1x16xf32>
    %16 = vector.broadcast %15 : vector<1x16xf32> to vector<8x16xf32>
    %17 = arith.addf %14, %16 : vector<8x16xf32>
    %18 = tpu.iota {dimensions = array<i32: 1>} : vector<8x16xi32>
    %c2_i32 = arith.constant 2 : i32
    %19 = vector.broadcast %c2_i32 : i32 to vector<8x16xi32>
    %20 = arith.cmpi slt, %18, %19 : vector<8x16xi32>
    %cst_13 = arith.constant 0xFF800000 : f32
    %21 = vector.broadcast %cst_13 : f32 to vector<8x16xf32>
    %22 = arith.select %20, %17, %21 : vector<8x16xi1>, vector<8x16xf32>
    %cst_14 = arith.constant dense<0xFF800000> : vector<8xf32>
    %23 = vector.multi_reduction <maximumf>, %22, %cst_14 [1] : vector<8x16xf32> to vector<8xf32>
    %24 = vector.shape_cast %23 : vector<8xf32> to vector<8x1xf32>
    %25 = vector.broadcast %24 : vector<8x1xf32> to vector<8x16xf32>
    %26 = arith.subf %22, %25 : vector<8x16xf32>
    %27 = math.exp %26 : vector<8x16xf32>
    %cst_15 = arith.constant dense<0.000000e+00> : vector<8xf32>
    %28 = vector.multi_reduction <add>, %27, %cst_15 [1] : vector<8x16xf32> to vector<8xf32>
    %29 = vector.shape_cast %28 : vector<8xf32> to vector<8x1xf32>
    %30 = tpu.reciprocal %29 {approx = true} : vector<8x1xf32> -> vector<8x1xf32>
    %31 = vector.broadcast %30 : vector<8x1xf32> to vector<8x16xf32>
    %32 = arith.mulf %27, %31 : vector<8x16xf32>
    %33 = arith.select %20, %32, %17 : vector<8x16xi1>, vector<8x16xf32>
    %c0_16 = arith.constant 0 : index
    %c0_17 = arith.constant 0 : index
    %34 = vector.load %arg7[%c0_16, %c0_17] : memref<8x16xf32, #tpu.memory_space<vmem>>, vector<8x16xf32>
    tpu.vector_store %arg7[%c0_16, %c0_17], %33 {strides = array<i32>} : memref<8x16xf32, #tpu.memory_space<vmem>>, vector<8x16xf32>,
    return
  }
  func.func @transform_0(%arg0: i32) -> (i32, i32) {
    %c0_i32 = arith.constant 0 : i32
    %c0_i32_0 = arith.constant 0 : i32
    return %arg0, %c0_i32 : i32, i32
  }
  func.func @transform_1(%arg0: i32) -> (i32, i32) {
    %c0_i32 = arith.constant 0 : i32
    %c0_i32_0 = arith.constant 0 : i32
    %c0_i32_1 = arith.constant 0 : i32
    return %c0_i32, %c0_i32_0 : i32, i32
  }
  func.func @transform_2(%arg0: i32) -> (i32, i32) {
    %c0_i32 = arith.constant 0 : i32
    %c0_i32_0 = arith.constant 0 : i32
    %c0_i32_1 = arith.constant 0 : i32
    return %c0_i32, %c0_i32_0 : i32, i32
  }
  func.func @transform_3(%arg0: i32) -> (i32, i32) {
    %c0_i32 = arith.constant 0 : i32
    %c0_i32_0 = arith.constant 0 : i32
    %c0_i32_1 = arith.constant 0 : i32
    return %c0_i32, %c0_i32_0 : i32, i32
  }
  func.func @transform_4(%arg0: i32) -> (i32, i32) {
    %c0_i32 = arith.constant 0 : i32
    %c0_i32_0 = arith.constant 0 : i32
    %c0_i32_1 = arith.constant 0 : i32
    return %c0_i32, %c0_i32_0 : i32, i32
  }
  func.func @transform_5(%arg0: i32) -> (i32, i32) {
    %c0_i32 = arith.constant 0 : i32
    %c0_i32_0 = arith.constant 0 : i32
    %c0_i32_1 = arith.constant 0 : i32
    return %c0_i32, %c0_i32_0 : i32, i32
  }
  func.func @transform_6(%arg0: i32) -> (i32, i32) {
    %c0_i32 = arith.constant 0 : i32
    %c0_i32_0 = arith.constant 0 : i32
    return %arg0, %c0_i32 : i32, i32
  }
}

</mosaic_0001>

<llo_original>
// kernel: onet_forward.5
$region0: #{onet_forward.5}
  #allocation0 [shape = 'u32[]', space=smem, size = 0x4, offset = 0x4, fixed_abs, tag = 'smem constant byte address 0x4 - core index']
  #allocation1 [shape = 'u32[144,128]{1,0:T(1,128)}', space=vmem, size = 0x12000, scoped, tag = 'internal scratch']
  %s0 = inlined_call_operand.vmem [shape: bf16[4240,32], index: 0, kind: input, shape index: {}]
  %s1 = inlined_call_operand.vmem [shape: bf16[32,32], index: 1, kind: input, shape index: {}]
  %s2 = inlined_call_operand.vmem [shape: f32[1,32], index: 2, kind: input, shape index: {}]
  %s3 = inlined_call_operand.vmem [shape: f32[1,32], index: 3, kind: input, shape index: {}]
  %s4 = inlined_call_operand.vmem [shape: bf16[4240,32], index: 4, kind: output, shape index: {}]
  %s5 = sld [smem:[#allocation0]]
  $region49: #{onet_forward.5} parent=0
    _
  %s7 = ssub.s32 1, %s5
  %s8 = scalar_select 0, %s7, %s5
  loop: start=0, step=1, limit=4
  $region2: #{onet_forward.5} parent=0 // loop_pre_header
    _
  $region3: #{onet_forward.5} parent=0 // loop_header
    %s10 = sphi 0, %s14
    %p11 = scmp.ge.s32.totalorder %s10, 4
    %s20 = sphi 0, %s22
    %s23 = sphi 0, %s20
    %s24 = sphi 0, %s23
    %s40 = sphi 0, %s24
    %s44 = sphi 0, %s44
    %s46 = sphi 0, %s44
    %s47 = sphi 0, %s46
    %s61 = sphi 0, %s47
    %s65 = sphi 0, %s65
    %s67 = sphi 0, %s65
    %s68 = sphi 0, %s67
    %s82 = sphi 0, %s68
    %s86 = sphi 0, %s86
    %s88 = sphi 0, %s86
    %s89 = sphi 0, %s88
    %s103 = sphi 0, %s89
    %s109 = sphi 0, %s111
    %s112 = sphi 0, %s109
    %s113 = sphi 0, %s112
    %s129 = sphi 0, %s113
  $region4: #{onet_forward.5} parent=0 // loop_header_branch
    %13 = sbr.rel (%p11) target = $region8
  $region5: #{onet_forward.5} parent=0 // loop_body
    %s15 = ssub.s32 %s10, 1
    %s16 = ssub.s32 %s10, 2
    %s17 = sadd.s32 %s10, 1
    %s18 = ssub.s32 %s10, %s17
    %p19 = scmp.eq.s32.totalorder %s18, 0
    %s21 = sadd.s32 %s20, 1
    %s22 = scalar_select %p19, %s20, %s21
    %p25 = pneg %p19
    %p26 = scmp.eq.s32.totalorder %s10, 1
    %p27 = por %p25, %p26
    %p28 = scmp.ne.s32.totalorder %s20, %s23
    %p29 = scmp.eq.s32.totalorder %s10, 0
    %p30 = por %p28, %p29
    %p31 = scmp.ne.s32.totalorder %s20, %s23
    %p32 = scmp.eq.s32.totalorder %s15, 1
    %p33 = por %p31, %p32
    %p34 = scmp.ne.s32.totalorder %s23, %s24
    %p35 = scmp.eq.s32.totalorder %s15, 0
    %p36 = por %p34, %p35
    %p37 = scmp.ne.s32.totalorder %s23, %s24
    %p38 = scmp.eq.s32.totalorder %s16, 1
    %p39 = por %p37, %p38
    %p41 = scmp.ne.s32.totalorder %s24, %s40
    %p42 = scmp.eq.s32.totalorder %s16, 0
    %p43 = por %p41, %p42
    %s45 = sadd.s32 %s44, 1
    %p48 = scmp.eq.s32.totalorder %s10, 1
    %p49 = scmp.ne.s32.totalorder %s44, %s46
    %p50 = scmp.eq.s32.totalorder %s10, 0
    %p51 = por %p49, %p50
    %p52 = scmp.ne.s32.totalorder %s44, %s46
    %p53 = scmp.eq.s32.totalorder %s15, 1
    %p54 = por %p52, %p53
    %p55 = scmp.ne.s32.totalorder %s46, %s47
    %p56 = scmp.eq.s32.totalorder %s15, 0
    %p57 = por %p55, %p56
    %p58 = scmp.ne.s32.totalorder %s46, %s47
    %p59 = scmp.eq.s32.totalorder %s16, 1
    %p60 = por %p58, %p59
    %p62 = scmp.ne.s32.totalorder %s47, %s61
    %p63 = scmp.eq.s32.totalorder %s16, 0
    %p64 = por %p62, %p63
    %s66 = sadd.s32 %s65, 1
    %p69 = scmp.eq.s32.totalorder %s10, 1
    %p70 = scmp.ne.s32.totalorder %s65, %s67
    %p71 = scmp.eq.s32.totalorder %s10, 0
    %p72 = por %p70, %p71
    %p73 = scmp.ne.s32.totalorder %s65, %s67
    %p74 = scmp.eq.s32.totalorder %s15, 1
    %p75 = por %p73, %p74
    %p76 = scmp.ne.s32.totalorder %s67, %s68
    %p77 = scmp.eq.s32.totalorder %s15, 0
    %p78 = por %p76, %p77
    %p79 = scmp.ne.s32.totalorder %s67, %s68
    %p80 = scmp.eq.s32.totalorder %s16, 1
    %p81 = por %p79, %p80
    %p83 = scmp.ne.s32.totalorder %s68, %s82
    %p84 = scmp.eq.s32.totalorder %s16, 0
    %p85 = por %p83, %p84
    %s87 = sadd.s32 %s86, 1
    %p90 = scmp.eq.s32.totalorder %s10, 1
    %p91 = scmp.ne.s32.totalorder %s86, %s88
    %p92 = scmp.eq.s32.totalorder %s10, 0
    %p93 = por %p91, %p92
    %p94 = scmp.ne.s32.totalorder %s86, %s88
    %p95 = scmp.eq.s32.totalorder %s15, 1
    %p96 = por %p94, %p95
    %p97 = scmp.ne.s32.totalorder %s88, %s89
    %p98 = scmp.eq.s32.totalorder %s15, 0
    %p99 = por %p97, %p98
    %p100 = scmp.ne.s32.totalorder %s88, %s89
    %p101 = scmp.eq.s32.totalorder %s16, 1
    %p102 = por %p100, %p101
    %p104 = scmp.ne.s32.totalorder %s89, %s103
    %p105 = scmp.eq.s32.totalorder %s16, 0
    %p106 = por %p104, %p105
    %s107 = ssub.s32 %s10, %s17
    %p108 = scmp.eq.s32.totalorder %s107, 0
    %s110 = sadd.s32 %s109, 1
    %s111 = scalar_select %p108, %s109, %s110
    %p114 = pneg %p108
    %p115 = scmp.eq.s32.totalorder %s10, 1
    %p116 = por %p114, %p115
    %p117 = scmp.ne.s32.totalorder %s109, %s112
    %p118 = scmp.eq.s32.totalorder %s10, 0
    %p119 = por %p117, %p118
    %p120 = scmp.ne.s32.totalorder %s109, %s112
    %p121 = scmp.eq.s32.totalorder %s15, 1
    %p122 = por %p120, %p121
    %p123 = scmp.ne.s32.totalorder %s112, %s113
    %p124 = scmp.eq.s32.totalorder %s15, 0
    %p125 = por %p123, %p124
    %p126 = scmp.ne.s32.totalorder %s112, %s113
    %p127 = scmp.eq.s32.totalorder %s16, 1
    %p128 = por %p126, %p127
    %p130 = scmp.ne.s32.totalorder %s113, %s129
    %p131 = scmp.eq.s32.totalorder %s16, 0
    %p132 = por %p130, %p131
    %p133 = scmp.le.s32.totalorder 1, %s10
    %p134 = scmp.lt.s32.totalorder %s10, 3
    %p135 = pnand %p133, %p134
    %p136 = pneg %p135
    // Predicated region
    $region9: #{onet_forward.5} parent=5 // pred_check
      _
    $region10: #{onet_forward.5} parent=5 // pred_check_branch
      %138 = sbr.rel (%p135) target = $region12
    $region11: #{onet_forward.5} parent=5 // pred_region
      %s139 = ssub.s32 %s10, 1
      // Predicated region
      $region13: #{onet_forward.5} parent=11 // pred_check
        %p140 = pneg %p57
      $region14: #{onet_forward.5} parent=11 // pred_check_branch
        %142 = sbr.rel (%p140) target = $region16
      $region15: #{onet_forward.5} parent=11 // pred_region
        _
      $region16: #{onet_forward.5} parent=11 // pred_fallthru
        _
      // Predicated region
      $region17: #{onet_forward.5} parent=11 // pred_check
        %p143 = pneg %p78
      $region18: #{onet_forward.5} parent=11 // pred_check_branch
        %145 = sbr.rel (%p143) target = $region20
      $region19: #{onet_forward.5} parent=11 // pred_region
        _
      $region20: #{onet_forward.5} parent=11 // pred_fallthru
        _
      // Predicated region
      $region21: #{onet_forward.5} parent=11 // pred_check
        %p146 = pneg %p99
      $region22: #{onet_forward.5} parent=11 // pred_check_branch
        %148 = sbr.rel (%p146) target = $region24
      $region23: #{onet_forward.5} parent=11 // pred_region
        _
      $region24: #{onet_forward.5} parent=11 // pred_fallthru
        _
    $region12: #{onet_forward.5} parent=5 // pred_fallthru
      _
    %p149 = scmp.lt.s32.totalorder %s10, 2
    // Predicated region
    $region25: #{onet_forward.5} parent=5 // pred_check
      %p150 = pneg %p149
    $region26: #{onet_forward.5} parent=5 // pred_check_branch
      %152 = sbr.rel (%p150) target = $region28
    $region27: #{onet_forward.5} parent=5 // pred_region
      // Predicated region
      $region29: #{onet_forward.5} parent=27 // pred_check
        %p153 = pneg %p30
      $region30: #{onet_forward.5} parent=27 // pred_check_branch
        %155 = sbr.rel (%p153) target = $region32
      $region31: #{onet_forward.5} parent=27 // pred_region
        %s156 = smul.u32 265, %s10
        %p157 = scmp.lt.s32.totalorder %s156, 529
        %s158 = scalar_select %p157, %s156, 529
        %s159 = smul.addr %s158, 4
        %s160 = scalar_lea.vmem %s0, %s159
        %s161 = smul.u32 265, %s10
      $region32: #{onet_forward.5} parent=27 // pred_fallthru
        _
    $region28: #{onet_forward.5} parent=5 // pred_fallthru
      _
    %p162 = scmp.le.s32.totalorder 1, %s10
    %p163 = scmp.lt.s32.totalorder %s10, 3
    %p164 = pnand %p162, %p163
    %p165 = pneg %p164
    // Predicated region
    $region33: #{onet_forward.5} parent=5 // pred_check
      _
    $region34: #{onet_forward.5} parent=5 // pred_check_branch
      %167 = sbr.rel (%p164) target = $region36
    $region35: #{onet_forward.5} parent=5 // pred_region
      %s168 = ssub.s32 %s10, 1
      %s169 = smul.u32 265, %s15
      %p170 = scmp.lt.s32.totalorder %s169, 529
      %s171 = scalar_select %p170, %s169, 529
      %s172 = smul.addr %s171, 4
      %s173 = scalar_lea.vmem %s0, %s172
      %p174 = pneg %p36
      %p175 = pneg %p33
      %p176 = pneg %p57
      %p177 = pneg %p54
      %p178 = pneg %p78
      %p179 = pneg %p75
      %p180 = pneg %p99
      %p181 = pneg %p96
      %p182 = pneg %p125
      %p183 = pneg %p122
      %s184 = smul.u32 265, %s15
      %p185 = scmp.lt.s32.totalorder %s184, 529
      %s186 = scalar_select %p185, %s184, 529
      %s187 = smul.addr %s186, 4
      %s188 = scalar_lea.vmem %s4, %s187
      %s189 = smul.u32 265, %s15
      %p190 = scmp.lt.s32.totalorder %s189, 529
      %s191 = scalar_select %p190, %s189, 529
      %s192 = smul.addr %s191, 4
      %s193 = scalar_lea.vmem %s0, %s192
      %s194 = smul.u32 265, %s15
      %s195 = smul.u32 265, %s15
      %p196 = scmp.lt.s32.totalorder %s195, 529
      %s197 = scalar_select %p196, %s195, 529
      %s198 = smul.addr %s197, 4
      %s199 = scalar_lea.vmem %s4, %s198
      %s200 = smul.u32 265, %s15
      %v202 = vld [vmem:[%s193] sm:$0xf]
      %v203 = vld [vmem:[%s193 + $0x4] sm:$0xf]
      %v204 = vld [vmem:[%s193 + $0x8] sm:$0xf]
      %v205 = vld [vmem:[%s193 + $0xc] sm:$0xf]
      %v206 = vld [vmem:[%s193 + $0x10] sm:$0xf]
      %v207 = vld [vmem:[%s193 + $0x14] sm:$0xf]
      %v208 = vld [vmem:[%s193 + $0x18] sm:$0xf]
      %v209 = vld [vmem:[%s193 + $0x1c] sm:$0xf]
      %v210 = vld [vmem:[%s193 + $0x20] sm:$0xf]
      %v211 = vld [vmem:[%s193 + $0x24] sm:$0xf]
      %v212 = vld [vmem:[%s193 + $0x28] sm:$0xf]
      %v213 = vld [vmem:[%s193 + $0x2c] sm:$0xf]
      %v214 = vld [vmem:[%s193 + $0x30] sm:$0xf]
      %v215 = vld [vmem:[%s193 + $0x34] sm:$0xf]
      %v216 = vld [vmem:[%s193 + $0x38] sm:$0xf]
      %v217 = vld [vmem:[%s193 + $0x3c] sm:$0xf]
      %v218 = vld [vmem:[%s193 + $0x40] sm:$0xf]
      %v219 = vld [vmem:[%s193 + $0x44] sm:$0xf]
      %v220 = vld [vmem:[%s193 + $0x48] sm:$0xf]
      %v221 = vld [vmem:[%s193 + $0x4c] sm:$0xf]
      %v222 = vld [vmem:[%s193 + $0x50] sm:$0xf]
      %v223 = vld [vmem:[%s193 + $0x54] sm:$0xf]
      %v224 = vld [vmem:[%s193 + $0x58] sm:$0xf]
      %v225 = vld [vmem:[%s193 + $0x5c] sm:$0xf]
      %v226 = vld [vmem:[%s193 + $0x60] sm:$0xf]
      %v227 = vld [vmem:[%s193 + $0x64] sm:$0xf]
      %v228 = vld [vmem:[%s193 + $0x68] sm:$0xf]
      %v229 = vld [vmem:[%s193 + $0x6c] sm:$0xf]
      %v230 = vld [vmem:[%s193 + $0x70] sm:$0xf]
      %v231 = vld [vmem:[%s193 + $0x74] sm:$0xf]
      %v232 = vld [vmem:[%s193 + $0x78] sm:$0xf]
      %v233 = vld [vmem:[%s193 + $0x7c] sm:$0xf]
      %v234 = vld [vmem:[%s193 + $0x80] sm:$0xf]
      %v235 = vld [vmem:[%s193 + $0x84] sm:$0xf]
      %v236 = vld [vmem:[%s193 + $0x88] sm:$0xf]
      %v237 = vld [vmem:[%s193 + $0x8c] sm:$0xf]
      %v238 = vld [vmem:[%s193 + $0x90] sm:$0xf]
      %v239 = vld [vmem:[%s193 + $0x94] sm:$0xf]
      %v240 = vld [vmem:[%s193 + $0x98] sm:$0xf]
      %v241 = vld [vmem:[%s193 + $0x9c] sm:$0xf]
      %v242 = vld [vmem:[%s193 + $0xa0] sm:$0xf]
      %v243 = vld [vmem:[%s193 + $0xa4] sm:$0xf]
      %v244 = vld [vmem:[%s193 + $0xa8] sm:$0xf]
      %v245 = vld [vmem:[%s193 + $0xac] sm:$0xf]
      %v246 = vld [vmem:[%s193 + $0xb0] sm:$0xf]
      %v247 = vld [vmem:[%s193 + $0xb4] sm:$0xf]
      %v248 = vld [vmem:[%s193 + $0xb8] sm:$0xf]
      %v249 = vld [vmem:[%s193 + $0xbc] sm:$0xf]
      %v250 = vld [vmem:[%s193 + $0xc0] sm:$0xf]
      %v251 = vld [vmem:[%s193 + $0xc4] sm:$0xf]
      %v252 = vld [vmem:[%s193 + $0xc8] sm:$0xf]
      %v253 = vld [vmem:[%s193 + $0xcc] sm:$0xf]
      %v254 = vld [vmem:[%s193 + $0xd0] sm:$0xf]
      %v255 = vld [vmem:[%s193 + $0xd4] sm:$0xf]
      %v256 = vld [vmem:[%s193 + $0xd8] sm:$0xf]
      %v257 = vld [vmem:[%s193 + $0xdc] sm:$0xf]
      %v258 = vld [vmem:[%s193 + $0xe0] sm:$0xf]
      %v259 = vld [vmem:[%s193 + $0xe4] sm:$0xf]
      %v260 = vld [vmem:[%s193 + $0xe8] sm:$0xf]
      %v261 = vld [vmem:[%s193 + $0xec] sm:$0xf]
      %v262 = vld [vmem:[%s193 + $0xf0] sm:$0xf]
      %v263 = vld [vmem:[%s193 + $0xf4] sm:$0xf]
      %v264 = vld [vmem:[%s193 + $0xf8] sm:$0xf]
      %v265 = vld [vmem:[%s193 + $0xfc] sm:$0xf]
      %v266 = vld [vmem:[%s193 + $0x100] sm:$0xf]
      %v267 = vld [vmem:[%s193 + $0x104] sm:$0xf]
      %v268 = vld [vmem:[%s193 + $0x108] sm:$0xf]
      %v269 = vld [vmem:[%s193 + $0x10c] sm:$0xf]
      %v270 = vld [vmem:[%s193 + $0x110] sm:$0xf]
      %v271 = vld [vmem:[%s193 + $0x114] sm:$0xf]
      %v272 = vld [vmem:[%s193 + $0x118] sm:$0xf]
      %v273 = vld [vmem:[%s193 + $0x11c] sm:$0xf]
      %v274 = vld [vmem:[%s193 + $0x120] sm:$0xf]
      %v275 = vld [vmem:[%s193 + $0x124] sm:$0xf]
      %v276 = vld [vmem:[%s193 + $0x128] sm:$0xf]
      %v277 = vld [vmem:[%s193 + $0x12c] sm:$0xf]
      %v278 = vld [vmem:[%s193 + $0x130] sm:$0xf]
      %v279 = vld [vmem:[%s193 + $0x134] sm:$0xf]
      %v280 = vld [vmem:[%s193 + $0x138] sm:$0xf]
      %v281 = vld [vmem:[%s193 + $0x13c] sm:$0xf]
      %v282 = vld [vmem:[%s193 + $0x140] sm:$0xf]
      %v283 = vld [vmem:[%s193 + $0x144] sm:$0xf]
      %v284 = vld [vmem:[%s193 + $0x148] sm:$0xf]
      %v285 = vld [vmem:[%s193 + $0x14c] sm:$0xf]
      %v286 = vld [vmem:[%s193 + $0x150] sm:$0xf]
      %v287 = vld [vmem:[%s193 + $0x154] sm:$0xf]
      %v288 = vld [vmem:[%s193 + $0x158] sm:$0xf]
      %v289 = vld [vmem:[%s193 + $0x15c] sm:$0xf]
      %v290 = vld [vmem:[%s193 + $0x160] sm:$0xf]
      %v291 = vld [vmem:[%s193 + $0x164] sm:$0xf]
      %v292 = vld [vmem:[%s193 + $0x168] sm:$0xf]
      %v293 = vld [vmem:[%s193 + $0x16c] sm:$0xf]
      %v294 = vld [vmem:[%s193 + $0x170] sm:$0xf]
      %v295 = vld [vmem:[%s193 + $0x174] sm:$0xf]
      %v296 = vld [vmem:[%s193 + $0x178] sm:$0xf]
      %v297 = vld [vmem:[%s193 + $0x17c] sm:$0xf]
      %v298 = vld [vmem:[%s193 + $0x180] sm:$0xf]
      %v299 = vld [vmem:[%s193 + $0x184] sm:$0xf]
      %v300 = vld [vmem:[%s193 + $0x188] sm:$0xf]
      %v301 = vld [vmem:[%s193 + $0x18c] sm:$0xf]
      %v302 = vld [vmem:[%s193 + $0x190] sm:$0xf]
      %v303 = vld [vmem:[%s193 + $0x194] sm:$0xf]
      %v304 = vld [vmem:[%s193 + $0x198] sm:$0xf]
      %v305 = vld [vmem:[%s193 + $0x19c] sm:$0xf]
      %v306 = vld [vmem:[%s193 + $0x1a0] sm:$0xf]
      %v307 = vld [vmem:[%s193 + $0x1a4] sm:$0xf]
      %v308 = vld [vmem:[%s193 + $0x1a8] sm:$0xf]
      %v309 = vld [vmem:[%s193 + $0x1ac] sm:$0xf]
      %v310 = vld [vmem:[%s193 + $0x1b0] sm:$0xf]
      %v311 = vld [vmem:[%s193 + $0x1b4] sm:$0xf]
      %v312 = vld [vmem:[%s193 + $0x1b8] sm:$0xf]
      %v313 = vld [vmem:[%s193 + $0x1bc] sm:$0xf]
      %v314 = vld [vmem:[%s193 + $0x1c0] sm:$0xf]
      %v315 = vld [vmem:[%s193 + $0x1c4] sm:$0xf]
      %v316 = vld [vmem:[%s193 + $0x1c8] sm:$0xf]
      %v317 = vld [vmem:[%s193 + $0x1cc] sm:$0xf]
      %v318 = vld [vmem:[%s193 + $0x1d0] sm:$0xf]
      %v319 = vld [vmem:[%s193 + $0x1d4] sm:$0xf]
      %v320 = vld [vmem:[%s193 + $0x1d8] sm:$0xf]
      %v321 = vld [vmem:[%s193 + $0x1dc] sm:$0xf]
      %v322 = vld [vmem:[%s193 + $0x1e0] sm:$0xf]
      %v323 = vld [vmem:[%s193 + $0x1e4] sm:$0xf]
      %v324 = vld [vmem:[%s193 + $0x1e8] sm:$0xf]
      %v325 = vld [vmem:[%s193 + $0x1ec] sm:$0xf]
      %v326 = vld [vmem:[%s193 + $0x1f0] sm:$0xf]
      %v327 = vld [vmem:[%s193 + $0x1f4] sm:$0xf]
      %v328 = vld [vmem:[%s193 + $0x1f8] sm:$0xf]
      %v329 = vld [vmem:[%s193 + $0x1fc] sm:$0xf]
      %v330 = vld [vmem:[%s193 + $0x200] sm:$0xf]
      %v331 = vld [vmem:[%s193 + $0x204] sm:$0xf]
      %v332 = vld [vmem:[%s193 + $0x208] sm:$0xf]
      %v333 = vld [vmem:[%s193 + $0x20c] sm:$0xf]
      %v334 = vld [vmem:[%s193 + $0x210] sm:$0xf]
      %v335 = vld [vmem:[%s193 + $0x214] sm:$0xf]
      %v336 = vld [vmem:[%s193 + $0x218] sm:$0xf]
      %v337 = vld [vmem:[%s193 + $0x21c] sm:$0xf]
      %v338 = vld [vmem:[%s193 + $0x220] sm:$0xf]
      %v339 = vld [vmem:[%s193 + $0x224] sm:$0xf]
      %v340 = vld [vmem:[%s193 + $0x228] sm:$0xf]
      %v341 = vld [vmem:[%s193 + $0x22c] sm:$0xf]
      %v342 = vld [vmem:[%s193 + $0x230] sm:$0xf]
      %v343 = vld [vmem:[%s193 + $0x234] sm:$0xf]
      %v344 = vld [vmem:[%s193 + $0x238] sm:$0xf]
      %v345 = vld [vmem:[%s193 + $0x23c] sm:$0xf]
      %v346 = vld [vmem:[%s193 + $0x240] sm:$0xf]
      %v347 = vld [vmem:[%s193 + $0x244] sm:$0xf]
      %v348 = vld [vmem:[%s193 + $0x248] sm:$0xf]
      %v349 = vld [vmem:[%s193 + $0x24c] sm:$0xf]
      %v350 = vld [vmem:[%s193 + $0x250] sm:$0xf]
      %v351 = vld [vmem:[%s193 + $0x254] sm:$0xf]
      %v352 = vld [vmem:[%s193 + $0x258] sm:$0xf]
      %v353 = vld [vmem:[%s193 + $0x25c] sm:$0xf]
      %v354 = vld [vmem:[%s193 + $0x260] sm:$0xf]
      %v355 = vld [vmem:[%s193 + $0x264] sm:$0xf]
      %v356 = vld [vmem:[%s193 + $0x268] sm:$0xf]
      %v357 = vld [vmem:[%s193 + $0x26c] sm:$0xf]
      %v358 = vld [vmem:[%s193 + $0x270] sm:$0xf]
      %v359 = vld [vmem:[%s193 + $0x274] sm:$0xf]
      %v360 = vld [vmem:[%s193 + $0x278] sm:$0xf]
      %v361 = vld [vmem:[%s193 + $0x27c] sm:$0xf]
      %v362 = vld [vmem:[%s193 + $0x280] sm:$0xf]
      %v363 = vld [vmem:[%s193 + $0x284] sm:$0xf]
      %v364 = vld [vmem:[%s193 + $0x288] sm:$0xf]
      %v365 = vld [vmem:[%s193 + $0x28c] sm:$0xf]
      %v366 = vld [vmem:[%s193 + $0x290] sm:$0xf]
      %v367 = vld [vmem:[%s193 + $0x294] sm:$0xf]
      %v368 = vld [vmem:[%s193 + $0x298] sm:$0xf]
      %v369 = vld [vmem:[%s193 + $0x29c] sm:$0xf]
      %v370 = vld [vmem:[%s193 + $0x2a0] sm:$0xf]
      %v371 = vld [vmem:[%s193 + $0x2a4] sm:$0xf]
      %v372 = vld [vmem:[%s193 + $0x2a8] sm:$0xf]
      %v373 = vld [vmem:[%s193 + $0x2ac] sm:$0xf]
      %v374 = vld [vmem:[%s193 + $0x2b0] sm:$0xf]
      %v375 = vld [vmem:[%s193 + $0x2b4] sm:$0xf]
      %v376 = vld [vmem:[%s193 + $0x2b8] sm:$0xf]
      %v377 = vld [vmem:[%s193 + $0x2bc] sm:$0xf]
      %v378 = vld [vmem:[%s193 + $0x2c0] sm:$0xf]
      %v379 = vld [vmem:[%s193 + $0x2c4] sm:$0xf]
      %v380 = vld [vmem:[%s193 + $0x2c8] sm:$0xf]
      %v381 = vld [vmem:[%s193 + $0x2cc] sm:$0xf]
      %v382 = vld [vmem:[%s193 + $0x2d0] sm:$0xf]
      %v383 = vld [vmem:[%s193 + $0x2d4] sm:$0xf]
      %v384 = vld [vmem:[%s193 + $0x2d8] sm:$0xf]
      %v385 = vld [vmem:[%s193 + $0x2dc] sm:$0xf]
      %v386 = vld [vmem:[%s193 + $0x2e0] sm:$0xf]
      %v387 = vld [vmem:[%s193 + $0x2e4] sm:$0xf]
      %v388 = vld [vmem:[%s193 + $0x2e8] sm:$0xf]
      %v389 = vld [vmem:[%s193 + $0x2ec] sm:$0xf]
      %v390 = vld [vmem:[%s193 + $0x2f0] sm:$0xf]
      %v391 = vld [vmem:[%s193 + $0x2f4] sm:$0xf]
      %v392 = vld [vmem:[%s193 + $0x2f8] sm:$0xf]
      %v393 = vld [vmem:[%s193 + $0x2fc] sm:$0xf]
      %v394 = vld [vmem:[%s193 + $0x300] sm:$0xf]
      %v395 = vld [vmem:[%s193 + $0x304] sm:$0xf]
      %v396 = vld [vmem:[%s193 + $0x308] sm:$0xf]
      %v397 = vld [vmem:[%s193 + $0x30c] sm:$0xf]
      %v398 = vld [vmem:[%s193 + $0x310] sm:$0xf]
      %v399 = vld [vmem:[%s193 + $0x314] sm:$0xf]
      %v400 = vld [vmem:[%s193 + $0x318] sm:$0xf]
      %v401 = vld [vmem:[%s193 + $0x31c] sm:$0xf]
      %v402 = vld [vmem:[%s193 + $0x320] sm:$0xf]
      %v403 = vld [vmem:[%s193 + $0x324] sm:$0xf]
      %v404 = vld [vmem:[%s193 + $0x328] sm:$0xf]
      %v405 = vld [vmem:[%s193 + $0x32c] sm:$0xf]
      %v406 = vld [vmem:[%s193 + $0x330] sm:$0xf]
      %v407 = vld [vmem:[%s193 + $0x334] sm:$0xf]
      %v408 = vld [vmem:[%s193 + $0x338] sm:$0xf]
      %v409 = vld [vmem:[%s193 + $0x33c] sm:$0xf]
      %v410 = vld [vmem:[%s193 + $0x340] sm:$0xf]
      %v411 = vld [vmem:[%s193 + $0x344] sm:$0xf]
      %v412 = vld [vmem:[%s193 + $0x348] sm:$0xf]
      %v413 = vld [vmem:[%s193 + $0x34c] sm:$0xf]
      %v414 = vld [vmem:[%s193 + $0x350] sm:$0xf]
      %v415 = vld [vmem:[%s193 + $0x354] sm:$0xf]
      %v416 = vld [vmem:[%s193 + $0x358] sm:$0xf]
      %v417 = vld [vmem:[%s193 + $0x35c] sm:$0xf]
      %v418 = vld [vmem:[%s193 + $0x360] sm:$0xf]
      %v419 = vld [vmem:[%s193 + $0x364] sm:$0xf]
      %v420 = vld [vmem:[%s193 + $0x368] sm:$0xf]
      %v421 = vld [vmem:[%s193 + $0x36c] sm:$0xf]
      %v422 = vld [vmem:[%s193 + $0x370] sm:$0xf]
      %v423 = vld [vmem:[%s193 + $0x374] sm:$0xf]
      %v424 = vld [vmem:[%s193 + $0x378] sm:$0xf]
      %v425 = vld [vmem:[%s193 + $0x37c] sm:$0xf]
      %v426 = vld [vmem:[%s193 + $0x380] sm:$0xf]
      %v427 = vld [vmem:[%s193 + $0x384] sm:$0xf]
      %v428 = vld [vmem:[%s193 + $0x388] sm:$0xf]
      %v429 = vld [vmem:[%s193 + $0x38c] sm:$0xf]
      %v430 = vld [vmem:[%s193 + $0x390] sm:$0xf]
      %v431 = vld [vmem:[%s193 + $0x394] sm:$0xf]
      %v432 = vld [vmem:[%s193 + $0x398] sm:$0xf]
      %v433 = vld [vmem:[%s193 + $0x39c] sm:$0xf]
      %v434 = vld [vmem:[%s193 + $0x3a0] sm:$0xf]
      %v435 = vld [vmem:[%s193 + $0x3a4] sm:$0xf]
      %v436 = vld [vmem:[%s193 + $0x3a8] sm:$0xf]
      %v437 = vld [vmem:[%s193 + $0x3ac] sm:$0xf]
      %v438 = vld [vmem:[%s193 + $0x3b0] sm:$0xf]
      %v439 = vld [vmem:[%s193 + $0x3b4] sm:$0xf]
      %v440 = vld [vmem:[%s193 + $0x3b8] sm:$0xf]
      %v441 = vld [vmem:[%s193 + $0x3bc] sm:$0xf]
      %v442 = vld [vmem:[%s193 + $0x3c0] sm:$0xf]
      %v443 = vld [vmem:[%s193 + $0x3c4] sm:$0xf]
      %v444 = vld [vmem:[%s193 + $0x3c8] sm:$0xf]
      %v445 = vld [vmem:[%s193 + $0x3cc] sm:$0xf]
      %v446 = vld [vmem:[%s193 + $0x3d0] sm:$0xf]
      %v447 = vld [vmem:[%s193 + $0x3d4] sm:$0xf]
      %v448 = vld [vmem:[%s193 + $0x3d8] sm:$0xf]
      %v449 = vld [vmem:[%s193 + $0x3dc] sm:$0xf]
      %v450 = vld [vmem:[%s193 + $0x3e0] sm:$0xf]
      %v451 = vld [vmem:[%s193 + $0x3e4] sm:$0xf]
      %v452 = vld [vmem:[%s193 + $0x3e8] sm:$0xf]
      %v453 = vld [vmem:[%s193 + $0x3ec] sm:$0xf]
      %v454 = vld [vmem:[%s193 + $0x3f0] sm:$0xf]
      %v455 = vld [vmem:[%s193 + $0x3f4] sm:$0xf]
      %v456 = vld [vmem:[%s193 + $0x3f8] sm:$0xf]
      %v457 = vld [vmem:[%s193 + $0x3fc] sm:$0xf]
      %v458 = vld [vmem:[%s193 + $0x400] sm:$0xf]
      %v459 = vld [vmem:[%s193 + $0x404] sm:$0xf]
      %v460 = vld [vmem:[%s193 + $0x408] sm:$0xf]
      %v461 = vld [vmem:[%s193 + $0x40c] sm:$0xf]
      %v462 = vld [vmem:[%s193 + $0x410] sm:$0xf]
      %v463 = vld [vmem:[%s193 + $0x414] sm:$0xf]
      %v464 = vld [vmem:[%s193 + $0x418] sm:$0xf]
      %v465 = vld [vmem:[%s193 + $0x41c] sm:$0xf]
      %v466 = vld [vmem:[%s193 + $0x420] sm:$0xf]
      %v467 = vld [vmem:[%s1] sm:$0xf]
      %v468 = vld [vmem:[%s1 + $0x4] sm:$0xf]
      %v469 = vld [vmem:[%s1 + $0x8] sm:$0xf]
      %v470 = vld [vmem:[%s1 + $0xc] sm:$0xf]
      %v471 = vld [vmem:[%s2] sm:$0x1]
      %v473 = vlaneseq
      %v474 = vshrl.u32 %v473, 7
      %v475 = vsub.s32 0, %v474
      %v476 = vrot.slane %v471, %v475
      %v743 = vunpack.c.l.b16 %v202
      %v744 = vunpack.c.l.b16 %v203
      %v745 = vunpack.c.l.b16 %v204
      %v746 = vunpack.c.l.b16 %v205
      %v747 = vunpack.c.l.b16 %v206
      %v748 = vunpack.c.l.b16 %v207
      %v749 = vunpack.c.l.b16 %v208
      %v750 = vunpack.c.l.b16 %v209
      %v751 = vunpack.c.l.b16 %v210
      %v752 = vunpack.c.l.b16 %v211
      %v753 = vunpack.c.l.b16 %v212
      %v754 = vunpack.c.l.b16 %v213
      %v755 = vunpack.c.l.b16 %v214
      %v756 = vunpack.c.l.b16 %v215
      %v757 = vunpack.c.l.b16 %v216
      %v758 = vunpack.c.l.b16 %v217
      %v759 = vunpack.c.l.b16 %v218
      %v760 = vunpack.c.l.b16 %v219
      %v761 = vunpack.c.l.b16 %v220
      %v762 = vunpack.c.l.b16 %v221
      %v763 = vunpack.c.l.b16 %v222
      %v764 = vunpack.c.l.b16 %v223
      %v765 = vunpack.c.l.b16 %v224
      %v766 = vunpack.c.l.b16 %v225
      %v767 = vunpack.c.l.b16 %v226
      %v768 = vunpack.c.l.b16 %v227
      %v769 = vunpack.c.l.b16 %v228
      %v770 = vunpack.c.l.b16 %v229
      %v771 = vunpack.c.l.b16 %v230
      %v772 = vunpack.c.l.b16 %v231
      %v773 = vunpack.c.l.b16 %v232
      %v774 = vunpack.c.l.b16 %v233
      %v775 = vunpack.c.l.b16 %v234
      %v776 = vunpack.c.l.b16 %v235
      %v777 = vunpack.c.l.b16 %v236
      %v778 = vunpack.c.l.b16 %v237
      %v779 = vunpack.c.l.b16 %v238
      %v780 = vunpack.c.l.b16 %v239
      %v781 = vunpack.c.l.b16 %v240
      %v782 = vunpack.c.l.b16 %v241
      %v783 = vunpack.c.l.b16 %v242
      %v784 = vunpack.c.l.b16 %v243
      %v785 = vunpack.c.l.b16 %v244
      %v786 = vunpack.c.l.b16 %v245
      %v787 = vunpack.c.l.b16 %v246
      %v788 = vunpack.c.l.b16 %v247
      %v789 = vunpack.c.l.b16 %v248
      %v790 = vunpack.c.l.b16 %v249
      %v791 = vunpack.c.l.b16 %v250
      %v792 = vunpack.c.l.b16 %v251
      %v793 = vunpack.c.l.b16 %v252
      %v794 = vunpack.c.l.b16 %v253
      %v795 = vunpack.c.l.b16 %v254
      %v796 = vunpack.c.l.b16 %v255
      %v797 = vunpack.c.l.b16 %v256
      %v798 = vunpack.c.l.b16 %v257
      %v799 = vunpack.c.l.b16 %v258
      %v800 = vunpack.c.l.b16 %v259
      %v801 = vunpack.c.l.b16 %v260
      %v802 = vunpack.c.l.b16 %v261
      %v803 = vunpack.c.l.b16 %v262
      %v804 = vunpack.c.l.b16 %v263
      %v805 = vunpack.c.l.b16 %v264
      %v806 = vunpack.c.l.b16 %v265
      %v807 = vunpack.c.l.b16 %v266
      %v808 = vunpack.c.l.b16 %v267
      %v809 = vunpack.c.l.b16 %v268
      %v810 = vunpack.c.l.b16 %v269
      %v811 = vunpack.c.l.b16 %v270
      %v812 = vunpack.c.l.b16 %v271
      %v813 = vunpack.c.l.b16 %v272
      %v814 = vunpack.c.l.b16 %v273
      %v815 = vunpack.c.l.b16 %v274
      %v816 = vunpack.c.l.b16 %v275
      %v817 = vunpack.c.l.b16 %v276
      %v818 = vunpack.c.l.b16 %v277
      %v819 = vunpack.c.l.b16 %v278
      %v820 = vunpack.c.l.b16 %v279
      %v821 = vunpack.c.l.b16 %v280
      %v822 = vunpack.c.l.b16 %v281
      %v823 = vunpack.c.l.b16 %v282
      %v824 = vunpack.c.l.b16 %v283
      %v825 = vunpack.c.l.b16 %v284
      %v826 = vunpack.c.l.b16 %v285
      %v827 = vunpack.c.l.b16 %v286
      %v828 = vunpack.c.l.b16 %v287
      %v829 = vunpack.c.l.b16 %v288
      %v830 = vunpack.c.l.b16 %v289
      %v831 = vunpack.c.l.b16 %v290
      %v832 = vunpack.c.l.b16 %v291
      %v833 = vunpack.c.l.b16 %v292
      %v834 = vunpack.c.l.b16 %v293
      %v835 = vunpack.c.l.b16 %v294
      %v836 = vunpack.c.l.b16 %v295
      %v837 = vunpack.c.l.b16 %v296
      %v838 = vunpack.c.l.b16 %v297
      %v839 = vunpack.c.l.b16 %v298
      %v840 = vunpack.c.l.b16 %v299
      %v841 = vunpack.c.l.b16 %v300
      %v842 = vunpack.c.l.b16 %v301
      %v843 = vunpack.c.l.b16 %v302
      %v844 = vunpack.c.l.b16 %v303
      %v845 = vunpack.c.l.b16 %v304
      %v846 = vunpack.c.l.b16 %v305
      %v847 = vunpack.c.l.b16 %v306
      %v848 = vunpack.c.l.b16 %v307
      %v849 = vunpack.c.l.b16 %v308
      %v850 = vunpack.c.l.b16 %v309
      %v851 = vunpack.c.l.b16 %v310
      %v852 = vunpack.c.l.b16 %v311
      %v853 = vunpack.c.l.b16 %v312
      %v854 = vunpack.c.l.b16 %v313
      %v855 = vunpack.c.l.b16 %v314
      %v856 = vunpack.c.l.b16 %v315
      %v857 = vunpack.c.l.b16 %v316
      %v858 = vunpack.c.l.b16 %v317
      %v859 = vunpack.c.l.b16 %v318
      %v860 = vunpack.c.l.b16 %v319
      %v861 = vunpack.c.l.b16 %v320
      %v862 = vunpack.c.l.b16 %v321
      %v863 = vunpack.c.l.b16 %v322
      %v864 = vunpack.c.l.b16 %v323
      %v865 = vunpack.c.l.b16 %v324
      %v866 = vunpack.c.l.b16 %v325
      %v867 = vunpack.c.l.b16 %v326
      %v868 = vunpack.c.l.b16 %v327
      %v869 = vunpack.c.l.b16 %v328
      %v870 = vunpack.c.l.b16 %v329
      %v871 = vunpack.c.l.b16 %v330
      %v872 = vunpack.c.l.b16 %v331
      %v873 = vunpack.c.l.b16 %v332
      %v874 = vunpack.c.l.b16 %v333
      %v875 = vunpack.c.l.b16 %v334
      %v876 = vunpack.c.l.b16 %v335
      %v877 = vunpack.c.l.b16 %v336
      %v878 = vunpack.c.l.b16 %v337
      %v879 = vunpack.c.l.b16 %v338
      %v880 = vunpack.c.l.b16 %v339
      %v881 = vunpack.c.l.b16 %v340
      %v882 = vunpack.c.l.b16 %v341
      %v883 = vunpack.c.l.b16 %v342
      %v884 = vunpack.c.l.b16 %v343
      %v885 = vunpack.c.l.b16 %v344
      %v886 = vunpack.c.l.b16 %v345
      %v887 = vunpack.c.l.b16 %v346
      %v888 = vunpack.c.l.b16 %v347
      %v889 = vunpack.c.l.b16 %v348
      %v890 = vunpack.c.l.b16 %v349
      %v891 = vunpack.c.l.b16 %v350
      %v892 = vunpack.c.l.b16 %v351
      %v893 = vunpack.c.l.b16 %v352
      %v894 = vunpack.c.l.b16 %v353
      %v895 = vunpack.c.l.b16 %v354
      %v896 = vunpack.c.l.b16 %v355
      %v897 = vunpack.c.l.b16 %v356
      %v898 = vunpack.c.l.b16 %v357
      %v899 = vunpack.c.l.b16 %v358
      %v900 = vunpack.c.l.b16 %v359
      %v901 = vunpack.c.l.b16 %v360
      %v902 = vunpack.c.l.b16 %v361
      %v903 = vunpack.c.l.b16 %v362
      %v904 = vunpack.c.l.b16 %v363
      %v905 = vunpack.c.l.b16 %v364
      %v906 = vunpack.c.l.b16 %v365
      %v907 = vunpack.c.l.b16 %v366
      %v908 = vunpack.c.l.b16 %v367
      %v909 = vunpack.c.l.b16 %v368
      %v910 = vunpack.c.l.b16 %v369
      %v911 = vunpack.c.l.b16 %v370
      %v912 = vunpack.c.l.b16 %v371
      %v913 = vunpack.c.l.b16 %v372
      %v914 = vunpack.c.l.b16 %v373
      %v915 = vunpack.c.l.b16 %v374
      %v916 = vunpack.c.l.b16 %v375
      %v917 = vunpack.c.l.b16 %v376
      %v918 = vunpack.c.l.b16 %v377
      %v919 = vunpack.c.l.b16 %v378
      %v920 = vunpack.c.l.b16 %v379
      %v921 = vunpack.c.l.b16 %v380
      %v922 = vunpack.c.l.b16 %v381
      %v923 = vunpack.c.l.b16 %v382
      %v924 = vunpack.c.l.b16 %v383
      %v925 = vunpack.c.l.b16 %v384
      %v926 = vunpack.c.l.b16 %v385
      %v927 = vunpack.c.l.b16 %v386
      %v928 = vunpack.c.l.b16 %v387
      %v929 = vunpack.c.l.b16 %v388
      %v930 = vunpack.c.l.b16 %v389
      %v931 = vunpack.c.l.b16 %v390
      %v932 = vunpack.c.l.b16 %v391
      %v933 = vunpack.c.l.b16 %v392
      %v934 = vunpack.c.l.b16 %v393
      %v935 = vunpack.c.l.b16 %v394
      %v936 = vunpack.c.l.b16 %v395
      %v937 = vunpack.c.l.b16 %v396
      %v938 = vunpack.c.l.b16 %v397
      %v939 = vunpack.c.l.b16 %v398
      %v940 = vunpack.c.l.b16 %v399
      %v941 = vunpack.c.l.b16 %v400
      %v942 = vunpack.c.l.b16 %v401
      %v943 = vunpack.c.l.b16 %v402
      %v944 = vunpack.c.l.b16 %v403
      %v945 = vunpack.c.l.b16 %v404
      %v946 = vunpack.c.l.b16 %v405
      %v947 = vunpack.c.l.b16 %v406
      %v948 = vunpack.c.l.b16 %v407
      %v949 = vunpack.c.l.b16 %v408
      %v950 = vunpack.c.l.b16 %v409
      %v951 = vunpack.c.l.b16 %v410
      %v952 = vunpack.c.l.b16 %v411
      %v953 = vunpack.c.l.b16 %v412
      %v954 = vunpack.c.l.b16 %v413
      %v955 = vunpack.c.l.b16 %v414
      %v956 = vunpack.c.l.b16 %v415
      %v957 = vunpack.c.l.b16 %v416
      %v958 = vunpack.c.l.b16 %v417
      %v959 = vunpack.c.l.b16 %v418
      %v960 = vunpack.c.l.b16 %v419
      %v961 = vunpack.c.l.b16 %v420
      %v962 = vunpack.c.l.b16 %v421
      %v963 = vunpack.c.l.b16 %v422
      %v964 = vunpack.c.l.b16 %v423
      %v965 = vunpack.c.l.b16 %v424
      %v966 = vunpack.c.l.b16 %v425
      %v967 = vunpack.c.l.b16 %v426
      %v968 = vunpack.c.l.b16 %v427
      %v969 = vunpack.c.l.b16 %v428
      %v970 = vunpack.c.l.b16 %v429
      %v971 = vunpack.c.l.b16 %v430
      %v972 = vunpack.c.l.b16 %v431
      %v973 = vunpack.c.l.b16 %v432
      %v974 = vunpack.c.l.b16 %v433
      %v975 = vunpack.c.l.b16 %v434
      %v976 = vunpack.c.l.b16 %v435
      %v977 = vunpack.c.l.b16 %v436
      %v978 = vunpack.c.l.b16 %v437
      %v979 = vunpack.c.l.b16 %v438
      %v980 = vunpack.c.l.b16 %v439
      %v981 = vunpack.c.l.b16 %v440
      %v982 = vunpack.c.l.b16 %v441
      %v983 = vunpack.c.l.b16 %v442
      %v984 = vunpack.c.l.b16 %v443
      %v985 = vunpack.c.l.b16 %v444
      %v986 = vunpack.c.l.b16 %v445
      %v987 = vunpack.c.l.b16 %v446
      %v988 = vunpack.c.l.b16 %v447
      %v989 = vunpack.c.l.b16 %v448
      %v990 = vunpack.c.l.b16 %v449
      %v991 = vunpack.c.l.b16 %v450
      %v992 = vunpack.c.l.b16 %v451
      %v993 = vunpack.c.l.b16 %v452
      %v994 = vunpack.c.l.b16 %v453
      %v995 = vunpack.c.l.b16 %v454
      %v996 = vunpack.c.l.b16 %v455
      %v997 = vunpack.c.l.b16 %v456
      %v998 = vunpack.c.l.b16 %v457
      %v999 = vunpack.c.l.b16 %v458
      %v1000 = vunpack.c.l.b16 %v459
      %v1001 = vunpack.c.l.b16 %v460
      %v1002 = vunpack.c.l.b16 %v461
      %v1003 = vunpack.c.l.b16 %v462
      %v1004 = vunpack.c.l.b16 %v463
      %v1005 = vunpack.c.l.b16 %v464
      %v1006 = vunpack.c.l.b16 %v465
      %v1007 = vunpack.c.l.b16 %v466
      %v1008 = vpack.c.b16 %v744, %v743
      %v1009 = vpack.c.b16 %v746, %v745
      %v1010 = vpack.c.b16 %v748, %v747
      %v1011 = vpack.c.b16 %v750, %v749
      %v1012 = vpack.c.b16 %v752, %v751
      %v1013 = vpack.c.b16 %v754, %v753
      %v1014 = vpack.c.b16 %v756, %v755
      %v1015 = vpack.c.b16 %v758, %v757
      %v1016 = vpack.c.b16 %v760, %v759
      %v1017 = vpack.c.b16 %v762, %v761
      %v1018 = vpack.c.b16 %v764, %v763
      %v1019 = vpack.c.b16 %v766, %v765
      %v1020 = vpack.c.b16 %v768, %v767
      %v1021 = vpack.c.b16 %v770, %v769
      %v1022 = vpack.c.b16 %v772, %v771
      %v1023 = vpack.c.b16 %v774, %v773
      %v1024 = vpack.c.b16 %v776, %v775
      %v1025 = vpack.c.b16 %v778, %v777
      %v1026 = vpack.c.b16 %v780, %v779
      %v1027 = vpack.c.b16 %v782, %v781
      %v1028 = vpack.c.b16 %v784, %v783
      %v1029 = vpack.c.b16 %v786, %v785
      %v1030 = vpack.c.b16 %v788, %v787
      %v1031 = vpack.c.b16 %v790, %v789
      %v1032 = vpack.c.b16 %v792, %v791
      %v1033 = vpack.c.b16 %v794, %v793
      %v1034 = vpack.c.b16 %v796, %v795
      %v1035 = vpack.c.b16 %v798, %v797
      %v1036 = vpack.c.b16 %v800, %v799
      %v1037 = vpack.c.b16 %v802, %v801
      %v1038 = vpack.c.b16 %v804, %v803
      %v1039 = vpack.c.b16 %v806, %v805
      %v1040 = vpack.c.b16 %v808, %v807
      %v1041 = vpack.c.b16 %v810, %v809
      %v1042 = vpack.c.b16 %v812, %v811
      %v1043 = vpack.c.b16 %v814, %v813
      %v1044 = vpack.c.b16 %v816, %v815
      %v1045 = vpack.c.b16 %v818, %v817
      %v1046 = vpack.c.b16 %v820, %v819
      %v1047 = vpack.c.b16 %v822, %v821
      %v1048 = vpack.c.b16 %v824, %v823
      %v1049 = vpack.c.b16 %v826, %v825
      %v1050 = vpack.c.b16 %v828, %v827
      %v1051 = vpack.c.b16 %v830, %v829
      %v1052 = vpack.c.b16 %v832, %v831
      %v1053 = vpack.c.b16 %v834, %v833
      %v1054 = vpack.c.b16 %v836, %v835
      %v1055 = vpack.c.b16 %v838, %v837
      %v1056 = vpack.c.b16 %v840, %v839
      %v1057 = vpack.c.b16 %v842, %v841
      %v1058 = vpack.c.b16 %v844, %v843
      %v1059 = vpack.c.b16 %v846, %v845
      %v1060 = vpack.c.b16 %v848, %v847
      %v1061 = vpack.c.b16 %v850, %v849
      %v1062 = vpack.c.b16 %v852, %v851
      %v1063 = vpack.c.b16 %v854, %v853
      %v1064 = vpack.c.b16 %v856, %v855
      %v1065 = vpack.c.b16 %v858, %v857
      %v1066 = vpack.c.b16 %v860, %v859
      %v1067 = vpack.c.b16 %v862, %v861
      %v1068 = vpack.c.b16 %v864, %v863
      %v1069 = vpack.c.b16 %v866, %v865
      %v1070 = vpack.c.b16 %v868, %v867
      %v1071 = vpack.c.b16 %v870, %v869
      %v1072 = vpack.c.b16 %v872, %v871
      %v1073 = vpack.c.b16 %v874, %v873
      %v1074 = vpack.c.b16 %v876, %v875
      %v1075 = vpack.c.b16 %v878, %v877
      %v1076 = vpack.c.b16 %v880, %v879
      %v1077 = vpack.c.b16 %v882, %v881
      %v1078 = vpack.c.b16 %v884, %v883
      %v1079 = vpack.c.b16 %v886, %v885
      %v1080 = vpack.c.b16 %v888, %v887
      %v1081 = vpack.c.b16 %v890, %v889
      %v1082 = vpack.c.b16 %v892, %v891
      %v1083 = vpack.c.b16 %v894, %v893
      %v1084 = vpack.c.b16 %v896, %v895
      %v1085 = vpack.c.b16 %v898, %v897
      %v1086 = vpack.c.b16 %v900, %v899
      %v1087 = vpack.c.b16 %v902, %v901
      %v1088 = vpack.c.b16 %v904, %v903
      %v1089 = vpack.c.b16 %v906, %v905
      %v1090 = vpack.c.b16 %v908, %v907
      %v1091 = vpack.c.b16 %v910, %v909
      %v1092 = vpack.c.b16 %v912, %v911
      %v1093 = vpack.c.b16 %v914, %v913
      %v1094 = vpack.c.b16 %v916, %v915
      %v1095 = vpack.c.b16 %v918, %v917
      %v1096 = vpack.c.b16 %v920, %v919
      %v1097 = vpack.c.b16 %v922, %v921
      %v1098 = vpack.c.b16 %v924, %v923
      %v1099 = vpack.c.b16 %v926, %v925
      %v1100 = vpack.c.b16 %v928, %v927
      %v1101 = vpack.c.b16 %v930, %v929
      %v1102 = vpack.c.b16 %v932, %v931
      %v1103 = vpack.c.b16 %v934, %v933
      %v1104 = vpack.c.b16 %v936, %v935
      %v1105 = vpack.c.b16 %v938, %v937
      %v1106 = vpack.c.b16 %v940, %v939
      %v1107 = vpack.c.b16 %v942, %v941
      %v1108 = vpack.c.b16 %v944, %v943
      %v1109 = vpack.c.b16 %v946, %v945
      %v1110 = vpack.c.b16 %v948, %v947
      %v1111 = vpack.c.b16 %v950, %v949
      %v1112 = vpack.c.b16 %v952, %v951
      %v1113 = vpack.c.b16 %v954, %v953
      %v1114 = vpack.c.b16 %v956, %v955
      %v1115 = vpack.c.b16 %v958, %v957
      %v1116 = vpack.c.b16 %v960, %v959
      %v1117 = vpack.c.b16 %v962, %v961
      %v1118 = vpack.c.b16 %v964, %v963
      %v1119 = vpack.c.b16 %v966, %v965
      %v1120 = vpack.c.b16 %v968, %v967
      %v1121 = vpack.c.b16 %v970, %v969
      %v1122 = vpack.c.b16 %v972, %v971
      %v1123 = vpack.c.b16 %v974, %v973
      %v1124 = vpack.c.b16 %v976, %v975
      %v1125 = vpack.c.b16 %v978, %v977
      %v1126 = vpack.c.b16 %v980, %v979
      %v1127 = vpack.c.b16 %v982, %v981
      %v1128 = vpack.c.b16 %v984, %v983
      %v1129 = vpack.c.b16 %v986, %v985
      %v1130 = vpack.c.b16 %v988, %v987
      %v1131 = vpack.c.b16 %v990, %v989
      %v1132 = vpack.c.b16 %v992, %v991
      %v1133 = vpack.c.b16 %v994, %v993
      %v1134 = vpack.c.b16 %v996, %v995
      %v1135 = vpack.c.b16 %v998, %v997
      %v1136 = vpack.c.b16 %v1000, %v999
      %v1137 = vpack.c.b16 %v1002, %v1001
      %v1138 = vpack.c.b16 %v1004, %v1003
      %v1139 = vpack.c.b16 %v1006, %v1005
      %v1140 = vpack.c.b16 %v1007, %v1007
      %v1145 = vunpack.c.l.b16 %v467
      %v1146 = vunpack.c.l.b16 %v468
      %v1147 = vunpack.c.l.b16 %v469
      %v1148 = vunpack.c.l.b16 %v470
      %v1149 = vpack.c.b16 %v1146, %v1145
      %v1150 = vpack.c.b16 %v1148, %v1147
      %vm1153 = vcmask 261120
      %v1155 = vsel %vm1153, %v1008, 0
      %v1158 = vsel %vm1153, %v1009, 0
      %v1161 = vsel %vm1153, %v1010, 0
      %v1164 = vsel %vm1153, %v1011, 0
      %v1167 = vsel %vm1153, %v1012, 0
      %v1170 = vsel %vm1153, %v1013, 0
      %v1173 = vsel %vm1153, %v1014, 0
      %v1176 = vsel %vm1153, %v1015, 0
      %v1179 = vsel %vm1153, %v1016, 0
      %v1182 = vsel %vm1153, %v1017, 0
      %v1185 = vsel %vm1153, %v1018, 0
      %v1188 = vsel %vm1153, %v1019, 0
      %v1191 = vsel %vm1153, %v1020, 0
      %v1194 = vsel %vm1153, %v1021, 0
      %v1197 = vsel %vm1153, %v1022, 0
      %v1200 = vsel %vm1153, %v1023, 0
      %v1203 = vsel %vm1153, %v1024, 0
      %v1206 = vsel %vm1153, %v1025, 0
      %v1209 = vsel %vm1153, %v1026, 0
      %v1212 = vsel %vm1153, %v1027, 0
      %v1215 = vsel %vm1153, %v1028, 0
      %v1218 = vsel %vm1153, %v1029, 0
      %v1221 = vsel %vm1153, %v1030, 0
      %v1224 = vsel %vm1153, %v1031, 0
      %v1227 = vsel %vm1153, %v1032, 0
      %v1230 = vsel %vm1153, %v1033, 0
      %v1233 = vsel %vm1153, %v1034, 0
      %v1236 = vsel %vm1153, %v1035, 0
      %v1239 = vsel %vm1153, %v1036, 0
      %v1242 = vsel %vm1153, %v1037, 0
      %v1245 = vsel %vm1153, %v1038, 0
      %v1248 = vsel %vm1153, %v1039, 0
      %v1251 = vsel %vm1153, %v1040, 0
      %v1254 = vsel %vm1153, %v1041, 0
      %v1257 = vsel %vm1153, %v1042, 0
      %v1260 = vsel %vm1153, %v1043, 0
      %v1263 = vsel %vm1153, %v1044, 0
      %v1266 = vsel %vm1153, %v1045, 0
      %v1269 = vsel %vm1153, %v1046, 0
      %v1272 = vsel %vm1153, %v1047, 0
      %v1275 = vsel %vm1153, %v1048, 0
      %v1278 = vsel %vm1153, %v1049, 0
      %v1281 = vsel %vm1153, %v1050, 0
      %v1284 = vsel %vm1153, %v1051, 0
      %v1287 = vsel %vm1153, %v1052, 0
      %v1290 = vsel %vm1153, %v1053, 0
      %v1293 = vsel %vm1153, %v1054, 0
      %v1296 = vsel %vm1153, %v1055, 0
      %v1299 = vsel %vm1153, %v1056, 0
      %v1302 = vsel %vm1153, %v1057, 0
      %v1305 = vsel %vm1153, %v1058, 0
      %v1308 = vsel %vm1153, %v1059, 0
      %v1311 = vsel %vm1153, %v1060, 0
      %v1314 = vsel %vm1153, %v1061, 0
      %v1317 = vsel %vm1153, %v1062, 0
      %v1320 = vsel %vm1153, %v1063, 0
      %v1323 = vsel %vm1153, %v1064, 0
      %v1326 = vsel %vm1153, %v1065, 0
      %v1329 = vsel %vm1153, %v1066, 0
      %v1332 = vsel %vm1153, %v1067, 0
      %v1335 = vsel %vm1153, %v1068, 0
      %v1338 = vsel %vm1153, %v1069, 0
      %v1341 = vsel %vm1153, %v1070, 0
      %v1344 = vsel %vm1153, %v1071, 0
      %v1347 = vsel %vm1153, %v1072, 0
      %v1350 = vsel %vm1153, %v1073, 0
      %v1353 = vsel %vm1153, %v1074, 0
      %v1356 = vsel %vm1153, %v1075, 0
      %v1359 = vsel %vm1153, %v1076, 0
      %v1362 = vsel %vm1153, %v1077, 0
      %v1365 = vsel %vm1153, %v1078, 0
      %v1368 = vsel %vm1153, %v1079, 0
      %v1371 = vsel %vm1153, %v1080, 0
      %v1374 = vsel %vm1153, %v1081, 0
      %v1377 = vsel %vm1153, %v1082, 0
      %v1380 = vsel %vm1153, %v1083, 0
      %v1383 = vsel %vm1153, %v1084, 0
      %v1386 = vsel %vm1153, %v1085, 0
      %v1389 = vsel %vm1153, %v1086, 0
      %v1392 = vsel %vm1153, %v1087, 0
      %v1395 = vsel %vm1153, %v1088, 0
      %v1398 = vsel %vm1153, %v1089, 0
      %v1401 = vsel %vm1153, %v1090, 0
      %v1404 = vsel %vm1153, %v1091, 0
      %v1407 = vsel %vm1153, %v1092, 0
      %v1410 = vsel %vm1153, %v1093, 0
      %v1413 = vsel %vm1153, %v1094, 0
      %v1416 = vsel %vm1153, %v1095, 0
      %v1419 = vsel %vm1153, %v1096, 0
      %v1422 = vsel %vm1153, %v1097, 0
      %v1425 = vsel %vm1153, %v1098, 0
      %v1428 = vsel %vm1153, %v1099, 0
      %v1431 = vsel %vm1153, %v1100, 0
      %v1434 = vsel %vm1153, %v1101, 0
      %v1437 = vsel %vm1153, %v1102, 0
      %v1440 = vsel %vm1153, %v1103, 0
      %v1443 = vsel %vm1153, %v1104, 0
      %v1446 = vsel %vm1153, %v1105, 0
      %v1449 = vsel %vm1153, %v1106, 0
      %v1452 = vsel %vm1153, %v1107, 0
      %v1455 = vsel %vm1153, %v1108, 0
      %v1458 = vsel %vm1153, %v1109, 0
      %v1461 = vsel %vm1153, %v1110, 0
      %v1464 = vsel %vm1153, %v1111, 0
      %v1467 = vsel %vm1153, %v1112, 0
      %v1470 = vsel %vm1153, %v1113, 0
      %v1473 = vsel %vm1153, %v1114, 0
      %v1476 = vsel %vm1153, %v1115, 0
      %v1479 = vsel %vm1153, %v1116, 0
      %v1482 = vsel %vm1153, %v1117, 0
      %v1485 = vsel %vm1153, %v1118, 0
      %v1488 = vsel %vm1153, %v1119, 0
      %v1491 = vsel %vm1153, %v1120, 0
      %v1494 = vsel %vm1153, %v1121, 0
      %v1497 = vsel %vm1153, %v1122, 0
      %v1500 = vsel %vm1153, %v1123, 0
      %v1503 = vsel %vm1153, %v1124, 0
      %v1506 = vsel %vm1153, %v1125, 0
      %v1509 = vsel %vm1153, %v1126, 0
      %v1512 = vsel %vm1153, %v1127, 0
      %v1515 = vsel %vm1153, %v1128, 0
      %v1518 = vsel %vm1153, %v1129, 0
      %v1521 = vsel %vm1153, %v1130, 0
      %v1524 = vsel %vm1153, %v1131, 0
      %v1527 = vsel %vm1153, %v1132, 0
      %v1530 = vsel %vm1153, %v1133, 0
      %v1533 = vsel %vm1153, %v1134, 0
      %v1536 = vsel %vm1153, %v1135, 0
      %v1539 = vsel %vm1153, %v1136, 0
      %v1542 = vsel %vm1153, %v1137, 0
      %v1545 = vsel %vm1153, %v1138, 0
      %v1548 = vsel %vm1153, %v1139, 0
      %v1551 = vsel %vm1153, %v1140, 0
      %1553 = vmatprep.subr.bf16.mxu0 0
      %1554 = vmatpush1.bf16.msra.mxu0 0
      %1555 = vmatprep.subr.bf16.mxu0 0
      %1556 = vmatpush1.bf16.msra.mxu0 0
      %1557 = vmatprep.subr.bf16.mxu0 0
      %1558 = vmatpush1.bf16.msra.mxu0 0
      %1559 = vmatprep.subr.bf16.mxu0 0
      %1560 = vmatpush1.bf16.msra.mxu0 0
      %1561 = vmatprep.subr.bf16.mxu0 0
      %1562 = vmatpush1.bf16.msra.mxu0 0
      %1563 = vmatprep.subr.bf16.mxu0 0
      %1564 = vmatpush1.bf16.msra.mxu0 0
      %1565 = vmatprep.subr.bf16.mxu0 0
      %1566 = vmatpush1.bf16.msra.mxu0 %v1150
      %1567 = vmatprep.subr.bf16.mxu0 0
      %1568 = vmatpush1.bf16.msra.mxu0 %v1149
      %1569 = vmatprep.subr.bf16.mxu0 0
      %1570 = vmatpush2.bf16.msra.mxu0 0
      %1571 = vmatprep.subr.bf16.mxu0 0
      %1572 = vmatpush2.bf16.msra.mxu0 0
      %1573 = vmatprep.subr.bf16.mxu0 0
      %1574 = vmatpush2.bf16.msra.mxu0 0
      %1575 = vmatprep.subr.bf16.mxu0 0
      %1576 = vmatpush2.bf16.msra.mxu0 0
      %1577 = vmatprep.subr.bf16.mxu0 0
      %1578 = vmatpush2.bf16.msra.mxu0 0
      %1579 = vmatprep.subr.bf16.mxu0 0
      %1580 = vmatpush2.bf16.msra.mxu0 0
      %1581 = vmatprep.subr.bf16.mxu0 0
      %1582 = vmatpush2.bf16.msra.mxu0 0
      %1583 = vmatprep.subr.bf16.mxu0 0
      %1584 = vmatpush2.bf16.msra.mxu0 0
      %1585 = vmatprep.mubr.bf16.mxu0 0
      %1586 = vmatmul.mubr.bf16.gmra.mxu0 %v1155
      %v1587 = vpop.f32.mrf.mxu0
      %v1588 = vadd.f32 %v476, %v1587
      %v1589 = vpop.f32.mrf.mxu0
      %v1590 = vpop.f32.mrf.mxu0
      %v1591 = vadd.f32 %v476, %v1590
      %v1592 = vpop.f32.mrf.mxu0
      %1593 = vmatprep.mubr.bf16.mxu0 0
      %1594 = vmatmul.mubr.bf16.gmra.mxu0 %v1158
      %v1595 = vpop.f32.mrf.mxu0
      %v1596 = vadd.f32 %v476, %v1595
      %v1597 = vpop.f32.mrf.mxu0
      %v1598 = vpop.f32.mrf.mxu0
      %v1599 = vadd.f32 %v476, %v1598
      %v1600 = vpop.f32.mrf.mxu0
      %1601 = vmatprep.mubr.bf16.mxu0 0
      %1602 = vmatmul.mubr.bf16.gmra.mxu0 %v1161
      %v1603 = vpop.f32.mrf.mxu0
      %v1604 = vadd.f32 %v476, %v1603
      %v1605 = vpop.f32.mrf.mxu0
      %v1606 = vpop.f32.mrf.mxu0
      %v1607 = vadd.f32 %v476, %v1606
      %v1608 = vpop.f32.mrf.mxu0
      %1609 = vmatprep.mubr.bf16.mxu0 0
      %1610 = vmatmul.mubr.bf16.gmra.mxu0 %v1164
      %v1611 = vpop.f32.mrf.mxu0
      %v1612 = vadd.f32 %v476, %v1611
      %v1613 = vpop.f32.mrf.mxu0
      %v1614 = vpop.f32.mrf.mxu0
      %v1615 = vadd.f32 %v476, %v1614
      %v1616 = vpop.f32.mrf.mxu0
      %1617 = vmatprep.mubr.bf16.mxu0 0
      %1618 = vmatmul.mubr.bf16.gmra.mxu0 %v1167
      %v1619 = vpop.f32.mrf.mxu0
      %v1620 = vadd.f32 %v476, %v1619
      %v1621 = vpop.f32.mrf.mxu0
      %v1622 = vpop.f32.mrf.mxu0
      %v1623 = vadd.f32 %v476, %v1622
      %v1624 = vpop.f32.mrf.mxu0
      %1625 = vmatprep.mubr.bf16.mxu0 0
      %1626 = vmatmul.mubr.bf16.gmra.mxu0 %v1170
      %v1627 = vpop.f32.mrf.mxu0
      %v1628 = vadd.f32 %v476, %v1627
      %v1629 = vpop.f32.mrf.mxu0
      %v1630 = vpop.f32.mrf.mxu0
      %v1631 = vadd.f32 %v476, %v1630
      %v1632 = vpop.f32.mrf.mxu0
      %1633 = vmatprep.mubr.bf16.mxu0 0
      %1634 = vmatmul.mubr.bf16.gmra.mxu0 %v1173
      %v1635 = vpop.f32.mrf.mxu0
      %v1636 = vadd.f32 %v476, %v1635
      %v1637 = vpop.f32.mrf.mxu0
      %v1638 = vpop.f32.mrf.mxu0
      %v1639 = vadd.f32 %v476, %v1638
      %v1640 = vpop.f32.mrf.mxu0
      %1641 = vmatprep.mubr.bf16.mxu0 0
      %1642 = vmatmul.mubr.bf16.gmra.mxu0 %v1176
      %v1643 = vpop.f32.mrf.mxu0
      %v1644 = vadd.f32 %v476, %v1643
      %v1645 = vpop.f32.mrf.mxu0
      %v1646 = vpop.f32.mrf.mxu0
      %v1647 = vadd.f32 %v476, %v1646
      %v1648 = vpop.f32.mrf.mxu0
      %1649 = vmatprep.mubr.bf16.mxu0 0
      %1650 = vmatmul.mubr.bf16.gmra.mxu0 %v1179
      %v1651 = vpop.f32.mrf.mxu0
      %v1652 = vadd.f32 %v476, %v1651
      %v1653 = vpop.f32.mrf.mxu0
      %v1654 = vpop.f32.mrf.mxu0
      %v1655 = vadd.f32 %v476, %v1654
      %v1656 = vpop.f32.mrf.mxu0
      %1657 = vmatprep.mubr.bf16.mxu0 0
      %1658 = vmatmul.mubr.bf16.gmra.mxu0 %v1182
      %v1659 = vpop.f32.mrf.mxu0
      %v1660 = vadd.f32 %v476, %v1659
      %v1661 = vpop.f32.mrf.mxu0
      %v1662 = vpop.f32.mrf.mxu0
      %v1663 = vadd.f32 %v476, %v1662
      %v1664 = vpop.f32.mrf.mxu0
      %1665 = vmatprep.mubr.bf16.mxu0 0
      %1666 = vmatmul.mubr.bf16.gmra.mxu0 %v1185
      %v1667 = vpop.f32.mrf.mxu0
      %v1668 = vadd.f32 %v476, %v1667
      %v1669 = vpop.f32.mrf.mxu0
      %v1670 = vpop.f32.mrf.mxu0
      %v1671 = vadd.f32 %v476, %v1670
      %v1672 = vpop.f32.mrf.mxu0
      %1673 = vmatprep.mubr.bf16.mxu0 0
      %1674 = vmatmul.mubr.bf16.gmra.mxu0 %v1188
      %v1675 = vpop.f32.mrf.mxu0
      %v1676 = vadd.f32 %v476, %v1675
      %v1677 = vpop.f32.mrf.mxu0
      %v1678 = vpop.f32.mrf.mxu0
      %v1679 = vadd.f32 %v476, %v1678
      %v1680 = vpop.f32.mrf.mxu0
      %1681 = vmatprep.mubr.bf16.mxu0 0
      %1682 = vmatmul.mubr.bf16.gmra.mxu0 %v1191
      %v1683 = vpop.f32.mrf.mxu0
      %v1684 = vadd.f32 %v476, %v1683
      %v1685 = vpop.f32.mrf.mxu0
      %v1686 = vpop.f32.mrf.mxu0
      %v1687 = vadd.f32 %v476, %v1686
      %v1688 = vpop.f32.mrf.mxu0
      %1689 = vmatprep.mubr.bf16.mxu0 0
      %1690 = vmatmul.mubr.bf16.gmra.mxu0 %v1194
      %v1691 = vpop.f32.mrf.mxu0
      %v1692 = vadd.f32 %v476, %v1691
      %v1693 = vpop.f32.mrf.mxu0
      %v1694 = vpop.f32.mrf.mxu0
      %v1695 = vadd.f32 %v476, %v1694
      %v1696 = vpop.f32.mrf.mxu0
      %1697 = vmatprep.mubr.bf16.mxu0 0
      %1698 = vmatmul.mubr.bf16.gmra.mxu0 %v1197
      %v1699 = vpop.f32.mrf.mxu0
      %v1700 = vadd.f32 %v476, %v1699
      %v1701 = vpop.f32.mrf.mxu0
      %v1702 = vpop.f32.mrf.mxu0
      %v1703 = vadd.f32 %v476, %v1702
      %v1704 = vpop.f32.mrf.mxu0
      %1705 = vmatprep.mubr.bf16.mxu0 0
      %1706 = vmatmul.mubr.bf16.gmra.mxu0 %v1200
      %v1707 = vpop.f32.mrf.mxu0
      %v1708 = vadd.f32 %v476, %v1707
      %v1709 = vpop.f32.mrf.mxu0
      %v1710 = vpop.f32.mrf.mxu0
      %v1711 = vadd.f32 %v476, %v1710
      %v1712 = vpop.f32.mrf.mxu0
      %1713 = vmatprep.mubr.bf16.mxu0 0
      %1714 = vmatmul.mubr.bf16.gmra.mxu0 %v1203
      %v1715 = vpop.f32.mrf.mxu0
      %v1716 = vadd.f32 %v476, %v1715
      %v1717 = vpop.f32.mrf.mxu0
      %v1718 = vpop.f32.mrf.mxu0
      %v1719 = vadd.f32 %v476, %v1718
      %v1720 = vpop.f32.mrf.mxu0
      %1721 = vmatprep.mubr.bf16.mxu0 0
      %1722 = vmatmul.mubr.bf16.gmra.mxu0 %v1206
      %v1723 = vpop.f32.mrf.mxu0
      %v1724 = vadd.f32 %v476, %v1723
      %v1725 = vpop.f32.mrf.mxu0
      %v1726 = vpop.f32.mrf.mxu0
      %v1727 = vadd.f32 %v476, %v1726
      %v1728 = vpop.f32.mrf.mxu0
      %1729 = vmatprep.mubr.bf16.mxu0 0
      %1730 = vmatmul.mubr.bf16.gmra.mxu0 %v1209
      %v1731 = vpop.f32.mrf.mxu0
      %v1732 = vadd.f32 %v476, %v1731
      %v1733 = vpop.f32.mrf.mxu0
      %v1734 = vpop.f32.mrf.mxu0
      %v1735 = vadd.f32 %v476, %v1734
      %v1736 = vpop.f32.mrf.mxu0
      %1737 = vmatprep.mubr.bf16.mxu0 0
      %1738 = vmatmul.mubr.bf16.gmra.mxu0 %v1212
      %v1739 = vpop.f32.mrf.mxu0
      %v1740 = vadd.f32 %v476, %v1739
      %v1741 = vpop.f32.mrf.mxu0
      %v1742 = vpop.f32.mrf.mxu0
      %v1743 = vadd.f32 %v476, %v1742
      %v1744 = vpop.f32.mrf.mxu0
      %1745 = vmatprep.mubr.bf16.mxu0 0
      %1746 = vmatmul.mubr.bf16.gmra.mxu0 %v1215
      %v1747 = vpop.f32.mrf.mxu0
      %v1748 = vadd.f32 %v476, %v1747
      %v1749 = vpop.f32.mrf.mxu0
      %v1750 = vpop.f32.mrf.mxu0
      %v1751 = vadd.f32 %v476, %v1750
      %v1752 = vpop.f32.mrf.mxu0
      %1753 = vmatprep.mubr.bf16.mxu0 0
      %1754 = vmatmul.mubr.bf16.gmra.mxu0 %v1218
      %v1755 = vpop.f32.mrf.mxu0
      %v1756 = vadd.f32 %v476, %v1755
      %v1757 = vpop.f32.mrf.mxu0
      %v1758 = vpop.f32.mrf.mxu0
      %v1759 = vadd.f32 %v476, %v1758
      %v1760 = vpop.f32.mrf.mxu0
      %1761 = vmatprep.mubr.bf16.mxu0 0
      %1762 = vmatmul.mubr.bf16.gmra.mxu0 %v1221
      %v1763 = vpop.f32.mrf.mxu0
      %v1764 = vadd.f32 %v476, %v1763
      %v1765 = vpop.f32.mrf.mxu0
      %v1766 = vpop.f32.mrf.mxu0
      %v1767 = vadd.f32 %v476, %v1766
      %v1768 = vpop.f32.mrf.mxu0
      %1769 = vmatprep.mubr.bf16.mxu0 0
      %1770 = vmatmul.mubr.bf16.gmra.mxu0 %v1224
      %v1771 = vpop.f32.mrf.mxu0
      %v1772 = vadd.f32 %v476, %v1771
      %v1773 = vpop.f32.mrf.mxu0
      %v1774 = vpop.f32.mrf.mxu0
      %v1775 = vadd.f32 %v476, %v1774
      %v1776 = vpop.f32.mrf.mxu0
      %1777 = vmatprep.mubr.bf16.mxu0 0
      %1778 = vmatmul.mubr.bf16.gmra.mxu0 %v1227
      %v1779 = vpop.f32.mrf.mxu0
      %v1780 = vadd.f32 %v476, %v1779
      %v1781 = vpop.f32.mrf.mxu0
      %v1782 = vpop.f32.mrf.mxu0
      %v1783 = vadd.f32 %v476, %v1782
      %v1784 = vpop.f32.mrf.mxu0
      %1785 = vmatprep.mubr.bf16.mxu0 0
      %1786 = vmatmul.mubr.bf16.gmra.mxu0 %v1230
      %v1787 = vpop.f32.mrf.mxu0
      %v1788 = vadd.f32 %v476, %v1787
      %v1789 = vpop.f32.mrf.mxu0
      %v1790 = vpop.f32.mrf.mxu0
      %v1791 = vadd.f32 %v476, %v1790
      %v1792 = vpop.f32.mrf.mxu0
      %1793 = vmatprep.mubr.bf16.mxu0 0
      %1794 = vmatmul.mubr.bf16.gmra.mxu0 %v1233
      %v1795 = vpop.f32.mrf.mxu0
      %v1796 = vadd.f32 %v476, %v1795
      %v1797 = vpop.f32.mrf.mxu0
      %v1798 = vpop.f32.mrf.mxu0
      %v1799 = vadd.f32 %v476, %v1798
      %v1800 = vpop.f32.mrf.mxu0
      %1801 = vmatprep.mubr.bf16.mxu0 0
      %1802 = vmatmul.mubr.bf16.gmra.mxu0 %v1236
      %v1803 = vpop.f32.mrf.mxu0
      %v1804 = vadd.f32 %v476, %v1803
      %v1805 = vpop.f32.mrf.mxu0
      %v1806 = vpop.f32.mrf.mxu0
      %v1807 = vadd.f32 %v476, %v1806
      %v1808 = vpop.f32.mrf.mxu0
      %1809 = vmatprep.mubr.bf16.mxu0 0
      %1810 = vmatmul.mubr.bf16.gmra.mxu0 %v1239
      %v1811 = vpop.f32.mrf.mxu0
      %v1812 = vadd.f32 %v476, %v1811
      %v1813 = vpop.f32.mrf.mxu0
      %v1814 = vpop.f32.mrf.mxu0
      %v1815 = vadd.f32 %v476, %v1814
      %v1816 = vpop.f32.mrf.mxu0
      %1817 = vmatprep.mubr.bf16.mxu0 0
      %1818 = vmatmul.mubr.bf16.gmra.mxu0 %v1242
      %v1819 = vpop.f32.mrf.mxu0
      %v1820 = vadd.f32 %v476, %v1819
      %v1821 = vpop.f32.mrf.mxu0
      %v1822 = vpop.f32.mrf.mxu0
      %v1823 = vadd.f32 %v476, %v1822
      %v1824 = vpop.f32.mrf.mxu0
      %1825 = vmatprep.mubr.bf16.mxu0 0
      %1826 = vmatmul.mubr.bf16.gmra.mxu0 %v1245
      %v1827 = vpop.f32.mrf.mxu0
      %v1828 = vadd.f32 %v476, %v1827
      %v1829 = vpop.f32.mrf.mxu0
      %v1830 = vpop.f32.mrf.mxu0
      %v1831 = vadd.f32 %v476, %v1830
      %v1832 = vpop.f32.mrf.mxu0
      %1833 = vmatprep.mubr.bf16.mxu0 0
      %1834 = vmatmul.mubr.bf16.gmra.mxu0 %v1248
      %v1835 = vpop.f32.mrf.mxu0
      %v1836 = vadd.f32 %v476, %v1835
      %v1837 = vpop.f32.mrf.mxu0
      %v1838 = vpop.f32.mrf.mxu0
      %v1839 = vadd.f32 %v476, %v1838
      %v1840 = vpop.f32.mrf.mxu0
      %1841 = vmatprep.mubr.bf16.mxu0 0
      %1842 = vmatmul.mubr.bf16.gmra.mxu0 %v1251
      %v1843 = vpop.f32.mrf.mxu0
      %v1844 = vadd.f32 %v476, %v1843
      %v1845 = vpop.f32.mrf.mxu0
      %v1846 = vpop.f32.mrf.mxu0
      %v1847 = vadd.f32 %v476, %v1846
      %v1848 = vpop.f32.mrf.mxu0
      %1849 = vmatprep.mubr.bf16.mxu0 0
      %1850 = vmatmul.mubr.bf16.gmra.mxu0 %v1254
      %v1851 = vpop.f32.mrf.mxu0
      %v1852 = vadd.f32 %v476, %v1851
      %v1853 = vpop.f32.mrf.mxu0
      %v1854 = vpop.f32.mrf.mxu0
      %v1855 = vadd.f32 %v476, %v1854
      %v1856 = vpop.f32.mrf.mxu0
      %1857 = vmatprep.mubr.bf16.mxu0 0
      %1858 = vmatmul.mubr.bf16.gmra.mxu0 %v1257
      %v1859 = vpop.f32.mrf.mxu0
      %v1860 = vadd.f32 %v476, %v1859
      %v1861 = vpop.f32.mrf.mxu0
      %v1862 = vpop.f32.mrf.mxu0
      %v1863 = vadd.f32 %v476, %v1862
      %v1864 = vpop.f32.mrf.mxu0
      %1865 = vmatprep.mubr.bf16.mxu0 0
      %1866 = vmatmul.mubr.bf16.gmra.mxu0 %v1260
      %v1867 = vpop.f32.mrf.mxu0
      %v1868 = vadd.f32 %v476, %v1867
      %v1869 = vpop.f32.mrf.mxu0
      %v1870 = vpop.f32.mrf.mxu0
      %v1871 = vadd.f32 %v476, %v1870
      %v1872 = vpop.f32.mrf.mxu0
      %1873 = vmatprep.mubr.bf16.mxu0 0
      %1874 = vmatmul.mubr.bf16.gmra.mxu0 %v1263
      %v1875 = vpop.f32.mrf.mxu0
      %v1876 = vadd.f32 %v476, %v1875
      %v1877 = vpop.f32.mrf.mxu0
      %v1878 = vpop.f32.mrf.mxu0
      %v1879 = vadd.f32 %v476, %v1878
      %v1880 = vpop.f32.mrf.mxu0
      %1881 = vmatprep.mubr.bf16.mxu0 0
      %1882 = vmatmul.mubr.bf16.gmra.mxu0 %v1266
      %v1883 = vpop.f32.mrf.mxu0
      %v1884 = vadd.f32 %v476, %v1883
      %v1885 = vpop.f32.mrf.mxu0
      %v1886 = vpop.f32.mrf.mxu0
      %v1887 = vadd.f32 %v476, %v1886
      %v1888 = vpop.f32.mrf.mxu0
      %1889 = vmatprep.mubr.bf16.mxu0 0
      %1890 = vmatmul.mubr.bf16.gmra.mxu0 %v1269
      %v1891 = vpop.f32.mrf.mxu0
      %v1892 = vadd.f32 %v476, %v1891
      %v1893 = vpop.f32.mrf.mxu0
      %v1894 = vpop.f32.mrf.mxu0
      %v1895 = vadd.f32 %v476, %v1894
      %v1896 = vpop.f32.mrf.mxu0
      %1897 = vmatprep.mubr.bf16.mxu0 0
      %1898 = vmatmul.mubr.bf16.gmra.mxu0 %v1272
      %v1899 = vpop.f32.mrf.mxu0
      %v1900 = vadd.f32 %v476, %v1899
      %v1901 = vpop.f32.mrf.mxu0
      %v1902 = vpop.f32.mrf.mxu0
      %v1903 = vadd.f32 %v476, %v1902
      %v1904 = vpop.f32.mrf.mxu0
      %1905 = vmatprep.mubr.bf16.mxu0 0
      %1906 = vmatmul.mubr.bf16.gmra.mxu0 %v1275
      %v1907 = vpop.f32.mrf.mxu0
      %v1908 = vadd.f32 %v476, %v1907
      %v1909 = vpop.f32.mrf.mxu0
      %v1910 = vpop.f32.mrf.mxu0
      %v1911 = vadd.f32 %v476, %v1910
      %v1912 = vpop.f32.mrf.mxu0
      %1913 = vmatprep.mubr.bf16.mxu0 0
      %1914 = vmatmul.mubr.bf16.gmra.mxu0 %v1278
      %v1915 = vpop.f32.mrf.mxu0
      %v1916 = vadd.f32 %v476, %v1915
      %v1917 = vpop.f32.mrf.mxu0
      %v1918 = vpop.f32.mrf.mxu0
      %v1919 = vadd.f32 %v476, %v1918
      %v1920 = vpop.f32.mrf.mxu0
      %1921 = vmatprep.mubr.bf16.mxu0 0
      %1922 = vmatmul.mubr.bf16.gmra.mxu0 %v1281
      %v1923 = vpop.f32.mrf.mxu0
      %v1924 = vadd.f32 %v476, %v1923
      %v1925 = vpop.f32.mrf.mxu0
      %v1926 = vpop.f32.mrf.mxu0
      %v1927 = vadd.f32 %v476, %v1926
      %v1928 = vpop.f32.mrf.mxu0
      %1929 = vmatprep.mubr.bf16.mxu0 0
      %1930 = vmatmul.mubr.bf16.gmra.mxu0 %v1284
      %v1931 = vpop.f32.mrf.mxu0
      %v1932 = vadd.f32 %v476, %v1931
      %v1933 = vpop.f32.mrf.mxu0
      %v1934 = vpop.f32.mrf.mxu0
      %v1935 = vadd.f32 %v476, %v1934
      %v1936 = vpop.f32.mrf.mxu0
      %1937 = vmatprep.mubr.bf16.mxu0 0
      %1938 = vmatmul.mubr.bf16.gmra.mxu0 %v1287
      %v1939 = vpop.f32.mrf.mxu0
      %v1940 = vadd.f32 %v476, %v1939
      %v1941 = vpop.f32.mrf.mxu0
      %v1942 = vpop.f32.mrf.mxu0
      %v1943 = vadd.f32 %v476, %v1942
      %v1944 = vpop.f32.mrf.mxu0
      %1945 = vmatprep.mubr.bf16.mxu0 0
      %1946 = vmatmul.mubr.bf16.gmra.mxu0 %v1290
      %v1947 = vpop.f32.mrf.mxu0
      %v1948 = vadd.f32 %v476, %v1947
      %v1949 = vpop.f32.mrf.mxu0
      %v1950 = vpop.f32.mrf.mxu0
      %v1951 = vadd.f32 %v476, %v1950
      %v1952 = vpop.f32.mrf.mxu0
      %1953 = vmatprep.mubr.bf16.mxu0 0
      %1954 = vmatmul.mubr.bf16.gmra.mxu0 %v1293
      %v1955 = vpop.f32.mrf.mxu0
      %v1956 = vadd.f32 %v476, %v1955
      %v1957 = vpop.f32.mrf.mxu0
      %v1958 = vpop.f32.mrf.mxu0
      %v1959 = vadd.f32 %v476, %v1958
      %v1960 = vpop.f32.mrf.mxu0
      %1961 = vmatprep.mubr.bf16.mxu0 0
      %1962 = vmatmul.mubr.bf16.gmra.mxu0 %v1296
      %v1963 = vpop.f32.mrf.mxu0
      %v1964 = vadd.f32 %v476, %v1963
      %v1965 = vpop.f32.mrf.mxu0
      %v1966 = vpop.f32.mrf.mxu0
      %v1967 = vadd.f32 %v476, %v1966
      %v1968 = vpop.f32.mrf.mxu0
      %1969 = vmatprep.mubr.bf16.mxu0 0
      %1970 = vmatmul.mubr.bf16.gmra.mxu0 %v1299
      %v1971 = vpop.f32.mrf.mxu0
      %v1972 = vadd.f32 %v476, %v1971
      %v1973 = vpop.f32.mrf.mxu0
      %v1974 = vpop.f32.mrf.mxu0
      %v1975 = vadd.f32 %v476, %v1974
      %v1976 = vpop.f32.mrf.mxu0
      %1977 = vmatprep.mubr.bf16.mxu0 0
      %1978 = vmatmul.mubr.bf16.gmra.mxu0 %v1302
      %v1979 = vpop.f32.mrf.mxu0
      %v1980 = vadd.f32 %v476, %v1979
      %v1981 = vpop.f32.mrf.mxu0
      %v1982 = vpop.f32.mrf.mxu0
      %v1983 = vadd.f32 %v476, %v1982
      %v1984 = vpop.f32.mrf.mxu0
      %1985 = vmatprep.mubr.bf16.mxu0 0
      %1986 = vmatmul.mubr.bf16.gmra.mxu0 %v1305
      %v1987 = vpop.f32.mrf.mxu0
      %v1988 = vadd.f32 %v476, %v1987
      %v1989 = vpop.f32.mrf.mxu0
      %v1990 = vpop.f32.mrf.mxu0
      %v1991 = vadd.f32 %v476, %v1990
      %v1992 = vpop.f32.mrf.mxu0
      %1993 = vmatprep.mubr.bf16.mxu0 0
      %1994 = vmatmul.mubr.bf16.gmra.mxu0 %v1308
      %v1995 = vpop.f32.mrf.mxu0
      %v1996 = vadd.f32 %v476, %v1995
      %v1997 = vpop.f32.mrf.mxu0
      %v1998 = vpop.f32.mrf.mxu0
      %v1999 = vadd.f32 %v476, %v1998
      %v2000 = vpop.f32.mrf.mxu0
      %2001 = vmatprep.mubr.bf16.mxu0 0
      %2002 = vmatmul.mubr.bf16.gmra.mxu0 %v1311
      %v2003 = vpop.f32.mrf.mxu0
      %v2004 = vadd.f32 %v476, %v2003
      %v2005 = vpop.f32.mrf.mxu0
      %v2006 = vpop.f32.mrf.mxu0
      %v2007 = vadd.f32 %v476, %v2006
      %v2008 = vpop.f32.mrf.mxu0
      %2009 = vmatprep.mubr.bf16.mxu0 0
      %2010 = vmatmul.mubr.bf16.gmra.mxu0 %v1314
      %v2011 = vpop.f32.mrf.mxu0
      %v2012 = vadd.f32 %v476, %v2011
      %v2013 = vpop.f32.mrf.mxu0
      %v2014 = vpop.f32.mrf.mxu0
      %v2015 = vadd.f32 %v476, %v2014
      %v2016 = vpop.f32.mrf.mxu0
      %2017 = vmatprep.mubr.bf16.mxu0 0
      %2018 = vmatmul.mubr.bf16.gmra.mxu0 %v1317
      %v2019 = vpop.f32.mrf.mxu0
      %v2020 = vadd.f32 %v476, %v2019
      %v2021 = vpop.f32.mrf.mxu0
      %v2022 = vpop.f32.mrf.mxu0
      %v2023 = vadd.f32 %v476, %v2022
      %v2024 = vpop.f32.mrf.mxu0
      %2025 = vmatprep.mubr.bf16.mxu0 0
      %2026 = vmatmul.mubr.bf16.gmra.mxu0 %v1320
      %v2027 = vpop.f32.mrf.mxu0
      %v2028 = vadd.f32 %v476, %v2027
      %v2029 = vpop.f32.mrf.mxu0
      %v2030 = vpop.f32.mrf.mxu0
      %v2031 = vadd.f32 %v476, %v2030
      %v2032 = vpop.f32.mrf.mxu0
      %2033 = vmatprep.mubr.bf16.mxu0 0
      %2034 = vmatmul.mubr.bf16.gmra.mxu0 %v1323
      %v2035 = vpop.f32.mrf.mxu0
      %v2036 = vadd.f32 %v476, %v2035
      %v2037 = vpop.f32.mrf.mxu0
      %v2038 = vpop.f32.mrf.mxu0
      %v2039 = vadd.f32 %v476, %v2038
      %v2040 = vpop.f32.mrf.mxu0
      %2041 = vmatprep.mubr.bf16.mxu0 0
      %2042 = vmatmul.mubr.bf16.gmra.mxu0 %v1326
      %v2043 = vpop.f32.mrf.mxu0
      %v2044 = vadd.f32 %v476, %v2043
      %v2045 = vpop.f32.mrf.mxu0
      %v2046 = vpop.f32.mrf.mxu0
      %v2047 = vadd.f32 %v476, %v2046
      %v2048 = vpop.f32.mrf.mxu0
      %2049 = vmatprep.mubr.bf16.mxu0 0
      %2050 = vmatmul.mubr.bf16.gmra.mxu0 %v1329
      %v2051 = vpop.f32.mrf.mxu0
      %v2052 = vadd.f32 %v476, %v2051
      %v2053 = vpop.f32.mrf.mxu0
      %v2054 = vpop.f32.mrf.mxu0
      %v2055 = vadd.f32 %v476, %v2054
      %v2056 = vpop.f32.mrf.mxu0
      %2057 = vmatprep.mubr.bf16.mxu0 0
      %2058 = vmatmul.mubr.bf16.gmra.mxu0 %v1332
      %v2059 = vpop.f32.mrf.mxu0
      %v2060 = vadd.f32 %v476, %v2059
      %v2061 = vpop.f32.mrf.mxu0
      %v2062 = vpop.f32.mrf.mxu0
      %v2063 = vadd.f32 %v476, %v2062
      %v2064 = vpop.f32.mrf.mxu0
      %2065 = vmatprep.mubr.bf16.mxu0 0
      %2066 = vmatmul.mubr.bf16.gmra.mxu0 %v1335
      %v2067 = vpop.f32.mrf.mxu0
      %v2068 = vadd.f32 %v476, %v2067
      %v2069 = vpop.f32.mrf.mxu0
      %v2070 = vpop.f32.mrf.mxu0
      %v2071 = vadd.f32 %v476, %v2070
      %v2072 = vpop.f32.mrf.mxu0
      %2073 = vmatprep.mubr.bf16.mxu0 0
      %2074 = vmatmul.mubr.bf16.gmra.mxu0 %v1338
      %v2075 = vpop.f32.mrf.mxu0
      %v2076 = vadd.f32 %v476, %v2075
      %v2077 = vpop.f32.mrf.mxu0
      %v2078 = vpop.f32.mrf.mxu0
      %v2079 = vadd.f32 %v476, %v2078
      %v2080 = vpop.f32.mrf.mxu0
      %2081 = vmatprep.mubr.bf16.mxu0 0
      %2082 = vmatmul.mubr.bf16.gmra.mxu0 %v1341
      %v2083 = vpop.f32.mrf.mxu0
      %v2084 = vadd.f32 %v476, %v2083
      %v2085 = vpop.f32.mrf.mxu0
      %v2086 = vpop.f32.mrf.mxu0
      %v2087 = vadd.f32 %v476, %v2086
      %v2088 = vpop.f32.mrf.mxu0
      %2089 = vmatprep.mubr.bf16.mxu0 0
      %2090 = vmatmul.mubr.bf16.gmra.mxu0 %v1344
      %v2091 = vpop.f32.mrf.mxu0
      %v2092 = vadd.f32 %v476, %v2091
      %v2093 = vpop.f32.mrf.mxu0
      %v2094 = vpop.f32.mrf.mxu0
      %v2095 = vadd.f32 %v476, %v2094
      %v2096 = vpop.f32.mrf.mxu0
      %2097 = vmatprep.mubr.bf16.mxu0 0
      %2098 = vmatmul.mubr.bf16.gmra.mxu0 %v1347
      %v2099 = vpop.f32.mrf.mxu0
      %v2100 = vadd.f32 %v476, %v2099
      %v2101 = vpop.f32.mrf.mxu0
      %v2102 = vpop.f32.mrf.mxu0
      %v2103 = vadd.f32 %v476, %v2102
      %v2104 = vpop.f32.mrf.mxu0
      %2105 = vmatprep.mubr.bf16.mxu0 0
      %2106 = vmatmul.mubr.bf16.gmra.mxu0 %v1350
      %v2107 = vpop.f32.mrf.mxu0
      %v2108 = vadd.f32 %v476, %v2107
      %v2109 = vpop.f32.mrf.mxu0
      %v2110 = vpop.f32.mrf.mxu0
      %v2111 = vadd.f32 %v476, %v2110
      %v2112 = vpop.f32.mrf.mxu0
      %2113 = vmatprep.mubr.bf16.mxu0 0
      %2114 = vmatmul.mubr.bf16.gmra.mxu0 %v1353
      %v2115 = vpop.f32.mrf.mxu0
      %v2116 = vadd.f32 %v476, %v2115
      %v2117 = vpop.f32.mrf.mxu0
      %v2118 = vpop.f32.mrf.mxu0
      %v2119 = vadd.f32 %v476, %v2118
      %v2120 = vpop.f32.mrf.mxu0
      %2121 = vmatprep.mubr.bf16.mxu0 0
      %2122 = vmatmul.mubr.bf16.gmra.mxu0 %v1356
      %v2123 = vpop.f32.mrf.mxu0
      %v2124 = vadd.f32 %v476, %v2123
      %v2125 = vpop.f32.mrf.mxu0
      %v2126 = vpop.f32.mrf.mxu0
      %v2127 = vadd.f32 %v476, %v2126
      %v2128 = vpop.f32.mrf.mxu0
      %2129 = vmatprep.mubr.bf16.mxu0 0
      %2130 = vmatmul.mubr.bf16.gmra.mxu0 %v1359
      %v2131 = vpop.f32.mrf.mxu0
      %v2132 = vadd.f32 %v476, %v2131
      %v2133 = vpop.f32.mrf.mxu0
      %v2134 = vpop.f32.mrf.mxu0
      %v2135 = vadd.f32 %v476, %v2134
      %v2136 = vpop.f32.mrf.mxu0
      %2137 = vmatprep.mubr.bf16.mxu0 0
      %2138 = vmatmul.mubr.bf16.gmra.mxu0 %v1362
      %v2139 = vpop.f32.mrf.mxu0
      %v2140 = vadd.f32 %v476, %v2139
      %v2141 = vpop.f32.mrf.mxu0
      %v2142 = vpop.f32.mrf.mxu0
      %v2143 = vadd.f32 %v476, %v2142
      %v2144 = vpop.f32.mrf.mxu0
      %2145 = vmatprep.mubr.bf16.mxu0 0
      %2146 = vmatmul.mubr.bf16.gmra.mxu0 %v1365
      %v2147 = vpop.f32.mrf.mxu0
      %v2148 = vadd.f32 %v476, %v2147
      %v2149 = vpop.f32.mrf.mxu0
      %v2150 = vpop.f32.mrf.mxu0
      %v2151 = vadd.f32 %v476, %v2150
      %v2152 = vpop.f32.mrf.mxu0
      %2153 = vmatprep.mubr.bf16.mxu0 0
      %2154 = vmatmul.mubr.bf16.gmra.mxu0 %v1368
      %v2155 = vpop.f32.mrf.mxu0
      %v2156 = vadd.f32 %v476, %v2155
      %v2157 = vpop.f32.mrf.mxu0
      %v2158 = vpop.f32.mrf.mxu0
      %v2159 = vadd.f32 %v476, %v2158
      %v2160 = vpop.f32.mrf.mxu0
      %2161 = vmatprep.mubr.bf16.mxu0 0
      %2162 = vmatmul.mubr.bf16.gmra.mxu0 %v1371
      %v2163 = vpop.f32.mrf.mxu0
      %v2164 = vadd.f32 %v476, %v2163
      %v2165 = vpop.f32.mrf.mxu0
      %v2166 = vpop.f32.mrf.mxu0
      %v2167 = vadd.f32 %v476, %v2166
      %v2168 = vpop.f32.mrf.mxu0
      %2169 = vmatprep.mubr.bf16.mxu0 0
      %2170 = vmatmul.mubr.bf16.gmra.mxu0 %v1374
      %v2171 = vpop.f32.mrf.mxu0
      %v2172 = vadd.f32 %v476, %v2171
      %v2173 = vpop.f32.mrf.mxu0
      %v2174 = vpop.f32.mrf.mxu0
      %v2175 = vadd.f32 %v476, %v2174
      %v2176 = vpop.f32.mrf.mxu0
      %2177 = vmatprep.mubr.bf16.mxu0 0
      %2178 = vmatmul.mubr.bf16.gmra.mxu0 %v1377
      %v2179 = vpop.f32.mrf.mxu0
      %v2180 = vadd.f32 %v476, %v2179
      %v2181 = vpop.f32.mrf.mxu0
      %v2182 = vpop.f32.mrf.mxu0
      %v2183 = vadd.f32 %v476, %v2182
      %v2184 = vpop.f32.mrf.mxu0
      %2185 = vmatprep.mubr.bf16.mxu0 0
      %2186 = vmatmul.mubr.bf16.gmra.mxu0 %v1380
      %v2187 = vpop.f32.mrf.mxu0
      %v2188 = vadd.f32 %v476, %v2187
      %v2189 = vpop.f32.mrf.mxu0
      %v2190 = vpop.f32.mrf.mxu0
      %v2191 = vadd.f32 %v476, %v2190
      %v2192 = vpop.f32.mrf.mxu0
      %2193 = vmatprep.mubr.bf16.mxu0 0
      %2194 = vmatmul.mubr.bf16.gmra.mxu0 %v1383
      %v2195 = vpop.f32.mrf.mxu0
      %v2196 = vadd.f32 %v476, %v2195
      %v2197 = vpop.f32.mrf.mxu0
      %v2198 = vpop.f32.mrf.mxu0
      %v2199 = vadd.f32 %v476, %v2198
      %v2200 = vpop.f32.mrf.mxu0
      %2201 = vmatprep.mubr.bf16.mxu0 0
      %2202 = vmatmul.mubr.bf16.gmra.mxu0 %v1386
      %v2203 = vpop.f32.mrf.mxu0
      %v2204 = vadd.f32 %v476, %v2203
      %v2205 = vpop.f32.mrf.mxu0
      %v2206 = vpop.f32.mrf.mxu0
      %v2207 = vadd.f32 %v476, %v2206
      %v2208 = vpop.f32.mrf.mxu0
      %2209 = vmatprep.mubr.bf16.mxu0 0
      %2210 = vmatmul.mubr.bf16.gmra.mxu0 %v1389
      %v2211 = vpop.f32.mrf.mxu0
      %v2212 = vadd.f32 %v476, %v2211
      %v2213 = vpop.f32.mrf.mxu0
      %v2214 = vpop.f32.mrf.mxu0
      %v2215 = vadd.f32 %v476, %v2214
      %v2216 = vpop.f32.mrf.mxu0
      %2217 = vmatprep.mubr.bf16.mxu0 0
      %2218 = vmatmul.mubr.bf16.gmra.mxu0 %v1392
      %v2219 = vpop.f32.mrf.mxu0
      %v2220 = vadd.f32 %v476, %v2219
      %v2221 = vpop.f32.mrf.mxu0
      %v2222 = vpop.f32.mrf.mxu0
      %v2223 = vadd.f32 %v476, %v2222
      %v2224 = vpop.f32.mrf.mxu0
      %2225 = vmatprep.mubr.bf16.mxu0 0
      %2226 = vmatmul.mubr.bf16.gmra.mxu0 %v1395
      %v2227 = vpop.f32.mrf.mxu0
      %v2228 = vadd.f32 %v476, %v2227
      %v2229 = vpop.f32.mrf.mxu0
      %v2230 = vpop.f32.mrf.mxu0
      %v2231 = vadd.f32 %v476, %v2230
      %v2232 = vpop.f32.mrf.mxu0
      %2233 = vmatprep.mubr.bf16.mxu0 0
      %2234 = vmatmul.mubr.bf16.gmra.mxu0 %v1398
      %v2235 = vpop.f32.mrf.mxu0
      %v2236 = vadd.f32 %v476, %v2235
      %v2237 = vpop.f32.mrf.mxu0
      %v2238 = vpop.f32.mrf.mxu0
      %v2239 = vadd.f32 %v476, %v2238
      %v2240 = vpop.f32.mrf.mxu0
      %2241 = vmatprep.mubr.bf16.mxu0 0
      %2242 = vmatmul.mubr.bf16.gmra.mxu0 %v1401
      %v2243 = vpop.f32.mrf.mxu0
      %v2244 = vadd.f32 %v476, %v2243
      %v2245 = vpop.f32.mrf.mxu0
      %v2246 = vpop.f32.mrf.mxu0
      %v2247 = vadd.f32 %v476, %v2246
      %v2248 = vpop.f32.mrf.mxu0
      %2249 = vmatprep.mubr.bf16.mxu0 0
      %2250 = vmatmul.mubr.bf16.gmra.mxu0 %v1404
      %v2251 = vpop.f32.mrf.mxu0
      %v2252 = vadd.f32 %v476, %v2251
      %v2253 = vpop.f32.mrf.mxu0
      %v2254 = vpop.f32.mrf.mxu0
      %v2255 = vadd.f32 %v476, %v2254
      %v2256 = vpop.f32.mrf.mxu0
      %2257 = vmatprep.mubr.bf16.mxu0 0
      %2258 = vmatmul.mubr.bf16.gmra.mxu0 %v1407
      %v2259 = vpop.f32.mrf.mxu0
      %v2260 = vadd.f32 %v476, %v2259
      %v2261 = vpop.f32.mrf.mxu0
      %v2262 = vpop.f32.mrf.mxu0
      %v2263 = vadd.f32 %v476, %v2262
      %v2264 = vpop.f32.mrf.mxu0
      %2265 = vmatprep.mubr.bf16.mxu0 0
      %2266 = vmatmul.mubr.bf16.gmra.mxu0 %v1410
      %v2267 = vpop.f32.mrf.mxu0
      %v2268 = vadd.f32 %v476, %v2267
      %v2269 = vpop.f32.mrf.mxu0
      %v2270 = vpop.f32.mrf.mxu0
      %v2271 = vadd.f32 %v476, %v2270
      %v2272 = vpop.f32.mrf.mxu0
      %2273 = vmatprep.mubr.bf16.mxu0 0
      %2274 = vmatmul.mubr.bf16.gmra.mxu0 %v1413
      %v2275 = vpop.f32.mrf.mxu0
      %v2276 = vadd.f32 %v476, %v2275
      %v2277 = vpop.f32.mrf.mxu0
      %v2278 = vpop.f32.mrf.mxu0
      %v2279 = vadd.f32 %v476, %v2278
      %v2280 = vpop.f32.mrf.mxu0
      %2281 = vmatprep.mubr.bf16.mxu0 0
      %2282 = vmatmul.mubr.bf16.gmra.mxu0 %v1416
      %v2283 = vpop.f32.mrf.mxu0
      %v2284 = vadd.f32 %v476, %v2283
      %v2285 = vpop.f32.mrf.mxu0
      %v2286 = vpop.f32.mrf.mxu0
      %v2287 = vadd.f32 %v476, %v2286
      %v2288 = vpop.f32.mrf.mxu0
      %2289 = vmatprep.mubr.bf16.mxu0 0
      %2290 = vmatmul.mubr.bf16.gmra.mxu0 %v1419
      %v2291 = vpop.f32.mrf.mxu0
      %v2292 = vadd.f32 %v476, %v2291
      %v2293 = vpop.f32.mrf.mxu0
      %v2294 = vpop.f32.mrf.mxu0
      %v2295 = vadd.f32 %v476, %v2294
      %v2296 = vpop.f32.mrf.mxu0
      %2297 = vmatprep.mubr.bf16.mxu0 0
      %2298 = vmatmul.mubr.bf16.gmra.mxu0 %v1422
      %v2299 = vpop.f32.mrf.mxu0
      %v2300 = vadd.f32 %v476, %v2299
      %v2301 = vpop.f32.mrf.mxu0
      %v2302 = vpop.f32.mrf.mxu0
      %v2303 = vadd.f32 %v476, %v2302
      %v2304 = vpop.f32.mrf.mxu0
      %2305 = vmatprep.mubr.bf16.mxu0 0
      %2306 = vmatmul.mubr.bf16.gmra.mxu0 %v1425
      %v2307 = vpop.f32.mrf.mxu0
      %v2308 = vadd.f32 %v476, %v2307
      %v2309 = vpop.f32.mrf.mxu0
      %v2310 = vpop.f32.mrf.mxu0
      %v2311 = vadd.f32 %v476, %v2310
      %v2312 = vpop.f32.mrf.mxu0
      %2313 = vmatprep.mubr.bf16.mxu0 0
      %2314 = vmatmul.mubr.bf16.gmra.mxu0 %v1428
      %v2315 = vpop.f32.mrf.mxu0
      %v2316 = vadd.f32 %v476, %v2315
      %v2317 = vpop.f32.mrf.mxu0
      %v2318 = vpop.f32.mrf.mxu0
      %v2319 = vadd.f32 %v476, %v2318
      %v2320 = vpop.f32.mrf.mxu0
      %2321 = vmatprep.mubr.bf16.mxu0 0
      %2322 = vmatmul.mubr.bf16.gmra.mxu0 %v1431
      %v2323 = vpop.f32.mrf.mxu0
      %v2324 = vadd.f32 %v476, %v2323
      %v2325 = vpop.f32.mrf.mxu0
      %v2326 = vpop.f32.mrf.mxu0
      %v2327 = vadd.f32 %v476, %v2326
      %v2328 = vpop.f32.mrf.mxu0
      %2329 = vmatprep.mubr.bf16.mxu0 0
      %2330 = vmatmul.mubr.bf16.gmra.mxu0 %v1434
      %v2331 = vpop.f32.mrf.mxu0
      %v2332 = vadd.f32 %v476, %v2331
      %v2333 = vpop.f32.mrf.mxu0
      %v2334 = vpop.f32.mrf.mxu0
      %v2335 = vadd.f32 %v476, %v2334
      %v2336 = vpop.f32.mrf.mxu0
      %2337 = vmatprep.mubr.bf16.mxu0 0
      %2338 = vmatmul.mubr.bf16.gmra.mxu0 %v1437
      %v2339 = vpop.f32.mrf.mxu0
      %v2340 = vadd.f32 %v476, %v2339
      %v2341 = vpop.f32.mrf.mxu0
      %v2342 = vpop.f32.mrf.mxu0
      %v2343 = vadd.f32 %v476, %v2342
      %v2344 = vpop.f32.mrf.mxu0
      %2345 = vmatprep.mubr.bf16.mxu0 0
      %2346 = vmatmul.mubr.bf16.gmra.mxu0 %v1440
      %v2347 = vpop.f32.mrf.mxu0
      %v2348 = vadd.f32 %v476, %v2347
      %v2349 = vpop.f32.mrf.mxu0
      %v2350 = vpop.f32.mrf.mxu0
      %v2351 = vadd.f32 %v476, %v2350
      %v2352 = vpop.f32.mrf.mxu0
      %2353 = vmatprep.mubr.bf16.mxu0 0
      %2354 = vmatmul.mubr.bf16.gmra.mxu0 %v1443
      %v2355 = vpop.f32.mrf.mxu0
      %v2356 = vadd.f32 %v476, %v2355
      %v2357 = vpop.f32.mrf.mxu0
      %v2358 = vpop.f32.mrf.mxu0
      %v2359 = vadd.f32 %v476, %v2358
      %v2360 = vpop.f32.mrf.mxu0
      %2361 = vmatprep.mubr.bf16.mxu0 0
      %2362 = vmatmul.mubr.bf16.gmra.mxu0 %v1446
      %v2363 = vpop.f32.mrf.mxu0
      %v2364 = vadd.f32 %v476, %v2363
      %v2365 = vpop.f32.mrf.mxu0
      %v2366 = vpop.f32.mrf.mxu0
      %v2367 = vadd.f32 %v476, %v2366
      %v2368 = vpop.f32.mrf.mxu0
      %2369 = vmatprep.mubr.bf16.mxu0 0
      %2370 = vmatmul.mubr.bf16.gmra.mxu0 %v1449
      %v2371 = vpop.f32.mrf.mxu0
      %v2372 = vadd.f32 %v476, %v2371
      %v2373 = vpop.f32.mrf.mxu0
      %v2374 = vpop.f32.mrf.mxu0
      %v2375 = vadd.f32 %v476, %v2374
      %v2376 = vpop.f32.mrf.mxu0
      %2377 = vmatprep.mubr.bf16.mxu0 0
      %2378 = vmatmul.mubr.bf16.gmra.mxu0 %v1452
      %v2379 = vpop.f32.mrf.mxu0
      %v2380 = vadd.f32 %v476, %v2379
      %v2381 = vpop.f32.mrf.mxu0
      %v2382 = vpop.f32.mrf.mxu0
      %v2383 = vadd.f32 %v476, %v2382
      %v2384 = vpop.f32.mrf.mxu0
      %2385 = vmatprep.mubr.bf16.mxu0 0
      %2386 = vmatmul.mubr.bf16.gmra.mxu0 %v1455
      %v2387 = vpop.f32.mrf.mxu0
      %v2388 = vadd.f32 %v476, %v2387
      %v2389 = vpop.f32.mrf.mxu0
      %v2390 = vpop.f32.mrf.mxu0
      %v2391 = vadd.f32 %v476, %v2390
      %v2392 = vpop.f32.mrf.mxu0
      %2393 = vmatprep.mubr.bf16.mxu0 0
      %2394 = vmatmul.mubr.bf16.gmra.mxu0 %v1458
      %v2395 = vpop.f32.mrf.mxu0
      %v2396 = vadd.f32 %v476, %v2395
      %v2397 = vpop.f32.mrf.mxu0
      %v2398 = vpop.f32.mrf.mxu0
      %v2399 = vadd.f32 %v476, %v2398
      %v2400 = vpop.f32.mrf.mxu0
      %2401 = vmatprep.mubr.bf16.mxu0 0
      %2402 = vmatmul.mubr.bf16.gmra.mxu0 %v1461
      %v2403 = vpop.f32.mrf.mxu0
      %v2404 = vadd.f32 %v476, %v2403
      %v2405 = vpop.f32.mrf.mxu0
      %v2406 = vpop.f32.mrf.mxu0
      %v2407 = vadd.f32 %v476, %v2406
      %v2408 = vpop.f32.mrf.mxu0
      %2409 = vmatprep.mubr.bf16.mxu0 0
      %2410 = vmatmul.mubr.bf16.gmra.mxu0 %v1464
      %v2411 = vpop.f32.mrf.mxu0
      %v2412 = vadd.f32 %v476, %v2411
      %v2413 = vpop.f32.mrf.mxu0
      %v2414 = vpop.f32.mrf.mxu0
      %v2415 = vadd.f32 %v476, %v2414
      %v2416 = vpop.f32.mrf.mxu0
      %2417 = vmatprep.mubr.bf16.mxu0 0
      %2418 = vmatmul.mubr.bf16.gmra.mxu0 %v1467
      %v2419 = vpop.f32.mrf.mxu0
      %v2420 = vadd.f32 %v476, %v2419
      %v2421 = vpop.f32.mrf.mxu0
      %v2422 = vpop.f32.mrf.mxu0
      %v2423 = vadd.f32 %v476, %v2422
      %v2424 = vpop.f32.mrf.mxu0
      %2425 = vmatprep.mubr.bf16.mxu0 0
      %2426 = vmatmul.mubr.bf16.gmra.mxu0 %v1470
      %v2427 = vpop.f32.mrf.mxu0
      %v2428 = vadd.f32 %v476, %v2427
      %v2429 = vpop.f32.mrf.mxu0
      %v2430 = vpop.f32.mrf.mxu0
      %v2431 = vadd.f32 %v476, %v2430
      %v2432 = vpop.f32.mrf.mxu0
      %2433 = vmatprep.mubr.bf16.mxu0 0
      %2434 = vmatmul.mubr.bf16.gmra.mxu0 %v1473
      %v2435 = vpop.f32.mrf.mxu0
      %v2436 = vadd.f32 %v476, %v2435
      %v2437 = vpop.f32.mrf.mxu0
      %v2438 = vpop.f32.mrf.mxu0
      %v2439 = vadd.f32 %v476, %v2438
      %v2440 = vpop.f32.mrf.mxu0
      %2441 = vmatprep.mubr.bf16.mxu0 0
      %2442 = vmatmul.mubr.bf16.gmra.mxu0 %v1476
      %v2443 = vpop.f32.mrf.mxu0
      %v2444 = vadd.f32 %v476, %v2443
      %v2445 = vpop.f32.mrf.mxu0
      %v2446 = vpop.f32.mrf.mxu0
      %v2447 = vadd.f32 %v476, %v2446
      %v2448 = vpop.f32.mrf.mxu0
      %2449 = vmatprep.mubr.bf16.mxu0 0
      %2450 = vmatmul.mubr.bf16.gmra.mxu0 %v1479
      %v2451 = vpop.f32.mrf.mxu0
      %v2452 = vadd.f32 %v476, %v2451
      %v2453 = vpop.f32.mrf.mxu0
      %v2454 = vpop.f32.mrf.mxu0
      %v2455 = vadd.f32 %v476, %v2454
      %v2456 = vpop.f32.mrf.mxu0
      %2457 = vmatprep.mubr.bf16.mxu0 0
      %2458 = vmatmul.mubr.bf16.gmra.mxu0 %v1482
      %v2459 = vpop.f32.mrf.mxu0
      %v2460 = vadd.f32 %v476, %v2459
      %v2461 = vpop.f32.mrf.mxu0
      %v2462 = vpop.f32.mrf.mxu0
      %v2463 = vadd.f32 %v476, %v2462
      %v2464 = vpop.f32.mrf.mxu0
      %2465 = vmatprep.mubr.bf16.mxu0 0
      %2466 = vmatmul.mubr.bf16.gmra.mxu0 %v1485
      %v2467 = vpop.f32.mrf.mxu0
      %v2468 = vadd.f32 %v476, %v2467
      %v2469 = vpop.f32.mrf.mxu0
      %v2470 = vpop.f32.mrf.mxu0
      %v2471 = vadd.f32 %v476, %v2470
      %v2472 = vpop.f32.mrf.mxu0
      %2473 = vmatprep.mubr.bf16.mxu0 0
      %2474 = vmatmul.mubr.bf16.gmra.mxu0 %v1488
      %v2475 = vpop.f32.mrf.mxu0
      %v2476 = vadd.f32 %v476, %v2475
      %v2477 = vpop.f32.mrf.mxu0
      %v2478 = vpop.f32.mrf.mxu0
      %v2479 = vadd.f32 %v476, %v2478
      %v2480 = vpop.f32.mrf.mxu0
      %2481 = vmatprep.mubr.bf16.mxu0 0
      %2482 = vmatmul.mubr.bf16.gmra.mxu0 %v1491
      %v2483 = vpop.f32.mrf.mxu0
      %v2484 = vadd.f32 %v476, %v2483
      %v2485 = vpop.f32.mrf.mxu0
      %v2486 = vpop.f32.mrf.mxu0
      %v2487 = vadd.f32 %v476, %v2486
      %v2488 = vpop.f32.mrf.mxu0
      %2489 = vmatprep.mubr.bf16.mxu0 0
      %2490 = vmatmul.mubr.bf16.gmra.mxu0 %v1494
      %v2491 = vpop.f32.mrf.mxu0
      %v2492 = vadd.f32 %v476, %v2491
      %v2493 = vpop.f32.mrf.mxu0
      %v2494 = vpop.f32.mrf.mxu0
      %v2495 = vadd.f32 %v476, %v2494
      %v2496 = vpop.f32.mrf.mxu0
      %2497 = vmatprep.mubr.bf16.mxu0 0
      %2498 = vmatmul.mubr.bf16.gmra.mxu0 %v1497
      %v2499 = vpop.f32.mrf.mxu0
      %v2500 = vadd.f32 %v476, %v2499
      %v2501 = vpop.f32.mrf.mxu0
      %v2502 = vpop.f32.mrf.mxu0
      %v2503 = vadd.f32 %v476, %v2502
      %v2504 = vpop.f32.mrf.mxu0
      %2505 = vmatprep.mubr.bf16.mxu0 0
      %2506 = vmatmul.mubr.bf16.gmra.mxu0 %v1500
      %v2507 = vpop.f32.mrf.mxu0
      %v2508 = vadd.f32 %v476, %v2507
      %v2509 = vpop.f32.mrf.mxu0
      %v2510 = vpop.f32.mrf.mxu0
      %v2511 = vadd.f32 %v476, %v2510
      %v2512 = vpop.f32.mrf.mxu0
      %2513 = vmatprep.mubr.bf16.mxu0 0
      %2514 = vmatmul.mubr.bf16.gmra.mxu0 %v1503
      %v2515 = vpop.f32.mrf.mxu0
      %v2516 = vadd.f32 %v476, %v2515
      %v2517 = vpop.f32.mrf.mxu0
      %v2518 = vpop.f32.mrf.mxu0
      %v2519 = vadd.f32 %v476, %v2518
      %v2520 = vpop.f32.mrf.mxu0
      %2521 = vmatprep.mubr.bf16.mxu0 0
      %2522 = vmatmul.mubr.bf16.gmra.mxu0 %v1506
      %v2523 = vpop.f32.mrf.mxu0
      %v2524 = vadd.f32 %v476, %v2523
      %v2525 = vpop.f32.mrf.mxu0
      %v2526 = vpop.f32.mrf.mxu0
      %v2527 = vadd.f32 %v476, %v2526
      %v2528 = vpop.f32.mrf.mxu0
      %2529 = vmatprep.mubr.bf16.mxu0 0
      %2530 = vmatmul.mubr.bf16.gmra.mxu0 %v1509
      %v2531 = vpop.f32.mrf.mxu0
      %v2532 = vadd.f32 %v476, %v2531
      %v2533 = vpop.f32.mrf.mxu0
      %v2534 = vpop.f32.mrf.mxu0
      %v2535 = vadd.f32 %v476, %v2534
      %v2536 = vpop.f32.mrf.mxu0
      %2537 = vmatprep.mubr.bf16.mxu0 0
      %2538 = vmatmul.mubr.bf16.gmra.mxu0 %v1512
      %v2539 = vpop.f32.mrf.mxu0
      %v2540 = vadd.f32 %v476, %v2539
      %v2541 = vpop.f32.mrf.mxu0
      %v2542 = vpop.f32.mrf.mxu0
      %v2543 = vadd.f32 %v476, %v2542
      %v2544 = vpop.f32.mrf.mxu0
      %2545 = vmatprep.mubr.bf16.mxu0 0
      %2546 = vmatmul.mubr.bf16.gmra.mxu0 %v1515
      %v2547 = vpop.f32.mrf.mxu0
      %v2548 = vadd.f32 %v476, %v2547
      %v2549 = vpop.f32.mrf.mxu0
      %v2550 = vpop.f32.mrf.mxu0
      %v2551 = vadd.f32 %v476, %v2550
      %v2552 = vpop.f32.mrf.mxu0
      %2553 = vmatprep.mubr.bf16.mxu0 0
      %2554 = vmatmul.mubr.bf16.gmra.mxu0 %v1518
      %v2555 = vpop.f32.mrf.mxu0
      %v2556 = vadd.f32 %v476, %v2555
      %v2557 = vpop.f32.mrf.mxu0
      %v2558 = vpop.f32.mrf.mxu0
      %v2559 = vadd.f32 %v476, %v2558
      %v2560 = vpop.f32.mrf.mxu0
      %2561 = vmatprep.mubr.bf16.mxu0 0
      %2562 = vmatmul.mubr.bf16.gmra.mxu0 %v1521
      %v2563 = vpop.f32.mrf.mxu0
      %v2564 = vadd.f32 %v476, %v2563
      %v2565 = vpop.f32.mrf.mxu0
      %v2566 = vpop.f32.mrf.mxu0
      %v2567 = vadd.f32 %v476, %v2566
      %v2568 = vpop.f32.mrf.mxu0
      %2569 = vmatprep.mubr.bf16.mxu0 0
      %2570 = vmatmul.mubr.bf16.gmra.mxu0 %v1524
      %v2571 = vpop.f32.mrf.mxu0
      %v2572 = vadd.f32 %v476, %v2571
      %v2573 = vpop.f32.mrf.mxu0
      %v2574 = vpop.f32.mrf.mxu0
      %v2575 = vadd.f32 %v476, %v2574
      %v2576 = vpop.f32.mrf.mxu0
      %2577 = vmatprep.mubr.bf16.mxu0 0
      %2578 = vmatmul.mubr.bf16.gmra.mxu0 %v1527
      %v2579 = vpop.f32.mrf.mxu0
      %v2580 = vadd.f32 %v476, %v2579
      %v2581 = vpop.f32.mrf.mxu0
      %v2582 = vpop.f32.mrf.mxu0
      %v2583 = vadd.f32 %v476, %v2582
      %v2584 = vpop.f32.mrf.mxu0
      %2585 = vmatprep.mubr.bf16.mxu0 0
      %2586 = vmatmul.mubr.bf16.gmra.mxu0 %v1530
      %v2587 = vpop.f32.mrf.mxu0
      %v2588 = vadd.f32 %v476, %v2587
      %v2589 = vpop.f32.mrf.mxu0
      %v2590 = vpop.f32.mrf.mxu0
      %v2591 = vadd.f32 %v476, %v2590
      %v2592 = vpop.f32.mrf.mxu0
      %2593 = vmatprep.mubr.bf16.mxu0 0
      %2594 = vmatmul.mubr.bf16.gmra.mxu0 %v1533
      %v2595 = vpop.f32.mrf.mxu0
      %v2596 = vadd.f32 %v476, %v2595
      %v2597 = vpop.f32.mrf.mxu0
      %v2598 = vpop.f32.mrf.mxu0
      %v2599 = vadd.f32 %v476, %v2598
      %v2600 = vpop.f32.mrf.mxu0
      %2601 = vmatprep.mubr.bf16.mxu0 0
      %2602 = vmatmul.mubr.bf16.gmra.mxu0 %v1536
      %v2603 = vpop.f32.mrf.mxu0
      %v2604 = vadd.f32 %v476, %v2603
      %v2605 = vpop.f32.mrf.mxu0
      %v2606 = vpop.f32.mrf.mxu0
      %v2607 = vadd.f32 %v476, %v2606
      %v2608 = vpop.f32.mrf.mxu0
      %2609 = vmatprep.mubr.bf16.mxu0 0
      %2610 = vmatmul.mubr.bf16.gmra.mxu0 %v1539
      %v2611 = vpop.f32.mrf.mxu0
      %v2612 = vadd.f32 %v476, %v2611
      %v2613 = vpop.f32.mrf.mxu0
      %v2614 = vpop.f32.mrf.mxu0
      %v2615 = vadd.f32 %v476, %v2614
      %v2616 = vpop.f32.mrf.mxu0
      %2617 = vmatprep.mubr.bf16.mxu0 0
      %2618 = vmatmul.mubr.bf16.gmra.mxu0 %v1542
      %v2619 = vpop.f32.mrf.mxu0
      %v2620 = vadd.f32 %v476, %v2619
      %v2621 = vpop.f32.mrf.mxu0
      %v2622 = vpop.f32.mrf.mxu0
      %v2623 = vadd.f32 %v476, %v2622
      %v2624 = vpop.f32.mrf.mxu0
      %2625 = vmatprep.mubr.bf16.mxu0 0
      %2626 = vmatmul.mubr.bf16.gmra.mxu0 %v1545
      %v2627 = vpop.f32.mrf.mxu0
      %v2628 = vadd.f32 %v476, %v2627
      %v2629 = vpop.f32.mrf.mxu0
      %v2630 = vpop.f32.mrf.mxu0
      %v2631 = vadd.f32 %v476, %v2630
      %v2632 = vpop.f32.mrf.mxu0
      %2633 = vmatprep.mubr.bf16.mxu0 0
      %2634 = vmatmul.mubr.bf16.gmra.mxu0 %v1548
      %v2635 = vpop.f32.mrf.mxu0
      %v2636 = vadd.f32 %v476, %v2635
      %v2637 = vpop.f32.mrf.mxu0
      %v2638 = vpop.f32.mrf.mxu0
      %v2639 = vadd.f32 %v476, %v2638
      %v2640 = vpop.f32.mrf.mxu0
      %2641 = vmatprep.mubr.bf16.mxu0 0
      %2642 = vmatmul.mubr.bf16.gmra.mxu0 %v1551
      %v2643 = vpop.f32.mrf.mxu0
      %v2644 = vadd.f32 %v476, %v2643
      %v2645 = vpop.f32.mrf.mxu0
      %v2646 = vpop.f32.mrf.mxu0
      %v2647 = vpop.f32.mrf.mxu0
      %2648 = vdwg.mxu0
      %vm2649 = vcmp.gt.f32.partialorder %v1588, 0.0
      %vm2650 = vcmp.gt.f32.partialorder %v1591, 0.0
      %vm2651 = vcmp.gt.f32.partialorder %v1596, 0.0
      %vm2652 = vcmp.gt.f32.partialorder %v1599, 0.0
      %vm2653 = vcmp.gt.f32.partialorder %v1604, 0.0
      %vm2654 = vcmp.gt.f32.partialorder %v1607, 0.0
      %vm2655 = vcmp.gt.f32.partialorder %v1612, 0.0
      %vm2656 = vcmp.gt.f32.partialorder %v1615, 0.0
      %vm2657 = vcmp.gt.f32.partialorder %v1620, 0.0
      %vm2658 = vcmp.gt.f32.partialorder %v1623, 0.0
      %vm2659 = vcmp.gt.f32.partialorder %v1628, 0.0
      %vm2660 = vcmp.gt.f32.partialorder %v1631, 0.0
      %vm2661 = vcmp.gt.f32.partialorder %v1636, 0.0
      %vm2662 = vcmp.gt.f32.partialorder %v1639, 0.0
      %vm2663 = vcmp.gt.f32.partialorder %v1644, 0.0
      %vm2664 = vcmp.gt.f32.partialorder %v1647, 0.0
      %vm2665 = vcmp.gt.f32.partialorder %v1652, 0.0
      %vm2666 = vcmp.gt.f32.partialorder %v1655, 0.0
      %vm2667 = vcmp.gt.f32.partialorder %v1660, 0.0
      %vm2668 = vcmp.gt.f32.partialorder %v1663, 0.0
      %vm2669 = vcmp.gt.f32.partialorder %v1668, 0.0
      %vm2670 = vcmp.gt.f32.partialorder %v1671, 0.0
      %vm2671 = vcmp.gt.f32.partialorder %v1676, 0.0
      %vm2672 = vcmp.gt.f32.partialorder %v1679, 0.0
      %vm2673 = vcmp.gt.f32.partialorder %v1684, 0.0
      %vm2674 = vcmp.gt.f32.partialorder %v1687, 0.0
      %vm2675 = vcmp.gt.f32.partialorder %v1692, 0.0
      %vm2676 = vcmp.gt.f32.partialorder %v1695, 0.0
      %vm2677 = vcmp.gt.f32.partialorder %v1700, 0.0
      %vm2678 = vcmp.gt.f32.partialorder %v1703, 0.0
      %vm2679 = vcmp.gt.f32.partialorder %v1708, 0.0
      %vm2680 = vcmp.gt.f32.partialorder %v1711, 0.0
      %vm2681 = vcmp.gt.f32.partialorder %v1716, 0.0
      %vm2682 = vcmp.gt.f32.partialorder %v1719, 0.0
      %vm2683 = vcmp.gt.f32.partialorder %v1724, 0.0
      %vm2684 = vcmp.gt.f32.partialorder %v1727, 0.0
      %vm2685 = vcmp.gt.f32.partialorder %v1732, 0.0
      %vm2686 = vcmp.gt.f32.partialorder %v1735, 0.0
      %vm2687 = vcmp.gt.f32.partialorder %v1740, 0.0
      %vm2688 = vcmp.gt.f32.partialorder %v1743, 0.0
      %vm2689 = vcmp.gt.f32.partialorder %v1748, 0.0
      %vm2690 = vcmp.gt.f32.partialorder %v1751, 0.0
      %vm2691 = vcmp.gt.f32.partialorder %v1756, 0.0
      %vm2692 = vcmp.gt.f32.partialorder %v1759, 0.0
      %vm2693 = vcmp.gt.f32.partialorder %v1764, 0.0
      %vm2694 = vcmp.gt.f32.partialorder %v1767, 0.0
      %vm2695 = vcmp.gt.f32.partialorder %v1772, 0.0
      %vm2696 = vcmp.gt.f32.partialorder %v1775, 0.0
      %vm2697 = vcmp.gt.f32.partialorder %v1780, 0.0
      %vm2698 = vcmp.gt.f32.partialorder %v1783, 0.0
      %vm2699 = vcmp.gt.f32.partialorder %v1788, 0.0
      %vm2700 = vcmp.gt.f32.partialorder %v1791, 0.0
      %vm2701 = vcmp.gt.f32.partialorder %v1796, 0.0
      %vm2702 = vcmp.gt.f32.partialorder %v1799, 0.0
      %vm2703 = vcmp.gt.f32.partialorder %v1804, 0.0
      %vm2704 = vcmp.gt.f32.partialorder %v1807, 0.0
      %vm2705 = vcmp.gt.f32.partialorder %v1812, 0.0
      %vm2706 = vcmp.gt.f32.partialorder %v1815, 0.0
      %vm2707 = vcmp.gt.f32.partialorder %v1820, 0.0
      %vm2708 = vcmp.gt.f32.partialorder %v1823, 0.0
      %vm2709 = vcmp.gt.f32.partialorder %v1828, 0.0
      %vm2710 = vcmp.gt.f32.partialorder %v1831, 0.0
      %vm2711 = vcmp.gt.f32.partialorder %v1836, 0.0
      %vm2712 = vcmp.gt.f32.partialorder %v1839, 0.0
      %vm2713 = vcmp.gt.f32.partialorder %v1844, 0.0
      %vm2714 = vcmp.gt.f32.partialorder %v1847, 0.0
      %vm2715 = vcmp.gt.f32.partialorder %v1852, 0.0
      %vm2716 = vcmp.gt.f32.partialorder %v1855, 0.0
      %vm2717 = vcmp.gt.f32.partialorder %v1860, 0.0
      %vm2718 = vcmp.gt.f32.partialorder %v1863, 0.0
      %vm2719 = vcmp.gt.f32.partialorder %v1868, 0.0
      %vm2720 = vcmp.gt.f32.partialorder %v1871, 0.0
      %vm2721 = vcmp.gt.f32.partialorder %v1876, 0.0
      %vm2722 = vcmp.gt.f32.partialorder %v1879, 0.0
      %vm2723 = vcmp.gt.f32.partialorder %v1884, 0.0
      %vm2724 = vcmp.gt.f32.partialorder %v1887, 0.0
      %vm2725 = vcmp.gt.f32.partialorder %v1892, 0.0
      %vm2726 = vcmp.gt.f32.partialorder %v1895, 0.0
      %vm2727 = vcmp.gt.f32.partialorder %v1900, 0.0
      %vm2728 = vcmp.gt.f32.partialorder %v1903, 0.0
      %vm2729 = vcmp.gt.f32.partialorder %v1908, 0.0
      %vm2730 = vcmp.gt.f32.partialorder %v1911, 0.0
      %vm2731 = vcmp.gt.f32.partialorder %v1916, 0.0
      %vm2732 = vcmp.gt.f32.partialorder %v1919, 0.0
      %vm2733 = vcmp.gt.f32.partialorder %v1924, 0.0
      %vm2734 = vcmp.gt.f32.partialorder %v1927, 0.0
      %vm2735 = vcmp.gt.f32.partialorder %v1932, 0.0
      %vm2736 = vcmp.gt.f32.partialorder %v1935, 0.0
      %vm2737 = vcmp.gt.f32.partialorder %v1940, 0.0
      %vm2738 = vcmp.gt.f32.partialorder %v1943, 0.0
      %vm2739 = vcmp.gt.f32.partialorder %v1948, 0.0
      %vm2740 = vcmp.gt.f32.partialorder %v1951, 0.0
      %vm2741 = vcmp.gt.f32.partialorder %v1956, 0.0
      %vm2742 = vcmp.gt.f32.partialorder %v1959, 0.0
      %vm2743 = vcmp.gt.f32.partialorder %v1964, 0.0
      %vm2744 = vcmp.gt.f32.partialorder %v1967, 0.0
      %vm2745 = vcmp.gt.f32.partialorder %v1972, 0.0
      %vm2746 = vcmp.gt.f32.partialorder %v1975, 0.0
      %vm2747 = vcmp.gt.f32.partialorder %v1980, 0.0
      %vm2748 = vcmp.gt.f32.partialorder %v1983, 0.0
      %vm2749 = vcmp.gt.f32.partialorder %v1988, 0.0
      %vm2750 = vcmp.gt.f32.partialorder %v1991, 0.0
      %vm2751 = vcmp.gt.f32.partialorder %v1996, 0.0
      %vm2752 = vcmp.gt.f32.partialorder %v1999, 0.0
      %vm2753 = vcmp.gt.f32.partialorder %v2004, 0.0
      %vm2754 = vcmp.gt.f32.partialorder %v2007, 0.0
      %vm2755 = vcmp.gt.f32.partialorder %v2012, 0.0
      %vm2756 = vcmp.gt.f32.partialorder %v2015, 0.0
      %vm2757 = vcmp.gt.f32.partialorder %v2020, 0.0
      %vm2758 = vcmp.gt.f32.partialorder %v2023, 0.0
      %vm2759 = vcmp.gt.f32.partialorder %v2028, 0.0
      %vm2760 = vcmp.gt.f32.partialorder %v2031, 0.0
      %vm2761 = vcmp.gt.f32.partialorder %v2036, 0.0
      %vm2762 = vcmp.gt.f32.partialorder %v2039, 0.0
      %vm2763 = vcmp.gt.f32.partialorder %v2044, 0.0
      %vm2764 = vcmp.gt.f32.partialorder %v2047, 0.0
      %vm2765 = vcmp.gt.f32.partialorder %v2052, 0.0
      %vm2766 = vcmp.gt.f32.partialorder %v2055, 0.0
      %vm2767 = vcmp.gt.f32.partialorder %v2060, 0.0
      %vm2768 = vcmp.gt.f32.partialorder %v2063, 0.0
      %vm2769 = vcmp.gt.f32.partialorder %v2068, 0.0
      %vm2770 = vcmp.gt.f32.partialorder %v2071, 0.0
      %vm2771 = vcmp.gt.f32.partialorder %v2076, 0.0
      %vm2772 = vcmp.gt.f32.partialorder %v2079, 0.0
      %vm2773 = vcmp.gt.f32.partialorder %v2084, 0.0
      %vm2774 = vcmp.gt.f32.partialorder %v2087, 0.0
      %vm2775 = vcmp.gt.f32.partialorder %v2092, 0.0
      %vm2776 = vcmp.gt.f32.partialorder %v2095, 0.0
      %vm2777 = vcmp.gt.f32.partialorder %v2100, 0.0
      %vm2778 = vcmp.gt.f32.partialorder %v2103, 0.0
      %vm2779 = vcmp.gt.f32.partialorder %v2108, 0.0
      %vm2780 = vcmp.gt.f32.partialorder %v2111, 0.0
      %vm2781 = vcmp.gt.f32.partialorder %v2116, 0.0
      %vm2782 = vcmp.gt.f32.partialorder %v2119, 0.0
      %vm2783 = vcmp.gt.f32.partialorder %v2124, 0.0
      %vm2784 = vcmp.gt.f32.partialorder %v2127, 0.0
      %vm2785 = vcmp.gt.f32.partialorder %v2132, 0.0
      %vm2786 = vcmp.gt.f32.partialorder %v2135, 0.0
      %vm2787 = vcmp.gt.f32.partialorder %v2140, 0.0
      %vm2788 = vcmp.gt.f32.partialorder %v2143, 0.0
      %vm2789 = vcmp.gt.f32.partialorder %v2148, 0.0
      %vm2790 = vcmp.gt.f32.partialorder %v2151, 0.0
      %vm2791 = vcmp.gt.f32.partialorder %v2156, 0.0
      %vm2792 = vcmp.gt.f32.partialorder %v2159, 0.0
      %vm2793 = vcmp.gt.f32.partialorder %v2164, 0.0
      %vm2794 = vcmp.gt.f32.partialorder %v2167, 0.0
      %vm2795 = vcmp.gt.f32.partialorder %v2172, 0.0
      %vm2796 = vcmp.gt.f32.partialorder %v2175, 0.0
      %vm2797 = vcmp.gt.f32.partialorder %v2180, 0.0
      %vm2798 = vcmp.gt.f32.partialorder %v2183, 0.0
      %vm2799 = vcmp.gt.f32.partialorder %v2188, 0.0
      %vm2800 = vcmp.gt.f32.partialorder %v2191, 0.0
      %vm2801 = vcmp.gt.f32.partialorder %v2196, 0.0
      %vm2802 = vcmp.gt.f32.partialorder %v2199, 0.0
      %vm2803 = vcmp.gt.f32.partialorder %v2204, 0.0
      %vm2804 = vcmp.gt.f32.partialorder %v2207, 0.0
      %vm2805 = vcmp.gt.f32.partialorder %v2212, 0.0
      %vm2806 = vcmp.gt.f32.partialorder %v2215, 0.0
      %vm2807 = vcmp.gt.f32.partialorder %v2220, 0.0
      %vm2808 = vcmp.gt.f32.partialorder %v2223, 0.0
      %vm2809 = vcmp.gt.f32.partialorder %v2228, 0.0
      %vm2810 = vcmp.gt.f32.partialorder %v2231, 0.0
      %vm2811 = vcmp.gt.f32.partialorder %v2236, 0.0
      %vm2812 = vcmp.gt.f32.partialorder %v2239, 0.0
      %vm2813 = vcmp.gt.f32.partialorder %v2244, 0.0
      %vm2814 = vcmp.gt.f32.partialorder %v2247, 0.0
      %vm2815 = vcmp.gt.f32.partialorder %v2252, 0.0
      %vm2816 = vcmp.gt.f32.partialorder %v2255, 0.0
      %vm2817 = vcmp.gt.f32.partialorder %v2260, 0.0
      %vm2818 = vcmp.gt.f32.partialorder %v2263, 0.0
      %vm2819 = vcmp.gt.f32.partialorder %v2268, 0.0
      %vm2820 = vcmp.gt.f32.partialorder %v2271, 0.0
      %vm2821 = vcmp.gt.f32.partialorder %v2276, 0.0
      %vm2822 = vcmp.gt.f32.partialorder %v2279, 0.0
      %vm2823 = vcmp.gt.f32.partialorder %v2284, 0.0
      %vm2824 = vcmp.gt.f32.partialorder %v2287, 0.0
      %vm2825 = vcmp.gt.f32.partialorder %v2292, 0.0
      %vm2826 = vcmp.gt.f32.partialorder %v2295, 0.0
      %vm2827 = vcmp.gt.f32.partialorder %v2300, 0.0
      %vm2828 = vcmp.gt.f32.partialorder %v2303, 0.0
      %vm2829 = vcmp.gt.f32.partialorder %v2308, 0.0
      %vm2830 = vcmp.gt.f32.partialorder %v2311, 0.0
      %vm2831 = vcmp.gt.f32.partialorder %v2316, 0.0
      %vm2832 = vcmp.gt.f32.partialorder %v2319, 0.0
      %vm2833 = vcmp.gt.f32.partialorder %v2324, 0.0
      %vm2834 = vcmp.gt.f32.partialorder %v2327, 0.0
      %vm2835 = vcmp.gt.f32.partialorder %v2332, 0.0
      %vm2836 = vcmp.gt.f32.partialorder %v2335, 0.0
      %vm2837 = vcmp.gt.f32.partialorder %v2340, 0.0
      %vm2838 = vcmp.gt.f32.partialorder %v2343, 0.0
      %vm2839 = vcmp.gt.f32.partialorder %v2348, 0.0
      %vm2840 = vcmp.gt.f32.partialorder %v2351, 0.0
      %vm2841 = vcmp.gt.f32.partialorder %v2356, 0.0
      %vm2842 = vcmp.gt.f32.partialorder %v2359, 0.0
      %vm2843 = vcmp.gt.f32.partialorder %v2364, 0.0
      %vm2844 = vcmp.gt.f32.partialorder %v2367, 0.0
      %vm2845 = vcmp.gt.f32.partialorder %v2372, 0.0
      %vm2846 = vcmp.gt.f32.partialorder %v2375, 0.0
      %vm2847 = vcmp.gt.f32.partialorder %v2380, 0.0
      %vm2848 = vcmp.gt.f32.partialorder %v2383, 0.0
      %vm2849 = vcmp.gt.f32.partialorder %v2388, 0.0
      %vm2850 = vcmp.gt.f32.partialorder %v2391, 0.0
      %vm2851 = vcmp.gt.f32.partialorder %v2396, 0.0
      %vm2852 = vcmp.gt.f32.partialorder %v2399, 0.0
      %vm2853 = vcmp.gt.f32.partialorder %v2404, 0.0
      %vm2854 = vcmp.gt.f32.partialorder %v2407, 0.0
      %vm2855 = vcmp.gt.f32.partialorder %v2412, 0.0
      %vm2856 = vcmp.gt.f32.partialorder %v2415, 0.0
      %vm2857 = vcmp.gt.f32.partialorder %v2420, 0.0
      %vm2858 = vcmp.gt.f32.partialorder %v2423, 0.0
      %vm2859 = vcmp.gt.f32.partialorder %v2428, 0.0
      %vm2860 = vcmp.gt.f32.partialorder %v2431, 0.0
      %vm2861 = vcmp.gt.f32.partialorder %v2436, 0.0
      %vm2862 = vcmp.gt.f32.partialorder %v2439, 0.0
      %vm2863 = vcmp.gt.f32.partialorder %v2444, 0.0
      %vm2864 = vcmp.gt.f32.partialorder %v2447, 0.0
      %vm2865 = vcmp.gt.f32.partialorder %v2452, 0.0
      %vm2866 = vcmp.gt.f32.partialorder %v2455, 0.0
      %vm2867 = vcmp.gt.f32.partialorder %v2460, 0.0
      %vm2868 = vcmp.gt.f32.partialorder %v2463, 0.0
      %vm2869 = vcmp.gt.f32.partialorder %v2468, 0.0
      %vm2870 = vcmp.gt.f32.partialorder %v2471, 0.0
      %vm2871 = vcmp.gt.f32.partialorder %v2476, 0.0
      %vm2872 = vcmp.gt.f32.partialorder %v2479, 0.0
      %vm2873 = vcmp.gt.f32.partialorder %v2484, 0.0
      %vm2874 = vcmp.gt.f32.partialorder %v2487, 0.0
      %vm2875 = vcmp.gt.f32.partialorder %v2492, 0.0
      %vm2876 = vcmp.gt.f32.partialorder %v2495, 0.0
      %vm2877 = vcmp.gt.f32.partialorder %v2500, 0.0
      %vm2878 = vcmp.gt.f32.partialorder %v2503, 0.0
      %vm2879 = vcmp.gt.f32.partialorder %v2508, 0.0
      %vm2880 = vcmp.gt.f32.partialorder %v2511, 0.0
      %vm2881 = vcmp.gt.f32.partialorder %v2516, 0.0
      %vm2882 = vcmp.gt.f32.partialorder %v2519, 0.0
      %vm2883 = vcmp.gt.f32.partialorder %v2524, 0.0
      %vm2884 = vcmp.gt.f32.partialorder %v2527, 0.0
      %vm2885 = vcmp.gt.f32.partialorder %v2532, 0.0
      %vm2886 = vcmp.gt.f32.partialorder %v2535, 0.0
      %vm2887 = vcmp.gt.f32.partialorder %v2540, 0.0
      %vm2888 = vcmp.gt.f32.partialorder %v2543, 0.0
      %vm2889 = vcmp.gt.f32.partialorder %v2548, 0.0
      %vm2890 = vcmp.gt.f32.partialorder %v2551, 0.0
      %vm2891 = vcmp.gt.f32.partialorder %v2556, 0.0
      %vm2892 = vcmp.gt.f32.partialorder %v2559, 0.0
      %vm2893 = vcmp.gt.f32.partialorder %v2564, 0.0
      %vm2894 = vcmp.gt.f32.partialorder %v2567, 0.0
      %vm2895 = vcmp.gt.f32.partialorder %v2572, 0.0
      %vm2896 = vcmp.gt.f32.partialorder %v2575, 0.0
      %vm2897 = vcmp.gt.f32.partialorder %v2580, 0.0
      %vm2898 = vcmp.gt.f32.partialorder %v2583, 0.0
      %vm2899 = vcmp.gt.f32.partialorder %v2588, 0.0
      %vm2900 = vcmp.gt.f32.partialorder %v2591, 0.0
      %vm2901 = vcmp.gt.f32.partialorder %v2596, 0.0
      %vm2902 = vcmp.gt.f32.partialorder %v2599, 0.0
      %vm2903 = vcmp.gt.f32.partialorder %v2604, 0.0
      %vm2904 = vcmp.gt.f32.partialorder %v2607, 0.0
      %vm2905 = vcmp.gt.f32.partialorder %v2612, 0.0
      %vm2906 = vcmp.gt.f32.partialorder %v2615, 0.0
      %vm2907 = vcmp.gt.f32.partialorder %v2620, 0.0
      %vm2908 = vcmp.gt.f32.partialorder %v2623, 0.0
      %vm2909 = vcmp.gt.f32.partialorder %v2628, 0.0
      %vm2910 = vcmp.gt.f32.partialorder %v2631, 0.0
      %vm2911 = vcmp.gt.f32.partialorder %v2636, 0.0
      %vm2912 = vcmp.gt.f32.partialorder %v2639, 0.0
      %vm2913 = vcmp.gt.f32.partialorder %v2644, 0.0
      %v2914 = vld [vmem:[%s3] sm:$0x1]
      %v2916 = vlaneseq
      %v2917 = vshrl.u32 %v2916, 7
      %v2918 = vsub.s32 0, %v2917
      %v2919 = vrot.slane %v2914, %v2918
      %v2921 = vmul.f32 %v2919, %v1588
      %v2922 = vmul.f32 %v2919, %v1591
      %v2923 = vmul.f32 %v2919, %v1596
      %v2924 = vmul.f32 %v2919, %v1599
      %v2925 = vmul.f32 %v2919, %v1604
      %v2926 = vmul.f32 %v2919, %v1607
      %v2927 = vmul.f32 %v2919, %v1612
      %v2928 = vmul.f32 %v2919, %v1615
      %v2929 = vmul.f32 %v2919, %v1620
      %v2930 = vmul.f32 %v2919, %v1623
      %v2931 = vmul.f32 %v2919, %v1628
      %v2932 = vmul.f32 %v2919, %v1631
      %v2933 = vmul.f32 %v2919, %v1636
      %v2934 = vmul.f32 %v2919, %v1639
      %v2935 = vmul.f32 %v2919, %v1644
      %v2936 = vmul.f32 %v2919, %v1647
      %v2937 = vmul.f32 %v2919, %v1652
      %v2938 = vmul.f32 %v2919, %v1655
      %v2939 = vmul.f32 %v2919, %v1660
      %v2940 = vmul.f32 %v2919, %v1663
      %v2941 = vmul.f32 %v2919, %v1668
      %v2942 = vmul.f32 %v2919, %v1671
      %v2943 = vmul.f32 %v2919, %v1676
      %v2944 = vmul.f32 %v2919, %v1679
      %v2945 = vmul.f32 %v2919, %v1684
      %v2946 = vmul.f32 %v2919, %v1687
      %v2947 = vmul.f32 %v2919, %v1692
      %v2948 = vmul.f32 %v2919, %v1695
      %v2949 = vmul.f32 %v2919, %v1700
      %v2950 = vmul.f32 %v2919, %v1703
      %v2951 = vmul.f32 %v2919, %v1708
      %v2952 = vmul.f32 %v2919, %v1711
      %v2953 = vmul.f32 %v2919, %v1716
      %v2954 = vmul.f32 %v2919, %v1719
      %v2955 = vmul.f32 %v2919, %v1724
      %v2956 = vmul.f32 %v2919, %v1727
      %v2957 = vmul.f32 %v2919, %v1732
      %v2958 = vmul.f32 %v2919, %v1735
      %v2959 = vmul.f32 %v2919, %v1740
      %v2960 = vmul.f32 %v2919, %v1743
      %v2961 = vmul.f32 %v2919, %v1748
      %v2962 = vmul.f32 %v2919, %v1751
      %v2963 = vmul.f32 %v2919, %v1756
      %v2964 = vmul.f32 %v2919, %v1759
      %v2965 = vmul.f32 %v2919, %v1764
      %v2966 = vmul.f32 %v2919, %v1767
      %v2967 = vmul.f32 %v2919, %v1772
      %v2968 = vmul.f32 %v2919, %v1775
      %v2969 = vmul.f32 %v2919, %v1780
      %v2970 = vmul.f32 %v2919, %v1783
      %v2971 = vmul.f32 %v2919, %v1788
      %v2972 = vmul.f32 %v2919, %v1791
      %v2973 = vmul.f32 %v2919, %v1796
      %v2974 = vmul.f32 %v2919, %v1799
      %v2975 = vmul.f32 %v2919, %v1804
      %v2976 = vmul.f32 %v2919, %v1807
      %v2977 = vmul.f32 %v2919, %v1812
      %v2978 = vmul.f32 %v2919, %v1815
      %v2979 = vmul.f32 %v2919, %v1820
      %v2980 = vmul.f32 %v2919, %v1823
      %v2981 = vmul.f32 %v2919, %v1828
      %v2982 = vmul.f32 %v2919, %v1831
      %v2983 = vmul.f32 %v2919, %v1836
      %v2984 = vmul.f32 %v2919, %v1839
      %v2985 = vmul.f32 %v2919, %v1844
      %v2986 = vmul.f32 %v2919, %v1847
      %v2987 = vmul.f32 %v2919, %v1852
      %v2988 = vmul.f32 %v2919, %v1855
      %v2989 = vmul.f32 %v2919, %v1860
      %v2990 = vmul.f32 %v2919, %v1863
      %v2991 = vmul.f32 %v2919, %v1868
      %v2992 = vmul.f32 %v2919, %v1871
      %v2993 = vmul.f32 %v2919, %v1876
      %v2994 = vmul.f32 %v2919, %v1879
      %v2995 = vmul.f32 %v2919, %v1884
      %v2996 = vmul.f32 %v2919, %v1887
      %v2997 = vmul.f32 %v2919, %v1892
      %v2998 = vmul.f32 %v2919, %v1895
      %v2999 = vmul.f32 %v2919, %v1900
      %v3000 = vmul.f32 %v2919, %v1903
      %v3001 = vmul.f32 %v2919, %v1908
      %v3002 = vmul.f32 %v2919, %v1911
      %v3003 = vmul.f32 %v2919, %v1916
      %v3004 = vmul.f32 %v2919, %v1919
      %v3005 = vmul.f32 %v2919, %v1924
      %v3006 = vmul.f32 %v2919, %v1927
      %v3007 = vmul.f32 %v2919, %v1932
      %v3008 = vmul.f32 %v2919, %v1935
      %v3009 = vmul.f32 %v2919, %v1940
      %v3010 = vmul.f32 %v2919, %v1943
      %v3011 = vmul.f32 %v2919, %v1948
      %v3012 = vmul.f32 %v2919, %v1951
      %v3013 = vmul.f32 %v2919, %v1956
      %v3014 = vmul.f32 %v2919, %v1959
      %v3015 = vmul.f32 %v2919, %v1964
      %v3016 = vmul.f32 %v2919, %v1967
      %v3017 = vmul.f32 %v2919, %v1972
      %v3018 = vmul.f32 %v2919, %v1975
      %v3019 = vmul.f32 %v2919, %v1980
      %v3020 = vmul.f32 %v2919, %v1983
      %v3021 = vmul.f32 %v2919, %v1988
      %v3022 = vmul.f32 %v2919, %v1991
      %v3023 = vmul.f32 %v2919, %v1996
      %v3024 = vmul.f32 %v2919, %v1999
      %v3025 = vmul.f32 %v2919, %v2004
      %v3026 = vmul.f32 %v2919, %v2007
      %v3027 = vmul.f32 %v2919, %v2012
      %v3028 = vmul.f32 %v2919, %v2015
      %v3029 = vmul.f32 %v2919, %v2020
      %v3030 = vmul.f32 %v2919, %v2023
      %v3031 = vmul.f32 %v2919, %v2028
      %v3032 = vmul.f32 %v2919, %v2031
      %v3033 = vmul.f32 %v2919, %v2036
      %v3034 = vmul.f32 %v2919, %v2039
      %v3035 = vmul.f32 %v2919, %v2044
      %v3036 = vmul.f32 %v2919, %v2047
      %v3037 = vmul.f32 %v2919, %v2052
      %v3038 = vmul.f32 %v2919, %v2055
      %v3039 = vmul.f32 %v2919, %v2060
      %v3040 = vmul.f32 %v2919, %v2063
      %v3041 = vmul.f32 %v2919, %v2068
      %v3042 = vmul.f32 %v2919, %v2071
      %v3043 = vmul.f32 %v2919, %v2076
      %v3044 = vmul.f32 %v2919, %v2079
      %v3045 = vmul.f32 %v2919, %v2084
      %v3046 = vmul.f32 %v2919, %v2087
      %v3047 = vmul.f32 %v2919, %v2092
      %v3048 = vmul.f32 %v2919, %v2095
      %v3049 = vmul.f32 %v2919, %v2100
      %v3050 = vmul.f32 %v2919, %v2103
      %v3051 = vmul.f32 %v2919, %v2108
      %v3052 = vmul.f32 %v2919, %v2111
      %v3053 = vmul.f32 %v2919, %v2116
      %v3054 = vmul.f32 %v2919, %v2119
      %v3055 = vmul.f32 %v2919, %v2124
      %v3056 = vmul.f32 %v2919, %v2127
      %v3057 = vmul.f32 %v2919, %v2132
      %v3058 = vmul.f32 %v2919, %v2135
      %v3059 = vmul.f32 %v2919, %v2140
      %v3060 = vmul.f32 %v2919, %v2143
      %v3061 = vmul.f32 %v2919, %v2148
      %v3062 = vmul.f32 %v2919, %v2151
      %v3063 = vmul.f32 %v2919, %v2156
      %v3064 = vmul.f32 %v2919, %v2159
      %v3065 = vmul.f32 %v2919, %v2164
      %v3066 = vmul.f32 %v2919, %v2167
      %v3067 = vmul.f32 %v2919, %v2172
      %v3068 = vmul.f32 %v2919, %v2175
      %v3069 = vmul.f32 %v2919, %v2180
      %v3070 = vmul.f32 %v2919, %v2183
      %v3071 = vmul.f32 %v2919, %v2188
      %v3072 = vmul.f32 %v2919, %v2191
      %v3073 = vmul.f32 %v2919, %v2196
      %v3074 = vmul.f32 %v2919, %v2199
      %v3075 = vmul.f32 %v2919, %v2204
      %v3076 = vmul.f32 %v2919, %v2207
      %v3077 = vmul.f32 %v2919, %v2212
      %v3078 = vmul.f32 %v2919, %v2215
      %v3079 = vmul.f32 %v2919, %v2220
      %v3080 = vmul.f32 %v2919, %v2223
      %v3081 = vmul.f32 %v2919, %v2228
      %v3082 = vmul.f32 %v2919, %v2231
      %v3083 = vmul.f32 %v2919, %v2236
      %v3084 = vmul.f32 %v2919, %v2239
      %v3085 = vmul.f32 %v2919, %v2244
      %v3086 = vmul.f32 %v2919, %v2247
      %v3087 = vmul.f32 %v2919, %v2252
      %v3088 = vmul.f32 %v2919, %v2255
      %v3089 = vmul.f32 %v2919, %v2260
      %v3090 = vmul.f32 %v2919, %v2263
      %v3091 = vmul.f32 %v2919, %v2268
      %v3092 = vmul.f32 %v2919, %v2271
      %v3093 = vmul.f32 %v2919, %v2276
      %v3094 = vmul.f32 %v2919, %v2279
      %v3095 = vmul.f32 %v2919, %v2284
      %v3096 = vmul.f32 %v2919, %v2287
      %v3097 = vmul.f32 %v2919, %v2292
      %v3098 = vmul.f32 %v2919, %v2295
      %v3099 = vmul.f32 %v2919, %v2300
      %v3100 = vmul.f32 %v2919, %v2303
      %v3101 = vmul.f32 %v2919, %v2308
      %v3102 = vmul.f32 %v2919, %v2311
      %v3103 = vmul.f32 %v2919, %v2316
      %v3104 = vmul.f32 %v2919, %v2319
      %v3105 = vmul.f32 %v2919, %v2324
      %v3106 = vmul.f32 %v2919, %v2327
      %v3107 = vmul.f32 %v2919, %v2332
      %v3108 = vmul.f32 %v2919, %v2335
      %v3109 = vmul.f32 %v2919, %v2340
      %v3110 = vmul.f32 %v2919, %v2343
      %v3111 = vmul.f32 %v2919, %v2348
      %v3112 = vmul.f32 %v2919, %v2351
      %v3113 = vmul.f32 %v2919, %v2356
      %v3114 = vmul.f32 %v2919, %v2359
      %v3115 = vmul.f32 %v2919, %v2364
      %v3116 = vmul.f32 %v2919, %v2367
      %v3117 = vmul.f32 %v2919, %v2372
      %v3118 = vmul.f32 %v2919, %v2375
      %v3119 = vmul.f32 %v2919, %v2380
      %v3120 = vmul.f32 %v2919, %v2383
      %v3121 = vmul.f32 %v2919, %v2388
      %v3122 = vmul.f32 %v2919, %v2391
      %v3123 = vmul.f32 %v2919, %v2396
      %v3124 = vmul.f32 %v2919, %v2399
      %v3125 = vmul.f32 %v2919, %v2404
      %v3126 = vmul.f32 %v2919, %v2407
      %v3127 = vmul.f32 %v2919, %v2412
      %v3128 = vmul.f32 %v2919, %v2415
      %v3129 = vmul.f32 %v2919, %v2420
      %v3130 = vmul.f32 %v2919, %v2423
      %v3131 = vmul.f32 %v2919, %v2428
      %v3132 = vmul.f32 %v2919, %v2431
      %v3133 = vmul.f32 %v2919, %v2436
      %v3134 = vmul.f32 %v2919, %v2439
      %v3135 = vmul.f32 %v2919, %v2444
      %v3136 = vmul.f32 %v2919, %v2447
      %v3137 = vmul.f32 %v2919, %v2452
      %v3138 = vmul.f32 %v2919, %v2455
      %v3139 = vmul.f32 %v2919, %v2460
      %v3140 = vmul.f32 %v2919, %v2463
      %v3141 = vmul.f32 %v2919, %v2468
      %v3142 = vmul.f32 %v2919, %v2471
      %v3143 = vmul.f32 %v2919, %v2476
      %v3144 = vmul.f32 %v2919, %v2479
      %v3145 = vmul.f32 %v2919, %v2484
      %v3146 = vmul.f32 %v2919, %v2487
      %v3147 = vmul.f32 %v2919, %v2492
      %v3148 = vmul.f32 %v2919, %v2495
      %v3149 = vmul.f32 %v2919, %v2500
      %v3150 = vmul.f32 %v2919, %v2503
      %v3151 = vmul.f32 %v2919, %v2508
      %v3152 = vmul.f32 %v2919, %v2511
      %v3153 = vmul.f32 %v2919, %v2516
      %v3154 = vmul.f32 %v2919, %v2519
      %v3155 = vmul.f32 %v2919, %v2524
      %v3156 = vmul.f32 %v2919, %v2527
      %v3157 = vmul.f32 %v2919, %v2532
      %v3158 = vmul.f32 %v2919, %v2535
      %v3159 = vmul.f32 %v2919, %v2540
      %v3160 = vmul.f32 %v2919, %v2543
      %v3161 = vmul.f32 %v2919, %v2548
      %v3162 = vmul.f32 %v2919, %v2551
      %v3163 = vmul.f32 %v2919, %v2556
      %v3164 = vmul.f32 %v2919, %v2559
      %v3165 = vmul.f32 %v2919, %v2564
      %v3166 = vmul.f32 %v2919, %v2567
      %v3167 = vmul.f32 %v2919, %v2572
      %v3168 = vmul.f32 %v2919, %v2575
      %v3169 = vmul.f32 %v2919, %v2580
      %v3170 = vmul.f32 %v2919, %v2583
      %v3171 = vmul.f32 %v2919, %v2588
      %v3172 = vmul.f32 %v2919, %v2591
      %v3173 = vmul.f32 %v2919, %v2596
      %v3174 = vmul.f32 %v2919, %v2599
      %v3175 = vmul.f32 %v2919, %v2604
      %v3176 = vmul.f32 %v2919, %v2607
      %v3177 = vmul.f32 %v2919, %v2612
      %v3178 = vmul.f32 %v2919, %v2615
      %v3179 = vmul.f32 %v2919, %v2620
      %v3180 = vmul.f32 %v2919, %v2623
      %v3181 = vmul.f32 %v2919, %v2628
      %v3182 = vmul.f32 %v2919, %v2631
      %v3183 = vmul.f32 %v2919, %v2636
      %v3184 = vmul.f32 %v2919, %v2639
      %v3185 = vmul.f32 %v2919, %v2644
      %v3186 = vsel %vm2649, %v1588, %v2921
      %v3187 = vsel %vm2650, %v1591, %v2922
      %v3188 = vsel %vm2651, %v1596, %v2923
      %v3189 = vsel %vm2652, %v1599, %v2924
      %v3190 = vsel %vm2653, %v1604, %v2925
      %v3191 = vsel %vm2654, %v1607, %v2926
      %v3192 = vsel %vm2655, %v1612, %v2927
      %v3193 = vsel %vm2656, %v1615, %v2928
      %v3194 = vsel %vm2657, %v1620, %v2929
      %v3195 = vsel %vm2658, %v1623, %v2930
      %v3196 = vsel %vm2659, %v1628, %v2931
      %v3197 = vsel %vm2660, %v1631, %v2932
      %v3198 = vsel %vm2661, %v1636, %v2933
      %v3199 = vsel %vm2662, %v1639, %v2934
      %v3200 = vsel %vm2663, %v1644, %v2935
      %v3201 = vsel %vm2664, %v1647, %v2936
      %v3202 = vsel %vm2665, %v1652, %v2937
      %v3203 = vsel %vm2666, %v1655, %v2938
      %v3204 = vsel %vm2667, %v1660, %v2939
      %v3205 = vsel %vm2668, %v1663, %v2940
      %v3206 = vsel %vm2669, %v1668, %v2941
      %v3207 = vsel %vm2670, %v1671, %v2942
      %v3208 = vsel %vm2671, %v1676, %v2943
      %v3209 = vsel %vm2672, %v1679, %v2944
      %v3210 = vsel %vm2673, %v1684, %v2945
      %v3211 = vsel %vm2674, %v1687, %v2946
      %v3212 = vsel %vm2675, %v1692, %v2947
      %v3213 = vsel %vm2676, %v1695, %v2948
      %v3214 = vsel %vm2677, %v1700, %v2949
      %v3215 = vsel %vm2678, %v1703, %v2950
      %v3216 = vsel %vm2679, %v1708, %v2951
      %v3217 = vsel %vm2680, %v1711, %v2952
      %v3218 = vsel %vm2681, %v1716, %v2953
      %v3219 = vsel %vm2682, %v1719, %v2954
      %v3220 = vsel %vm2683, %v1724, %v2955
      %v3221 = vsel %vm2684, %v1727, %v2956
      %v3222 = vsel %vm2685, %v1732, %v2957
      %v3223 = vsel %vm2686, %v1735, %v2958
      %v3224 = vsel %vm2687, %v1740, %v2959
      %v3225 = vsel %vm2688, %v1743, %v2960
      %v3226 = vsel %vm2689, %v1748, %v2961
      %v3227 = vsel %vm2690, %v1751, %v2962
      %v3228 = vsel %vm2691, %v1756, %v2963
      %v3229 = vsel %vm2692, %v1759, %v2964
      %v3230 = vsel %vm2693, %v1764, %v2965
      %v3231 = vsel %vm2694, %v1767, %v2966
      %v3232 = vsel %vm2695, %v1772, %v2967
      %v3233 = vsel %vm2696, %v1775, %v2968
      %v3234 = vsel %vm2697, %v1780, %v2969
      %v3235 = vsel %vm2698, %v1783, %v2970
      %v3236 = vsel %vm2699, %v1788, %v2971
      %v3237 = vsel %vm2700, %v1791, %v2972
      %v3238 = vsel %vm2701, %v1796, %v2973
      %v3239 = vsel %vm2702, %v1799, %v2974
      %v3240 = vsel %vm2703, %v1804, %v2975
      %v3241 = vsel %vm2704, %v1807, %v2976
      %v3242 = vsel %vm2705, %v1812, %v2977
      %v3243 = vsel %vm2706, %v1815, %v2978
      %v3244 = vsel %vm2707, %v1820, %v2979
      %v3245 = vsel %vm2708, %v1823, %v2980
      %v3246 = vsel %vm2709, %v1828, %v2981
      %v3247 = vsel %vm2710, %v1831, %v2982
      %v3248 = vsel %vm2711, %v1836, %v2983
      %v3249 = vsel %vm2712, %v1839, %v2984
      %v3250 = vsel %vm2713, %v1844, %v2985
      %v3251 = vsel %vm2714, %v1847, %v2986
      %v3252 = vsel %vm2715, %v1852, %v2987
      %v3253 = vsel %vm2716, %v1855, %v2988
      %v3254 = vsel %vm2717, %v1860, %v2989
      %v3255 = vsel %vm2718, %v1863, %v2990
      %v3256 = vsel %vm2719, %v1868, %v2991
      %v3257 = vsel %vm2720, %v1871, %v2992
      %v3258 = vsel %vm2721, %v1876, %v2993
      %v3259 = vsel %vm2722, %v1879, %v2994
      %v3260 = vsel %vm2723, %v1884, %v2995
      %v3261 = vsel %vm2724, %v1887, %v2996
      %v3262 = vsel %vm2725, %v1892, %v2997
      %v3263 = vsel %vm2726, %v1895, %v2998
      %v3264 = vsel %vm2727, %v1900, %v2999
      %v3265 = vsel %vm2728, %v1903, %v3000
      %v3266 = vsel %vm2729, %v1908, %v3001
      %v3267 = vsel %vm2730, %v1911, %v3002
      %v3268 = vsel %vm2731, %v1916, %v3003
      %v3269 = vsel %vm2732, %v1919, %v3004
      %v3270 = vsel %vm2733, %v1924, %v3005
      %v3271 = vsel %vm2734, %v1927, %v3006
      %v3272 = vsel %vm2735, %v1932, %v3007
      %v3273 = vsel %vm2736, %v1935, %v3008
      %v3274 = vsel %vm2737, %v1940, %v3009
      %v3275 = vsel %vm2738, %v1943, %v3010
      %v3276 = vsel %vm2739, %v1948, %v3011
      %v3277 = vsel %vm2740, %v1951, %v3012
      %v3278 = vsel %vm2741, %v1956, %v3013
      %v3279 = vsel %vm2742, %v1959, %v3014
      %v3280 = vsel %vm2743, %v1964, %v3015
      %v3281 = vsel %vm2744, %v1967, %v3016
      %v3282 = vsel %vm2745, %v1972, %v3017
      %v3283 = vsel %vm2746, %v1975, %v3018
      %v3284 = vsel %vm2747, %v1980, %v3019
      %v3285 = vsel %vm2748, %v1983, %v3020
      %v3286 = vsel %vm2749, %v1988, %v3021
      %v3287 = vsel %vm2750, %v1991, %v3022
      %v3288 = vsel %vm2751, %v1996, %v3023
      %v3289 = vsel %vm2752, %v1999, %v3024
      %v3290 = vsel %vm2753, %v2004, %v3025
      %v3291 = vsel %vm2754, %v2007, %v3026
      %v3292 = vsel %vm2755, %v2012, %v3027
      %v3293 = vsel %vm2756, %v2015, %v3028
      %v3294 = vsel %vm2757, %v2020, %v3029
      %v3295 = vsel %vm2758, %v2023, %v3030
      %v3296 = vsel %vm2759, %v2028, %v3031
      %v3297 = vsel %vm2760, %v2031, %v3032
      %v3298 = vsel %vm2761, %v2036, %v3033
      %v3299 = vsel %vm2762, %v2039, %v3034
      %v3300 = vsel %vm2763, %v2044, %v3035
      %v3301 = vsel %vm2764, %v2047, %v3036
      %v3302 = vsel %vm2765, %v2052, %v3037
      %v3303 = vsel %vm2766, %v2055, %v3038
      %v3304 = vsel %vm2767, %v2060, %v3039
      %v3305 = vsel %vm2768, %v2063, %v3040
      %v3306 = vsel %vm2769, %v2068, %v3041
      %v3307 = vsel %vm2770, %v2071, %v3042
      %v3308 = vsel %vm2771, %v2076, %v3043
      %v3309 = vsel %vm2772, %v2079, %v3044
      %v3310 = vsel %vm2773, %v2084, %v3045
      %v3311 = vsel %vm2774, %v2087, %v3046
      %v3312 = vsel %vm2775, %v2092, %v3047
      %v3313 = vsel %vm2776, %v2095, %v3048
      %v3314 = vsel %vm2777, %v2100, %v3049
      %v3315 = vsel %vm2778, %v2103, %v3050
      %v3316 = vsel %vm2779, %v2108, %v3051
      %v3317 = vsel %vm2780, %v2111, %v3052
      %v3318 = vsel %vm2781, %v2116, %v3053
      %v3319 = vsel %vm2782, %v2119, %v3054
      %v3320 = vsel %vm2783, %v2124, %v3055
      %v3321 = vsel %vm2784, %v2127, %v3056
      %v3322 = vsel %vm2785, %v2132, %v3057
      %v3323 = vsel %vm2786, %v2135, %v3058
      %v3324 = vsel %vm2787, %v2140, %v3059
      %v3325 = vsel %vm2788, %v2143, %v3060
      %v3326 = vsel %vm2789, %v2148, %v3061
      %v3327 = vsel %vm2790, %v2151, %v3062
      %v3328 = vsel %vm2791, %v2156, %v3063
      %v3329 = vsel %vm2792, %v2159, %v3064
      %v3330 = vsel %vm2793, %v2164, %v3065
      %v3331 = vsel %vm2794, %v2167, %v3066
      %v3332 = vsel %vm2795, %v2172, %v3067
      %v3333 = vsel %vm2796, %v2175, %v3068
      %v3334 = vsel %vm2797, %v2180, %v3069
      %v3335 = vsel %vm2798, %v2183, %v3070
      %v3336 = vsel %vm2799, %v2188, %v3071
      %v3337 = vsel %vm2800, %v2191, %v3072
      %v3338 = vsel %vm2801, %v2196, %v3073
      %v3339 = vsel %vm2802, %v2199, %v3074
      %v3340 = vsel %vm2803, %v2204, %v3075
      %v3341 = vsel %vm2804, %v2207, %v3076
      %v3342 = vsel %vm2805, %v2212, %v3077
      %v3343 = vsel %vm2806, %v2215, %v3078
      %v3344 = vsel %vm2807, %v2220, %v3079
      %v3345 = vsel %vm2808, %v2223, %v3080
      %v3346 = vsel %vm2809, %v2228, %v3081
      %v3347 = vsel %vm2810, %v2231, %v3082
      %v3348 = vsel %vm2811, %v2236, %v3083
      %v3349 = vsel %vm2812, %v2239, %v3084
      %v3350 = vsel %vm2813, %v2244, %v3085
      %v3351 = vsel %vm2814, %v2247, %v3086
      %v3352 = vsel %vm2815, %v2252, %v3087
      %v3353 = vsel %vm2816, %v2255, %v3088
      %v3354 = vsel %vm2817, %v2260, %v3089
      %v3355 = vsel %vm2818, %v2263, %v3090
      %v3356 = vsel %vm2819, %v2268, %v3091
      %v3357 = vsel %vm2820, %v2271, %v3092
      %v3358 = vsel %vm2821, %v2276, %v3093
      %v3359 = vsel %vm2822, %v2279, %v3094
      %v3360 = vsel %vm2823, %v2284, %v3095
      %v3361 = vsel %vm2824, %v2287, %v3096
      %v3362 = vsel %vm2825, %v2292, %v3097
      %v3363 = vsel %vm2826, %v2295, %v3098
      %v3364 = vsel %vm2827, %v2300, %v3099
      %v3365 = vsel %vm2828, %v2303, %v3100
      %v3366 = vsel %vm2829, %v2308, %v3101
      %v3367 = vsel %vm2830, %v2311, %v3102
      %v3368 = vsel %vm2831, %v2316, %v3103
      %v3369 = vsel %vm2832, %v2319, %v3104
      %v3370 = vsel %vm2833, %v2324, %v3105
      %v3371 = vsel %vm2834, %v2327, %v3106
      %v3372 = vsel %vm2835, %v2332, %v3107
      %v3373 = vsel %vm2836, %v2335, %v3108
      %v3374 = vsel %vm2837, %v2340, %v3109
      %v3375 = vsel %vm2838, %v2343, %v3110
      %v3376 = vsel %vm2839, %v2348, %v3111
      %v3377 = vsel %vm2840, %v2351, %v3112
      %v3378 = vsel %vm2841, %v2356, %v3113
      %v3379 = vsel %vm2842, %v2359, %v3114
      %v3380 = vsel %vm2843, %v2364, %v3115
      %v3381 = vsel %vm2844, %v2367, %v3116
      %v3382 = vsel %vm2845, %v2372, %v3117
      %v3383 = vsel %vm2846, %v2375, %v3118
      %v3384 = vsel %vm2847, %v2380, %v3119
      %v3385 = vsel %vm2848, %v2383, %v3120
      %v3386 = vsel %vm2849, %v2388, %v3121
      %v3387 = vsel %vm2850, %v2391, %v3122
      %v3388 = vsel %vm2851, %v2396, %v3123
      %v3389 = vsel %vm2852, %v2399, %v3124
      %v3390 = vsel %vm2853, %v2404, %v3125
      %v3391 = vsel %vm2854, %v2407, %v3126
      %v3392 = vsel %vm2855, %v2412, %v3127
      %v3393 = vsel %vm2856, %v2415, %v3128
      %v3394 = vsel %vm2857, %v2420, %v3129
      %v3395 = vsel %vm2858, %v2423, %v3130
      %v3396 = vsel %vm2859, %v2428, %v3131
      %v3397 = vsel %vm2860, %v2431, %v3132
      %v3398 = vsel %vm2861, %v2436, %v3133
      %v3399 = vsel %vm2862, %v2439, %v3134
      %v3400 = vsel %vm2863, %v2444, %v3135
      %v3401 = vsel %vm2864, %v2447, %v3136
      %v3402 = vsel %vm2865, %v2452, %v3137
      %v3403 = vsel %vm2866, %v2455, %v3138
      %v3404 = vsel %vm2867, %v2460, %v3139
      %v3405 = vsel %vm2868, %v2463, %v3140
      %v3406 = vsel %vm2869, %v2468, %v3141
      %v3407 = vsel %vm2870, %v2471, %v3142
      %v3408 = vsel %vm2871, %v2476, %v3143
      %v3409 = vsel %vm2872, %v2479, %v3144
      %v3410 = vsel %vm2873, %v2484, %v3145
      %v3411 = vsel %vm2874, %v2487, %v3146
      %v3412 = vsel %vm2875, %v2492, %v3147
      %v3413 = vsel %vm2876, %v2495, %v3148
      %v3414 = vsel %vm2877, %v2500, %v3149
      %v3415 = vsel %vm2878, %v2503, %v3150
      %v3416 = vsel %vm2879, %v2508, %v3151
      %v3417 = vsel %vm2880, %v2511, %v3152
      %v3418 = vsel %vm2881, %v2516, %v3153
      %v3419 = vsel %vm2882, %v2519, %v3154
      %v3420 = vsel %vm2883, %v2524, %v3155
      %v3421 = vsel %vm2884, %v2527, %v3156
      %v3422 = vsel %vm2885, %v2532, %v3157
      %v3423 = vsel %vm2886, %v2535, %v3158
      %v3424 = vsel %vm2887, %v2540, %v3159
      %v3425 = vsel %vm2888, %v2543, %v3160
      %v3426 = vsel %vm2889, %v2548, %v3161
      %v3427 = vsel %vm2890, %v2551, %v3162
      %v3428 = vsel %vm2891, %v2556, %v3163
      %v3429 = vsel %vm2892, %v2559, %v3164
      %v3430 = vsel %vm2893, %v2564, %v3165
      %v3431 = vsel %vm2894, %v2567, %v3166
      %v3432 = vsel %vm2895, %v2572, %v3167
      %v3433 = vsel %vm2896, %v2575, %v3168
      %v3434 = vsel %vm2897, %v2580, %v3169
      %v3435 = vsel %vm2898, %v2583, %v3170
      %v3436 = vsel %vm2899, %v2588, %v3171
      %v3437 = vsel %vm2900, %v2591, %v3172
      %v3438 = vsel %vm2901, %v2596, %v3173
      %v3439 = vsel %vm2902, %v2599, %v3174
      %v3440 = vsel %vm2903, %v2604, %v3175
      %v3441 = vsel %vm2904, %v2607, %v3176
      %v3442 = vsel %vm2905, %v2612, %v3177
      %v3443 = vsel %vm2906, %v2615, %v3178
      %v3444 = vsel %vm2907, %v2620, %v3179
      %v3445 = vsel %vm2908, %v2623, %v3180
      %v3446 = vsel %vm2909, %v2628, %v3181
      %v3447 = vsel %vm2910, %v2631, %v3182
      %v3448 = vsel %vm2911, %v2636, %v3183
      %v3449 = vsel %vm2912, %v2639, %v3184
      %v3450 = vsel %vm2913, %v2644, %v3185
      %v3451 = vpack.c.bf16 %v3187, %v3186
      %v3452 = vpack.c.bf16 %v3189, %v3188
      %v3453 = vpack.c.bf16 %v3191, %v3190
      %v3454 = vpack.c.bf16 %v3193, %v3192
      %v3455 = vpack.c.bf16 %v3195, %v3194
      %v3456 = vpack.c.bf16 %v3197, %v3196
      %v3457 = vpack.c.bf16 %v3199, %v3198
      %v3458 = vpack.c.bf16 %v3201, %v3200
      %v3459 = vpack.c.bf16 %v3203, %v3202
      %v3460 = vpack.c.bf16 %v3205, %v3204
      %v3461 = vpack.c.bf16 %v3207, %v3206
      %v3462 = vpack.c.bf16 %v3209, %v3208
      %v3463 = vpack.c.bf16 %v3211, %v3210
      %v3464 = vpack.c.bf16 %v3213, %v3212
      %v3465 = vpack.c.bf16 %v3215, %v3214
      %v3466 = vpack.c.bf16 %v3217, %v3216
      %v3467 = vpack.c.bf16 %v3219, %v3218
      %v3468 = vpack.c.bf16 %v3221, %v3220
      %v3469 = vpack.c.bf16 %v3223, %v3222
      %v3470 = vpack.c.bf16 %v3225, %v3224
      %v3471 = vpack.c.bf16 %v3227, %v3226
      %v3472 = vpack.c.bf16 %v3229, %v3228
      %v3473 = vpack.c.bf16 %v3231, %v3230
      %v3474 = vpack.c.bf16 %v3233, %v3232
      %v3475 = vpack.c.bf16 %v3235, %v3234
      %v3476 = vpack.c.bf16 %v3237, %v3236
      %v3477 = vpack.c.bf16 %v3239, %v3238
      %v3478 = vpack.c.bf16 %v3241, %v3240
      %v3479 = vpack.c.bf16 %v3243, %v3242
      %v3480 = vpack.c.bf16 %v3245, %v3244
      %v3481 = vpack.c.bf16 %v3247, %v3246
      %v3482 = vpack.c.bf16 %v3249, %v3248
      %v3483 = vpack.c.bf16 %v3251, %v3250
      %v3484 = vpack.c.bf16 %v3253, %v3252
      %v3485 = vpack.c.bf16 %v3255, %v3254
      %v3486 = vpack.c.bf16 %v3257, %v3256
      %v3487 = vpack.c.bf16 %v3259, %v3258
      %v3488 = vpack.c.bf16 %v3261, %v3260
      %v3489 = vpack.c.bf16 %v3263, %v3262
      %v3490 = vpack.c.bf16 %v3265, %v3264
      %v3491 = vpack.c.bf16 %v3267, %v3266
      %v3492 = vpack.c.bf16 %v3269, %v3268
      %v3493 = vpack.c.bf16 %v3271, %v3270
      %v3494 = vpack.c.bf16 %v3273, %v3272
      %v3495 = vpack.c.bf16 %v3275, %v3274
      %v3496 = vpack.c.bf16 %v3277, %v3276
      %v3497 = vpack.c.bf16 %v3279, %v3278
      %v3498 = vpack.c.bf16 %v3281, %v3280
      %v3499 = vpack.c.bf16 %v3283, %v3282
      %v3500 = vpack.c.bf16 %v3285, %v3284
      %v3501 = vpack.c.bf16 %v3287, %v3286
      %v3502 = vpack.c.bf16 %v3289, %v3288
      %v3503 = vpack.c.bf16 %v3291, %v3290
      %v3504 = vpack.c.bf16 %v3293, %v3292
      %v3505 = vpack.c.bf16 %v3295, %v3294
      %v3506 = vpack.c.bf16 %v3297, %v3296
      %v3507 = vpack.c.bf16 %v3299, %v3298
      %v3508 = vpack.c.bf16 %v3301, %v3300
      %v3509 = vpack.c.bf16 %v3303, %v3302
      %v3510 = vpack.c.bf16 %v3305, %v3304
      %v3511 = vpack.c.bf16 %v3307, %v3306
      %v3512 = vpack.c.bf16 %v3309, %v3308
      %v3513 = vpack.c.bf16 %v3311, %v3310
      %v3514 = vpack.c.bf16 %v3313, %v3312
      %v3515 = vpack.c.bf16 %v3315, %v3314
      %v3516 = vpack.c.bf16 %v3317, %v3316
      %v3517 = vpack.c.bf16 %v3319, %v3318
      %v3518 = vpack.c.bf16 %v3321, %v3320
      %v3519 = vpack.c.bf16 %v3323, %v3322
      %v3520 = vpack.c.bf16 %v3325, %v3324
      %v3521 = vpack.c.bf16 %v3327, %v3326
      %v3522 = vpack.c.bf16 %v3329, %v3328
      %v3523 = vpack.c.bf16 %v3331, %v3330
      %v3524 = vpack.c.bf16 %v3333, %v3332
      %v3525 = vpack.c.bf16 %v3335, %v3334
      %v3526 = vpack.c.bf16 %v3337, %v3336
      %v3527 = vpack.c.bf16 %v3339, %v3338
      %v3528 = vpack.c.bf16 %v3341, %v3340
      %v3529 = vpack.c.bf16 %v3343, %v3342
      %v3530 = vpack.c.bf16 %v3345, %v3344
      %v3531 = vpack.c.bf16 %v3347, %v3346
      %v3532 = vpack.c.bf16 %v3349, %v3348
      %v3533 = vpack.c.bf16 %v3351, %v3350
      %v3534 = vpack.c.bf16 %v3353, %v3352
      %v3535 = vpack.c.bf16 %v3355, %v3354
      %v3536 = vpack.c.bf16 %v3357, %v3356
      %v3537 = vpack.c.bf16 %v3359, %v3358
      %v3538 = vpack.c.bf16 %v3361, %v3360
      %v3539 = vpack.c.bf16 %v3363, %v3362
      %v3540 = vpack.c.bf16 %v3365, %v3364
      %v3541 = vpack.c.bf16 %v3367, %v3366
      %v3542 = vpack.c.bf16 %v3369, %v3368
      %v3543 = vpack.c.bf16 %v3371, %v3370
      %v3544 = vpack.c.bf16 %v3373, %v3372
      %v3545 = vpack.c.bf16 %v3375, %v3374
      %v3546 = vpack.c.bf16 %v3377, %v3376
      %v3547 = vpack.c.bf16 %v3379, %v3378
      %v3548 = vpack.c.bf16 %v3381, %v3380
      %v3549 = vpack.c.bf16 %v3383, %v3382
      %v3550 = vpack.c.bf16 %v3385, %v3384
      %v3551 = vpack.c.bf16 %v3387, %v3386
      %v3552 = vpack.c.bf16 %v3389, %v3388
      %v3553 = vpack.c.bf16 %v3391, %v3390
      %v3554 = vpack.c.bf16 %v3393, %v3392
      %v3555 = vpack.c.bf16 %v3395, %v3394
      %v3556 = vpack.c.bf16 %v3397, %v3396
      %v3557 = vpack.c.bf16 %v3399, %v3398
      %v3558 = vpack.c.bf16 %v3401, %v3400
      %v3559 = vpack.c.bf16 %v3403, %v3402
      %v3560 = vpack.c.bf16 %v3405, %v3404
      %v3561 = vpack.c.bf16 %v3407, %v3406
      %v3562 = vpack.c.bf16 %v3409, %v3408
      %v3563 = vpack.c.bf16 %v3411, %v3410
      %v3564 = vpack.c.bf16 %v3413, %v3412
      %v3565 = vpack.c.bf16 %v3415, %v3414
      %v3566 = vpack.c.bf16 %v3417, %v3416
      %v3567 = vpack.c.bf16 %v3419, %v3418
      %v3568 = vpack.c.bf16 %v3421, %v3420
      %v3569 = vpack.c.bf16 %v3423, %v3422
      %v3570 = vpack.c.bf16 %v3425, %v3424
      %v3571 = vpack.c.bf16 %v3427, %v3426
      %v3572 = vpack.c.bf16 %v3429, %v3428
      %v3573 = vpack.c.bf16 %v3431, %v3430
      %v3574 = vpack.c.bf16 %v3433, %v3432
      %v3575 = vpack.c.bf16 %v3435, %v3434
      %v3576 = vpack.c.bf16 %v3437, %v3436
      %v3577 = vpack.c.bf16 %v3439, %v3438
      %v3578 = vpack.c.bf16 %v3441, %v3440
      %v3579 = vpack.c.bf16 %v3443, %v3442
      %v3580 = vpack.c.bf16 %v3445, %v3444
      %v3581 = vpack.c.bf16 %v3447, %v3446
      %v3582 = vpack.c.bf16 %v3449, %v3448
      %v3583 = vpack.c.bf16 %v3450, %v3450
      %v3717 = vunpack.c.l.b16 %v3451
      %v3718 = vunpack.c.h.b16 %v3451
      %v3719 = vunpack.c.l.b16 %v3452
      %v3720 = vunpack.c.h.b16 %v3452
      %v3721 = vunpack.c.l.b16 %v3453
      %v3722 = vunpack.c.h.b16 %v3453
      %v3723 = vunpack.c.l.b16 %v3454
      %v3724 = vunpack.c.h.b16 %v3454
      %v3725 = vunpack.c.l.b16 %v3455
      %v3726 = vunpack.c.h.b16 %v3455
      %v3727 = vunpack.c.l.b16 %v3456
      %v3728 = vunpack.c.h.b16 %v3456
      %v3729 = vunpack.c.l.b16 %v3457
      %v3730 = vunpack.c.h.b16 %v3457
      %v3731 = vunpack.c.l.b16 %v3458
      %v3732 = vunpack.c.h.b16 %v3458
      %v3733 = vunpack.c.l.b16 %v3459
      %v3734 = vunpack.c.h.b16 %v3459
      %v3735 = vunpack.c.l.b16 %v3460
      %v3736 = vunpack.c.h.b16 %v3460
      %v3737 = vunpack.c.l.b16 %v3461
      %v3738 = vunpack.c.h.b16 %v3461
      %v3739 = vunpack.c.l.b16 %v3462
      %v3740 = vunpack.c.h.b16 %v3462
      %v3741 = vunpack.c.l.b16 %v3463
      %v3742 = vunpack.c.h.b16 %v3463
      %v3743 = vunpack.c.l.b16 %v3464
      %v3744 = vunpack.c.h.b16 %v3464
      %v3745 = vunpack.c.l.b16 %v3465
      %v3746 = vunpack.c.h.b16 %v3465
      %v3747 = vunpack.c.l.b16 %v3466
      %v3748 = vunpack.c.h.b16 %v3466
      %v3749 = vunpack.c.l.b16 %v3467
      %v3750 = vunpack.c.h.b16 %v3467
      %v3751 = vunpack.c.l.b16 %v3468
      %v3752 = vunpack.c.h.b16 %v3468
      %v3753 = vunpack.c.l.b16 %v3469
      %v3754 = vunpack.c.h.b16 %v3469
      %v3755 = vunpack.c.l.b16 %v3470
      %v3756 = vunpack.c.h.b16 %v3470
      %v3757 = vunpack.c.l.b16 %v3471
      %v3758 = vunpack.c.h.b16 %v3471
      %v3759 = vunpack.c.l.b16 %v3472
      %v3760 = vunpack.c.h.b16 %v3472
      %v3761 = vunpack.c.l.b16 %v3473
      %v3762 = vunpack.c.h.b16 %v3473
      %v3763 = vunpack.c.l.b16 %v3474
      %v3764 = vunpack.c.h.b16 %v3474
      %v3765 = vunpack.c.l.b16 %v3475
      %v3766 = vunpack.c.h.b16 %v3475
      %v3767 = vunpack.c.l.b16 %v3476
      %v3768 = vunpack.c.h.b16 %v3476
      %v3769 = vunpack.c.l.b16 %v3477
      %v3770 = vunpack.c.h.b16 %v3477
      %v3771 = vunpack.c.l.b16 %v3478
      %v3772 = vunpack.c.h.b16 %v3478
      %v3773 = vunpack.c.l.b16 %v3479
      %v3774 = vunpack.c.h.b16 %v3479
      %v3775 = vunpack.c.l.b16 %v3480
      %v3776 = vunpack.c.h.b16 %v3480
      %v3777 = vunpack.c.l.b16 %v3481
      %v3778 = vunpack.c.h.b16 %v3481
      %v3779 = vunpack.c.l.b16 %v3482
      %v3780 = vunpack.c.h.b16 %v3482
      %v3781 = vunpack.c.l.b16 %v3483
      %v3782 = vunpack.c.h.b16 %v3483
      %v3783 = vunpack.c.l.b16 %v3484
      %v3784 = vunpack.c.h.b16 %v3484
      %v3785 = vunpack.c.l.b16 %v3485
      %v3786 = vunpack.c.h.b16 %v3485
      %v3787 = vunpack.c.l.b16 %v3486
      %v3788 = vunpack.c.h.b16 %v3486
      %v3789 = vunpack.c.l.b16 %v3487
      %v3790 = vunpack.c.h.b16 %v3487
      %v3791 = vunpack.c.l.b16 %v3488
      %v3792 = vunpack.c.h.b16 %v3488
      %v3793 = vunpack.c.l.b16 %v3489
      %v3794 = vunpack.c.h.b16 %v3489
      %v3795 = vunpack.c.l.b16 %v3490
      %v3796 = vunpack.c.h.b16 %v3490
      %v3797 = vunpack.c.l.b16 %v3491
      %v3798 = vunpack.c.h.b16 %v3491
      %v3799 = vunpack.c.l.b16 %v3492
      %v3800 = vunpack.c.h.b16 %v3492
      %v3801 = vunpack.c.l.b16 %v3493
      %v3802 = vunpack.c.h.b16 %v3493
      %v3803 = vunpack.c.l.b16 %v3494
      %v3804 = vunpack.c.h.b16 %v3494
      %v3805 = vunpack.c.l.b16 %v3495
      %v3806 = vunpack.c.h.b16 %v3495
      %v3807 = vunpack.c.l.b16 %v3496
      %v3808 = vunpack.c.h.b16 %v3496
      %v3809 = vunpack.c.l.b16 %v3497
      %v3810 = vunpack.c.h.b16 %v3497
      %v3811 = vunpack.c.l.b16 %v3498
      %v3812 = vunpack.c.h.b16 %v3498
      %v3813 = vunpack.c.l.b16 %v3499
      %v3814 = vunpack.c.h.b16 %v3499
      %v3815 = vunpack.c.l.b16 %v3500
      %v3816 = vunpack.c.h.b16 %v3500
      %v3817 = vunpack.c.l.b16 %v3501
      %v3818 = vunpack.c.h.b16 %v3501
      %v3819 = vunpack.c.l.b16 %v3502
      %v3820 = vunpack.c.h.b16 %v3502
      %v3821 = vunpack.c.l.b16 %v3503
      %v3822 = vunpack.c.h.b16 %v3503
      %v3823 = vunpack.c.l.b16 %v3504
      %v3824 = vunpack.c.h.b16 %v3504
      %v3825 = vunpack.c.l.b16 %v3505
      %v3826 = vunpack.c.h.b16 %v3505
      %v3827 = vunpack.c.l.b16 %v3506
      %v3828 = vunpack.c.h.b16 %v3506
      %v3829 = vunpack.c.l.b16 %v3507
      %v3830 = vunpack.c.h.b16 %v3507
      %v3831 = vunpack.c.l.b16 %v3508
      %v3832 = vunpack.c.h.b16 %v3508
      %v3833 = vunpack.c.l.b16 %v3509
      %v3834 = vunpack.c.h.b16 %v3509
      %v3835 = vunpack.c.l.b16 %v3510
      %v3836 = vunpack.c.h.b16 %v3510
      %v3837 = vunpack.c.l.b16 %v3511
      %v3838 = vunpack.c.h.b16 %v3511
      %v3839 = vunpack.c.l.b16 %v3512
      %v3840 = vunpack.c.h.b16 %v3512
      %v3841 = vunpack.c.l.b16 %v3513
      %v3842 = vunpack.c.h.b16 %v3513
      %v3843 = vunpack.c.l.b16 %v3514
      %v3844 = vunpack.c.h.b16 %v3514
      %v3845 = vunpack.c.l.b16 %v3515
      %v3846 = vunpack.c.h.b16 %v3515
      %v3847 = vunpack.c.l.b16 %v3516
      %v3848 = vunpack.c.h.b16 %v3516
      %v3849 = vunpack.c.l.b16 %v3517
      %v3850 = vunpack.c.h.b16 %v3517
      %v3851 = vunpack.c.l.b16 %v3518
      %v3852 = vunpack.c.h.b16 %v3518
      %v3853 = vunpack.c.l.b16 %v3519
      %v3854 = vunpack.c.h.b16 %v3519
      %v3855 = vunpack.c.l.b16 %v3520
      %v3856 = vunpack.c.h.b16 %v3520
      %v3857 = vunpack.c.l.b16 %v3521
      %v3858 = vunpack.c.h.b16 %v3521
      %v3859 = vunpack.c.l.b16 %v3522
      %v3860 = vunpack.c.h.b16 %v3522
      %v3861 = vunpack.c.l.b16 %v3523
      %v3862 = vunpack.c.h.b16 %v3523
      %v3863 = vunpack.c.l.b16 %v3524
      %v3864 = vunpack.c.h.b16 %v3524
      %v3865 = vunpack.c.l.b16 %v3525
      %v3866 = vunpack.c.h.b16 %v3525
      %v3867 = vunpack.c.l.b16 %v3526
      %v3868 = vunpack.c.h.b16 %v3526
      %v3869 = vunpack.c.l.b16 %v3527
      %v3870 = vunpack.c.h.b16 %v3527
      %v3871 = vunpack.c.l.b16 %v3528
      %v3872 = vunpack.c.h.b16 %v3528
      %v3873 = vunpack.c.l.b16 %v3529
      %v3874 = vunpack.c.h.b16 %v3529
      %v3875 = vunpack.c.l.b16 %v3530
      %v3876 = vunpack.c.h.b16 %v3530
      %v3877 = vunpack.c.l.b16 %v3531
      %v3878 = vunpack.c.h.b16 %v3531
      %v3879 = vunpack.c.l.b16 %v3532
      %v3880 = vunpack.c.h.b16 %v3532
      %v3881 = vunpack.c.l.b16 %v3533
      %v3882 = vunpack.c.h.b16 %v3533
      %v3883 = vunpack.c.l.b16 %v3534
      %v3884 = vunpack.c.h.b16 %v3534
      %v3885 = vunpack.c.l.b16 %v3535
      %v3886 = vunpack.c.h.b16 %v3535
      %v3887 = vunpack.c.l.b16 %v3536
      %v3888 = vunpack.c.h.b16 %v3536
      %v3889 = vunpack.c.l.b16 %v3537
      %v3890 = vunpack.c.h.b16 %v3537
      %v3891 = vunpack.c.l.b16 %v3538
      %v3892 = vunpack.c.h.b16 %v3538
      %v3893 = vunpack.c.l.b16 %v3539
      %v3894 = vunpack.c.h.b16 %v3539
      %v3895 = vunpack.c.l.b16 %v3540
      %v3896 = vunpack.c.h.b16 %v3540
      %v3897 = vunpack.c.l.b16 %v3541
      %v3898 = vunpack.c.h.b16 %v3541
      %v3899 = vunpack.c.l.b16 %v3542
      %v3900 = vunpack.c.h.b16 %v3542
      %v3901 = vunpack.c.l.b16 %v3543
      %v3902 = vunpack.c.h.b16 %v3543
      %v3903 = vunpack.c.l.b16 %v3544
      %v3904 = vunpack.c.h.b16 %v3544
      %v3905 = vunpack.c.l.b16 %v3545
      %v3906 = vunpack.c.h.b16 %v3545
      %v3907 = vunpack.c.l.b16 %v3546
      %v3908 = vunpack.c.h.b16 %v3546
      %v3909 = vunpack.c.l.b16 %v3547
      %v3910 = vunpack.c.h.b16 %v3547
      %v3911 = vunpack.c.l.b16 %v3548
      %v3912 = vunpack.c.h.b16 %v3548
      %v3913 = vunpack.c.l.b16 %v3549
      %v3914 = vunpack.c.h.b16 %v3549
      %v3915 = vunpack.c.l.b16 %v3550
      %v3916 = vunpack.c.h.b16 %v3550
      %v3917 = vunpack.c.l.b16 %v3551
      %v3918 = vunpack.c.h.b16 %v3551
      %v3919 = vunpack.c.l.b16 %v3552
      %v3920 = vunpack.c.h.b16 %v3552
      %v3921 = vunpack.c.l.b16 %v3553
      %v3922 = vunpack.c.h.b16 %v3553
      %v3923 = vunpack.c.l.b16 %v3554
      %v3924 = vunpack.c.h.b16 %v3554
      %v3925 = vunpack.c.l.b16 %v3555
      %v3926 = vunpack.c.h.b16 %v3555
      %v3927 = vunpack.c.l.b16 %v3556
      %v3928 = vunpack.c.h.b16 %v3556
      %v3929 = vunpack.c.l.b16 %v3557
      %v3930 = vunpack.c.h.b16 %v3557
      %v3931 = vunpack.c.l.b16 %v3558
      %v3932 = vunpack.c.h.b16 %v3558
      %v3933 = vunpack.c.l.b16 %v3559
      %v3934 = vunpack.c.h.b16 %v3559
      %v3935 = vunpack.c.l.b16 %v3560
      %v3936 = vunpack.c.h.b16 %v3560
      %v3937 = vunpack.c.l.b16 %v3561
      %v3938 = vunpack.c.h.b16 %v3561
      %v3939 = vunpack.c.l.b16 %v3562
      %v3940 = vunpack.c.h.b16 %v3562
      %v3941 = vunpack.c.l.b16 %v3563
      %v3942 = vunpack.c.h.b16 %v3563
      %v3943 = vunpack.c.l.b16 %v3564
      %v3944 = vunpack.c.h.b16 %v3564
      %v3945 = vunpack.c.l.b16 %v3565
      %v3946 = vunpack.c.h.b16 %v3565
      %v3947 = vunpack.c.l.b16 %v3566
      %v3948 = vunpack.c.h.b16 %v3566
      %v3949 = vunpack.c.l.b16 %v3567
      %v3950 = vunpack.c.h.b16 %v3567
      %v3951 = vunpack.c.l.b16 %v3568
      %v3952 = vunpack.c.h.b16 %v3568
      %v3953 = vunpack.c.l.b16 %v3569
      %v3954 = vunpack.c.h.b16 %v3569
      %v3955 = vunpack.c.l.b16 %v3570
      %v3956 = vunpack.c.h.b16 %v3570
      %v3957 = vunpack.c.l.b16 %v3571
      %v3958 = vunpack.c.h.b16 %v3571
      %v3959 = vunpack.c.l.b16 %v3572
      %v3960 = vunpack.c.h.b16 %v3572
      %v3961 = vunpack.c.l.b16 %v3573
      %v3962 = vunpack.c.h.b16 %v3573
      %v3963 = vunpack.c.l.b16 %v3574
      %v3964 = vunpack.c.h.b16 %v3574
      %v3965 = vunpack.c.l.b16 %v3575
      %v3966 = vunpack.c.h.b16 %v3575
      %v3967 = vunpack.c.l.b16 %v3576
      %v3968 = vunpack.c.h.b16 %v3576
      %v3969 = vunpack.c.l.b16 %v3577
      %v3970 = vunpack.c.h.b16 %v3577
      %v3971 = vunpack.c.l.b16 %v3578
      %v3972 = vunpack.c.h.b16 %v3578
      %v3973 = vunpack.c.l.b16 %v3579
      %v3974 = vunpack.c.h.b16 %v3579
      %v3975 = vunpack.c.l.b16 %v3580
      %v3976 = vunpack.c.h.b16 %v3580
      %v3977 = vunpack.c.l.b16 %v3581
      %v3978 = vunpack.c.h.b16 %v3581
      %v3979 = vunpack.c.l.b16 %v3582
      %v3980 = vunpack.c.h.b16 %v3582
      %v3981 = vunpack.c.l.b16 %v3583
      %v3982 = vpack.c.b16 %v3717, %v3717
      %v3983 = vpack.c.b16 %v3718, %v3718
      %v3984 = vpack.c.b16 %v3719, %v3719
      %v3985 = vpack.c.b16 %v3720, %v3720
      %v3986 = vpack.c.b16 %v3721, %v3721
      %v3987 = vpack.c.b16 %v3722, %v3722
      %v3988 = vpack.c.b16 %v3723, %v3723
      %v3989 = vpack.c.b16 %v3724, %v3724
      %v3990 = vpack.c.b16 %v3725, %v3725
      %v3991 = vpack.c.b16 %v3726, %v3726
      %v3992 = vpack.c.b16 %v3727, %v3727
      %v3993 = vpack.c.b16 %v3728, %v3728
      %v3994 = vpack.c.b16 %v3729, %v3729
      %v3995 = vpack.c.b16 %v3730, %v3730
      %v3996 = vpack.c.b16 %v3731, %v3731
      %v3997 = vpack.c.b16 %v3732, %v3732
      %v3998 = vpack.c.b16 %v3733, %v3733
      %v3999 = vpack.c.b16 %v3734, %v3734
      %v4000 = vpack.c.b16 %v3735, %v3735
      %v4001 = vpack.c.b16 %v3736, %v3736
      %v4002 = vpack.c.b16 %v3737, %v3737
      %v4003 = vpack.c.b16 %v3738, %v3738
      %v4004 = vpack.c.b16 %v3739, %v3739
      %v4005 = vpack.c.b16 %v3740, %v3740
      %v4006 = vpack.c.b16 %v3741, %v3741
      %v4007 = vpack.c.b16 %v3742, %v3742
      %v4008 = vpack.c.b16 %v3743, %v3743
      %v4009 = vpack.c.b16 %v3744, %v3744
      %v4010 = vpack.c.b16 %v3745, %v3745
      %v4011 = vpack.c.b16 %v3746, %v3746
      %v4012 = vpack.c.b16 %v3747, %v3747
      %v4013 = vpack.c.b16 %v3748, %v3748
      %v4014 = vpack.c.b16 %v3749, %v3749
      %v4015 = vpack.c.b16 %v3750, %v3750
      %v4016 = vpack.c.b16 %v3751, %v3751
      %v4017 = vpack.c.b16 %v3752, %v3752
      %v4018 = vpack.c.b16 %v3753, %v3753
      %v4019 = vpack.c.b16 %v3754, %v3754
      %v4020 = vpack.c.b16 %v3755, %v3755
      %v4021 = vpack.c.b16 %v3756, %v3756
      %v4022 = vpack.c.b16 %v3757, %v3757
      %v4023 = vpack.c.b16 %v3758, %v3758
      %v4024 = vpack.c.b16 %v3759, %v3759
      %v4025 = vpack.c.b16 %v3760, %v3760
      %v4026 = vpack.c.b16 %v3761, %v3761
      %v4027 = vpack.c.b16 %v3762, %v3762
      %v4028 = vpack.c.b16 %v3763, %v3763
      %v4029 = vpack.c.b16 %v3764, %v3764
      %v4030 = vpack.c.b16 %v3765, %v3765
      %v4031 = vpack.c.b16 %v3766, %v3766
      %v4032 = vpack.c.b16 %v3767, %v3767
      %v4033 = vpack.c.b16 %v3768, %v3768
      %v4034 = vpack.c.b16 %v3769, %v3769
      %v4035 = vpack.c.b16 %v3770, %v3770
      %v4036 = vpack.c.b16 %v3771, %v3771
      %v4037 = vpack.c.b16 %v3772, %v3772
      %v4038 = vpack.c.b16 %v3773, %v3773
      %v4039 = vpack.c.b16 %v3774, %v3774
      %v4040 = vpack.c.b16 %v3775, %v3775
      %v4041 = vpack.c.b16 %v3776, %v3776
      %v4042 = vpack.c.b16 %v3777, %v3777
      %v4043 = vpack.c.b16 %v3778, %v3778
      %v4044 = vpack.c.b16 %v3779, %v3779
      %v4045 = vpack.c.b16 %v3780, %v3780
      %v4046 = vpack.c.b16 %v3781, %v3781
      %v4047 = vpack.c.b16 %v3782, %v3782
      %v4048 = vpack.c.b16 %v3783, %v3783
      %v4049 = vpack.c.b16 %v3784, %v3784
      %v4050 = vpack.c.b16 %v3785, %v3785
      %v4051 = vpack.c.b16 %v3786, %v3786
      %v4052 = vpack.c.b16 %v3787, %v3787
      %v4053 = vpack.c.b16 %v3788, %v3788
      %v4054 = vpack.c.b16 %v3789, %v3789
      %v4055 = vpack.c.b16 %v3790, %v3790
      %v4056 = vpack.c.b16 %v3791, %v3791
      %v4057 = vpack.c.b16 %v3792, %v3792
      %v4058 = vpack.c.b16 %v3793, %v3793
      %v4059 = vpack.c.b16 %v3794, %v3794
      %v4060 = vpack.c.b16 %v3795, %v3795
      %v4061 = vpack.c.b16 %v3796, %v3796
      %v4062 = vpack.c.b16 %v3797, %v3797
      %v4063 = vpack.c.b16 %v3798, %v3798
      %v4064 = vpack.c.b16 %v3799, %v3799
      %v4065 = vpack.c.b16 %v3800, %v3800
      %v4066 = vpack.c.b16 %v3801, %v3801
      %v4067 = vpack.c.b16 %v3802, %v3802
      %v4068 = vpack.c.b16 %v3803, %v3803
      %v4069 = vpack.c.b16 %v3804, %v3804
      %v4070 = vpack.c.b16 %v3805, %v3805
      %v4071 = vpack.c.b16 %v3806, %v3806
      %v4072 = vpack.c.b16 %v3807, %v3807
      %v4073 = vpack.c.b16 %v3808, %v3808
      %v4074 = vpack.c.b16 %v3809, %v3809
      %v4075 = vpack.c.b16 %v3810, %v3810
      %v4076 = vpack.c.b16 %v3811, %v3811
      %v4077 = vpack.c.b16 %v3812, %v3812
      %v4078 = vpack.c.b16 %v3813, %v3813
      %v4079 = vpack.c.b16 %v3814, %v3814
      %v4080 = vpack.c.b16 %v3815, %v3815
      %v4081 = vpack.c.b16 %v3816, %v3816
      %v4082 = vpack.c.b16 %v3817, %v3817
      %v4083 = vpack.c.b16 %v3818, %v3818
      %v4084 = vpack.c.b16 %v3819, %v3819
      %v4085 = vpack.c.b16 %v3820, %v3820
      %v4086 = vpack.c.b16 %v3821, %v3821
      %v4087 = vpack.c.b16 %v3822, %v3822
      %v4088 = vpack.c.b16 %v3823, %v3823
      %v4089 = vpack.c.b16 %v3824, %v3824
      %v4090 = vpack.c.b16 %v3825, %v3825
      %v4091 = vpack.c.b16 %v3826, %v3826
      %v4092 = vpack.c.b16 %v3827, %v3827
      %v4093 = vpack.c.b16 %v3828, %v3828
      %v4094 = vpack.c.b16 %v3829, %v3829
      %v4095 = vpack.c.b16 %v3830, %v3830
      %v4096 = vpack.c.b16 %v3831, %v3831
      %v4097 = vpack.c.b16 %v3832, %v3832
      %v4098 = vpack.c.b16 %v3833, %v3833
      %v4099 = vpack.c.b16 %v3834, %v3834
      %v4100 = vpack.c.b16 %v3835, %v3835
      %v4101 = vpack.c.b16 %v3836, %v3836
      %v4102 = vpack.c.b16 %v3837, %v3837
      %v4103 = vpack.c.b16 %v3838, %v3838
      %v4104 = vpack.c.b16 %v3839, %v3839
      %v4105 = vpack.c.b16 %v3840, %v3840
      %v4106 = vpack.c.b16 %v3841, %v3841
      %v4107 = vpack.c.b16 %v3842, %v3842
      %v4108 = vpack.c.b16 %v3843, %v3843
      %v4109 = vpack.c.b16 %v3844, %v3844
      %v4110 = vpack.c.b16 %v3845, %v3845
      %v4111 = vpack.c.b16 %v3846, %v3846
      %v4112 = vpack.c.b16 %v3847, %v3847
      %v4113 = vpack.c.b16 %v3848, %v3848
      %v4114 = vpack.c.b16 %v3849, %v3849
      %v4115 = vpack.c.b16 %v3850, %v3850
      %v4116 = vpack.c.b16 %v3851, %v3851
      %v4117 = vpack.c.b16 %v3852, %v3852
      %v4118 = vpack.c.b16 %v3853, %v3853
      %v4119 = vpack.c.b16 %v3854, %v3854
      %v4120 = vpack.c.b16 %v3855, %v3855
      %v4121 = vpack.c.b16 %v3856, %v3856
      %v4122 = vpack.c.b16 %v3857, %v3857
      %v4123 = vpack.c.b16 %v3858, %v3858
      %v4124 = vpack.c.b16 %v3859, %v3859
      %v4125 = vpack.c.b16 %v3860, %v3860
      %v4126 = vpack.c.b16 %v3861, %v3861
      %v4127 = vpack.c.b16 %v3862, %v3862
      %v4128 = vpack.c.b16 %v3863, %v3863
      %v4129 = vpack.c.b16 %v3864, %v3864
      %v4130 = vpack.c.b16 %v3865, %v3865
      %v4131 = vpack.c.b16 %v3866, %v3866
      %v4132 = vpack.c.b16 %v3867, %v3867
      %v4133 = vpack.c.b16 %v3868, %v3868
      %v4134 = vpack.c.b16 %v3869, %v3869
      %v4135 = vpack.c.b16 %v3870, %v3870
      %v4136 = vpack.c.b16 %v3871, %v3871
      %v4137 = vpack.c.b16 %v3872, %v3872
      %v4138 = vpack.c.b16 %v3873, %v3873
      %v4139 = vpack.c.b16 %v3874, %v3874
      %v4140 = vpack.c.b16 %v3875, %v3875
      %v4141 = vpack.c.b16 %v3876, %v3876
      %v4142 = vpack.c.b16 %v3877, %v3877
      %v4143 = vpack.c.b16 %v3878, %v3878
      %v4144 = vpack.c.b16 %v3879, %v3879
      %v4145 = vpack.c.b16 %v3880, %v3880
      %v4146 = vpack.c.b16 %v3881, %v3881
      %v4147 = vpack.c.b16 %v3882, %v3882
      %v4148 = vpack.c.b16 %v3883, %v3883
      %v4149 = vpack.c.b16 %v3884, %v3884
      %v4150 = vpack.c.b16 %v3885, %v3885
      %v4151 = vpack.c.b16 %v3886, %v3886
      %v4152 = vpack.c.b16 %v3887, %v3887
      %v4153 = vpack.c.b16 %v3888, %v3888
      %v4154 = vpack.c.b16 %v3889, %v3889
      %v4155 = vpack.c.b16 %v3890, %v3890
      %v4156 = vpack.c.b16 %v3891, %v3891
      %v4157 = vpack.c.b16 %v3892, %v3892
      %v4158 = vpack.c.b16 %v3893, %v3893
      %v4159 = vpack.c.b16 %v3894, %v3894
      %v4160 = vpack.c.b16 %v3895, %v3895
      %v4161 = vpack.c.b16 %v3896, %v3896
      %v4162 = vpack.c.b16 %v3897, %v3897
      %v4163 = vpack.c.b16 %v3898, %v3898
      %v4164 = vpack.c.b16 %v3899, %v3899
      %v4165 = vpack.c.b16 %v3900, %v3900
      %v4166 = vpack.c.b16 %v3901, %v3901
      %v4167 = vpack.c.b16 %v3902, %v3902
      %v4168 = vpack.c.b16 %v3903, %v3903
      %v4169 = vpack.c.b16 %v3904, %v3904
      %v4170 = vpack.c.b16 %v3905, %v3905
      %v4171 = vpack.c.b16 %v3906, %v3906
      %v4172 = vpack.c.b16 %v3907, %v3907
      %v4173 = vpack.c.b16 %v3908, %v3908
      %v4174 = vpack.c.b16 %v3909, %v3909
      %v4175 = vpack.c.b16 %v3910, %v3910
      %v4176 = vpack.c.b16 %v3911, %v3911
      %v4177 = vpack.c.b16 %v3912, %v3912
      %v4178 = vpack.c.b16 %v3913, %v3913
      %v4179 = vpack.c.b16 %v3914, %v3914
      %v4180 = vpack.c.b16 %v3915, %v3915
      %v4181 = vpack.c.b16 %v3916, %v3916
      %v4182 = vpack.c.b16 %v3917, %v3917
      %v4183 = vpack.c.b16 %v3918, %v3918
      %v4184 = vpack.c.b16 %v3919, %v3919
      %v4185 = vpack.c.b16 %v3920, %v3920
      %v4186 = vpack.c.b16 %v3921, %v3921
      %v4187 = vpack.c.b16 %v3922, %v3922
      %v4188 = vpack.c.b16 %v3923, %v3923
      %v4189 = vpack.c.b16 %v3924, %v3924
      %v4190 = vpack.c.b16 %v3925, %v3925
      %v4191 = vpack.c.b16 %v3926, %v3926
      %v4192 = vpack.c.b16 %v3927, %v3927
      %v4193 = vpack.c.b16 %v3928, %v3928
      %v4194 = vpack.c.b16 %v3929, %v3929
      %v4195 = vpack.c.b16 %v3930, %v3930
      %v4196 = vpack.c.b16 %v3931, %v3931
      %v4197 = vpack.c.b16 %v3932, %v3932
      %v4198 = vpack.c.b16 %v3933, %v3933
      %v4199 = vpack.c.b16 %v3934, %v3934
      %v4200 = vpack.c.b16 %v3935, %v3935
      %v4201 = vpack.c.b16 %v3936, %v3936
      %v4202 = vpack.c.b16 %v3937, %v3937
      %v4203 = vpack.c.b16 %v3938, %v3938
      %v4204 = vpack.c.b16 %v3939, %v3939
      %v4205 = vpack.c.b16 %v3940, %v3940
      %v4206 = vpack.c.b16 %v3941, %v3941
      %v4207 = vpack.c.b16 %v3942, %v3942
      %v4208 = vpack.c.b16 %v3943, %v3943
      %v4209 = vpack.c.b16 %v3944, %v3944
      %v4210 = vpack.c.b16 %v3945, %v3945
      %v4211 = vpack.c.b16 %v3946, %v3946
      %v4212 = vpack.c.b16 %v3947, %v3947
      %v4213 = vpack.c.b16 %v3948, %v3948
      %v4214 = vpack.c.b16 %v3949, %v3949
      %v4215 = vpack.c.b16 %v3950, %v3950
      %v4216 = vpack.c.b16 %v3951, %v3951
      %v4217 = vpack.c.b16 %v3952, %v3952
      %v4218 = vpack.c.b16 %v3953, %v3953
      %v4219 = vpack.c.b16 %v3954, %v3954
      %v4220 = vpack.c.b16 %v3955, %v3955
      %v4221 = vpack.c.b16 %v3956, %v3956
      %v4222 = vpack.c.b16 %v3957, %v3957
      %v4223 = vpack.c.b16 %v3958, %v3958
      %v4224 = vpack.c.b16 %v3959, %v3959
      %v4225 = vpack.c.b16 %v3960, %v3960
      %v4226 = vpack.c.b16 %v3961, %v3961
      %v4227 = vpack.c.b16 %v3962, %v3962
      %v4228 = vpack.c.b16 %v3963, %v3963
      %v4229 = vpack.c.b16 %v3964, %v3964
      %v4230 = vpack.c.b16 %v3965, %v3965
      %v4231 = vpack.c.b16 %v3966, %v3966
      %v4232 = vpack.c.b16 %v3967, %v3967
      %v4233 = vpack.c.b16 %v3968, %v3968
      %v4234 = vpack.c.b16 %v3969, %v3969
      %v4235 = vpack.c.b16 %v3970, %v3970
      %v4236 = vpack.c.b16 %v3971, %v3971
      %v4237 = vpack.c.b16 %v3972, %v3972
      %v4238 = vpack.c.b16 %v3973, %v3973
      %v4239 = vpack.c.b16 %v3974, %v3974
      %v4240 = vpack.c.b16 %v3975, %v3975
      %v4241 = vpack.c.b16 %v3976, %v3976
      %v4242 = vpack.c.b16 %v3977, %v3977
      %v4243 = vpack.c.b16 %v3978, %v3978
      %v4244 = vpack.c.b16 %v3979, %v3979
      %v4245 = vpack.c.b16 %v3980, %v3980
      %v4246 = vpack.c.b16 %v3981, %v3981
      %vm4512 = vcmask 257024
      %4513 = vst.msk [vmem:[%s199] sm:$0xf] %vm4512, %v3982
      %4514 = vst.msk [vmem:[%s199 + $0x4] sm:$0xf] %vm4512, %v3983
      %4515 = vst.msk [vmem:[%s199 + $0x8] sm:$0xf] %vm4512, %v3984
      %4516 = vst.msk [vmem:[%s199 + $0xc] sm:$0xf] %vm4512, %v3985
      %4517 = vst.msk [vmem:[%s199 + $0x10] sm:$0xf] %vm4512, %v3986
      %4518 = vst.msk [vmem:[%s199 + $0x14] sm:$0xf] %vm4512, %v3987
      %4519 = vst.msk [vmem:[%s199 + $0x18] sm:$0xf] %vm4512, %v3988
      %4520 = vst.msk [vmem:[%s199 + $0x1c] sm:$0xf] %vm4512, %v3989
      %4521 = vst.msk [vmem:[%s199 + $0x20] sm:$0xf] %vm4512, %v3990
      %4522 = vst.msk [vmem:[%s199 + $0x24] sm:$0xf] %vm4512, %v3991
      %4523 = vst.msk [vmem:[%s199 + $0x28] sm:$0xf] %vm4512, %v3992
      %4524 = vst.msk [vmem:[%s199 + $0x2c] sm:$0xf] %vm4512, %v3993
      %4525 = vst.msk [vmem:[%s199 + $0x30] sm:$0xf] %vm4512, %v3994
      %4526 = vst.msk [vmem:[%s199 + $0x34] sm:$0xf] %vm4512, %v3995
      %4527 = vst.msk [vmem:[%s199 + $0x38] sm:$0xf] %vm4512, %v3996
      %4528 = vst.msk [vmem:[%s199 + $0x3c] sm:$0xf] %vm4512, %v3997
      %4529 = vst.msk [vmem:[%s199 + $0x40] sm:$0xf] %vm4512, %v3998
      %4530 = vst.msk [vmem:[%s199 + $0x44] sm:$0xf] %vm4512, %v3999
      %4531 = vst.msk [vmem:[%s199 + $0x48] sm:$0xf] %vm4512, %v4000
      %4532 = vst.msk [vmem:[%s199 + $0x4c] sm:$0xf] %vm4512, %v4001
      %4533 = vst.msk [vmem:[%s199 + $0x50] sm:$0xf] %vm4512, %v4002
      %4534 = vst.msk [vmem:[%s199 + $0x54] sm:$0xf] %vm4512, %v4003
      %4535 = vst.msk [vmem:[%s199 + $0x58] sm:$0xf] %vm4512, %v4004
      %4536 = vst.msk [vmem:[%s199 + $0x5c] sm:$0xf] %vm4512, %v4005
      %4537 = vst.msk [vmem:[%s199 + $0x60] sm:$0xf] %vm4512, %v4006
      %4538 = vst.msk [vmem:[%s199 + $0x64] sm:$0xf] %vm4512, %v4007
      %4539 = vst.msk [vmem:[%s199 + $0x68] sm:$0xf] %vm4512, %v4008
      %4540 = vst.msk [vmem:[%s199 + $0x6c] sm:$0xf] %vm4512, %v4009
      %4541 = vst.msk [vmem:[%s199 + $0x70] sm:$0xf] %vm4512, %v4010
      %4542 = vst.msk [vmem:[%s199 + $0x74] sm:$0xf] %vm4512, %v4011
      %4543 = vst.msk [vmem:[%s199 + $0x78] sm:$0xf] %vm4512, %v4012
      %4544 = vst.msk [vmem:[%s199 + $0x7c] sm:$0xf] %vm4512, %v4013
      %4545 = vst.msk [vmem:[%s199 + $0x80] sm:$0xf] %vm4512, %v4014
      %4546 = vst.msk [vmem:[%s199 + $0x84] sm:$0xf] %vm4512, %v4015
      %4547 = vst.msk [vmem:[%s199 + $0x88] sm:$0xf] %vm4512, %v4016
      %4548 = vst.msk [vmem:[%s199 + $0x8c] sm:$0xf] %vm4512, %v4017
      %4549 = vst.msk [vmem:[%s199 + $0x90] sm:$0xf] %vm4512, %v4018
      %4550 = vst.msk [vmem:[%s199 + $0x94] sm:$0xf] %vm4512, %v4019
      %4551 = vst.msk [vmem:[%s199 + $0x98] sm:$0xf] %vm4512, %v4020
      %4552 = vst.msk [vmem:[%s199 + $0x9c] sm:$0xf] %vm4512, %v4021
      %4553 = vst.msk [vmem:[%s199 + $0xa0] sm:$0xf] %vm4512, %v4022
      %4554 = vst.msk [vmem:[%s199 + $0xa4] sm:$0xf] %vm4512, %v4023
      %4555 = vst.msk [vmem:[%s199 + $0xa8] sm:$0xf] %vm4512, %v4024
      %4556 = vst.msk [vmem:[%s199 + $0xac] sm:$0xf] %vm4512, %v4025
      %4557 = vst.msk [vmem:[%s199 + $0xb0] sm:$0xf] %vm4512, %v4026
      %4558 = vst.msk [vmem:[%s199 + $0xb4] sm:$0xf] %vm4512, %v4027
      %4559 = vst.msk [vmem:[%s199 + $0xb8] sm:$0xf] %vm4512, %v4028
      %4560 = vst.msk [vmem:[%s199 + $0xbc] sm:$0xf] %vm4512, %v4029
      %4561 = vst.msk [vmem:[%s199 + $0xc0] sm:$0xf] %vm4512, %v4030
      %4562 = vst.msk [vmem:[%s199 + $0xc4] sm:$0xf] %vm4512, %v4031
      %4563 = vst.msk [vmem:[%s199 + $0xc8] sm:$0xf] %vm4512, %v4032
      %4564 = vst.msk [vmem:[%s199 + $0xcc] sm:$0xf] %vm4512, %v4033
      %4565 = vst.msk [vmem:[%s199 + $0xd0] sm:$0xf] %vm4512, %v4034
      %4566 = vst.msk [vmem:[%s199 + $0xd4] sm:$0xf] %vm4512, %v4035
      %4567 = vst.msk [vmem:[%s199 + $0xd8] sm:$0xf] %vm4512, %v4036
      %4568 = vst.msk [vmem:[%s199 + $0xdc] sm:$0xf] %vm4512, %v4037
      %4569 = vst.msk [vmem:[%s199 + $0xe0] sm:$0xf] %vm4512, %v4038
      %4570 = vst.msk [vmem:[%s199 + $0xe4] sm:$0xf] %vm4512, %v4039
      %4571 = vst.msk [vmem:[%s199 + $0xe8] sm:$0xf] %vm4512, %v4040
      %4572 = vst.msk [vmem:[%s199 + $0xec] sm:$0xf] %vm4512, %v4041
      %4573 = vst.msk [vmem:[%s199 + $0xf0] sm:$0xf] %vm4512, %v4042
      %4574 = vst.msk [vmem:[%s199 + $0xf4] sm:$0xf] %vm4512, %v4043
      %4575 = vst.msk [vmem:[%s199 + $0xf8] sm:$0xf] %vm4512, %v4044
      %4576 = vst.msk [vmem:[%s199 + $0xfc] sm:$0xf] %vm4512, %v4045
      %4577 = vst.msk [vmem:[%s199 + $0x100] sm:$0xf] %vm4512, %v4046
      %4578 = vst.msk [vmem:[%s199 + $0x104] sm:$0xf] %vm4512, %v4047
      %4579 = vst.msk [vmem:[%s199 + $0x108] sm:$0xf] %vm4512, %v4048
      %4580 = vst.msk [vmem:[%s199 + $0x10c] sm:$0xf] %vm4512, %v4049
      %4581 = vst.msk [vmem:[%s199 + $0x110] sm:$0xf] %vm4512, %v4050
      %4582 = vst.msk [vmem:[%s199 + $0x114] sm:$0xf] %vm4512, %v4051
      %4583 = vst.msk [vmem:[%s199 + $0x118] sm:$0xf] %vm4512, %v4052
      %4584 = vst.msk [vmem:[%s199 + $0x11c] sm:$0xf] %vm4512, %v4053
      %4585 = vst.msk [vmem:[%s199 + $0x120] sm:$0xf] %vm4512, %v4054
      %4586 = vst.msk [vmem:[%s199 + $0x124] sm:$0xf] %vm4512, %v4055
      %4587 = vst.msk [vmem:[%s199 + $0x128] sm:$0xf] %vm4512, %v4056
      %4588 = vst.msk [vmem:[%s199 + $0x12c] sm:$0xf] %vm4512, %v4057
      %4589 = vst.msk [vmem:[%s199 + $0x130] sm:$0xf] %vm4512, %v4058
      %4590 = vst.msk [vmem:[%s199 + $0x134] sm:$0xf] %vm4512, %v4059
      %4591 = vst.msk [vmem:[%s199 + $0x138] sm:$0xf] %vm4512, %v4060
      %4592 = vst.msk [vmem:[%s199 + $0x13c] sm:$0xf] %vm4512, %v4061
      %4593 = vst.msk [vmem:[%s199 + $0x140] sm:$0xf] %vm4512, %v4062
      %4594 = vst.msk [vmem:[%s199 + $0x144] sm:$0xf] %vm4512, %v4063
      %4595 = vst.msk [vmem:[%s199 + $0x148] sm:$0xf] %vm4512, %v4064
      %4596 = vst.msk [vmem:[%s199 + $0x14c] sm:$0xf] %vm4512, %v4065
      %4597 = vst.msk [vmem:[%s199 + $0x150] sm:$0xf] %vm4512, %v4066
      %4598 = vst.msk [vmem:[%s199 + $0x154] sm:$0xf] %vm4512, %v4067
      %4599 = vst.msk [vmem:[%s199 + $0x158] sm:$0xf] %vm4512, %v4068
      %4600 = vst.msk [vmem:[%s199 + $0x15c] sm:$0xf] %vm4512, %v4069
      %4601 = vst.msk [vmem:[%s199 + $0x160] sm:$0xf] %vm4512, %v4070
      %4602 = vst.msk [vmem:[%s199 + $0x164] sm:$0xf] %vm4512, %v4071
      %4603 = vst.msk [vmem:[%s199 + $0x168] sm:$0xf] %vm4512, %v4072
      %4604 = vst.msk [vmem:[%s199 + $0x16c] sm:$0xf] %vm4512, %v4073
      %4605 = vst.msk [vmem:[%s199 + $0x170] sm:$0xf] %vm4512, %v4074
      %4606 = vst.msk [vmem:[%s199 + $0x174] sm:$0xf] %vm4512, %v4075
      %4607 = vst.msk [vmem:[%s199 + $0x178] sm:$0xf] %vm4512, %v4076
      %4608 = vst.msk [vmem:[%s199 + $0x17c] sm:$0xf] %vm4512, %v4077
      %4609 = vst.msk [vmem:[%s199 + $0x180] sm:$0xf] %vm4512, %v4078
      %4610 = vst.msk [vmem:[%s199 + $0x184] sm:$0xf] %vm4512, %v4079
      %4611 = vst.msk [vmem:[%s199 + $0x188] sm:$0xf] %vm4512, %v4080
      %4612 = vst.msk [vmem:[%s199 + $0x18c] sm:$0xf] %vm4512, %v4081
      %4613 = vst.msk [vmem:[%s199 + $0x190] sm:$0xf] %vm4512, %v4082
      %4614 = vst.msk [vmem:[%s199 + $0x194] sm:$0xf] %vm4512, %v4083
      %4615 = vst.msk [vmem:[%s199 + $0x198] sm:$0xf] %vm4512, %v4084
      %4616 = vst.msk [vmem:[%s199 + $0x19c] sm:$0xf] %vm4512, %v4085
      %4617 = vst.msk [vmem:[%s199 + $0x1a0] sm:$0xf] %vm4512, %v4086
      %4618 = vst.msk [vmem:[%s199 + $0x1a4] sm:$0xf] %vm4512, %v4087
      %4619 = vst.msk [vmem:[%s199 + $0x1a8] sm:$0xf] %vm4512, %v4088
      %4620 = vst.msk [vmem:[%s199 + $0x1ac] sm:$0xf] %vm4512, %v4089
      %4621 = vst.msk [vmem:[%s199 + $0x1b0] sm:$0xf] %vm4512, %v4090
      %4622 = vst.msk [vmem:[%s199 + $0x1b4] sm:$0xf] %vm4512, %v4091
      %4623 = vst.msk [vmem:[%s199 + $0x1b8] sm:$0xf] %vm4512, %v4092
      %4624 = vst.msk [vmem:[%s199 + $0x1bc] sm:$0xf] %vm4512, %v4093
      %4625 = vst.msk [vmem:[%s199 + $0x1c0] sm:$0xf] %vm4512, %v4094
      %4626 = vst.msk [vmem:[%s199 + $0x1c4] sm:$0xf] %vm4512, %v4095
      %4627 = vst.msk [vmem:[%s199 + $0x1c8] sm:$0xf] %vm4512, %v4096
      %4628 = vst.msk [vmem:[%s199 + $0x1cc] sm:$0xf] %vm4512, %v4097
      %4629 = vst.msk [vmem:[%s199 + $0x1d0] sm:$0xf] %vm4512, %v4098
      %4630 = vst.msk [vmem:[%s199 + $0x1d4] sm:$0xf] %vm4512, %v4099
      %4631 = vst.msk [vmem:[%s199 + $0x1d8] sm:$0xf] %vm4512, %v4100
      %4632 = vst.msk [vmem:[%s199 + $0x1dc] sm:$0xf] %vm4512, %v4101
      %4633 = vst.msk [vmem:[%s199 + $0x1e0] sm:$0xf] %vm4512, %v4102
      %4634 = vst.msk [vmem:[%s199 + $0x1e4] sm:$0xf] %vm4512, %v4103
      %4635 = vst.msk [vmem:[%s199 + $0x1e8] sm:$0xf] %vm4512, %v4104
      %4636 = vst.msk [vmem:[%s199 + $0x1ec] sm:$0xf] %vm4512, %v4105
      %4637 = vst.msk [vmem:[%s199 + $0x1f0] sm:$0xf] %vm4512, %v4106
      %4638 = vst.msk [vmem:[%s199 + $0x1f4] sm:$0xf] %vm4512, %v4107
      %4639 = vst.msk [vmem:[%s199 + $0x1f8] sm:$0xf] %vm4512, %v4108
      %4640 = vst.msk [vmem:[%s199 + $0x1fc] sm:$0xf] %vm4512, %v4109
      %4641 = vst.msk [vmem:[%s199 + $0x200] sm:$0xf] %vm4512, %v4110
      %4642 = vst.msk [vmem:[%s199 + $0x204] sm:$0xf] %vm4512, %v4111
      %4643 = vst.msk [vmem:[%s199 + $0x208] sm:$0xf] %vm4512, %v4112
      %4644 = vst.msk [vmem:[%s199 + $0x20c] sm:$0xf] %vm4512, %v4113
      %4645 = vst.msk [vmem:[%s199 + $0x210] sm:$0xf] %vm4512, %v4114
      %4646 = vst.msk [vmem:[%s199 + $0x214] sm:$0xf] %vm4512, %v4115
      %4647 = vst.msk [vmem:[%s199 + $0x218] sm:$0xf] %vm4512, %v4116
      %4648 = vst.msk [vmem:[%s199 + $0x21c] sm:$0xf] %vm4512, %v4117
      %4649 = vst.msk [vmem:[%s199 + $0x220] sm:$0xf] %vm4512, %v4118
      %4650 = vst.msk [vmem:[%s199 + $0x224] sm:$0xf] %vm4512, %v4119
      %4651 = vst.msk [vmem:[%s199 + $0x228] sm:$0xf] %vm4512, %v4120
      %4652 = vst.msk [vmem:[%s199 + $0x22c] sm:$0xf] %vm4512, %v4121
      %4653 = vst.msk [vmem:[%s199 + $0x230] sm:$0xf] %vm4512, %v4122
      %4654 = vst.msk [vmem:[%s199 + $0x234] sm:$0xf] %vm4512, %v4123
      %4655 = vst.msk [vmem:[%s199 + $0x238] sm:$0xf] %vm4512, %v4124
      %4656 = vst.msk [vmem:[%s199 + $0x23c] sm:$0xf] %vm4512, %v4125
      %4657 = vst.msk [vmem:[%s199 + $0x240] sm:$0xf] %vm4512, %v4126
      %4658 = vst.msk [vmem:[%s199 + $0x244] sm:$0xf] %vm4512, %v4127
      %4659 = vst.msk [vmem:[%s199 + $0x248] sm:$0xf] %vm4512, %v4128
      %4660 = vst.msk [vmem:[%s199 + $0x24c] sm:$0xf] %vm4512, %v4129
      %4661 = vst.msk [vmem:[%s199 + $0x250] sm:$0xf] %vm4512, %v4130
      %4662 = vst.msk [vmem:[%s199 + $0x254] sm:$0xf] %vm4512, %v4131
      %4663 = vst.msk [vmem:[%s199 + $0x258] sm:$0xf] %vm4512, %v4132
      %4664 = vst.msk [vmem:[%s199 + $0x25c] sm:$0xf] %vm4512, %v4133
      %4665 = vst.msk [vmem:[%s199 + $0x260] sm:$0xf] %vm4512, %v4134
      %4666 = vst.msk [vmem:[%s199 + $0x264] sm:$0xf] %vm4512, %v4135
      %4667 = vst.msk [vmem:[%s199 + $0x268] sm:$0xf] %vm4512, %v4136
      %4668 = vst.msk [vmem:[%s199 + $0x26c] sm:$0xf] %vm4512, %v4137
      %4669 = vst.msk [vmem:[%s199 + $0x270] sm:$0xf] %vm4512, %v4138
      %4670 = vst.msk [vmem:[%s199 + $0x274] sm:$0xf] %vm4512, %v4139
      %4671 = vst.msk [vmem:[%s199 + $0x278] sm:$0xf] %vm4512, %v4140
      %4672 = vst.msk [vmem:[%s199 + $0x27c] sm:$0xf] %vm4512, %v4141
      %4673 = vst.msk [vmem:[%s199 + $0x280] sm:$0xf] %vm4512, %v4142
      %4674 = vst.msk [vmem:[%s199 + $0x284] sm:$0xf] %vm4512, %v4143
      %4675 = vst.msk [vmem:[%s199 + $0x288] sm:$0xf] %vm4512, %v4144
      %4676 = vst.msk [vmem:[%s199 + $0x28c] sm:$0xf] %vm4512, %v4145
      %4677 = vst.msk [vmem:[%s199 + $0x290] sm:$0xf] %vm4512, %v4146
      %4678 = vst.msk [vmem:[%s199 + $0x294] sm:$0xf] %vm4512, %v4147
      %4679 = vst.msk [vmem:[%s199 + $0x298] sm:$0xf] %vm4512, %v4148
      %4680 = vst.msk [vmem:[%s199 + $0x29c] sm:$0xf] %vm4512, %v4149
      %4681 = vst.msk [vmem:[%s199 + $0x2a0] sm:$0xf] %vm4512, %v4150
      %4682 = vst.msk [vmem:[%s199 + $0x2a4] sm:$0xf] %vm4512, %v4151
      %4683 = vst.msk [vmem:[%s199 + $0x2a8] sm:$0xf] %vm4512, %v4152
      %4684 = vst.msk [vmem:[%s199 + $0x2ac] sm:$0xf] %vm4512, %v4153
      %4685 = vst.msk [vmem:[%s199 + $0x2b0] sm:$0xf] %vm4512, %v4154
      %4686 = vst.msk [vmem:[%s199 + $0x2b4] sm:$0xf] %vm4512, %v4155
      %4687 = vst.msk [vmem:[%s199 + $0x2b8] sm:$0xf] %vm4512, %v4156
      %4688 = vst.msk [vmem:[%s199 + $0x2bc] sm:$0xf] %vm4512, %v4157
      %4689 = vst.msk [vmem:[%s199 + $0x2c0] sm:$0xf] %vm4512, %v4158
      %4690 = vst.msk [vmem:[%s199 + $0x2c4] sm:$0xf] %vm4512, %v4159
      %4691 = vst.msk [vmem:[%s199 + $0x2c8] sm:$0xf] %vm4512, %v4160
      %4692 = vst.msk [vmem:[%s199 + $0x2cc] sm:$0xf] %vm4512, %v4161
      %4693 = vst.msk [vmem:[%s199 + $0x2d0] sm:$0xf] %vm4512, %v4162
      %4694 = vst.msk [vmem:[%s199 + $0x2d4] sm:$0xf] %vm4512, %v4163
      %4695 = vst.msk [vmem:[%s199 + $0x2d8] sm:$0xf] %vm4512, %v4164
      %4696 = vst.msk [vmem:[%s199 + $0x2dc] sm:$0xf] %vm4512, %v4165
      %4697 = vst.msk [vmem:[%s199 + $0x2e0] sm:$0xf] %vm4512, %v4166
      %4698 = vst.msk [vmem:[%s199 + $0x2e4] sm:$0xf] %vm4512, %v4167
      %4699 = vst.msk [vmem:[%s199 + $0x2e8] sm:$0xf] %vm4512, %v4168
      %4700 = vst.msk [vmem:[%s199 + $0x2ec] sm:$0xf] %vm4512, %v4169
      %4701 = vst.msk [vmem:[%s199 + $0x2f0] sm:$0xf] %vm4512, %v4170
      %4702 = vst.msk [vmem:[%s199 + $0x2f4] sm:$0xf] %vm4512, %v4171
      %4703 = vst.msk [vmem:[%s199 + $0x2f8] sm:$0xf] %vm4512, %v4172
      %4704 = vst.msk [vmem:[%s199 + $0x2fc] sm:$0xf] %vm4512, %v4173
      %4705 = vst.msk [vmem:[%s199 + $0x300] sm:$0xf] %vm4512, %v4174
      %4706 = vst.msk [vmem:[%s199 + $0x304] sm:$0xf] %vm4512, %v4175
      %4707 = vst.msk [vmem:[%s199 + $0x308] sm:$0xf] %vm4512, %v4176
      %4708 = vst.msk [vmem:[%s199 + $0x30c] sm:$0xf] %vm4512, %v4177
      %4709 = vst.msk [vmem:[%s199 + $0x310] sm:$0xf] %vm4512, %v4178
      %4710 = vst.msk [vmem:[%s199 + $0x314] sm:$0xf] %vm4512, %v4179
      %4711 = vst.msk [vmem:[%s199 + $0x318] sm:$0xf] %vm4512, %v4180
      %4712 = vst.msk [vmem:[%s199 + $0x31c] sm:$0xf] %vm4512, %v4181
      %4713 = vst.msk [vmem:[%s199 + $0x320] sm:$0xf] %vm4512, %v4182
      %4714 = vst.msk [vmem:[%s199 + $0x324] sm:$0xf] %vm4512, %v4183
      %4715 = vst.msk [vmem:[%s199 + $0x328] sm:$0xf] %vm4512, %v4184
      %4716 = vst.msk [vmem:[%s199 + $0x32c] sm:$0xf] %vm4512, %v4185
      %4717 = vst.msk [vmem:[%s199 + $0x330] sm:$0xf] %vm4512, %v4186
      %4718 = vst.msk [vmem:[%s199 + $0x334] sm:$0xf] %vm4512, %v4187
      %4719 = vst.msk [vmem:[%s199 + $0x338] sm:$0xf] %vm4512, %v4188
      %4720 = vst.msk [vmem:[%s199 + $0x33c] sm:$0xf] %vm4512, %v4189
      %4721 = vst.msk [vmem:[%s199 + $0x340] sm:$0xf] %vm4512, %v4190
      %4722 = vst.msk [vmem:[%s199 + $0x344] sm:$0xf] %vm4512, %v4191
      %4723 = vst.msk [vmem:[%s199 + $0x348] sm:$0xf] %vm4512, %v4192
      %4724 = vst.msk [vmem:[%s199 + $0x34c] sm:$0xf] %vm4512, %v4193
      %4725 = vst.msk [vmem:[%s199 + $0x350] sm:$0xf] %vm4512, %v4194
      %4726 = vst.msk [vmem:[%s199 + $0x354] sm:$0xf] %vm4512, %v4195
      %4727 = vst.msk [vmem:[%s199 + $0x358] sm:$0xf] %vm4512, %v4196
      %4728 = vst.msk [vmem:[%s199 + $0x35c] sm:$0xf] %vm4512, %v4197
      %4729 = vst.msk [vmem:[%s199 + $0x360] sm:$0xf] %vm4512, %v4198
      %4730 = vst.msk [vmem:[%s199 + $0x364] sm:$0xf] %vm4512, %v4199
      %4731 = vst.msk [vmem:[%s199 + $0x368] sm:$0xf] %vm4512, %v4200
      %4732 = vst.msk [vmem:[%s199 + $0x36c] sm:$0xf] %vm4512, %v4201
      %4733 = vst.msk [vmem:[%s199 + $0x370] sm:$0xf] %vm4512, %v4202
      %4734 = vst.msk [vmem:[%s199 + $0x374] sm:$0xf] %vm4512, %v4203
      %4735 = vst.msk [vmem:[%s199 + $0x378] sm:$0xf] %vm4512, %v4204
      %4736 = vst.msk [vmem:[%s199 + $0x37c] sm:$0xf] %vm4512, %v4205
      %4737 = vst.msk [vmem:[%s199 + $0x380] sm:$0xf] %vm4512, %v4206
      %4738 = vst.msk [vmem:[%s199 + $0x384] sm:$0xf] %vm4512, %v4207
      %4739 = vst.msk [vmem:[%s199 + $0x388] sm:$0xf] %vm4512, %v4208
      %4740 = vst.msk [vmem:[%s199 + $0x38c] sm:$0xf] %vm4512, %v4209
      %4741 = vst.msk [vmem:[%s199 + $0x390] sm:$0xf] %vm4512, %v4210
      %4742 = vst.msk [vmem:[%s199 + $0x394] sm:$0xf] %vm4512, %v4211
      %4743 = vst.msk [vmem:[%s199 + $0x398] sm:$0xf] %vm4512, %v4212
      %4744 = vst.msk [vmem:[%s199 + $0x39c] sm:$0xf] %vm4512, %v4213
      %4745 = vst.msk [vmem:[%s199 + $0x3a0] sm:$0xf] %vm4512, %v4214
      %4746 = vst.msk [vmem:[%s199 + $0x3a4] sm:$0xf] %vm4512, %v4215
      %4747 = vst.msk [vmem:[%s199 + $0x3a8] sm:$0xf] %vm4512, %v4216
      %4748 = vst.msk [vmem:[%s199 + $0x3ac] sm:$0xf] %vm4512, %v4217
      %4749 = vst.msk [vmem:[%s199 + $0x3b0] sm:$0xf] %vm4512, %v4218
      %4750 = vst.msk [vmem:[%s199 + $0x3b4] sm:$0xf] %vm4512, %v4219
      %4751 = vst.msk [vmem:[%s199 + $0x3b8] sm:$0xf] %vm4512, %v4220
      %4752 = vst.msk [vmem:[%s199 + $0x3bc] sm:$0xf] %vm4512, %v4221
      %4753 = vst.msk [vmem:[%s199 + $0x3c0] sm:$0xf] %vm4512, %v4222
      %4754 = vst.msk [vmem:[%s199 + $0x3c4] sm:$0xf] %vm4512, %v4223
      %4755 = vst.msk [vmem:[%s199 + $0x3c8] sm:$0xf] %vm4512, %v4224
      %4756 = vst.msk [vmem:[%s199 + $0x3cc] sm:$0xf] %vm4512, %v4225
      %4757 = vst.msk [vmem:[%s199 + $0x3d0] sm:$0xf] %vm4512, %v4226
      %4758 = vst.msk [vmem:[%s199 + $0x3d4] sm:$0xf] %vm4512, %v4227
      %4759 = vst.msk [vmem:[%s199 + $0x3d8] sm:$0xf] %vm4512, %v4228
      %4760 = vst.msk [vmem:[%s199 + $0x3dc] sm:$0xf] %vm4512, %v4229
      %4761 = vst.msk [vmem:[%s199 + $0x3e0] sm:$0xf] %vm4512, %v4230
      %4762 = vst.msk [vmem:[%s199 + $0x3e4] sm:$0xf] %vm4512, %v4231
      %4763 = vst.msk [vmem:[%s199 + $0x3e8] sm:$0xf] %vm4512, %v4232
      %4764 = vst.msk [vmem:[%s199 + $0x3ec] sm:$0xf] %vm4512, %v4233
      %4765 = vst.msk [vmem:[%s199 + $0x3f0] sm:$0xf] %vm4512, %v4234
      %4766 = vst.msk [vmem:[%s199 + $0x3f4] sm:$0xf] %vm4512, %v4235
      %4767 = vst.msk [vmem:[%s199 + $0x3f8] sm:$0xf] %vm4512, %v4236
      %4768 = vst.msk [vmem:[%s199 + $0x3fc] sm:$0xf] %vm4512, %v4237
      %4769 = vst.msk [vmem:[%s199 + $0x400] sm:$0xf] %vm4512, %v4238
      %4770 = vst.msk [vmem:[%s199 + $0x404] sm:$0xf] %vm4512, %v4239
      %4771 = vst.msk [vmem:[%s199 + $0x408] sm:$0xf] %vm4512, %v4240
      %4772 = vst.msk [vmem:[%s199 + $0x40c] sm:$0xf] %vm4512, %v4241
      %4773 = vst.msk [vmem:[%s199 + $0x410] sm:$0xf] %vm4512, %v4242
      %4774 = vst.msk [vmem:[%s199 + $0x414] sm:$0xf] %vm4512, %v4243
      %4775 = vst.msk [vmem:[%s199 + $0x418] sm:$0xf] %vm4512, %v4244
      %4776 = vst.msk [vmem:[%s199 + $0x41c] sm:$0xf] %vm4512, %v4245
      %4777 = vst.msk [vmem:[%s199 + $0x420] sm:$0xf] %vm4512, %v4246
      %s4778 = smul.u32 265, %s15
      %p4779 = scmp.lt.s32.totalorder %s4778, 529
      %s4780 = scalar_select %p4779, %s4778, 529
      %s4781 = smul.addr %s4780, 4
      %s4782 = scalar_lea.vmem %s4, %s4781
      // Predicated region
      $region37: #{onet_forward.5} parent=35 // pred_check
        %p4783 = pneg %p122
      $region38: #{onet_forward.5} parent=35 // pred_check_branch
        %4785 = sbr.rel (%p4783) target = $region40
      $region39: #{onet_forward.5} parent=35 // pred_region
        %s4786 = smul.u32 265, %s15
      $region40: #{onet_forward.5} parent=35 // pred_fallthru
        _
    $region36: #{onet_forward.5} parent=5 // pred_fallthru
      _
    %p4787 = scmp.le.s32.totalorder 2, %s10
    // Predicated region
    $region41: #{onet_forward.5} parent=5 // pred_check
      %p4788 = pneg %p4787
    $region42: #{onet_forward.5} parent=5 // pred_check_branch
      %4790 = sbr.rel (%p4788) target = $region44
    $region43: #{onet_forward.5} parent=5 // pred_region
      %s4791 = ssub.s32 %s10, 2
      // Predicated region
      $region45: #{onet_forward.5} parent=43 // pred_check
        %p4792 = pneg %p128
      $region46: #{onet_forward.5} parent=43 // pred_check_branch
        %4794 = sbr.rel (%p4792) target = $region48
      $region47: #{onet_forward.5} parent=43 // pred_region
        %s4795 = smul.u32 265, %s16
        %p4796 = scmp.lt.s32.totalorder %s4795, 529
        %s4797 = scalar_select %p4796, %s4795, 529
        %s4798 = smul.addr %s4797, 4
        %s4799 = scalar_lea.vmem %s4, %s4798
      $region48: #{onet_forward.5} parent=43 // pred_fallthru
        _
    $region44: #{onet_forward.5} parent=5 // pred_fallthru
      _
  $region6: #{onet_forward.5} parent=0 // loop_footer
    %s14 = sadd.s32 1, %s10
  $region7: #{onet_forward.5} parent=0 // loop_footer_branch
    %9 = sbr.rel target = $region3
  $region8: #{onet_forward.5} parent=0 // loop_exit
    _

// kernel: onet_forward.6
$region0: #{onet_forward.6}
  #allocation0 [shape = 'u32[]', space=smem, size = 0x4, offset = 0x4, fixed_abs, tag = 'smem constant byte address 0x4 - core index']
  #allocation1 [shape = 'u32[144,128]{1,0:T(1,128)}', space=vmem, size = 0x12000, scoped, tag = 'internal scratch']
  %s0 = inlined_call_operand.vmem [shape: bf16[896,288], index: 0, kind: input, shape index: {}]
  %s1 = inlined_call_operand.vmem [shape: bf16[288,64], index: 1, kind: input, shape index: {}]
  %s2 = inlined_call_operand.vmem [shape: f32[1,64], index: 2, kind: input, shape index: {}]
  %s3 = inlined_call_operand.vmem [shape: f32[1,64], index: 3, kind: input, shape index: {}]
  %s4 = inlined_call_operand.vmem [shape: bf16[896,64], index: 4, kind: output, shape index: {}]
  %s5 = sld [smem:[#allocation0]]
  $region49: #{onet_forward.6} parent=0
    _
  %s7 = ssub.s32 1, %s5
  %s8 = scalar_select 0, %s7, %s5
  loop: start=0, step=1, limit=4
  $region2: #{onet_forward.6} parent=0 // loop_pre_header
    _
  $region3: #{onet_forward.6} parent=0 // loop_header
    %s10 = sphi 0, %s14
    %p11 = scmp.ge.s32.totalorder %s10, 4
    %s20 = sphi 0, %s22
    %s23 = sphi 0, %s20
    %s24 = sphi 0, %s23
    %s40 = sphi 0, %s24
    %s44 = sphi 0, %s44
    %s46 = sphi 0, %s44
    %s47 = sphi 0, %s46
    %s61 = sphi 0, %s47
    %s65 = sphi 0, %s65
    %s67 = sphi 0, %s65
    %s68 = sphi 0, %s67
    %s82 = sphi 0, %s68
    %s86 = sphi 0, %s86
    %s88 = sphi 0, %s86
    %s89 = sphi 0, %s88
    %s103 = sphi 0, %s89
    %s109 = sphi 0, %s111
    %s112 = sphi 0, %s109
    %s113 = sphi 0, %s112
    %s129 = sphi 0, %s113
  $region4: #{onet_forward.6} parent=0 // loop_header_branch
    %13 = sbr.rel (%p11) target = $region8
  $region5: #{onet_forward.6} parent=0 // loop_body
    %s15 = ssub.s32 %s10, 1
    %s16 = ssub.s32 %s10, 2
    %s17 = sadd.s32 %s10, 1
    %s18 = ssub.s32 %s10, %s17
    %p19 = scmp.eq.s32.totalorder %s18, 0
    %s21 = sadd.s32 %s20, 1
    %s22 = scalar_select %p19, %s20, %s21
    %p25 = pneg %p19
    %p26 = scmp.eq.s32.totalorder %s10, 1
    %p27 = por %p25, %p26
    %p28 = scmp.ne.s32.totalorder %s20, %s23
    %p29 = scmp.eq.s32.totalorder %s10, 0
    %p30 = por %p28, %p29
    %p31 = scmp.ne.s32.totalorder %s20, %s23
    %p32 = scmp.eq.s32.totalorder %s15, 1
    %p33 = por %p31, %p32
    %p34 = scmp.ne.s32.totalorder %s23, %s24
    %p35 = scmp.eq.s32.totalorder %s15, 0
    %p36 = por %p34, %p35
    %p37 = scmp.ne.s32.totalorder %s23, %s24
    %p38 = scmp.eq.s32.totalorder %s16, 1
    %p39 = por %p37, %p38
    %p41 = scmp.ne.s32.totalorder %s24, %s40
    %p42 = scmp.eq.s32.totalorder %s16, 0
    %p43 = por %p41, %p42
    %s45 = sadd.s32 %s44, 1
    %p48 = scmp.eq.s32.totalorder %s10, 1
    %p49 = scmp.ne.s32.totalorder %s44, %s46
    %p50 = scmp.eq.s32.totalorder %s10, 0
    %p51 = por %p49, %p50
    %p52 = scmp.ne.s32.totalorder %s44, %s46
    %p53 = scmp.eq.s32.totalorder %s15, 1
    %p54 = por %p52, %p53
    %p55 = scmp.ne.s32.totalorder %s46, %s47
    %p56 = scmp.eq.s32.totalorder %s15, 0
    %p57 = por %p55, %p56
    %p58 = scmp.ne.s32.totalorder %s46, %s47
    %p59 = scmp.eq.s32.totalorder %s16, 1
    %p60 = por %p58, %p59
    %p62 = scmp.ne.s32.totalorder %s47, %s61
    %p63 = scmp.eq.s32.totalorder %s16, 0
    %p64 = por %p62, %p63
    %s66 = sadd.s32 %s65, 1
    %p69 = scmp.eq.s32.totalorder %s10, 1
    %p70 = scmp.ne.s32.totalorder %s65, %s67
    %p71 = scmp.eq.s32.totalorder %s10, 0
    %p72 = por %p70, %p71
    %p73 = scmp.ne.s32.totalorder %s65, %s67
    %p74 = scmp.eq.s32.totalorder %s15, 1
    %p75 = por %p73, %p74
    %p76 = scmp.ne.s32.totalorder %s67, %s68
    %p77 = scmp.eq.s32.totalorder %s15, 0
    %p78 = por %p76, %p77
    %p79 = scmp.ne.s32.totalorder %s67, %s68
    %p80 = scmp.eq.s32.totalorder %s16, 1
    %p81 = por %p79, %p80
    %p83 = scmp.ne.s32.totalorder %s68, %s82
    %p84 = scmp.eq.s32.totalorder %s16, 0
    %p85 = por %p83, %p84
    %s87 = sadd.s32 %s86, 1
    %p90 = scmp.eq.s32.totalorder %s10, 1
    %p91 = scmp.ne.s32.totalorder %s86, %s88
    %p92 = scmp.eq.s32.totalorder %s10, 0
    %p93 = por %p91, %p92
    %p94 = scmp.ne.s32.totalorder %s86, %s88
    %p95 = scmp.eq.s32.totalorder %s15, 1
    %p96 = por %p94, %p95
    %p97 = scmp.ne.s32.totalorder %s88, %s89
    %p98 = scmp.eq.s32.totalorder %s15, 0
    %p99 = por %p97, %p98
    %p100 = scmp.ne.s32.totalorder %s88, %s89
    %p101 = scmp.eq.s32.totalorder %s16, 1
    %p102 = por %p100, %p101
    %p104 = scmp.ne.s32.totalorder %s89, %s103
    %p105 = scmp.eq.s32.totalorder %s16, 0
    %p106 = por %p104, %p105
    %s107 = ssub.s32 %s10, %s17
    %p108 = scmp.eq.s32.totalorder %s107, 0
    %s110 = sadd.s32 %s109, 1
    %s111 = scalar_select %p108, %s109, %s110
    %p114 = pneg %p108
    %p115 = scmp.eq.s32.totalorder %s10, 1
    %p116 = por %p114, %p115
    %p117 = scmp.ne.s32.totalorder %s109, %s112
    %p118 = scmp.eq.s32.totalorder %s10, 0
    %p119 = por %p117, %p118
    %p120 = scmp.ne.s32.totalorder %s109, %s112
    %p121 = scmp.eq.s32.totalorder %s15, 1
    %p122 = por %p120, %p121
    %p123 = scmp.ne.s32.totalorder %s112, %s113
    %p124 = scmp.eq.s32.totalorder %s15, 0
    %p125 = por %p123, %p124
    %p126 = scmp.ne.s32.totalorder %s112, %s113
    %p127 = scmp.eq.s32.totalorder %s16, 1
    %p128 = por %p126, %p127
    %p130 = scmp.ne.s32.totalorder %s113, %s129
    %p131 = scmp.eq.s32.totalorder %s16, 0
    %p132 = por %p130, %p131
    %p133 = scmp.le.s32.totalorder 1, %s10
    %p134 = scmp.lt.s32.totalorder %s10, 3
    %p135 = pnand %p133, %p134
    %p136 = pneg %p135
    // Predicated region
    $region9: #{onet_forward.6} parent=5 // pred_check
      _
    $region10: #{onet_forward.6} parent=5 // pred_check_branch
      %138 = sbr.rel (%p135) target = $region12
    $region11: #{onet_forward.6} parent=5 // pred_region
      %s139 = ssub.s32 %s10, 1
      // Predicated region
      $region13: #{onet_forward.6} parent=11 // pred_check
        %p140 = pneg %p57
      $region14: #{onet_forward.6} parent=11 // pred_check_branch
        %142 = sbr.rel (%p140) target = $region16
      $region15: #{onet_forward.6} parent=11 // pred_region
        _
      $region16: #{onet_forward.6} parent=11 // pred_fallthru
        _
      // Predicated region
      $region17: #{onet_forward.6} parent=11 // pred_check
        %p143 = pneg %p78
      $region18: #{onet_forward.6} parent=11 // pred_check_branch
        %145 = sbr.rel (%p143) target = $region20
      $region19: #{onet_forward.6} parent=11 // pred_region
        _
      $region20: #{onet_forward.6} parent=11 // pred_fallthru
        _
      // Predicated region
      $region21: #{onet_forward.6} parent=11 // pred_check
        %p146 = pneg %p99
      $region22: #{onet_forward.6} parent=11 // pred_check_branch
        %148 = sbr.rel (%p146) target = $region24
      $region23: #{onet_forward.6} parent=11 // pred_region
        _
      $region24: #{onet_forward.6} parent=11 // pred_fallthru
        _
    $region12: #{onet_forward.6} parent=5 // pred_fallthru
      _
    %p149 = scmp.lt.s32.totalorder %s10, 2
    // Predicated region
    $region25: #{onet_forward.6} parent=5 // pred_check
      %p150 = pneg %p149
    $region26: #{onet_forward.6} parent=5 // pred_check_branch
      %152 = sbr.rel (%p150) target = $region28
    $region27: #{onet_forward.6} parent=5 // pred_region
      // Predicated region
      $region29: #{onet_forward.6} parent=27 // pred_check
        %p153 = pneg %p30
      $region30: #{onet_forward.6} parent=27 // pred_check_branch
        %155 = sbr.rel (%p153) target = $region32
      $region31: #{onet_forward.6} parent=27 // pred_region
        %s156 = smul.u32 56, %s10
        %p157 = scmp.lt.s32.totalorder %s156, 111
        %s158 = scalar_select %p157, %s156, 111
        %s159 = smul.addr %s158, 3
        %s160 = smul.addr %s159, 4
        %s161 = scalar_lea.vmem %s0, %s160
        %s162 = smul.u32 56, %s10
      $region32: #{onet_forward.6} parent=27 // pred_fallthru
        _
    $region28: #{onet_forward.6} parent=5 // pred_fallthru
      _
    %p163 = scmp.le.s32.totalorder 1, %s10
    %p164 = scmp.lt.s32.totalorder %s10, 3
    %p165 = pnand %p163, %p164
    %p166 = pneg %p165
    // Predicated region
    $region33: #{onet_forward.6} parent=5 // pred_check
      _
    $region34: #{onet_forward.6} parent=5 // pred_check_branch
      %168 = sbr.rel (%p165) target = $region36
    $region35: #{onet_forward.6} parent=5 // pred_region
      %s169 = ssub.s32 %s10, 1
      %s170 = smul.u32 56, %s15
      %p171 = scmp.lt.s32.totalorder %s170, 111
      %s172 = scalar_select %p171, %s170, 111
      %s173 = smul.addr %s172, 3
      %s174 = smul.addr %s173, 4
      %s175 = scalar_lea.vmem %s0, %s174
      %p176 = pneg %p36
      %p177 = pneg %p33
      %p178 = pneg %p57
      %p179 = pneg %p54
      %p180 = pneg %p78
      %p181 = pneg %p75
      %p182 = pneg %p99
      %p183 = pneg %p96
      %p184 = pneg %p125
      %p185 = pneg %p122
      %s186 = smul.u32 56, %s15
      %p187 = scmp.lt.s32.totalorder %s186, 111
      %s188 = scalar_select %p187, %s186, 111
      %s189 = smul.addr %s188, 4
      %s190 = scalar_lea.vmem %s4, %s189
      %s191 = smul.u32 56, %s15
      %p192 = scmp.lt.s32.totalorder %s191, 111
      %s193 = scalar_select %p192, %s191, 111
      %s194 = smul.addr %s193, 3
      %s195 = smul.addr %s194, 4
      %s196 = scalar_lea.vmem %s0, %s195
      %s197 = smul.u32 56, %s15
      %s198 = smul.u32 56, %s15
      %p199 = scmp.lt.s32.totalorder %s198, 111
      %s200 = scalar_select %p199, %s198, 111
      %s201 = smul.addr %s200, 4
      %s202 = scalar_lea.vmem %s4, %s201
      %s203 = smul.u32 56, %s15
      %v205 = vld [vmem:[%s196] sm:$0xff]
      %v206 = vld [vmem:[%s196 + $0x8] sm:$0xf]
      %v207 = vld [vmem:[%s196 + $0xc] sm:$0xff]
      %v208 = vld [vmem:[%s196 + $0x14] sm:$0xf]
      %v209 = vld [vmem:[%s196 + $0x18] sm:$0xff]
      %v210 = vld [vmem:[%s196 + $0x20] sm:$0xf]
      %v211 = vld [vmem:[%s196 + $0x24] sm:$0xff]
      %v212 = vld [vmem:[%s196 + $0x2c] sm:$0xf]
      %v213 = vld [vmem:[%s196 + $0x30] sm:$0xff]
      %v214 = vld [vmem:[%s196 + $0x38] sm:$0xf]
      %v215 = vld [vmem:[%s196 + $0x3c] sm:$0xff]
      %v216 = vld [vmem:[%s196 + $0x44] sm:$0xf]
      %v217 = vld [vmem:[%s196 + $0x48] sm:$0xff]
      %v218 = vld [vmem:[%s196 + $0x50] sm:$0xf]
      %v219 = vld [vmem:[%s196 + $0x54] sm:$0xff]
      %v220 = vld [vmem:[%s196 + $0x5c] sm:$0xf]
      %v221 = vld [vmem:[%s196 + $0x60] sm:$0xff]
      %v222 = vld [vmem:[%s196 + $0x68] sm:$0xf]
      %v223 = vld [vmem:[%s196 + $0x6c] sm:$0xff]
      %v224 = vld [vmem:[%s196 + $0x74] sm:$0xf]
      %v225 = vld [vmem:[%s196 + $0x78] sm:$0xff]
      %v226 = vld [vmem:[%s196 + $0x80] sm:$0xf]
      %v227 = vld [vmem:[%s196 + $0x84] sm:$0xff]
      %v228 = vld [vmem:[%s196 + $0x8c] sm:$0xf]
      %v229 = vld [vmem:[%s196 + $0x90] sm:$0xff]
      %v230 = vld [vmem:[%s196 + $0x98] sm:$0xf]
      %v231 = vld [vmem:[%s196 + $0x9c] sm:$0xff]
      %v232 = vld [vmem:[%s196 + $0xa4] sm:$0xf]
      %v233 = vld [vmem:[%s196 + $0xa8] sm:$0xff]
      %v234 = vld [vmem:[%s196 + $0xb0] sm:$0xf]
      %v235 = vld [vmem:[%s196 + $0xb4] sm:$0xff]
      %v236 = vld [vmem:[%s196 + $0xbc] sm:$0xf]
      %v237 = vld [vmem:[%s196 + $0xc0] sm:$0xff]
      %v238 = vld [vmem:[%s196 + $0xc8] sm:$0xf]
      %v239 = vld [vmem:[%s196 + $0xcc] sm:$0xff]
      %v240 = vld [vmem:[%s196 + $0xd4] sm:$0xf]
      %v241 = vld [vmem:[%s196 + $0xd8] sm:$0xff]
      %v242 = vld [vmem:[%s196 + $0xe0] sm:$0xf]
      %v243 = vld [vmem:[%s196 + $0xe4] sm:$0xff]
      %v244 = vld [vmem:[%s196 + $0xec] sm:$0xf]
      %v245 = vld [vmem:[%s196 + $0xf0] sm:$0xff]
      %v246 = vld [vmem:[%s196 + $0xf8] sm:$0xf]
      %v247 = vld [vmem:[%s196 + $0xfc] sm:$0xff]
      %v248 = vld [vmem:[%s196 + $0x104] sm:$0xf]
      %v249 = vld [vmem:[%s196 + $0x108] sm:$0xff]
      %v250 = vld [vmem:[%s196 + $0x110] sm:$0xf]
      %v251 = vld [vmem:[%s196 + $0x114] sm:$0xff]
      %v252 = vld [vmem:[%s196 + $0x11c] sm:$0xf]
      %v253 = vld [vmem:[%s196 + $0x120] sm:$0xff]
      %v254 = vld [vmem:[%s196 + $0x128] sm:$0xf]
      %v255 = vld [vmem:[%s196 + $0x12c] sm:$0xff]
      %v256 = vld [vmem:[%s196 + $0x134] sm:$0xf]
      %v257 = vld [vmem:[%s196 + $0x138] sm:$0xff]
      %v258 = vld [vmem:[%s196 + $0x140] sm:$0xf]
      %v259 = vld [vmem:[%s196 + $0x144] sm:$0xff]
      %v260 = vld [vmem:[%s196 + $0x14c] sm:$0xf]
      %v261 = vld [vmem:[%s196 + $0x150] sm:$0xff]
      %v262 = vld [vmem:[%s196 + $0x158] sm:$0xf]
      %v263 = vld [vmem:[%s196 + $0x15c] sm:$0xff]
      %v264 = vld [vmem:[%s196 + $0x164] sm:$0xf]
      %v265 = vld [vmem:[%s196 + $0x168] sm:$0xff]
      %v266 = vld [vmem:[%s196 + $0x170] sm:$0xf]
      %v267 = vld [vmem:[%s196 + $0x174] sm:$0xff]
      %v268 = vld [vmem:[%s196 + $0x17c] sm:$0xf]
      %v269 = vld [vmem:[%s196 + $0x180] sm:$0xff]
      %v270 = vld [vmem:[%s196 + $0x188] sm:$0xf]
      %v271 = vld [vmem:[%s196 + $0x18c] sm:$0xff]
      %v272 = vld [vmem:[%s196 + $0x194] sm:$0xf]
      %v273 = vld [vmem:[%s196 + $0x198] sm:$0xff]
      %v274 = vld [vmem:[%s196 + $0x1a0] sm:$0xf]
      %v275 = vld [vmem:[%s196 + $0x1a4] sm:$0xff]
      %v276 = vld [vmem:[%s196 + $0x1ac] sm:$0xf]
      %v277 = vld [vmem:[%s196 + $0x1b0] sm:$0xff]
      %v278 = vld [vmem:[%s196 + $0x1b8] sm:$0xf]
      %v279 = vld [vmem:[%s196 + $0x1bc] sm:$0xff]
      %v280 = vld [vmem:[%s196 + $0x1c4] sm:$0xf]
      %v281 = vld [vmem:[%s196 + $0x1c8] sm:$0xff]
      %v282 = vld [vmem:[%s196 + $0x1d0] sm:$0xf]
      %v283 = vld [vmem:[%s196 + $0x1d4] sm:$0xff]
      %v284 = vld [vmem:[%s196 + $0x1dc] sm:$0xf]
      %v285 = vld [vmem:[%s196 + $0x1e0] sm:$0xff]
      %v286 = vld [vmem:[%s196 + $0x1e8] sm:$0xf]
      %v287 = vld [vmem:[%s196 + $0x1ec] sm:$0xff]
      %v288 = vld [vmem:[%s196 + $0x1f4] sm:$0xf]
      %v289 = vld [vmem:[%s196 + $0x1f8] sm:$0xff]
      %v290 = vld [vmem:[%s196 + $0x200] sm:$0xf]
      %v291 = vld [vmem:[%s196 + $0x204] sm:$0xff]
      %v292 = vld [vmem:[%s196 + $0x20c] sm:$0xf]
      %v293 = vld [vmem:[%s196 + $0x210] sm:$0xff]
      %v294 = vld [vmem:[%s196 + $0x218] sm:$0xf]
      %v295 = vld [vmem:[%s196 + $0x21c] sm:$0xff]
      %v296 = vld [vmem:[%s196 + $0x224] sm:$0xf]
      %v297 = vld [vmem:[%s196 + $0x228] sm:$0xff]
      %v298 = vld [vmem:[%s196 + $0x230] sm:$0xf]
      %v299 = vld [vmem:[%s196 + $0x234] sm:$0xff]
      %v300 = vld [vmem:[%s196 + $0x23c] sm:$0xf]
      %v301 = vld [vmem:[%s196 + $0x240] sm:$0xff]
      %v302 = vld [vmem:[%s196 + $0x248] sm:$0xf]
      %v303 = vld [vmem:[%s196 + $0x24c] sm:$0xff]
      %v304 = vld [vmem:[%s196 + $0x254] sm:$0xf]
      %v305 = vld [vmem:[%s196 + $0x258] sm:$0xff]
      %v306 = vld [vmem:[%s196 + $0x260] sm:$0xf]
      %v307 = vld [vmem:[%s196 + $0x264] sm:$0xff]
      %v308 = vld [vmem:[%s196 + $0x26c] sm:$0xf]
      %v309 = vld [vmem:[%s196 + $0x270] sm:$0xff]
      %v310 = vld [vmem:[%s196 + $0x278] sm:$0xf]
      %v311 = vld [vmem:[%s196 + $0x27c] sm:$0xff]
      %v312 = vld [vmem:[%s196 + $0x284] sm:$0xf]
      %v313 = vld [vmem:[%s196 + $0x288] sm:$0xff]
      %v314 = vld [vmem:[%s196 + $0x290] sm:$0xf]
      %v315 = vld [vmem:[%s196 + $0x294] sm:$0xff]
      %v316 = vld [vmem:[%s196 + $0x29c] sm:$0xf]
      %v317 = vld [vmem:[%s1] sm:$0xf]
      %v318 = vld [vmem:[%s1 + $0x4] sm:$0xf]
      %v319 = vld [vmem:[%s1 + $0x8] sm:$0xf]
      %v320 = vld [vmem:[%s1 + $0xc] sm:$0xf]
      %v321 = vld [vmem:[%s1 + $0x10] sm:$0xf]
      %v322 = vld [vmem:[%s1 + $0x14] sm:$0xf]
      %v323 = vld [vmem:[%s1 + $0x18] sm:$0xf]
      %v324 = vld [vmem:[%s1 + $0x1c] sm:$0xf]
      %v325 = vld [vmem:[%s1 + $0x20] sm:$0xf]
      %v326 = vld [vmem:[%s1 + $0x24] sm:$0xf]
      %v327 = vld [vmem:[%s1 + $0x28] sm:$0xf]
      %v328 = vld [vmem:[%s1 + $0x2c] sm:$0xf]
      %v329 = vld [vmem:[%s1 + $0x30] sm:$0xf]
      %v330 = vld [vmem:[%s1 + $0x34] sm:$0xf]
      %v331 = vld [vmem:[%s1 + $0x38] sm:$0xf]
      %v332 = vld [vmem:[%s1 + $0x3c] sm:$0xf]
      %v333 = vld [vmem:[%s1 + $0x40] sm:$0xf]
      %v334 = vld [vmem:[%s1 + $0x44] sm:$0xf]
      %v335 = vld [vmem:[%s1 + $0x48] sm:$0xf]
      %v336 = vld [vmem:[%s1 + $0x4c] sm:$0xf]
      %v337 = vld [vmem:[%s1 + $0x50] sm:$0xf]
      %v338 = vld [vmem:[%s1 + $0x54] sm:$0xf]
      %v339 = vld [vmem:[%s1 + $0x58] sm:$0xf]
      %v340 = vld [vmem:[%s1 + $0x5c] sm:$0xf]
      %v341 = vld [vmem:[%s1 + $0x60] sm:$0xf]
      %v342 = vld [vmem:[%s1 + $0x64] sm:$0xf]
      %v343 = vld [vmem:[%s1 + $0x68] sm:$0xf]
      %v344 = vld [vmem:[%s1 + $0x6c] sm:$0xf]
      %v345 = vld [vmem:[%s1 + $0x70] sm:$0xf]
      %v346 = vld [vmem:[%s1 + $0x74] sm:$0xf]
      %v347 = vld [vmem:[%s1 + $0x78] sm:$0xf]
      %v348 = vld [vmem:[%s1 + $0x7c] sm:$0xf]
      %v349 = vld [vmem:[%s1 + $0x80] sm:$0xf]
      %v350 = vld [vmem:[%s1 + $0x84] sm:$0xf]
      %v351 = vld [vmem:[%s1 + $0x88] sm:$0xf]
      %v352 = vld [vmem:[%s1 + $0x8c] sm:$0xf]
      %v353 = vld [vmem:[%s2] sm:$0x1]
      %v355 = vlaneseq
      %v356 = vshrl.u32 %v355, 7
      %v357 = vsub.s32 0, %v356
      %v358 = vrot.slane %v353, %v357
      %v472 = vunpack.c.l.b16 %v205
      %v473 = vunpack.c.h.b16 %v205
      %v474 = vunpack.c.l.b16 %v206
      %v475 = vunpack.c.l.b16 %v207
      %v476 = vunpack.c.h.b16 %v207
      %v477 = vunpack.c.l.b16 %v208
      %v478 = vunpack.c.l.b16 %v209
      %v479 = vunpack.c.h.b16 %v209
      %v480 = vunpack.c.l.b16 %v210
      %v481 = vunpack.c.l.b16 %v211
      %v482 = vunpack.c.h.b16 %v211
      %v483 = vunpack.c.l.b16 %v212
      %v484 = vunpack.c.l.b16 %v213
      %v485 = vunpack.c.h.b16 %v213
      %v486 = vunpack.c.l.b16 %v214
      %v487 = vunpack.c.l.b16 %v215
      %v488 = vunpack.c.h.b16 %v215
      %v489 = vunpack.c.l.b16 %v216
      %v490 = vunpack.c.l.b16 %v217
      %v491 = vunpack.c.h.b16 %v217
      %v492 = vunpack.c.l.b16 %v218
      %v493 = vunpack.c.l.b16 %v219
      %v494 = vunpack.c.h.b16 %v219
      %v495 = vunpack.c.l.b16 %v220
      %v496 = vunpack.c.l.b16 %v221
      %v497 = vunpack.c.h.b16 %v221
      %v498 = vunpack.c.l.b16 %v222
      %v499 = vunpack.c.l.b16 %v223
      %v500 = vunpack.c.h.b16 %v223
      %v501 = vunpack.c.l.b16 %v224
      %v502 = vunpack.c.l.b16 %v225
      %v503 = vunpack.c.h.b16 %v225
      %v504 = vunpack.c.l.b16 %v226
      %v505 = vunpack.c.l.b16 %v227
      %v506 = vunpack.c.h.b16 %v227
      %v507 = vunpack.c.l.b16 %v228
      %v508 = vunpack.c.l.b16 %v229
      %v509 = vunpack.c.h.b16 %v229
      %v510 = vunpack.c.l.b16 %v230
      %v511 = vunpack.c.l.b16 %v231
      %v512 = vunpack.c.h.b16 %v231
      %v513 = vunpack.c.l.b16 %v232
      %v514 = vunpack.c.l.b16 %v233
      %v515 = vunpack.c.h.b16 %v233
      %v516 = vunpack.c.l.b16 %v234
      %v517 = vunpack.c.l.b16 %v235
      %v518 = vunpack.c.h.b16 %v235
      %v519 = vunpack.c.l.b16 %v236
      %v520 = vunpack.c.l.b16 %v237
      %v521 = vunpack.c.h.b16 %v237
      %v522 = vunpack.c.l.b16 %v238
      %v523 = vunpack.c.l.b16 %v239
      %v524 = vunpack.c.h.b16 %v239
      %v525 = vunpack.c.l.b16 %v240
      %v526 = vunpack.c.l.b16 %v241
      %v527 = vunpack.c.h.b16 %v241
      %v528 = vunpack.c.l.b16 %v242
      %v529 = vunpack.c.l.b16 %v243
      %v530 = vunpack.c.h.b16 %v243
      %v531 = vunpack.c.l.b16 %v244
      %v532 = vunpack.c.l.b16 %v245
      %v533 = vunpack.c.h.b16 %v245
      %v534 = vunpack.c.l.b16 %v246
      %v535 = vunpack.c.l.b16 %v247
      %v536 = vunpack.c.h.b16 %v247
      %v537 = vunpack.c.l.b16 %v248
      %v538 = vunpack.c.l.b16 %v249
      %v539 = vunpack.c.h.b16 %v249
      %v540 = vunpack.c.l.b16 %v250
      %v541 = vunpack.c.l.b16 %v251
      %v542 = vunpack.c.h.b16 %v251
      %v543 = vunpack.c.l.b16 %v252
      %v544 = vunpack.c.l.b16 %v253
      %v545 = vunpack.c.h.b16 %v253
      %v546 = vunpack.c.l.b16 %v254
      %v547 = vunpack.c.l.b16 %v255
      %v548 = vunpack.c.h.b16 %v255
      %v549 = vunpack.c.l.b16 %v256
      %v550 = vunpack.c.l.b16 %v257
      %v551 = vunpack.c.h.b16 %v257
      %v552 = vunpack.c.l.b16 %v258
      %v553 = vunpack.c.l.b16 %v259
      %v554 = vunpack.c.h.b16 %v259
      %v555 = vunpack.c.l.b16 %v260
      %v556 = vunpack.c.l.b16 %v261
      %v557 = vunpack.c.h.b16 %v261
      %v558 = vunpack.c.l.b16 %v262
      %v559 = vunpack.c.l.b16 %v263
      %v560 = vunpack.c.h.b16 %v263
      %v561 = vunpack.c.l.b16 %v264
      %v562 = vunpack.c.l.b16 %v265
      %v563 = vunpack.c.h.b16 %v265
      %v564 = vunpack.c.l.b16 %v266
      %v565 = vunpack.c.l.b16 %v267
      %v566 = vunpack.c.h.b16 %v267
      %v567 = vunpack.c.l.b16 %v268
      %v568 = vunpack.c.l.b16 %v269
      %v569 = vunpack.c.h.b16 %v269
      %v570 = vunpack.c.l.b16 %v270
      %v571 = vunpack.c.l.b16 %v271
      %v572 = vunpack.c.h.b16 %v271
      %v573 = vunpack.c.l.b16 %v272
      %v574 = vunpack.c.l.b16 %v273
      %v575 = vunpack.c.h.b16 %v273
      %v576 = vunpack.c.l.b16 %v274
      %v577 = vunpack.c.l.b16 %v275
      %v578 = vunpack.c.h.b16 %v275
      %v579 = vunpack.c.l.b16 %v276
      %v580 = vunpack.c.l.b16 %v277
      %v581 = vunpack.c.h.b16 %v277
      %v582 = vunpack.c.l.b16 %v278
      %v583 = vunpack.c.l.b16 %v279
      %v584 = vunpack.c.h.b16 %v279
      %v585 = vunpack.c.l.b16 %v280
      %v586 = vunpack.c.l.b16 %v281
      %v587 = vunpack.c.h.b16 %v281
      %v588 = vunpack.c.l.b16 %v282
      %v589 = vunpack.c.l.b16 %v283
      %v590 = vunpack.c.h.b16 %v283
      %v591 = vunpack.c.l.b16 %v284
      %v592 = vunpack.c.l.b16 %v285
      %v593 = vunpack.c.h.b16 %v285
      %v594 = vunpack.c.l.b16 %v286
      %v595 = vunpack.c.l.b16 %v287
      %v596 = vunpack.c.h.b16 %v287
      %v597 = vunpack.c.l.b16 %v288
      %v598 = vunpack.c.l.b16 %v289
      %v599 = vunpack.c.h.b16 %v289
      %v600 = vunpack.c.l.b16 %v290
      %v601 = vunpack.c.l.b16 %v291
      %v602 = vunpack.c.h.b16 %v291
      %v603 = vunpack.c.l.b16 %v292
      %v604 = vunpack.c.l.b16 %v293
      %v605 = vunpack.c.h.b16 %v293
      %v606 = vunpack.c.l.b16 %v294
      %v607 = vunpack.c.l.b16 %v295
      %v608 = vunpack.c.h.b16 %v295
      %v609 = vunpack.c.l.b16 %v296
      %v610 = vunpack.c.l.b16 %v297
      %v611 = vunpack.c.h.b16 %v297
      %v612 = vunpack.c.l.b16 %v298
      %v613 = vunpack.c.l.b16 %v299
      %v614 = vunpack.c.h.b16 %v299
      %v615 = vunpack.c.l.b16 %v300
      %v616 = vunpack.c.l.b16 %v301
      %v617 = vunpack.c.h.b16 %v301
      %v618 = vunpack.c.l.b16 %v302
      %v619 = vunpack.c.l.b16 %v303
      %v620 = vunpack.c.h.b16 %v303
      %v621 = vunpack.c.l.b16 %v304
      %v622 = vunpack.c.l.b16 %v305
      %v623 = vunpack.c.h.b16 %v305
      %v624 = vunpack.c.l.b16 %v306
      %v625 = vunpack.c.l.b16 %v307
      %v626 = vunpack.c.h.b16 %v307
      %v627 = vunpack.c.l.b16 %v308
      %v628 = vunpack.c.l.b16 %v309
      %v629 = vunpack.c.h.b16 %v309
      %v630 = vunpack.c.l.b16 %v310
      %v631 = vunpack.c.l.b16 %v311
      %v632 = vunpack.c.h.b16 %v311
      %v633 = vunpack.c.l.b16 %v312
      %v634 = vunpack.c.l.b16 %v313
      %v635 = vunpack.c.h.b16 %v313
      %v636 = vunpack.c.l.b16 %v314
      %v637 = vunpack.c.l.b16 %v315
      %v638 = vunpack.c.h.b16 %v315
      %v639 = vunpack.c.l.b16 %v316
      %v640 = vpack.c.b16 %v475, %v472
      %v641 = vpack.c.b16 %v476, %v473
      %v642 = vpack.c.b16 %v477, %v474
      %v643 = vpack.c.b16 %v481, %v478
      %v644 = vpack.c.b16 %v482, %v479
      %v645 = vpack.c.b16 %v483, %v480
      %v646 = vpack.c.b16 %v487, %v484
      %v647 = vpack.c.b16 %v488, %v485
      %v648 = vpack.c.b16 %v489, %v486
      %v649 = vpack.c.b16 %v493, %v490
      %v650 = vpack.c.b16 %v494, %v491
      %v651 = vpack.c.b16 %v495, %v492
      %v652 = vpack.c.b16 %v499, %v496
      %v653 = vpack.c.b16 %v500, %v497
      %v654 = vpack.c.b16 %v501, %v498
      %v655 = vpack.c.b16 %v505, %v502
      %v656 = vpack.c.b16 %v506, %v503
      %v657 = vpack.c.b16 %v507, %v504
      %v658 = vpack.c.b16 %v511, %v508
      %v659 = vpack.c.b16 %v512, %v509
      %v660 = vpack.c.b16 %v513, %v510
      %v661 = vpack.c.b16 %v517, %v514
      %v662 = vpack.c.b16 %v518, %v515
      %v663 = vpack.c.b16 %v519, %v516
      %v664 = vpack.c.b16 %v523, %v520
      %v665 = vpack.c.b16 %v524, %v521
      %v666 = vpack.c.b16 %v525, %v522
      %v667 = vpack.c.b16 %v529, %v526
      %v668 = vpack.c.b16 %v530, %v527
      %v669 = vpack.c.b16 %v531, %v528
      %v670 = vpack.c.b16 %v535, %v532
      %v671 = vpack.c.b16 %v536, %v533
      %v672 = vpack.c.b16 %v537, %v534
      %v673 = vpack.c.b16 %v541, %v538
      %v674 = vpack.c.b16 %v542, %v539
      %v675 = vpack.c.b16 %v543, %v540
      %v676 = vpack.c.b16 %v547, %v544
      %v677 = vpack.c.b16 %v548, %v545
      %v678 = vpack.c.b16 %v549, %v546
      %v679 = vpack.c.b16 %v553, %v550
      %v680 = vpack.c.b16 %v554, %v551
      %v681 = vpack.c.b16 %v555, %v552
      %v682 = vpack.c.b16 %v559, %v556
      %v683 = vpack.c.b16 %v560, %v557
      %v684 = vpack.c.b16 %v561, %v558
      %v685 = vpack.c.b16 %v565, %v562
      %v686 = vpack.c.b16 %v566, %v563
      %v687 = vpack.c.b16 %v567, %v564
      %v688 = vpack.c.b16 %v571, %v568
      %v689 = vpack.c.b16 %v572, %v569
      %v690 = vpack.c.b16 %v573, %v570
      %v691 = vpack.c.b16 %v577, %v574
      %v692 = vpack.c.b16 %v578, %v575
      %v693 = vpack.c.b16 %v579, %v576
      %v694 = vpack.c.b16 %v583, %v580
      %v695 = vpack.c.b16 %v584, %v581
      %v696 = vpack.c.b16 %v585, %v582
      %v697 = vpack.c.b16 %v589, %v586
      %v698 = vpack.c.b16 %v590, %v587
      %v699 = vpack.c.b16 %v591, %v588
      %v700 = vpack.c.b16 %v595, %v592
      %v701 = vpack.c.b16 %v596, %v593
      %v702 = vpack.c.b16 %v597, %v594
      %v703 = vpack.c.b16 %v601, %v598
      %v704 = vpack.c.b16 %v602, %v599
      %v705 = vpack.c.b16 %v603, %v600
      %v706 = vpack.c.b16 %v607, %v604
      %v707 = vpack.c.b16 %v608, %v605
      %v708 = vpack.c.b16 %v609, %v606
      %v709 = vpack.c.b16 %v613, %v610
      %v710 = vpack.c.b16 %v614, %v611
      %v711 = vpack.c.b16 %v615, %v612
      %v712 = vpack.c.b16 %v619, %v616
      %v713 = vpack.c.b16 %v620, %v617
      %v714 = vpack.c.b16 %v621, %v618
      %v715 = vpack.c.b16 %v625, %v622
      %v716 = vpack.c.b16 %v626, %v623
      %v717 = vpack.c.b16 %v627, %v624
      %v718 = vpack.c.b16 %v631, %v628
      %v719 = vpack.c.b16 %v632, %v629
      %v720 = vpack.c.b16 %v633, %v630
      %v721 = vpack.c.b16 %v637, %v634
      %v722 = vpack.c.b16 %v638, %v635
      %v723 = vpack.c.b16 %v639, %v636
      %v816 = vunpack.c.l.b16 %v317
      %v817 = vunpack.c.l.b16 %v318
      %v818 = vunpack.c.l.b16 %v319
      %v819 = vunpack.c.l.b16 %v320
      %v820 = vunpack.c.l.b16 %v321
      %v821 = vunpack.c.l.b16 %v322
      %v822 = vunpack.c.l.b16 %v323
      %v823 = vunpack.c.l.b16 %v324
      %v824 = vunpack.c.l.b16 %v325
      %v825 = vunpack.c.l.b16 %v326
      %v826 = vunpack.c.l.b16 %v327
      %v827 = vunpack.c.l.b16 %v328
      %v828 = vunpack.c.l.b16 %v329
      %v829 = vunpack.c.l.b16 %v330
      %v830 = vunpack.c.l.b16 %v331
      %v831 = vunpack.c.l.b16 %v332
      %v832 = vunpack.c.l.b16 %v333
      %v833 = vunpack.c.l.b16 %v334
      %v834 = vunpack.c.l.b16 %v335
      %v835 = vunpack.c.l.b16 %v336
      %v836 = vunpack.c.l.b16 %v337
      %v837 = vunpack.c.l.b16 %v338
      %v838 = vunpack.c.l.b16 %v339
      %v839 = vunpack.c.l.b16 %v340
      %v840 = vunpack.c.l.b16 %v341
      %v841 = vunpack.c.l.b16 %v342
      %v842 = vunpack.c.l.b16 %v343
      %v843 = vunpack.c.l.b16 %v344
      %v844 = vunpack.c.l.b16 %v345
      %v845 = vunpack.c.l.b16 %v346
      %v846 = vunpack.c.l.b16 %v347
      %v847 = vunpack.c.l.b16 %v348
      %v848 = vunpack.c.l.b16 %v349
      %v849 = vunpack.c.l.b16 %v350
      %v850 = vunpack.c.l.b16 %v351
      %v851 = vunpack.c.l.b16 %v352
      %v852 = vpack.c.b16 %v817, %v816
      %v853 = vpack.c.b16 %v819, %v818
      %v854 = vpack.c.b16 %v821, %v820
      %v855 = vpack.c.b16 %v823, %v822
      %v856 = vpack.c.b16 %v825, %v824
      %v857 = vpack.c.b16 %v827, %v826
      %v858 = vpack.c.b16 %v829, %v828
      %v859 = vpack.c.b16 %v831, %v830
      %v860 = vpack.c.b16 %v833, %v832
      %v861 = vpack.c.b16 %v835, %v834
      %v862 = vpack.c.b16 %v837, %v836
      %v863 = vpack.c.b16 %v839, %v838
      %v864 = vpack.c.b16 %v841, %v840
      %v865 = vpack.c.b16 %v843, %v842
      %v866 = vpack.c.b16 %v845, %v844
      %v867 = vpack.c.b16 %v847, %v846
      %v868 = vpack.c.b16 %v849, %v848
      %v869 = vpack.c.b16 %v851, %v850
      %vm888 = vcmask 261120
      %v890 = vsel %vm888, %v642, 0
      %v893 = vsel %vm888, %v645, 0
      %v896 = vsel %vm888, %v648, 0
      %v899 = vsel %vm888, %v651, 0
      %v902 = vsel %vm888, %v654, 0
      %v905 = vsel %vm888, %v657, 0
      %v908 = vsel %vm888, %v660, 0
      %v911 = vsel %vm888, %v663, 0
      %v914 = vsel %vm888, %v666, 0
      %v917 = vsel %vm888, %v669, 0
      %v920 = vsel %vm888, %v672, 0
      %v923 = vsel %vm888, %v675, 0
      %v926 = vsel %vm888, %v678, 0
      %v929 = vsel %vm888, %v681, 0
      %v932 = vsel %vm888, %v684, 0
      %v935 = vsel %vm888, %v687, 0
      %v938 = vsel %vm888, %v690, 0
      %v941 = vsel %vm888, %v693, 0
      %v944 = vsel %vm888, %v696, 0
      %v947 = vsel %vm888, %v699, 0
      %v950 = vsel %vm888, %v702, 0
      %v953 = vsel %vm888, %v705, 0
      %v956 = vsel %vm888, %v708, 0
      %v959 = vsel %vm888, %v711, 0
      %v962 = vsel %vm888, %v714, 0
      %v965 = vsel %vm888, %v717, 0
      %v968 = vsel %vm888, %v720, 0
      %v971 = vsel %vm888, %v723, 0
      %973 = vmatprep.subr.bf16.mxu0 0
      %974 = vmatpush1.bf16.msra.mxu0 %v859
      %975 = vmatprep.subr.bf16.mxu0 0
      %976 = vmatpush1.bf16.msra.mxu0 %v858
      %977 = vmatprep.subr.bf16.mxu0 0
      %978 = vmatpush1.bf16.msra.mxu0 %v857
      %979 = vmatprep.subr.bf16.mxu0 0
      %980 = vmatpush1.bf16.msra.mxu0 %v856
      %981 = vmatprep.subr.bf16.mxu0 0
      %982 = vmatpush1.bf16.msra.mxu0 %v855
      %983 = vmatprep.subr.bf16.mxu0 0
      %984 = vmatpush1.bf16.msra.mxu0 %v854
      %985 = vmatprep.subr.bf16.mxu0 0
      %986 = vmatpush1.bf16.msra.mxu0 %v853
      %987 = vmatprep.subr.bf16.mxu0 0
      %988 = vmatpush1.bf16.msra.mxu0 %v852
      %989 = vmatprep.subr.bf16.mxu0 0
      %990 = vmatpush2.bf16.msra.mxu0 %v867
      %991 = vmatprep.subr.bf16.mxu0 0
      %992 = vmatpush2.bf16.msra.mxu0 %v866
      %993 = vmatprep.subr.bf16.mxu0 0
      %994 = vmatpush2.bf16.msra.mxu0 %v865
      %995 = vmatprep.subr.bf16.mxu0 0
      %996 = vmatpush2.bf16.msra.mxu0 %v864
      %997 = vmatprep.subr.bf16.mxu0 0
      %998 = vmatpush2.bf16.msra.mxu0 %v863
      %999 = vmatprep.subr.bf16.mxu0 0
      %1000 = vmatpush2.bf16.msra.mxu0 %v862
      %1001 = vmatprep.subr.bf16.mxu0 0
      %1002 = vmatpush2.bf16.msra.mxu0 %v861
      %1003 = vmatprep.subr.bf16.mxu0 0
      %1004 = vmatpush2.bf16.msra.mxu0 %v860
      %1005 = vmatprep.mubr.bf16.mxu0 %v641
      %1006 = vmatmul.mubr.bf16.gmra.mxu0 %v640
      %v1007 = vpop.f32.mrf.mxu0
      %v1008 = vadd.f32 %v358, %v1007
      %v1009 = vpop.f32.mrf.mxu0
      %v1010 = vpop.f32.mrf.mxu0
      %v1011 = vadd.f32 %v358, %v1010
      %v1012 = vpop.f32.mrf.mxu0
      %1013 = vmatprep.mubr.bf16.mxu0 %v644
      %1014 = vmatmul.mubr.bf16.gmra.mxu0 %v643
      %v1015 = vpop.f32.mrf.mxu0
      %v1016 = vadd.f32 %v358, %v1015
      %v1017 = vpop.f32.mrf.mxu0
      %v1018 = vpop.f32.mrf.mxu0
      %v1019 = vadd.f32 %v358, %v1018
      %v1020 = vpop.f32.mrf.mxu0
      %1021 = vmatprep.mubr.bf16.mxu0 %v647
      %1022 = vmatmul.mubr.bf16.gmra.mxu0 %v646
      %v1023 = vpop.f32.mrf.mxu0
      %v1024 = vadd.f32 %v358, %v1023
      %v1025 = vpop.f32.mrf.mxu0
      %v1026 = vpop.f32.mrf.mxu0
      %v1027 = vadd.f32 %v358, %v1026
      %v1028 = vpop.f32.mrf.mxu0
      %1029 = vmatprep.mubr.bf16.mxu0 %v650
      %1030 = vmatmul.mubr.bf16.gmra.mxu0 %v649
      %v1031 = vpop.f32.mrf.mxu0
      %v1032 = vadd.f32 %v358, %v1031
      %v1033 = vpop.f32.mrf.mxu0
      %v1034 = vpop.f32.mrf.mxu0
      %v1035 = vadd.f32 %v358, %v1034
      %v1036 = vpop.f32.mrf.mxu0
      %1037 = vmatprep.mubr.bf16.mxu0 %v653
      %1038 = vmatmul.mubr.bf16.gmra.mxu0 %v652
      %v1039 = vpop.f32.mrf.mxu0
      %v1040 = vadd.f32 %v358, %v1039
      %v1041 = vpop.f32.mrf.mxu0
      %v1042 = vpop.f32.mrf.mxu0
      %v1043 = vadd.f32 %v358, %v1042
      %v1044 = vpop.f32.mrf.mxu0
      %1045 = vmatprep.mubr.bf16.mxu0 %v656
      %1046 = vmatmul.mubr.bf16.gmra.mxu0 %v655
      %v1047 = vpop.f32.mrf.mxu0
      %v1048 = vadd.f32 %v358, %v1047
      %v1049 = vpop.f32.mrf.mxu0
      %v1050 = vpop.f32.mrf.mxu0
      %v1051 = vadd.f32 %v358, %v1050
      %v1052 = vpop.f32.mrf.mxu0
      %1053 = vmatprep.mubr.bf16.mxu0 %v659
      %1054 = vmatmul.mubr.bf16.gmra.mxu0 %v658
      %v1055 = vpop.f32.mrf.mxu0
      %v1056 = vadd.f32 %v358, %v1055
      %v1057 = vpop.f32.mrf.mxu0
      %v1058 = vpop.f32.mrf.mxu0
      %v1059 = vadd.f32 %v358, %v1058
      %v1060 = vpop.f32.mrf.mxu0
      %1061 = vmatprep.mubr.bf16.mxu0 %v662
      %1062 = vmatmul.mubr.bf16.gmra.mxu0 %v661
      %v1063 = vpop.f32.mrf.mxu0
      %v1064 = vadd.f32 %v358, %v1063
      %v1065 = vpop.f32.mrf.mxu0
      %v1066 = vpop.f32.mrf.mxu0
      %v1067 = vadd.f32 %v358, %v1066
      %v1068 = vpop.f32.mrf.mxu0
      %1069 = vmatprep.mubr.bf16.mxu0 %v665
      %1070 = vmatmul.mubr.bf16.gmra.mxu0 %v664
      %v1071 = vpop.f32.mrf.mxu0
      %v1072 = vadd.f32 %v358, %v1071
      %v1073 = vpop.f32.mrf.mxu0
      %v1074 = vpop.f32.mrf.mxu0
      %v1075 = vadd.f32 %v358, %v1074
      %v1076 = vpop.f32.mrf.mxu0
      %1077 = vmatprep.mubr.bf16.mxu0 %v668
      %1078 = vmatmul.mubr.bf16.gmra.mxu0 %v667
      %v1079 = vpop.f32.mrf.mxu0
      %v1080 = vadd.f32 %v358, %v1079
      %v1081 = vpop.f32.mrf.mxu0
      %v1082 = vpop.f32.mrf.mxu0
      %v1083 = vadd.f32 %v358, %v1082
      %v1084 = vpop.f32.mrf.mxu0
      %1085 = vmatprep.mubr.bf16.mxu0 %v671
      %1086 = vmatmul.mubr.bf16.gmra.mxu0 %v670
      %v1087 = vpop.f32.mrf.mxu0
      %v1088 = vadd.f32 %v358, %v1087
      %v1089 = vpop.f32.mrf.mxu0
      %v1090 = vpop.f32.mrf.mxu0
      %v1091 = vadd.f32 %v358, %v1090
      %v1092 = vpop.f32.mrf.mxu0
      %1093 = vmatprep.mubr.bf16.mxu0 %v674
      %1094 = vmatmul.mubr.bf16.gmra.mxu0 %v673
      %v1095 = vpop.f32.mrf.mxu0
      %v1096 = vadd.f32 %v358, %v1095
      %v1097 = vpop.f32.mrf.mxu0
      %v1098 = vpop.f32.mrf.mxu0
      %v1099 = vadd.f32 %v358, %v1098
      %v1100 = vpop.f32.mrf.mxu0
      %1101 = vmatprep.mubr.bf16.mxu0 %v677
      %1102 = vmatmul.mubr.bf16.gmra.mxu0 %v676
      %v1103 = vpop.f32.mrf.mxu0
      %v1104 = vadd.f32 %v358, %v1103
      %v1105 = vpop.f32.mrf.mxu0
      %v1106 = vpop.f32.mrf.mxu0
      %v1107 = vadd.f32 %v358, %v1106
      %v1108 = vpop.f32.mrf.mxu0
      %1109 = vmatprep.mubr.bf16.mxu0 %v680
      %1110 = vmatmul.mubr.bf16.gmra.mxu0 %v679
      %v1111 = vpop.f32.mrf.mxu0
      %v1112 = vadd.f32 %v358, %v1111
      %v1113 = vpop.f32.mrf.mxu0
      %v1114 = vpop.f32.mrf.mxu0
      %v1115 = vadd.f32 %v358, %v1114
      %v1116 = vpop.f32.mrf.mxu0
      %1117 = vmatprep.mubr.bf16.mxu0 %v683
      %1118 = vmatmul.mubr.bf16.gmra.mxu0 %v682
      %v1119 = vpop.f32.mrf.mxu0
      %v1120 = vadd.f32 %v358, %v1119
      %v1121 = vpop.f32.mrf.mxu0
      %v1122 = vpop.f32.mrf.mxu0
      %v1123 = vadd.f32 %v358, %v1122
      %v1124 = vpop.f32.mrf.mxu0
      %1125 = vmatprep.mubr.bf16.mxu0 %v686
      %1126 = vmatmul.mubr.bf16.gmra.mxu0 %v685
      %v1127 = vpop.f32.mrf.mxu0
      %v1128 = vadd.f32 %v358, %v1127
      %v1129 = vpop.f32.mrf.mxu0
      %v1130 = vpop.f32.mrf.mxu0
      %v1131 = vadd.f32 %v358, %v1130
      %v1132 = vpop.f32.mrf.mxu0
      %1133 = vmatprep.mubr.bf16.mxu0 %v689
      %1134 = vmatmul.mubr.bf16.gmra.mxu0 %v688
      %v1135 = vpop.f32.mrf.mxu0
      %v1136 = vadd.f32 %v358, %v1135
      %v1137 = vpop.f32.mrf.mxu0
      %v1138 = vpop.f32.mrf.mxu0
      %v1139 = vadd.f32 %v358, %v1138
      %v1140 = vpop.f32.mrf.mxu0
      %1141 = vmatprep.mubr.bf16.mxu0 %v692
      %1142 = vmatmul.mubr.bf16.gmra.mxu0 %v691
      %v1143 = vpop.f32.mrf.mxu0
      %v1144 = vadd.f32 %v358, %v1143
      %v1145 = vpop.f32.mrf.mxu0
      %v1146 = vpop.f32.mrf.mxu0
      %v1147 = vadd.f32 %v358, %v1146
      %v1148 = vpop.f32.mrf.mxu0
      %1149 = vmatprep.mubr.bf16.mxu0 %v695
      %1150 = vmatmul.mubr.bf16.gmra.mxu0 %v694
      %v1151 = vpop.f32.mrf.mxu0
      %v1152 = vadd.f32 %v358, %v1151
      %v1153 = vpop.f32.mrf.mxu0
      %v1154 = vpop.f32.mrf.mxu0
      %v1155 = vadd.f32 %v358, %v1154
      %v1156 = vpop.f32.mrf.mxu0
      %1157 = vmatprep.mubr.bf16.mxu0 %v698
      %1158 = vmatmul.mubr.bf16.gmra.mxu0 %v697
      %v1159 = vpop.f32.mrf.mxu0
      %v1160 = vadd.f32 %v358, %v1159
      %v1161 = vpop.f32.mrf.mxu0
      %v1162 = vpop.f32.mrf.mxu0
      %v1163 = vadd.f32 %v358, %v1162
      %v1164 = vpop.f32.mrf.mxu0
      %1165 = vmatprep.mubr.bf16.mxu0 %v701
      %1166 = vmatmul.mubr.bf16.gmra.mxu0 %v700
      %v1167 = vpop.f32.mrf.mxu0
      %v1168 = vadd.f32 %v358, %v1167
      %v1169 = vpop.f32.mrf.mxu0
      %v1170 = vpop.f32.mrf.mxu0
      %v1171 = vadd.f32 %v358, %v1170
      %v1172 = vpop.f32.mrf.mxu0
      %1173 = vmatprep.mubr.bf16.mxu0 %v704
      %1174 = vmatmul.mubr.bf16.gmra.mxu0 %v703
      %v1175 = vpop.f32.mrf.mxu0
      %v1176 = vadd.f32 %v358, %v1175
      %v1177 = vpop.f32.mrf.mxu0
      %v1178 = vpop.f32.mrf.mxu0
      %v1179 = vadd.f32 %v358, %v1178
      %v1180 = vpop.f32.mrf.mxu0
      %1181 = vmatprep.mubr.bf16.mxu0 %v707
      %1182 = vmatmul.mubr.bf16.gmra.mxu0 %v706
      %v1183 = vpop.f32.mrf.mxu0
      %v1184 = vadd.f32 %v358, %v1183
      %v1185 = vpop.f32.mrf.mxu0
      %v1186 = vpop.f32.mrf.mxu0
      %v1187 = vadd.f32 %v358, %v1186
      %v1188 = vpop.f32.mrf.mxu0
      %1189 = vmatprep.mubr.bf16.mxu0 %v710
      %1190 = vmatmul.mubr.bf16.gmra.mxu0 %v709
      %v1191 = vpop.f32.mrf.mxu0
      %v1192 = vadd.f32 %v358, %v1191
      %v1193 = vpop.f32.mrf.mxu0
      %v1194 = vpop.f32.mrf.mxu0
      %v1195 = vadd.f32 %v358, %v1194
      %v1196 = vpop.f32.mrf.mxu0
      %1197 = vmatprep.mubr.bf16.mxu0 %v713
      %1198 = vmatmul.mubr.bf16.gmra.mxu0 %v712
      %v1199 = vpop.f32.mrf.mxu0
      %v1200 = vadd.f32 %v358, %v1199
      %v1201 = vpop.f32.mrf.mxu0
      %v1202 = vpop.f32.mrf.mxu0
      %v1203 = vadd.f32 %v358, %v1202
      %v1204 = vpop.f32.mrf.mxu0
      %1205 = vmatprep.mubr.bf16.mxu0 %v716
      %1206 = vmatmul.mubr.bf16.gmra.mxu0 %v715
      %v1207 = vpop.f32.mrf.mxu0
      %v1208 = vadd.f32 %v358, %v1207
      %v1209 = vpop.f32.mrf.mxu0
      %v1210 = vpop.f32.mrf.mxu0
      %v1211 = vadd.f32 %v358, %v1210
      %v1212 = vpop.f32.mrf.mxu0
      %1213 = vmatprep.mubr.bf16.mxu0 %v719
      %1214 = vmatmul.mubr.bf16.gmra.mxu0 %v718
      %v1215 = vpop.f32.mrf.mxu0
      %v1216 = vadd.f32 %v358, %v1215
      %v1217 = vpop.f32.mrf.mxu0
      %v1218 = vpop.f32.mrf.mxu0
      %v1219 = vadd.f32 %v358, %v1218
      %v1220 = vpop.f32.mrf.mxu0
      %1221 = vmatprep.mubr.bf16.mxu0 %v722
      %1222 = vmatmul.mubr.bf16.gmra.mxu0 %v721
      %v1223 = vpop.f32.mrf.mxu0
      %v1224 = vadd.f32 %v358, %v1223
      %v1225 = vpop.f32.mrf.mxu0
      %v1226 = vpop.f32.mrf.mxu0
      %v1227 = vadd.f32 %v358, %v1226
      %v1228 = vpop.f32.mrf.mxu0
      %1229 = vdwg.mxu0
      %1230 = vmatprep.subr.bf16.mxu0 0
      %1231 = vmatpush1.bf16.msra.mxu0 0
      %1232 = vmatprep.subr.bf16.mxu0 0
      %1233 = vmatpush1.bf16.msra.mxu0 0
      %1234 = vmatprep.subr.bf16.mxu0 0
      %1235 = vmatpush1.bf16.msra.mxu0 0
      %1236 = vmatprep.subr.bf16.mxu0 0
      %1237 = vmatpush1.bf16.msra.mxu0 0
      %1238 = vmatprep.subr.bf16.mxu0 0
      %1239 = vmatpush1.bf16.msra.mxu0 0
      %1240 = vmatprep.subr.bf16.mxu0 0
      %1241 = vmatpush1.bf16.msra.mxu0 0
      %1242 = vmatprep.subr.bf16.mxu0 0
      %1243 = vmatpush1.bf16.msra.mxu0 %v869
      %1244 = vmatprep.subr.bf16.mxu0 0
      %1245 = vmatpush1.bf16.msra.mxu0 %v868
      %1246 = vmatprep.subr.bf16.mxu0 0
      %1247 = vmatpush2.bf16.msra.mxu0 0
      %1248 = vmatprep.subr.bf16.mxu0 0
      %1249 = vmatpush2.bf16.msra.mxu0 0
      %1250 = vmatprep.subr.bf16.mxu0 0
      %1251 = vmatpush2.bf16.msra.mxu0 0
      %1252 = vmatprep.subr.bf16.mxu0 0
      %1253 = vmatpush2.bf16.msra.mxu0 0
      %1254 = vmatprep.subr.bf16.mxu0 0
      %1255 = vmatpush2.bf16.msra.mxu0 0
      %1256 = vmatprep.subr.bf16.mxu0 0
      %1257 = vmatpush2.bf16.msra.mxu0 0
      %1258 = vmatprep.subr.bf16.mxu0 0
      %1259 = vmatpush2.bf16.msra.mxu0 0
      %1260 = vmatprep.subr.bf16.mxu0 0
      %1261 = vmatpush2.bf16.msra.mxu0 0
      %1262 = vmatprep.mubr.bf16.mxu0 0
      %1263 = vmatmul.mubr.bf16.gmra.mxu0 %v890
      %v1264 = vpop.f32.mrf.mxu0
      %v1265 = vadd.f32 %v1008, %v1264
      %v1266 = vpop.f32.mrf.mxu0
      %v1267 = vpop.f32.mrf.mxu0
      %v1268 = vadd.f32 %v1011, %v1267
      %v1269 = vpop.f32.mrf.mxu0
      %1270 = vmatprep.mubr.bf16.mxu0 0
      %1271 = vmatmul.mubr.bf16.gmra.mxu0 %v893
      %v1272 = vpop.f32.mrf.mxu0
      %v1273 = vadd.f32 %v1016, %v1272
      %v1274 = vpop.f32.mrf.mxu0
      %v1275 = vpop.f32.mrf.mxu0
      %v1276 = vadd.f32 %v1019, %v1275
      %v1277 = vpop.f32.mrf.mxu0
      %1278 = vmatprep.mubr.bf16.mxu0 0
      %1279 = vmatmul.mubr.bf16.gmra.mxu0 %v896
      %v1280 = vpop.f32.mrf.mxu0
      %v1281 = vadd.f32 %v1024, %v1280
      %v1282 = vpop.f32.mrf.mxu0
      %v1283 = vpop.f32.mrf.mxu0
      %v1284 = vadd.f32 %v1027, %v1283
      %v1285 = vpop.f32.mrf.mxu0
      %1286 = vmatprep.mubr.bf16.mxu0 0
      %1287 = vmatmul.mubr.bf16.gmra.mxu0 %v899
      %v1288 = vpop.f32.mrf.mxu0
      %v1289 = vadd.f32 %v1032, %v1288
      %v1290 = vpop.f32.mrf.mxu0
      %v1291 = vpop.f32.mrf.mxu0
      %v1292 = vadd.f32 %v1035, %v1291
      %v1293 = vpop.f32.mrf.mxu0
      %1294 = vmatprep.mubr.bf16.mxu0 0
      %1295 = vmatmul.mubr.bf16.gmra.mxu0 %v902
      %v1296 = vpop.f32.mrf.mxu0
      %v1297 = vadd.f32 %v1040, %v1296
      %v1298 = vpop.f32.mrf.mxu0
      %v1299 = vpop.f32.mrf.mxu0
      %v1300 = vadd.f32 %v1043, %v1299
      %v1301 = vpop.f32.mrf.mxu0
      %1302 = vmatprep.mubr.bf16.mxu0 0
      %1303 = vmatmul.mubr.bf16.gmra.mxu0 %v905
      %v1304 = vpop.f32.mrf.mxu0
      %v1305 = vadd.f32 %v1048, %v1304
      %v1306 = vpop.f32.mrf.mxu0
      %v1307 = vpop.f32.mrf.mxu0
      %v1308 = vadd.f32 %v1051, %v1307
      %v1309 = vpop.f32.mrf.mxu0
      %1310 = vmatprep.mubr.bf16.mxu0 0
      %1311 = vmatmul.mubr.bf16.gmra.mxu0 %v908
      %v1312 = vpop.f32.mrf.mxu0
      %v1313 = vadd.f32 %v1056, %v1312
      %v1314 = vpop.f32.mrf.mxu0
      %v1315 = vpop.f32.mrf.mxu0
      %v1316 = vadd.f32 %v1059, %v1315
      %v1317 = vpop.f32.mrf.mxu0
      %1318 = vmatprep.mubr.bf16.mxu0 0
      %1319 = vmatmul.mubr.bf16.gmra.mxu0 %v911
      %v1320 = vpop.f32.mrf.mxu0
      %v1321 = vadd.f32 %v1064, %v1320
      %v1322 = vpop.f32.mrf.mxu0
      %v1323 = vpop.f32.mrf.mxu0
      %v1324 = vadd.f32 %v1067, %v1323
      %v1325 = vpop.f32.mrf.mxu0
      %1326 = vmatprep.mubr.bf16.mxu0 0
      %1327 = vmatmul.mubr.bf16.gmra.mxu0 %v914
      %v1328 = vpop.f32.mrf.mxu0
      %v1329 = vadd.f32 %v1072, %v1328
      %v1330 = vpop.f32.mrf.mxu0
      %v1331 = vpop.f32.mrf.mxu0
      %v1332 = vadd.f32 %v1075, %v1331
      %v1333 = vpop.f32.mrf.mxu0
      %1334 = vmatprep.mubr.bf16.mxu0 0
      %1335 = vmatmul.mubr.bf16.gmra.mxu0 %v917
      %v1336 = vpop.f32.mrf.mxu0
      %v1337 = vadd.f32 %v1080, %v1336
      %v1338 = vpop.f32.mrf.mxu0
      %v1339 = vpop.f32.mrf.mxu0
      %v1340 = vadd.f32 %v1083, %v1339
      %v1341 = vpop.f32.mrf.mxu0
      %1342 = vmatprep.mubr.bf16.mxu0 0
      %1343 = vmatmul.mubr.bf16.gmra.mxu0 %v920
      %v1344 = vpop.f32.mrf.mxu0
      %v1345 = vadd.f32 %v1088, %v1344
      %v1346 = vpop.f32.mrf.mxu0
      %v1347 = vpop.f32.mrf.mxu0
      %v1348 = vadd.f32 %v1091, %v1347
      %v1349 = vpop.f32.mrf.mxu0
      %1350 = vmatprep.mubr.bf16.mxu0 0
      %1351 = vmatmul.mubr.bf16.gmra.mxu0 %v923
      %v1352 = vpop.f32.mrf.mxu0
      %v1353 = vadd.f32 %v1096, %v1352
      %v1354 = vpop.f32.mrf.mxu0
      %v1355 = vpop.f32.mrf.mxu0
      %v1356 = vadd.f32 %v1099, %v1355
      %v1357 = vpop.f32.mrf.mxu0
      %1358 = vmatprep.mubr.bf16.mxu0 0
      %1359 = vmatmul.mubr.bf16.gmra.mxu0 %v926
      %v1360 = vpop.f32.mrf.mxu0
      %v1361 = vadd.f32 %v1104, %v1360
      %v1362 = vpop.f32.mrf.mxu0
      %v1363 = vpop.f32.mrf.mxu0
      %v1364 = vadd.f32 %v1107, %v1363
      %v1365 = vpop.f32.mrf.mxu0
      %1366 = vmatprep.mubr.bf16.mxu0 0
      %1367 = vmatmul.mubr.bf16.gmra.mxu0 %v929
      %v1368 = vpop.f32.mrf.mxu0
      %v1369 = vadd.f32 %v1112, %v1368
      %v1370 = vpop.f32.mrf.mxu0
      %v1371 = vpop.f32.mrf.mxu0
      %v1372 = vadd.f32 %v1115, %v1371
      %v1373 = vpop.f32.mrf.mxu0
      %1374 = vmatprep.mubr.bf16.mxu0 0
      %1375 = vmatmul.mubr.bf16.gmra.mxu0 %v932
      %v1376 = vpop.f32.mrf.mxu0
      %v1377 = vadd.f32 %v1120, %v1376
      %v1378 = vpop.f32.mrf.mxu0
      %v1379 = vpop.f32.mrf.mxu0
      %v1380 = vadd.f32 %v1123, %v1379
      %v1381 = vpop.f32.mrf.mxu0
      %1382 = vmatprep.mubr.bf16.mxu0 0
      %1383 = vmatmul.mubr.bf16.gmra.mxu0 %v935
      %v1384 = vpop.f32.mrf.mxu0
      %v1385 = vadd.f32 %v1128, %v1384
      %v1386 = vpop.f32.mrf.mxu0
      %v1387 = vpop.f32.mrf.mxu0
      %v1388 = vadd.f32 %v1131, %v1387
      %v1389 = vpop.f32.mrf.mxu0
      %1390 = vmatprep.mubr.bf16.mxu0 0
      %1391 = vmatmul.mubr.bf16.gmra.mxu0 %v938
      %v1392 = vpop.f32.mrf.mxu0
      %v1393 = vadd.f32 %v1136, %v1392
      %v1394 = vpop.f32.mrf.mxu0
      %v1395 = vpop.f32.mrf.mxu0
      %v1396 = vadd.f32 %v1139, %v1395
      %v1397 = vpop.f32.mrf.mxu0
      %1398 = vmatprep.mubr.bf16.mxu0 0
      %1399 = vmatmul.mubr.bf16.gmra.mxu0 %v941
      %v1400 = vpop.f32.mrf.mxu0
      %v1401 = vadd.f32 %v1144, %v1400
      %v1402 = vpop.f32.mrf.mxu0
      %v1403 = vpop.f32.mrf.mxu0
      %v1404 = vadd.f32 %v1147, %v1403
      %v1405 = vpop.f32.mrf.mxu0
      %1406 = vmatprep.mubr.bf16.mxu0 0
      %1407 = vmatmul.mubr.bf16.gmra.mxu0 %v944
      %v1408 = vpop.f32.mrf.mxu0
      %v1409 = vadd.f32 %v1152, %v1408
      %v1410 = vpop.f32.mrf.mxu0
      %v1411 = vpop.f32.mrf.mxu0
      %v1412 = vadd.f32 %v1155, %v1411
      %v1413 = vpop.f32.mrf.mxu0
      %1414 = vmatprep.mubr.bf16.mxu0 0
      %1415 = vmatmul.mubr.bf16.gmra.mxu0 %v947
      %v1416 = vpop.f32.mrf.mxu0
      %v1417 = vadd.f32 %v1160, %v1416
      %v1418 = vpop.f32.mrf.mxu0
      %v1419 = vpop.f32.mrf.mxu0
      %v1420 = vadd.f32 %v1163, %v1419
      %v1421 = vpop.f32.mrf.mxu0
      %1422 = vmatprep.mubr.bf16.mxu0 0
      %1423 = vmatmul.mubr.bf16.gmra.mxu0 %v950
      %v1424 = vpop.f32.mrf.mxu0
      %v1425 = vadd.f32 %v1168, %v1424
      %v1426 = vpop.f32.mrf.mxu0
      %v1427 = vpop.f32.mrf.mxu0
      %v1428 = vadd.f32 %v1171, %v1427
      %v1429 = vpop.f32.mrf.mxu0
      %1430 = vmatprep.mubr.bf16.mxu0 0
      %1431 = vmatmul.mubr.bf16.gmra.mxu0 %v953
      %v1432 = vpop.f32.mrf.mxu0
      %v1433 = vadd.f32 %v1176, %v1432
      %v1434 = vpop.f32.mrf.mxu0
      %v1435 = vpop.f32.mrf.mxu0
      %v1436 = vadd.f32 %v1179, %v1435
      %v1437 = vpop.f32.mrf.mxu0
      %1438 = vmatprep.mubr.bf16.mxu0 0
      %1439 = vmatmul.mubr.bf16.gmra.mxu0 %v956
      %v1440 = vpop.f32.mrf.mxu0
      %v1441 = vadd.f32 %v1184, %v1440
      %v1442 = vpop.f32.mrf.mxu0
      %v1443 = vpop.f32.mrf.mxu0
      %v1444 = vadd.f32 %v1187, %v1443
      %v1445 = vpop.f32.mrf.mxu0
      %1446 = vmatprep.mubr.bf16.mxu0 0
      %1447 = vmatmul.mubr.bf16.gmra.mxu0 %v959
      %v1448 = vpop.f32.mrf.mxu0
      %v1449 = vadd.f32 %v1192, %v1448
      %v1450 = vpop.f32.mrf.mxu0
      %v1451 = vpop.f32.mrf.mxu0
      %v1452 = vadd.f32 %v1195, %v1451
      %v1453 = vpop.f32.mrf.mxu0
      %1454 = vmatprep.mubr.bf16.mxu0 0
      %1455 = vmatmul.mubr.bf16.gmra.mxu0 %v962
      %v1456 = vpop.f32.mrf.mxu0
      %v1457 = vadd.f32 %v1200, %v1456
      %v1458 = vpop.f32.mrf.mxu0
      %v1459 = vpop.f32.mrf.mxu0
      %v1460 = vadd.f32 %v1203, %v1459
      %v1461 = vpop.f32.mrf.mxu0
      %1462 = vmatprep.mubr.bf16.mxu0 0
      %1463 = vmatmul.mubr.bf16.gmra.mxu0 %v965
      %v1464 = vpop.f32.mrf.mxu0
      %v1465 = vadd.f32 %v1208, %v1464
      %v1466 = vpop.f32.mrf.mxu0
      %v1467 = vpop.f32.mrf.mxu0
      %v1468 = vadd.f32 %v1211, %v1467
      %v1469 = vpop.f32.mrf.mxu0
      %1470 = vmatprep.mubr.bf16.mxu0 0
      %1471 = vmatmul.mubr.bf16.gmra.mxu0 %v968
      %v1472 = vpop.f32.mrf.mxu0
      %v1473 = vadd.f32 %v1216, %v1472
      %v1474 = vpop.f32.mrf.mxu0
      %v1475 = vpop.f32.mrf.mxu0
      %v1476 = vadd.f32 %v1219, %v1475
      %v1477 = vpop.f32.mrf.mxu0
      %1478 = vmatprep.mubr.bf16.mxu0 0
      %1479 = vmatmul.mubr.bf16.gmra.mxu0 %v971
      %v1480 = vpop.f32.mrf.mxu0
      %v1481 = vadd.f32 %v1224, %v1480
      %v1482 = vpop.f32.mrf.mxu0
      %v1483 = vpop.f32.mrf.mxu0
      %v1484 = vadd.f32 %v1227, %v1483
      %v1485 = vpop.f32.mrf.mxu0
      %1486 = vdwg.mxu0
      %vm1487 = vcmp.gt.f32.partialorder %v1265, 0.0
      %vm1488 = vcmp.gt.f32.partialorder %v1268, 0.0
      %vm1489 = vcmp.gt.f32.partialorder %v1273, 0.0
      %vm1490 = vcmp.gt.f32.partialorder %v1276, 0.0
      %vm1491 = vcmp.gt.f32.partialorder %v1281, 0.0
      %vm1492 = vcmp.gt.f32.partialorder %v1284, 0.0
      %vm1493 = vcmp.gt.f32.partialorder %v1289, 0.0
      %vm1494 = vcmp.gt.f32.partialorder %v1292, 0.0
      %vm1495 = vcmp.gt.f32.partialorder %v1297, 0.0
      %vm1496 = vcmp.gt.f32.partialorder %v1300, 0.0
      %vm1497 = vcmp.gt.f32.partialorder %v1305, 0.0
      %vm1498 = vcmp.gt.f32.partialorder %v1308, 0.0
      %vm1499 = vcmp.gt.f32.partialorder %v1313, 0.0
      %vm1500 = vcmp.gt.f32.partialorder %v1316, 0.0
      %vm1501 = vcmp.gt.f32.partialorder %v1321, 0.0
      %vm1502 = vcmp.gt.f32.partialorder %v1324, 0.0
      %vm1503 = vcmp.gt.f32.partialorder %v1329, 0.0
      %vm1504 = vcmp.gt.f32.partialorder %v1332, 0.0
      %vm1505 = vcmp.gt.f32.partialorder %v1337, 0.0
      %vm1506 = vcmp.gt.f32.partialorder %v1340, 0.0
      %vm1507 = vcmp.gt.f32.partialorder %v1345, 0.0
      %vm1508 = vcmp.gt.f32.partialorder %v1348, 0.0
      %vm1509 = vcmp.gt.f32.partialorder %v1353, 0.0
      %vm1510 = vcmp.gt.f32.partialorder %v1356, 0.0
      %vm1511 = vcmp.gt.f32.partialorder %v1361, 0.0
      %vm1512 = vcmp.gt.f32.partialorder %v1364, 0.0
      %vm1513 = vcmp.gt.f32.partialorder %v1369, 0.0
      %vm1514 = vcmp.gt.f32.partialorder %v1372, 0.0
      %vm1515 = vcmp.gt.f32.partialorder %v1377, 0.0
      %vm1516 = vcmp.gt.f32.partialorder %v1380, 0.0
      %vm1517 = vcmp.gt.f32.partialorder %v1385, 0.0
      %vm1518 = vcmp.gt.f32.partialorder %v1388, 0.0
      %vm1519 = vcmp.gt.f32.partialorder %v1393, 0.0
      %vm1520 = vcmp.gt.f32.partialorder %v1396, 0.0
      %vm1521 = vcmp.gt.f32.partialorder %v1401, 0.0
      %vm1522 = vcmp.gt.f32.partialorder %v1404, 0.0
      %vm1523 = vcmp.gt.f32.partialorder %v1409, 0.0
      %vm1524 = vcmp.gt.f32.partialorder %v1412, 0.0
      %vm1525 = vcmp.gt.f32.partialorder %v1417, 0.0
      %vm1526 = vcmp.gt.f32.partialorder %v1420, 0.0
      %vm1527 = vcmp.gt.f32.partialorder %v1425, 0.0
      %vm1528 = vcmp.gt.f32.partialorder %v1428, 0.0
      %vm1529 = vcmp.gt.f32.partialorder %v1433, 0.0
      %vm1530 = vcmp.gt.f32.partialorder %v1436, 0.0
      %vm1531 = vcmp.gt.f32.partialorder %v1441, 0.0
      %vm1532 = vcmp.gt.f32.partialorder %v1444, 0.0
      %vm1533 = vcmp.gt.f32.partialorder %v1449, 0.0
      %vm1534 = vcmp.gt.f32.partialorder %v1452, 0.0
      %vm1535 = vcmp.gt.f32.partialorder %v1457, 0.0
      %vm1536 = vcmp.gt.f32.partialorder %v1460, 0.0
      %vm1537 = vcmp.gt.f32.partialorder %v1465, 0.0
      %vm1538 = vcmp.gt.f32.partialorder %v1468, 0.0
      %vm1539 = vcmp.gt.f32.partialorder %v1473, 0.0
      %vm1540 = vcmp.gt.f32.partialorder %v1476, 0.0
      %vm1541 = vcmp.gt.f32.partialorder %v1481, 0.0
      %vm1542 = vcmp.gt.f32.partialorder %v1484, 0.0
      %v1543 = vld [vmem:[%s3] sm:$0x1]
      %v1545 = vlaneseq
      %v1546 = vshrl.u32 %v1545, 7
      %v1547 = vsub.s32 0, %v1546
      %v1548 = vrot.slane %v1543, %v1547
      %v1550 = vmul.f32 %v1548, %v1265
      %v1551 = vmul.f32 %v1548, %v1268
      %v1552 = vmul.f32 %v1548, %v1273
      %v1553 = vmul.f32 %v1548, %v1276
      %v1554 = vmul.f32 %v1548, %v1281
      %v1555 = vmul.f32 %v1548, %v1284
      %v1556 = vmul.f32 %v1548, %v1289
      %v1557 = vmul.f32 %v1548, %v1292
      %v1558 = vmul.f32 %v1548, %v1297
      %v1559 = vmul.f32 %v1548, %v1300
      %v1560 = vmul.f32 %v1548, %v1305
      %v1561 = vmul.f32 %v1548, %v1308
      %v1562 = vmul.f32 %v1548, %v1313
      %v1563 = vmul.f32 %v1548, %v1316
      %v1564 = vmul.f32 %v1548, %v1321
      %v1565 = vmul.f32 %v1548, %v1324
      %v1566 = vmul.f32 %v1548, %v1329
      %v1567 = vmul.f32 %v1548, %v1332
      %v1568 = vmul.f32 %v1548, %v1337
      %v1569 = vmul.f32 %v1548, %v1340
      %v1570 = vmul.f32 %v1548, %v1345
      %v1571 = vmul.f32 %v1548, %v1348
      %v1572 = vmul.f32 %v1548, %v1353
      %v1573 = vmul.f32 %v1548, %v1356
      %v1574 = vmul.f32 %v1548, %v1361
      %v1575 = vmul.f32 %v1548, %v1364
      %v1576 = vmul.f32 %v1548, %v1369
      %v1577 = vmul.f32 %v1548, %v1372
      %v1578 = vmul.f32 %v1548, %v1377
      %v1579 = vmul.f32 %v1548, %v1380
      %v1580 = vmul.f32 %v1548, %v1385
      %v1581 = vmul.f32 %v1548, %v1388
      %v1582 = vmul.f32 %v1548, %v1393
      %v1583 = vmul.f32 %v1548, %v1396
      %v1584 = vmul.f32 %v1548, %v1401
      %v1585 = vmul.f32 %v1548, %v1404
      %v1586 = vmul.f32 %v1548, %v1409
      %v1587 = vmul.f32 %v1548, %v1412
      %v1588 = vmul.f32 %v1548, %v1417
      %v1589 = vmul.f32 %v1548, %v1420
      %v1590 = vmul.f32 %v1548, %v1425
      %v1591 = vmul.f32 %v1548, %v1428
      %v1592 = vmul.f32 %v1548, %v1433
      %v1593 = vmul.f32 %v1548, %v1436
      %v1594 = vmul.f32 %v1548, %v1441
      %v1595 = vmul.f32 %v1548, %v1444
      %v1596 = vmul.f32 %v1548, %v1449
      %v1597 = vmul.f32 %v1548, %v1452
      %v1598 = vmul.f32 %v1548, %v1457
      %v1599 = vmul.f32 %v1548, %v1460
      %v1600 = vmul.f32 %v1548, %v1465
      %v1601 = vmul.f32 %v1548, %v1468
      %v1602 = vmul.f32 %v1548, %v1473
      %v1603 = vmul.f32 %v1548, %v1476
      %v1604 = vmul.f32 %v1548, %v1481
      %v1605 = vmul.f32 %v1548, %v1484
      %v1606 = vsel %vm1487, %v1265, %v1550
      %v1607 = vsel %vm1488, %v1268, %v1551
      %v1608 = vsel %vm1489, %v1273, %v1552
      %v1609 = vsel %vm1490, %v1276, %v1553
      %v1610 = vsel %vm1491, %v1281, %v1554
      %v1611 = vsel %vm1492, %v1284, %v1555
      %v1612 = vsel %vm1493, %v1289, %v1556
      %v1613 = vsel %vm1494, %v1292, %v1557
      %v1614 = vsel %vm1495, %v1297, %v1558
      %v1615 = vsel %vm1496, %v1300, %v1559
      %v1616 = vsel %vm1497, %v1305, %v1560
      %v1617 = vsel %vm1498, %v1308, %v1561
      %v1618 = vsel %vm1499, %v1313, %v1562
      %v1619 = vsel %vm1500, %v1316, %v1563
      %v1620 = vsel %vm1501, %v1321, %v1564
      %v1621 = vsel %vm1502, %v1324, %v1565
      %v1622 = vsel %vm1503, %v1329, %v1566
      %v1623 = vsel %vm1504, %v1332, %v1567
      %v1624 = vsel %vm1505, %v1337, %v1568
      %v1625 = vsel %vm1506, %v1340, %v1569
      %v1626 = vsel %vm1507, %v1345, %v1570
      %v1627 = vsel %vm1508, %v1348, %v1571
      %v1628 = vsel %vm1509, %v1353, %v1572
      %v1629 = vsel %vm1510, %v1356, %v1573
      %v1630 = vsel %vm1511, %v1361, %v1574
      %v1631 = vsel %vm1512, %v1364, %v1575
      %v1632 = vsel %vm1513, %v1369, %v1576
      %v1633 = vsel %vm1514, %v1372, %v1577
      %v1634 = vsel %vm1515, %v1377, %v1578
      %v1635 = vsel %vm1516, %v1380, %v1579
      %v1636 = vsel %vm1517, %v1385, %v1580
      %v1637 = vsel %vm1518, %v1388, %v1581
      %v1638 = vsel %vm1519, %v1393, %v1582
      %v1639 = vsel %vm1520, %v1396, %v1583
      %v1640 = vsel %vm1521, %v1401, %v1584
      %v1641 = vsel %vm1522, %v1404, %v1585
      %v1642 = vsel %vm1523, %v1409, %v1586
      %v1643 = vsel %vm1524, %v1412, %v1587
      %v1644 = vsel %vm1525, %v1417, %v1588
      %v1645 = vsel %vm1526, %v1420, %v1589
      %v1646 = vsel %vm1527, %v1425, %v1590
      %v1647 = vsel %vm1528, %v1428, %v1591
      %v1648 = vsel %vm1529, %v1433, %v1592
      %v1649 = vsel %vm1530, %v1436, %v1593
      %v1650 = vsel %vm1531, %v1441, %v1594
      %v1651 = vsel %vm1532, %v1444, %v1595
      %v1652 = vsel %vm1533, %v1449, %v1596
      %v1653 = vsel %vm1534, %v1452, %v1597
      %v1654 = vsel %vm1535, %v1457, %v1598
      %v1655 = vsel %vm1536, %v1460, %v1599
      %v1656 = vsel %vm1537, %v1465, %v1600
      %v1657 = vsel %vm1538, %v1468, %v1601
      %v1658 = vsel %vm1539, %v1473, %v1602
      %v1659 = vsel %vm1540, %v1476, %v1603
      %v1660 = vsel %vm1541, %v1481, %v1604
      %v1661 = vsel %vm1542, %v1484, %v1605
      %v1662 = vpack.c.bf16 %v1607, %v1606
      %v1663 = vpack.c.bf16 %v1609, %v1608
      %v1664 = vpack.c.bf16 %v1611, %v1610
      %v1665 = vpack.c.bf16 %v1613, %v1612
      %v1666 = vpack.c.bf16 %v1615, %v1614
      %v1667 = vpack.c.bf16 %v1617, %v1616
      %v1668 = vpack.c.bf16 %v1619, %v1618
      %v1669 = vpack.c.bf16 %v1621, %v1620
      %v1670 = vpack.c.bf16 %v1623, %v1622
      %v1671 = vpack.c.bf16 %v1625, %v1624
      %v1672 = vpack.c.bf16 %v1627, %v1626
      %v1673 = vpack.c.bf16 %v1629, %v1628
      %v1674 = vpack.c.bf16 %v1631, %v1630
      %v1675 = vpack.c.bf16 %v1633, %v1632
      %v1676 = vpack.c.bf16 %v1635, %v1634
      %v1677 = vpack.c.bf16 %v1637, %v1636
      %v1678 = vpack.c.bf16 %v1639, %v1638
      %v1679 = vpack.c.bf16 %v1641, %v1640
      %v1680 = vpack.c.bf16 %v1643, %v1642
      %v1681 = vpack.c.bf16 %v1645, %v1644
      %v1682 = vpack.c.bf16 %v1647, %v1646
      %v1683 = vpack.c.bf16 %v1649, %v1648
      %v1684 = vpack.c.bf16 %v1651, %v1650
      %v1685 = vpack.c.bf16 %v1653, %v1652
      %v1686 = vpack.c.bf16 %v1655, %v1654
      %v1687 = vpack.c.bf16 %v1657, %v1656
      %v1688 = vpack.c.bf16 %v1659, %v1658
      %v1689 = vpack.c.bf16 %v1661, %v1660
      %v1718 = vunpack.c.l.b16 %v1662
      %v1719 = vunpack.c.h.b16 %v1662
      %v1720 = vunpack.c.l.b16 %v1663
      %v1721 = vunpack.c.h.b16 %v1663
      %v1722 = vunpack.c.l.b16 %v1664
      %v1723 = vunpack.c.h.b16 %v1664
      %v1724 = vunpack.c.l.b16 %v1665
      %v1725 = vunpack.c.h.b16 %v1665
      %v1726 = vunpack.c.l.b16 %v1666
      %v1727 = vunpack.c.h.b16 %v1666
      %v1728 = vunpack.c.l.b16 %v1667
      %v1729 = vunpack.c.h.b16 %v1667
      %v1730 = vunpack.c.l.b16 %v1668
      %v1731 = vunpack.c.h.b16 %v1668
      %v1732 = vunpack.c.l.b16 %v1669
      %v1733 = vunpack.c.h.b16 %v1669
      %v1734 = vunpack.c.l.b16 %v1670
      %v1735 = vunpack.c.h.b16 %v1670
      %v1736 = vunpack.c.l.b16 %v1671
      %v1737 = vunpack.c.h.b16 %v1671
      %v1738 = vunpack.c.l.b16 %v1672
      %v1739 = vunpack.c.h.b16 %v1672
      %v1740 = vunpack.c.l.b16 %v1673
      %v1741 = vunpack.c.h.b16 %v1673
      %v1742 = vunpack.c.l.b16 %v1674
      %v1743 = vunpack.c.h.b16 %v1674
      %v1744 = vunpack.c.l.b16 %v1675
      %v1745 = vunpack.c.h.b16 %v1675
      %v1746 = vunpack.c.l.b16 %v1676
      %v1747 = vunpack.c.h.b16 %v1676
      %v1748 = vunpack.c.l.b16 %v1677
      %v1749 = vunpack.c.h.b16 %v1677
      %v1750 = vunpack.c.l.b16 %v1678
      %v1751 = vunpack.c.h.b16 %v1678
      %v1752 = vunpack.c.l.b16 %v1679
      %v1753 = vunpack.c.h.b16 %v1679
      %v1754 = vunpack.c.l.b16 %v1680
      %v1755 = vunpack.c.h.b16 %v1680
      %v1756 = vunpack.c.l.b16 %v1681
      %v1757 = vunpack.c.h.b16 %v1681
      %v1758 = vunpack.c.l.b16 %v1682
      %v1759 = vunpack.c.h.b16 %v1682
      %v1760 = vunpack.c.l.b16 %v1683
      %v1761 = vunpack.c.h.b16 %v1683
      %v1762 = vunpack.c.l.b16 %v1684
      %v1763 = vunpack.c.h.b16 %v1684
      %v1764 = vunpack.c.l.b16 %v1685
      %v1765 = vunpack.c.h.b16 %v1685
      %v1766 = vunpack.c.l.b16 %v1686
      %v1767 = vunpack.c.h.b16 %v1686
      %v1768 = vunpack.c.l.b16 %v1687
      %v1769 = vunpack.c.h.b16 %v1687
      %v1770 = vunpack.c.l.b16 %v1688
      %v1771 = vunpack.c.h.b16 %v1688
      %v1772 = vunpack.c.l.b16 %v1689
      %v1773 = vunpack.c.h.b16 %v1689
      %v1774 = vpack.c.b16 %v1718, %v1718
      %v1775 = vpack.c.b16 %v1719, %v1719
      %v1776 = vpack.c.b16 %v1720, %v1720
      %v1777 = vpack.c.b16 %v1721, %v1721
      %v1778 = vpack.c.b16 %v1722, %v1722
      %v1779 = vpack.c.b16 %v1723, %v1723
      %v1780 = vpack.c.b16 %v1724, %v1724
      %v1781 = vpack.c.b16 %v1725, %v1725
      %v1782 = vpack.c.b16 %v1726, %v1726
      %v1783 = vpack.c.b16 %v1727, %v1727
      %v1784 = vpack.c.b16 %v1728, %v1728
      %v1785 = vpack.c.b16 %v1729, %v1729
      %v1786 = vpack.c.b16 %v1730, %v1730
      %v1787 = vpack.c.b16 %v1731, %v1731
      %v1788 = vpack.c.b16 %v1732, %v1732
      %v1789 = vpack.c.b16 %v1733, %v1733
      %v1790 = vpack.c.b16 %v1734, %v1734
      %v1791 = vpack.c.b16 %v1735, %v1735
      %v1792 = vpack.c.b16 %v1736, %v1736
      %v1793 = vpack.c.b16 %v1737, %v1737
      %v1794 = vpack.c.b16 %v1738, %v1738
      %v1795 = vpack.c.b16 %v1739, %v1739
      %v1796 = vpack.c.b16 %v1740, %v1740
      %v1797 = vpack.c.b16 %v1741, %v1741
      %v1798 = vpack.c.b16 %v1742, %v1742
      %v1799 = vpack.c.b16 %v1743, %v1743
      %v1800 = vpack.c.b16 %v1744, %v1744
      %v1801 = vpack.c.b16 %v1745, %v1745
      %v1802 = vpack.c.b16 %v1746, %v1746
      %v1803 = vpack.c.b16 %v1747, %v1747
      %v1804 = vpack.c.b16 %v1748, %v1748
      %v1805 = vpack.c.b16 %v1749, %v1749
      %v1806 = vpack.c.b16 %v1750, %v1750
      %v1807 = vpack.c.b16 %v1751, %v1751
      %v1808 = vpack.c.b16 %v1752, %v1752
      %v1809 = vpack.c.b16 %v1753, %v1753
      %v1810 = vpack.c.b16 %v1754, %v1754
      %v1811 = vpack.c.b16 %v1755, %v1755
      %v1812 = vpack.c.b16 %v1756, %v1756
      %v1813 = vpack.c.b16 %v1757, %v1757
      %v1814 = vpack.c.b16 %v1758, %v1758
      %v1815 = vpack.c.b16 %v1759, %v1759
      %v1816 = vpack.c.b16 %v1760, %v1760
      %v1817 = vpack.c.b16 %v1761, %v1761
      %v1818 = vpack.c.b16 %v1762, %v1762
      %v1819 = vpack.c.b16 %v1763, %v1763
      %v1820 = vpack.c.b16 %v1764, %v1764
      %v1821 = vpack.c.b16 %v1765, %v1765
      %v1822 = vpack.c.b16 %v1766, %v1766
      %v1823 = vpack.c.b16 %v1767, %v1767
      %v1824 = vpack.c.b16 %v1768, %v1768
      %v1825 = vpack.c.b16 %v1769, %v1769
      %v1826 = vpack.c.b16 %v1770, %v1770
      %v1827 = vpack.c.b16 %v1771, %v1771
      %v1828 = vpack.c.b16 %v1772, %v1772
      %v1829 = vpack.c.b16 %v1773, %v1773
      %vm1886 = vcmask 519168
      %1887 = vst.msk [vmem:[%s202] sm:$0xf] %vm1886, %v1774
      %1888 = vst.msk [vmem:[%s202 + $0x4] sm:$0xf] %vm1886, %v1775
      %1889 = vst.msk [vmem:[%s202 + $0x8] sm:$0xf] %vm1886, %v1776
      %1890 = vst.msk [vmem:[%s202 + $0xc] sm:$0xf] %vm1886, %v1777
      %1891 = vst.msk [vmem:[%s202 + $0x10] sm:$0xf] %vm1886, %v1778
      %1892 = vst.msk [vmem:[%s202 + $0x14] sm:$0xf] %vm1886, %v1779
      %1893 = vst.msk [vmem:[%s202 + $0x18] sm:$0xf] %vm1886, %v1780
      %1894 = vst.msk [vmem:[%s202 + $0x1c] sm:$0xf] %vm1886, %v1781
      %1895 = vst.msk [vmem:[%s202 + $0x20] sm:$0xf] %vm1886, %v1782
      %1896 = vst.msk [vmem:[%s202 + $0x24] sm:$0xf] %vm1886, %v1783
      %1897 = vst.msk [vmem:[%s202 + $0x28] sm:$0xf] %vm1886, %v1784
      %1898 = vst.msk [vmem:[%s202 + $0x2c] sm:$0xf] %vm1886, %v1785
      %1899 = vst.msk [vmem:[%s202 + $0x30] sm:$0xf] %vm1886, %v1786
      %1900 = vst.msk [vmem:[%s202 + $0x34] sm:$0xf] %vm1886, %v1787
      %1901 = vst.msk [vmem:[%s202 + $0x38] sm:$0xf] %vm1886, %v1788
      %1902 = vst.msk [vmem:[%s202 + $0x3c] sm:$0xf] %vm1886, %v1789
      %1903 = vst.msk [vmem:[%s202 + $0x40] sm:$0xf] %vm1886, %v1790
      %1904 = vst.msk [vmem:[%s202 + $0x44] sm:$0xf] %vm1886, %v1791
      %1905 = vst.msk [vmem:[%s202 + $0x48] sm:$0xf] %vm1886, %v1792
      %1906 = vst.msk [vmem:[%s202 + $0x4c] sm:$0xf] %vm1886, %v1793
      %1907 = vst.msk [vmem:[%s202 + $0x50] sm:$0xf] %vm1886, %v1794
      %1908 = vst.msk [vmem:[%s202 + $0x54] sm:$0xf] %vm1886, %v1795
      %1909 = vst.msk [vmem:[%s202 + $0x58] sm:$0xf] %vm1886, %v1796
      %1910 = vst.msk [vmem:[%s202 + $0x5c] sm:$0xf] %vm1886, %v1797
      %1911 = vst.msk [vmem:[%s202 + $0x60] sm:$0xf] %vm1886, %v1798
      %1912 = vst.msk [vmem:[%s202 + $0x64] sm:$0xf] %vm1886, %v1799
      %1913 = vst.msk [vmem:[%s202 + $0x68] sm:$0xf] %vm1886, %v1800
      %1914 = vst.msk [vmem:[%s202 + $0x6c] sm:$0xf] %vm1886, %v1801
      %1915 = vst.msk [vmem:[%s202 + $0x70] sm:$0xf] %vm1886, %v1802
      %1916 = vst.msk [vmem:[%s202 + $0x74] sm:$0xf] %vm1886, %v1803
      %1917 = vst.msk [vmem:[%s202 + $0x78] sm:$0xf] %vm1886, %v1804
      %1918 = vst.msk [vmem:[%s202 + $0x7c] sm:$0xf] %vm1886, %v1805
      %1919 = vst.msk [vmem:[%s202 + $0x80] sm:$0xf] %vm1886, %v1806
      %1920 = vst.msk [vmem:[%s202 + $0x84] sm:$0xf] %vm1886, %v1807
      %1921 = vst.msk [vmem:[%s202 + $0x88] sm:$0xf] %vm1886, %v1808
      %1922 = vst.msk [vmem:[%s202 + $0x8c] sm:$0xf] %vm1886, %v1809
      %1923 = vst.msk [vmem:[%s202 + $0x90] sm:$0xf] %vm1886, %v1810
      %1924 = vst.msk [vmem:[%s202 + $0x94] sm:$0xf] %vm1886, %v1811
      %1925 = vst.msk [vmem:[%s202 + $0x98] sm:$0xf] %vm1886, %v1812
      %1926 = vst.msk [vmem:[%s202 + $0x9c] sm:$0xf] %vm1886, %v1813
      %1927 = vst.msk [vmem:[%s202 + $0xa0] sm:$0xf] %vm1886, %v1814
      %1928 = vst.msk [vmem:[%s202 + $0xa4] sm:$0xf] %vm1886, %v1815
      %1929 = vst.msk [vmem:[%s202 + $0xa8] sm:$0xf] %vm1886, %v1816
      %1930 = vst.msk [vmem:[%s202 + $0xac] sm:$0xf] %vm1886, %v1817
      %1931 = vst.msk [vmem:[%s202 + $0xb0] sm:$0xf] %vm1886, %v1818
      %1932 = vst.msk [vmem:[%s202 + $0xb4] sm:$0xf] %vm1886, %v1819
      %1933 = vst.msk [vmem:[%s202 + $0xb8] sm:$0xf] %vm1886, %v1820
      %1934 = vst.msk [vmem:[%s202 + $0xbc] sm:$0xf] %vm1886, %v1821
      %1935 = vst.msk [vmem:[%s202 + $0xc0] sm:$0xf] %vm1886, %v1822
      %1936 = vst.msk [vmem:[%s202 + $0xc4] sm:$0xf] %vm1886, %v1823
      %1937 = vst.msk [vmem:[%s202 + $0xc8] sm:$0xf] %vm1886, %v1824
      %1938 = vst.msk [vmem:[%s202 + $0xcc] sm:$0xf] %vm1886, %v1825
      %1939 = vst.msk [vmem:[%s202 + $0xd0] sm:$0xf] %vm1886, %v1826
      %1940 = vst.msk [vmem:[%s202 + $0xd4] sm:$0xf] %vm1886, %v1827
      %1941 = vst.msk [vmem:[%s202 + $0xd8] sm:$0xf] %vm1886, %v1828
      %1942 = vst.msk [vmem:[%s202 + $0xdc] sm:$0xf] %vm1886, %v1829
      %s1943 = smul.u32 56, %s15
      %p1944 = scmp.lt.s32.totalorder %s1943, 111
      %s1945 = scalar_select %p1944, %s1943, 111
      %s1946 = smul.addr %s1945, 4
      %s1947 = scalar_lea.vmem %s4, %s1946
      // Predicated region
      $region37: #{onet_forward.6} parent=35 // pred_check
        %p1948 = pneg %p122
      $region38: #{onet_forward.6} parent=35 // pred_check_branch
        %1950 = sbr.rel (%p1948) target = $region40
      $region39: #{onet_forward.6} parent=35 // pred_region
        %s1951 = smul.u32 56, %s15
      $region40: #{onet_forward.6} parent=35 // pred_fallthru
        _
    $region36: #{onet_forward.6} parent=5 // pred_fallthru
      _
    %p1952 = scmp.le.s32.totalorder 2, %s10
    // Predicated region
    $region41: #{onet_forward.6} parent=5 // pred_check
      %p1953 = pneg %p1952
    $region42: #{onet_forward.6} parent=5 // pred_check_branch
      %1955 = sbr.rel (%p1953) target = $region44
    $region43: #{onet_forward.6} parent=5 // pred_region
      %s1956 = ssub.s32 %s10, 2
      // Predicated region
      $region45: #{onet_forward.6} parent=43 // pred_check
        %p1957 = pneg %p128
      $region46: #{onet_forward.6} parent=43 // pred_check_branch
        %1959 = sbr.rel (%p1957) target = $region48
      $region47: #{onet_forward.6} parent=43 // pred_region
        %s1960 = smul.u32 56, %s16
        %p1961 = scmp.lt.s32.totalorder %s1960, 111
        %s1962 = scalar_select %p1961, %s1960, 111
        %s1963 = smul.addr %s1962, 4
        %s1964 = scalar_lea.vmem %s4, %s1963
      $region48: #{onet_forward.6} parent=43 // pred_fallthru
        _
    $region44: #{onet_forward.6} parent=5 // pred_fallthru
      _
  $region6: #{onet_forward.6} parent=0 // loop_footer
    %s14 = sadd.s32 1, %s10
  $region7: #{onet_forward.6} parent=0 // loop_footer_branch
    %9 = sbr.rel target = $region3
  $region8: #{onet_forward.6} parent=0 // loop_exit
    _

// kernel: onet_forward.7
$region0: #{onet_forward.7}
  #allocation0 [shape = 'u32[]', space=smem, size = 0x4, offset = 0x4, fixed_abs, tag = 'smem constant byte address 0x4 - core index']
  #allocation1 [shape = 'u32[144,128]{1,0:T(1,128)}', space=vmem, size = 0x12000, scoped, tag = 'internal scratch']
  %s0 = inlined_call_operand.vmem [shape: bf16[128,576], index: 0, kind: input, shape index: {}]
  %s1 = inlined_call_operand.vmem [shape: bf16[576,64], index: 1, kind: input, shape index: {}]
  %s2 = inlined_call_operand.vmem [shape: f32[1,64], index: 2, kind: input, shape index: {}]
  %s3 = inlined_call_operand.vmem [shape: f32[1,64], index: 3, kind: input, shape index: {}]
  %s4 = inlined_call_operand.vmem [shape: bf16[128,64], index: 4, kind: output, shape index: {}]
  %s5 = sld [smem:[#allocation0]]
  $region49: #{onet_forward.7} parent=0
    _
  %s7 = ssub.s32 1, %s5
  %s8 = scalar_select 0, %s7, %s5
  loop: start=0, step=1, limit=4
  $region2: #{onet_forward.7} parent=0 // loop_pre_header
    _
  $region3: #{onet_forward.7} parent=0 // loop_header
    %s10 = sphi 0, %s14
    %p11 = scmp.ge.s32.totalorder %s10, 4
    %s20 = sphi 0, %s22
    %s23 = sphi 0, %s20
    %s24 = sphi 0, %s23
    %s40 = sphi 0, %s24
    %s44 = sphi 0, %s44
    %s46 = sphi 0, %s44
    %s47 = sphi 0, %s46
    %s61 = sphi 0, %s47
    %s65 = sphi 0, %s65
    %s67 = sphi 0, %s65
    %s68 = sphi 0, %s67
    %s82 = sphi 0, %s68
    %s86 = sphi 0, %s86
    %s88 = sphi 0, %s86
    %s89 = sphi 0, %s88
    %s103 = sphi 0, %s89
    %s109 = sphi 0, %s111
    %s112 = sphi 0, %s109
    %s113 = sphi 0, %s112
    %s129 = sphi 0, %s113
  $region4: #{onet_forward.7} parent=0 // loop_header_branch
    %13 = sbr.rel (%p11) target = $region8
  $region5: #{onet_forward.7} parent=0 // loop_body
    %s15 = ssub.s32 %s10, 1
    %s16 = ssub.s32 %s10, 2
    %s17 = sadd.s32 %s10, 1
    %s18 = ssub.s32 %s10, %s17
    %p19 = scmp.eq.s32.totalorder %s18, 0
    %s21 = sadd.s32 %s20, 1
    %s22 = scalar_select %p19, %s20, %s21
    %p25 = pneg %p19
    %p26 = scmp.eq.s32.totalorder %s10, 1
    %p27 = por %p25, %p26
    %p28 = scmp.ne.s32.totalorder %s20, %s23
    %p29 = scmp.eq.s32.totalorder %s10, 0
    %p30 = por %p28, %p29
    %p31 = scmp.ne.s32.totalorder %s20, %s23
    %p32 = scmp.eq.s32.totalorder %s15, 1
    %p33 = por %p31, %p32
    %p34 = scmp.ne.s32.totalorder %s23, %s24
    %p35 = scmp.eq.s32.totalorder %s15, 0
    %p36 = por %p34, %p35
    %p37 = scmp.ne.s32.totalorder %s23, %s24
    %p38 = scmp.eq.s32.totalorder %s16, 1
    %p39 = por %p37, %p38
    %p41 = scmp.ne.s32.totalorder %s24, %s40
    %p42 = scmp.eq.s32.totalorder %s16, 0
    %p43 = por %p41, %p42
    %s45 = sadd.s32 %s44, 1
    %p48 = scmp.eq.s32.totalorder %s10, 1
    %p49 = scmp.ne.s32.totalorder %s44, %s46
    %p50 = scmp.eq.s32.totalorder %s10, 0
    %p51 = por %p49, %p50
    %p52 = scmp.ne.s32.totalorder %s44, %s46
    %p53 = scmp.eq.s32.totalorder %s15, 1
    %p54 = por %p52, %p53
    %p55 = scmp.ne.s32.totalorder %s46, %s47
    %p56 = scmp.eq.s32.totalorder %s15, 0
    %p57 = por %p55, %p56
    %p58 = scmp.ne.s32.totalorder %s46, %s47
    %p59 = scmp.eq.s32.totalorder %s16, 1
    %p60 = por %p58, %p59
    %p62 = scmp.ne.s32.totalorder %s47, %s61
    %p63 = scmp.eq.s32.totalorder %s16, 0
    %p64 = por %p62, %p63
    %s66 = sadd.s32 %s65, 1
    %p69 = scmp.eq.s32.totalorder %s10, 1
    %p70 = scmp.ne.s32.totalorder %s65, %s67
    %p71 = scmp.eq.s32.totalorder %s10, 0
    %p72 = por %p70, %p71
    %p73 = scmp.ne.s32.totalorder %s65, %s67
    %p74 = scmp.eq.s32.totalorder %s15, 1
    %p75 = por %p73, %p74
    %p76 = scmp.ne.s32.totalorder %s67, %s68
    %p77 = scmp.eq.s32.totalorder %s15, 0
    %p78 = por %p76, %p77
    %p79 = scmp.ne.s32.totalorder %s67, %s68
    %p80 = scmp.eq.s32.totalorder %s16, 1
    %p81 = por %p79, %p80
    %p83 = scmp.ne.s32.totalorder %s68, %s82
    %p84 = scmp.eq.s32.totalorder %s16, 0
    %p85 = por %p83, %p84
    %s87 = sadd.s32 %s86, 1
    %p90 = scmp.eq.s32.totalorder %s10, 1
    %p91 = scmp.ne.s32.totalorder %s86, %s88
    %p92 = scmp.eq.s32.totalorder %s10, 0
    %p93 = por %p91, %p92
    %p94 = scmp.ne.s32.totalorder %s86, %s88
    %p95 = scmp.eq.s32.totalorder %s15, 1
    %p96 = por %p94, %p95
    %p97 = scmp.ne.s32.totalorder %s88, %s89
    %p98 = scmp.eq.s32.totalorder %s15, 0
    %p99 = por %p97, %p98
    %p100 = scmp.ne.s32.totalorder %s88, %s89
    %p101 = scmp.eq.s32.totalorder %s16, 1
    %p102 = por %p100, %p101
    %p104 = scmp.ne.s32.totalorder %s89, %s103
    %p105 = scmp.eq.s32.totalorder %s16, 0
    %p106 = por %p104, %p105
    %s107 = ssub.s32 %s10, %s17
    %p108 = scmp.eq.s32.totalorder %s107, 0
    %s110 = sadd.s32 %s109, 1
    %s111 = scalar_select %p108, %s109, %s110
    %p114 = pneg %p108
    %p115 = scmp.eq.s32.totalorder %s10, 1
    %p116 = por %p114, %p115
    %p117 = scmp.ne.s32.totalorder %s109, %s112
    %p118 = scmp.eq.s32.totalorder %s10, 0
    %p119 = por %p117, %p118
    %p120 = scmp.ne.s32.totalorder %s109, %s112
    %p121 = scmp.eq.s32.totalorder %s15, 1
    %p122 = por %p120, %p121
    %p123 = scmp.ne.s32.totalorder %s112, %s113
    %p124 = scmp.eq.s32.totalorder %s15, 0
    %p125 = por %p123, %p124
    %p126 = scmp.ne.s32.totalorder %s112, %s113
    %p127 = scmp.eq.s32.totalorder %s16, 1
    %p128 = por %p126, %p127
    %p130 = scmp.ne.s32.totalorder %s113, %s129
    %p131 = scmp.eq.s32.totalorder %s16, 0
    %p132 = por %p130, %p131
    %p133 = scmp.le.s32.totalorder 1, %s10
    %p134 = scmp.lt.s32.totalorder %s10, 3
    %p135 = pnand %p133, %p134
    %p136 = pneg %p135
    // Predicated region
    $region9: #{onet_forward.7} parent=5 // pred_check
      _
    $region10: #{onet_forward.7} parent=5 // pred_check_branch
      %138 = sbr.rel (%p135) target = $region12
    $region11: #{onet_forward.7} parent=5 // pred_region
      %s139 = ssub.s32 %s10, 1
      // Predicated region
      $region13: #{onet_forward.7} parent=11 // pred_check
        %p140 = pneg %p57
      $region14: #{onet_forward.7} parent=11 // pred_check_branch
        %142 = sbr.rel (%p140) target = $region16
      $region15: #{onet_forward.7} parent=11 // pred_region
        _
      $region16: #{onet_forward.7} parent=11 // pred_fallthru
        _
      // Predicated region
      $region17: #{onet_forward.7} parent=11 // pred_check
        %p143 = pneg %p78
      $region18: #{onet_forward.7} parent=11 // pred_check_branch
        %145 = sbr.rel (%p143) target = $region20
      $region19: #{onet_forward.7} parent=11 // pred_region
        _
      $region20: #{onet_forward.7} parent=11 // pred_fallthru
        _
      // Predicated region
      $region21: #{onet_forward.7} parent=11 // pred_check
        %p146 = pneg %p99
      $region22: #{onet_forward.7} parent=11 // pred_check_branch
        %148 = sbr.rel (%p146) target = $region24
      $region23: #{onet_forward.7} parent=11 // pred_region
        _
      $region24: #{onet_forward.7} parent=11 // pred_fallthru
        _
    $region12: #{onet_forward.7} parent=5 // pred_fallthru
      _
    %p149 = scmp.lt.s32.totalorder %s10, 2
    // Predicated region
    $region25: #{onet_forward.7} parent=5 // pred_check
      %p150 = pneg %p149
    $region26: #{onet_forward.7} parent=5 // pred_check_branch
      %152 = sbr.rel (%p150) target = $region28
    $region27: #{onet_forward.7} parent=5 // pred_region
      // Predicated region
      $region29: #{onet_forward.7} parent=27 // pred_check
        %p153 = pneg %p30
      $region30: #{onet_forward.7} parent=27 // pred_check_branch
        %155 = sbr.rel (%p153) target = $region32
      $region31: #{onet_forward.7} parent=27 // pred_region
        %s156 = smul.u32 8, %s10
        %p157 = scmp.lt.s32.totalorder %s156, 15
        %s158 = scalar_select %p157, %s156, 15
        %s159 = smul.addr %s158, 5
        %s160 = smul.addr %s159, 4
        %s161 = scalar_lea.vmem %s0, %s160
        %s162 = smul.u32 8, %s10
      $region32: #{onet_forward.7} parent=27 // pred_fallthru
        _
    $region28: #{onet_forward.7} parent=5 // pred_fallthru
      _
    %p163 = scmp.le.s32.totalorder 1, %s10
    %p164 = scmp.lt.s32.totalorder %s10, 3
    %p165 = pnand %p163, %p164
    %p166 = pneg %p165
    // Predicated region
    $region33: #{onet_forward.7} parent=5 // pred_check
      _
    $region34: #{onet_forward.7} parent=5 // pred_check_branch
      %168 = sbr.rel (%p165) target = $region36
    $region35: #{onet_forward.7} parent=5 // pred_region
      %s169 = ssub.s32 %s10, 1
      %s170 = smul.u32 8, %s15
      %p171 = scmp.lt.s32.totalorder %s170, 15
      %s172 = scalar_select %p171, %s170, 15
      %s173 = smul.addr %s172, 5
      %s174 = smul.addr %s173, 4
      %s175 = scalar_lea.vmem %s0, %s174
      %p176 = pneg %p36
      %p177 = pneg %p33
      %p178 = pneg %p57
      %p179 = pneg %p54
      %p180 = pneg %p78
      %p181 = pneg %p75
      %p182 = pneg %p99
      %p183 = pneg %p96
      %p184 = pneg %p125
      %p185 = pneg %p122
      %s186 = smul.u32 8, %s15
      %p187 = scmp.lt.s32.totalorder %s186, 15
      %s188 = scalar_select %p187, %s186, 15
      %s189 = smul.addr %s188, 4
      %s190 = scalar_lea.vmem %s4, %s189
      %s191 = smul.u32 8, %s15
      %p192 = scmp.lt.s32.totalorder %s191, 15
      %s193 = scalar_select %p192, %s191, 15
      %s194 = smul.addr %s193, 5
      %s195 = smul.addr %s194, 4
      %s196 = scalar_lea.vmem %s0, %s195
      %s197 = smul.u32 8, %s15
      %s198 = smul.u32 8, %s15
      %p199 = scmp.lt.s32.totalorder %s198, 15
      %s200 = scalar_select %p199, %s198, 15
      %s201 = smul.addr %s200, 4
      %s202 = scalar_lea.vmem %s4, %s201
      %s203 = smul.u32 8, %s15
      %v205 = vld [vmem:[%s196] sm:$0xff]
      %v206 = vld [vmem:[%s196 + $0x8] sm:$0xff]
      %v207 = vld [vmem:[%s196 + $0x10] sm:$0xf]
      %v208 = vld [vmem:[%s196 + $0x14] sm:$0xff]
      %v209 = vld [vmem:[%s196 + $0x1c] sm:$0xff]
      %v210 = vld [vmem:[%s196 + $0x24] sm:$0xf]
      %v211 = vld [vmem:[%s196 + $0x28] sm:$0xff]
      %v212 = vld [vmem:[%s196 + $0x30] sm:$0xff]
      %v213 = vld [vmem:[%s196 + $0x38] sm:$0xf]
      %v214 = vld [vmem:[%s196 + $0x3c] sm:$0xff]
      %v215 = vld [vmem:[%s196 + $0x44] sm:$0xff]
      %v216 = vld [vmem:[%s196 + $0x4c] sm:$0xf]
      %v217 = vld [vmem:[%s196 + $0x50] sm:$0xff]
      %v218 = vld [vmem:[%s196 + $0x58] sm:$0xff]
      %v219 = vld [vmem:[%s196 + $0x60] sm:$0xf]
      %v220 = vld [vmem:[%s196 + $0x64] sm:$0xff]
      %v221 = vld [vmem:[%s196 + $0x6c] sm:$0xff]
      %v222 = vld [vmem:[%s196 + $0x74] sm:$0xf]
      %v223 = vld [vmem:[%s196 + $0x78] sm:$0xff]
      %v224 = vld [vmem:[%s196 + $0x80] sm:$0xff]
      %v225 = vld [vmem:[%s196 + $0x88] sm:$0xf]
      %v226 = vld [vmem:[%s196 + $0x8c] sm:$0xff]
      %v227 = vld [vmem:[%s196 + $0x94] sm:$0xff]
      %v228 = vld [vmem:[%s196 + $0x9c] sm:$0xf]
      %v229 = vld [vmem:[%s1] sm:$0xf]
      %v230 = vld [vmem:[%s1 + $0x4] sm:$0xf]
      %v231 = vld [vmem:[%s1 + $0x8] sm:$0xf]
      %v232 = vld [vmem:[%s1 + $0xc] sm:$0xf]
      %v233 = vld [vmem:[%s1 + $0x10] sm:$0xf]
      %v234 = vld [vmem:[%s1 + $0x14] sm:$0xf]
      %v235 = vld [vmem:[%s1 + $0x18] sm:$0xf]
      %v236 = vld [vmem:[%s1 + $0x1c] sm:$0xf]
      %v237 = vld [vmem:[%s1 + $0x20] sm:$0xf]
      %v238 = vld [vmem:[%s1 + $0x24] sm:$0xf]
      %v239 = vld [vmem:[%s1 + $0x28] sm:$0xf]
      %v240 = vld [vmem:[%s1 + $0x2c] sm:$0xf]
      %v241 = vld [vmem:[%s1 + $0x30] sm:$0xf]
      %v242 = vld [vmem:[%s1 + $0x34] sm:$0xf]
      %v243 = vld [vmem:[%s1 + $0x38] sm:$0xf]
      %v244 = vld [vmem:[%s1 + $0x3c] sm:$0xf]
      %v245 = vld [vmem:[%s1 + $0x40] sm:$0xf]
      %v246 = vld [vmem:[%s1 + $0x44] sm:$0xf]
      %v247 = vld [vmem:[%s1 + $0x48] sm:$0xf]
      %v248 = vld [vmem:[%s1 + $0x4c] sm:$0xf]
      %v249 = vld [vmem:[%s1 + $0x50] sm:$0xf]
      %v250 = vld [vmem:[%s1 + $0x54] sm:$0xf]
      %v251 = vld [vmem:[%s1 + $0x58] sm:$0xf]
      %v252 = vld [vmem:[%s1 + $0x5c] sm:$0xf]
      %v253 = vld [vmem:[%s1 + $0x60] sm:$0xf]
      %v254 = vld [vmem:[%s1 + $0x64] sm:$0xf]
      %v255 = vld [vmem:[%s1 + $0x68] sm:$0xf]
      %v256 = vld [vmem:[%s1 + $0x6c] sm:$0xf]
      %v257 = vld [vmem:[%s1 + $0x70] sm:$0xf]
      %v258 = vld [vmem:[%s1 + $0x74] sm:$0xf]
      %v259 = vld [vmem:[%s1 + $0x78] sm:$0xf]
      %v260 = vld [vmem:[%s1 + $0x7c] sm:$0xf]
      %v261 = vld [vmem:[%s1 + $0x80] sm:$0xf]
      %v262 = vld [vmem:[%s1 + $0x84] sm:$0xf]
      %v263 = vld [vmem:[%s1 + $0x88] sm:$0xf]
      %v264 = vld [vmem:[%s1 + $0x8c] sm:$0xf]
      %v265 = vld [vmem:[%s1 + $0x90] sm:$0xf]
      %v266 = vld [vmem:[%s1 + $0x94] sm:$0xf]
      %v267 = vld [vmem:[%s1 + $0x98] sm:$0xf]
      %v268 = vld [vmem:[%s1 + $0x9c] sm:$0xf]
      %v269 = vld [vmem:[%s1 + $0xa0] sm:$0xf]
      %v270 = vld [vmem:[%s1 + $0xa4] sm:$0xf]
      %v271 = vld [vmem:[%s1 + $0xa8] sm:$0xf]
      %v272 = vld [vmem:[%s1 + $0xac] sm:$0xf]
      %v273 = vld [vmem:[%s1 + $0xb0] sm:$0xf]
      %v274 = vld [vmem:[%s1 + $0xb4] sm:$0xf]
      %v275 = vld [vmem:[%s1 + $0xb8] sm:$0xf]
      %v276 = vld [vmem:[%s1 + $0xbc] sm:$0xf]
      %v277 = vld [vmem:[%s1 + $0xc0] sm:$0xf]
      %v278 = vld [vmem:[%s1 + $0xc4] sm:$0xf]
      %v279 = vld [vmem:[%s1 + $0xc8] sm:$0xf]
      %v280 = vld [vmem:[%s1 + $0xcc] sm:$0xf]
      %v281 = vld [vmem:[%s1 + $0xd0] sm:$0xf]
      %v282 = vld [vmem:[%s1 + $0xd4] sm:$0xf]
      %v283 = vld [vmem:[%s1 + $0xd8] sm:$0xf]
      %v284 = vld [vmem:[%s1 + $0xdc] sm:$0xf]
      %v285 = vld [vmem:[%s1 + $0xe0] sm:$0xf]
      %v286 = vld [vmem:[%s1 + $0xe4] sm:$0xf]
      %v287 = vld [vmem:[%s1 + $0xe8] sm:$0xf]
      %v288 = vld [vmem:[%s1 + $0xec] sm:$0xf]
      %v289 = vld [vmem:[%s1 + $0xf0] sm:$0xf]
      %v290 = vld [vmem:[%s1 + $0xf4] sm:$0xf]
      %v291 = vld [vmem:[%s1 + $0xf8] sm:$0xf]
      %v292 = vld [vmem:[%s1 + $0xfc] sm:$0xf]
      %v293 = vld [vmem:[%s1 + $0x100] sm:$0xf]
      %v294 = vld [vmem:[%s1 + $0x104] sm:$0xf]
      %v295 = vld [vmem:[%s1 + $0x108] sm:$0xf]
      %v296 = vld [vmem:[%s1 + $0x10c] sm:$0xf]
      %v297 = vld [vmem:[%s1 + $0x110] sm:$0xf]
      %v298 = vld [vmem:[%s1 + $0x114] sm:$0xf]
      %v299 = vld [vmem:[%s1 + $0x118] sm:$0xf]
      %v300 = vld [vmem:[%s1 + $0x11c] sm:$0xf]
      %v301 = vld [vmem:[%s2] sm:$0x1]
      %v303 = vlaneseq
      %v304 = vshrl.u32 %v303, 7
      %v305 = vsub.s32 0, %v304
      %v306 = vrot.slane %v301, %v305
      %v332 = vunpack.c.l.b16 %v205
      %v333 = vunpack.c.h.b16 %v205
      %v334 = vunpack.c.l.b16 %v206
      %v335 = vunpack.c.h.b16 %v206
      %v336 = vunpack.c.l.b16 %v207
      %v337 = vunpack.c.l.b16 %v208
      %v338 = vunpack.c.h.b16 %v208
      %v339 = vunpack.c.l.b16 %v209
      %v340 = vunpack.c.h.b16 %v209
      %v341 = vunpack.c.l.b16 %v210
      %v342 = vunpack.c.l.b16 %v211
      %v343 = vunpack.c.h.b16 %v211
      %v344 = vunpack.c.l.b16 %v212
      %v345 = vunpack.c.h.b16 %v212
      %v346 = vunpack.c.l.b16 %v213
      %v347 = vunpack.c.l.b16 %v214
      %v348 = vunpack.c.h.b16 %v214
      %v349 = vunpack.c.l.b16 %v215
      %v350 = vunpack.c.h.b16 %v215
      %v351 = vunpack.c.l.b16 %v216
      %v352 = vunpack.c.l.b16 %v217
      %v353 = vunpack.c.h.b16 %v217
      %v354 = vunpack.c.l.b16 %v218
      %v355 = vunpack.c.h.b16 %v218
      %v356 = vunpack.c.l.b16 %v219
      %v357 = vunpack.c.l.b16 %v220
      %v358 = vunpack.c.h.b16 %v220
      %v359 = vunpack.c.l.b16 %v221
      %v360 = vunpack.c.h.b16 %v221
      %v361 = vunpack.c.l.b16 %v222
      %v362 = vunpack.c.l.b16 %v223
      %v363 = vunpack.c.h.b16 %v223
      %v364 = vunpack.c.l.b16 %v224
      %v365 = vunpack.c.h.b16 %v224
      %v366 = vunpack.c.l.b16 %v225
      %v367 = vunpack.c.l.b16 %v226
      %v368 = vunpack.c.h.b16 %v226
      %v369 = vunpack.c.l.b16 %v227
      %v370 = vunpack.c.h.b16 %v227
      %v371 = vunpack.c.l.b16 %v228
      %v372 = vpack.c.b16 %v337, %v332
      %v373 = vpack.c.b16 %v338, %v333
      %v374 = vpack.c.b16 %v339, %v334
      %v375 = vpack.c.b16 %v340, %v335
      %v376 = vpack.c.b16 %v341, %v336
      %v377 = vpack.c.b16 %v347, %v342
      %v378 = vpack.c.b16 %v348, %v343
      %v379 = vpack.c.b16 %v349, %v344
      %v380 = vpack.c.b16 %v350, %v345
      %v381 = vpack.c.b16 %v351, %v346
      %v382 = vpack.c.b16 %v357, %v352
      %v383 = vpack.c.b16 %v358, %v353
      %v384 = vpack.c.b16 %v359, %v354
      %v385 = vpack.c.b16 %v360, %v355
      %v386 = vpack.c.b16 %v361, %v356
      %v387 = vpack.c.b16 %v367, %v362
      %v388 = vpack.c.b16 %v368, %v363
      %v389 = vpack.c.b16 %v369, %v364
      %v390 = vpack.c.b16 %v370, %v365
      %v391 = vpack.c.b16 %v371, %v366
      %v480 = vunpack.c.l.b16 %v229
      %v481 = vunpack.c.l.b16 %v230
      %v482 = vunpack.c.l.b16 %v231
      %v483 = vunpack.c.l.b16 %v232
      %v484 = vunpack.c.l.b16 %v233
      %v485 = vunpack.c.l.b16 %v234
      %v486 = vunpack.c.l.b16 %v235
      %v487 = vunpack.c.l.b16 %v236
      %v488 = vunpack.c.l.b16 %v237
      %v489 = vunpack.c.l.b16 %v238
      %v490 = vunpack.c.l.b16 %v239
      %v491 = vunpack.c.l.b16 %v240
      %v492 = vunpack.c.l.b16 %v241
      %v493 = vunpack.c.l.b16 %v242
      %v494 = vunpack.c.l.b16 %v243
      %v495 = vunpack.c.l.b16 %v244
      %v496 = vunpack.c.l.b16 %v245
      %v497 = vunpack.c.l.b16 %v246
      %v498 = vunpack.c.l.b16 %v247
      %v499 = vunpack.c.l.b16 %v248
      %v500 = vunpack.c.l.b16 %v249
      %v501 = vunpack.c.l.b16 %v250
      %v502 = vunpack.c.l.b16 %v251
      %v503 = vunpack.c.l.b16 %v252
      %v504 = vunpack.c.l.b16 %v253
      %v505 = vunpack.c.l.b16 %v254
      %v506 = vunpack.c.l.b16 %v255
      %v507 = vunpack.c.l.b16 %v256
      %v508 = vunpack.c.l.b16 %v257
      %v509 = vunpack.c.l.b16 %v258
      %v510 = vunpack.c.l.b16 %v259
      %v511 = vunpack.c.l.b16 %v260
      %v512 = vunpack.c.l.b16 %v261
      %v513 = vunpack.c.l.b16 %v262
      %v514 = vunpack.c.l.b16 %v263
      %v515 = vunpack.c.l.b16 %v264
      %v516 = vunpack.c.l.b16 %v265
      %v517 = vunpack.c.l.b16 %v266
      %v518 = vunpack.c.l.b16 %v267
      %v519 = vunpack.c.l.b16 %v268
      %v520 = vunpack.c.l.b16 %v269
      %v521 = vunpack.c.l.b16 %v270
      %v522 = vunpack.c.l.b16 %v271
      %v523 = vunpack.c.l.b16 %v272
      %v524 = vunpack.c.l.b16 %v273
      %v525 = vunpack.c.l.b16 %v274
      %v526 = vunpack.c.l.b16 %v275
      %v527 = vunpack.c.l.b16 %v276
      %v528 = vunpack.c.l.b16 %v277
      %v529 = vunpack.c.l.b16 %v278
      %v530 = vunpack.c.l.b16 %v279
      %v531 = vunpack.c.l.b16 %v280
      %v532 = vunpack.c.l.b16 %v281
      %v533 = vunpack.c.l.b16 %v282
      %v534 = vunpack.c.l.b16 %v283
      %v535 = vunpack.c.l.b16 %v284
      %v536 = vunpack.c.l.b16 %v285
      %v537 = vunpack.c.l.b16 %v286
      %v538 = vunpack.c.l.b16 %v287
      %v539 = vunpack.c.l.b16 %v288
      %v540 = vunpack.c.l.b16 %v289
      %v541 = vunpack.c.l.b16 %v290
      %v542 = vunpack.c.l.b16 %v291
      %v543 = vunpack.c.l.b16 %v292
      %v544 = vunpack.c.l.b16 %v293
      %v545 = vunpack.c.l.b16 %v294
      %v546 = vunpack.c.l.b16 %v295
      %v547 = vunpack.c.l.b16 %v296
      %v548 = vunpack.c.l.b16 %v297
      %v549 = vunpack.c.l.b16 %v298
      %v550 = vunpack.c.l.b16 %v299
      %v551 = vunpack.c.l.b16 %v300
      %v552 = vpack.c.b16 %v481, %v480
      %v553 = vpack.c.b16 %v483, %v482
      %v554 = vpack.c.b16 %v485, %v484
      %v555 = vpack.c.b16 %v487, %v486
      %v556 = vpack.c.b16 %v489, %v488
      %v557 = vpack.c.b16 %v491, %v490
      %v558 = vpack.c.b16 %v493, %v492
      %v559 = vpack.c.b16 %v495, %v494
      %v560 = vpack.c.b16 %v497, %v496
      %v561 = vpack.c.b16 %v499, %v498
      %v562 = vpack.c.b16 %v501, %v500
      %v563 = vpack.c.b16 %v503, %v502
      %v564 = vpack.c.b16 %v505, %v504
      %v565 = vpack.c.b16 %v507, %v506
      %v566 = vpack.c.b16 %v509, %v508
      %v567 = vpack.c.b16 %v511, %v510
      %v568 = vpack.c.b16 %v513, %v512
      %v569 = vpack.c.b16 %v515, %v514
      %v570 = vpack.c.b16 %v517, %v516
      %v571 = vpack.c.b16 %v519, %v518
      %v572 = vpack.c.b16 %v521, %v520
      %v573 = vpack.c.b16 %v523, %v522
      %v574 = vpack.c.b16 %v525, %v524
      %v575 = vpack.c.b16 %v527, %v526
      %v576 = vpack.c.b16 %v529, %v528
      %v577 = vpack.c.b16 %v531, %v530
      %v578 = vpack.c.b16 %v533, %v532
      %v579 = vpack.c.b16 %v535, %v534
      %v580 = vpack.c.b16 %v537, %v536
      %v581 = vpack.c.b16 %v539, %v538
      %v582 = vpack.c.b16 %v541, %v540
      %v583 = vpack.c.b16 %v543, %v542
      %v584 = vpack.c.b16 %v545, %v544
      %v585 = vpack.c.b16 %v547, %v546
      %v586 = vpack.c.b16 %v549, %v548
      %v587 = vpack.c.b16 %v551, %v550
      %vm624 = vcmask 523264
      %v626 = vsel %vm624, %v376, 0
      %v629 = vsel %vm624, %v381, 0
      %v632 = vsel %vm624, %v386, 0
      %v635 = vsel %vm624, %v391, 0
      %637 = vmatprep.subr.bf16.mxu0 0
      %638 = vmatpush1.bf16.msra.mxu0 %v559
      %639 = vmatprep.subr.bf16.mxu0 0
      %640 = vmatpush1.bf16.msra.mxu0 %v558
      %641 = vmatprep.subr.bf16.mxu0 0
      %642 = vmatpush1.bf16.msra.mxu0 %v557
      %643 = vmatprep.subr.bf16.mxu0 0
      %644 = vmatpush1.bf16.msra.mxu0 %v556
      %645 = vmatprep.subr.bf16.mxu0 0
      %646 = vmatpush1.bf16.msra.mxu0 %v555
      %647 = vmatprep.subr.bf16.mxu0 0
      %648 = vmatpush1.bf16.msra.mxu0 %v554
      %649 = vmatprep.subr.bf16.mxu0 0
      %650 = vmatpush1.bf16.msra.mxu0 %v553
      %651 = vmatprep.subr.bf16.mxu0 0
      %652 = vmatpush1.bf16.msra.mxu0 %v552
      %653 = vmatprep.subr.bf16.mxu0 0
      %654 = vmatpush2.bf16.msra.mxu0 %v567
      %655 = vmatprep.subr.bf16.mxu0 0
      %656 = vmatpush2.bf16.msra.mxu0 %v566
      %657 = vmatprep.subr.bf16.mxu0 0
      %658 = vmatpush2.bf16.msra.mxu0 %v565
      %659 = vmatprep.subr.bf16.mxu0 0
      %660 = vmatpush2.bf16.msra.mxu0 %v564
      %661 = vmatprep.subr.bf16.mxu0 0
      %662 = vmatpush2.bf16.msra.mxu0 %v563
      %663 = vmatprep.subr.bf16.mxu0 0
      %664 = vmatpush2.bf16.msra.mxu0 %v562
      %665 = vmatprep.subr.bf16.mxu0 0
      %666 = vmatpush2.bf16.msra.mxu0 %v561
      %667 = vmatprep.subr.bf16.mxu0 0
      %668 = vmatpush2.bf16.msra.mxu0 %v560
      %669 = vmatprep.mubr.bf16.mxu0 %v373
      %670 = vmatmul.mubr.bf16.gmra.mxu0 %v372
      %v671 = vpop.f32.mrf.mxu0
      %v672 = vadd.f32 %v306, %v671
      %v673 = vpop.f32.mrf.mxu0
      %v674 = vpop.f32.mrf.mxu0
      %v675 = vadd.f32 %v306, %v674
      %v676 = vpop.f32.mrf.mxu0
      %677 = vmatprep.mubr.bf16.mxu0 %v378
      %678 = vmatmul.mubr.bf16.gmra.mxu0 %v377
      %v679 = vpop.f32.mrf.mxu0
      %v680 = vadd.f32 %v306, %v679
      %v681 = vpop.f32.mrf.mxu0
      %v682 = vpop.f32.mrf.mxu0
      %v683 = vadd.f32 %v306, %v682
      %v684 = vpop.f32.mrf.mxu0
      %685 = vmatprep.mubr.bf16.mxu0 %v383
      %686 = vmatmul.mubr.bf16.gmra.mxu0 %v382
      %v687 = vpop.f32.mrf.mxu0
      %v688 = vadd.f32 %v306, %v687
      %v689 = vpop.f32.mrf.mxu0
      %v690 = vpop.f32.mrf.mxu0
      %v691 = vadd.f32 %v306, %v690
      %v692 = vpop.f32.mrf.mxu0
      %693 = vmatprep.mubr.bf16.mxu0 %v388
      %694 = vmatmul.mubr.bf16.gmra.mxu0 %v387
      %v695 = vpop.f32.mrf.mxu0
      %v696 = vadd.f32 %v306, %v695
      %v697 = vpop.f32.mrf.mxu0
      %v698 = vpop.f32.mrf.mxu0
      %v699 = vadd.f32 %v306, %v698
      %v700 = vpop.f32.mrf.mxu0
      %701 = vdwg.mxu0
      %702 = vmatprep.subr.bf16.mxu0 0
      %703 = vmatpush1.bf16.msra.mxu0 %v575
      %704 = vmatprep.subr.bf16.mxu0 0
      %705 = vmatpush1.bf16.msra.mxu0 %v574
      %706 = vmatprep.subr.bf16.mxu0 0
      %707 = vmatpush1.bf16.msra.mxu0 %v573
      %708 = vmatprep.subr.bf16.mxu0 0
      %709 = vmatpush1.bf16.msra.mxu0 %v572
      %710 = vmatprep.subr.bf16.mxu0 0
      %711 = vmatpush1.bf16.msra.mxu0 %v571
      %712 = vmatprep.subr.bf16.mxu0 0
      %713 = vmatpush1.bf16.msra.mxu0 %v570
      %714 = vmatprep.subr.bf16.mxu0 0
      %715 = vmatpush1.bf16.msra.mxu0 %v569
      %716 = vmatprep.subr.bf16.mxu0 0
      %717 = vmatpush1.bf16.msra.mxu0 %v568
      %718 = vmatprep.subr.bf16.mxu0 0
      %719 = vmatpush2.bf16.msra.mxu0 %v583
      %720 = vmatprep.subr.bf16.mxu0 0
      %721 = vmatpush2.bf16.msra.mxu0 %v582
      %722 = vmatprep.subr.bf16.mxu0 0
      %723 = vmatpush2.bf16.msra.mxu0 %v581
      %724 = vmatprep.subr.bf16.mxu0 0
      %725 = vmatpush2.bf16.msra.mxu0 %v580
      %726 = vmatprep.subr.bf16.mxu0 0
      %727 = vmatpush2.bf16.msra.mxu0 %v579
      %728 = vmatprep.subr.bf16.mxu0 0
      %729 = vmatpush2.bf16.msra.mxu0 %v578
      %730 = vmatprep.subr.bf16.mxu0 0
      %731 = vmatpush2.bf16.msra.mxu0 %v577
      %732 = vmatprep.subr.bf16.mxu0 0
      %733 = vmatpush2.bf16.msra.mxu0 %v576
      %734 = vmatprep.mubr.bf16.mxu0 %v375
      %735 = vmatmul.mubr.bf16.gmra.mxu0 %v374
      %v736 = vpop.f32.mrf.mxu0
      %v737 = vadd.f32 %v672, %v736
      %v738 = vpop.f32.mrf.mxu0
      %v739 = vpop.f32.mrf.mxu0
      %v740 = vadd.f32 %v675, %v739
      %v741 = vpop.f32.mrf.mxu0
      %742 = vmatprep.mubr.bf16.mxu0 %v380
      %743 = vmatmul.mubr.bf16.gmra.mxu0 %v379
      %v744 = vpop.f32.mrf.mxu0
      %v745 = vadd.f32 %v680, %v744
      %v746 = vpop.f32.mrf.mxu0
      %v747 = vpop.f32.mrf.mxu0
      %v748 = vadd.f32 %v683, %v747
      %v749 = vpop.f32.mrf.mxu0
      %750 = vmatprep.mubr.bf16.mxu0 %v385
      %751 = vmatmul.mubr.bf16.gmra.mxu0 %v384
      %v752 = vpop.f32.mrf.mxu0
      %v753 = vadd.f32 %v688, %v752
      %v754 = vpop.f32.mrf.mxu0
      %v755 = vpop.f32.mrf.mxu0
      %v756 = vadd.f32 %v691, %v755
      %v757 = vpop.f32.mrf.mxu0
      %758 = vmatprep.mubr.bf16.mxu0 %v390
      %759 = vmatmul.mubr.bf16.gmra.mxu0 %v389
      %v760 = vpop.f32.mrf.mxu0
      %v761 = vadd.f32 %v696, %v760
      %v762 = vpop.f32.mrf.mxu0
      %v763 = vpop.f32.mrf.mxu0
      %v764 = vadd.f32 %v699, %v763
      %v765 = vpop.f32.mrf.mxu0
      %766 = vdwg.mxu0
      %767 = vmatprep.subr.bf16.mxu0 0
      %768 = vmatpush1.bf16.msra.mxu0 0
      %769 = vmatprep.subr.bf16.mxu0 0
      %770 = vmatpush1.bf16.msra.mxu0 0
      %771 = vmatprep.subr.bf16.mxu0 0
      %772 = vmatpush1.bf16.msra.mxu0 0
      %773 = vmatprep.subr.bf16.mxu0 0
      %774 = vmatpush1.bf16.msra.mxu0 0
      %775 = vmatprep.subr.bf16.mxu0 0
      %776 = vmatpush1.bf16.msra.mxu0 %v587
      %777 = vmatprep.subr.bf16.mxu0 0
      %778 = vmatpush1.bf16.msra.mxu0 %v586
      %779 = vmatprep.subr.bf16.mxu0 0
      %780 = vmatpush1.bf16.msra.mxu0 %v585
      %781 = vmatprep.subr.bf16.mxu0 0
      %782 = vmatpush1.bf16.msra.mxu0 %v584
      %783 = vmatprep.subr.bf16.mxu0 0
      %784 = vmatpush2.bf16.msra.mxu0 0
      %785 = vmatprep.subr.bf16.mxu0 0
      %786 = vmatpush2.bf16.msra.mxu0 0
      %787 = vmatprep.subr.bf16.mxu0 0
      %788 = vmatpush2.bf16.msra.mxu0 0
      %789 = vmatprep.subr.bf16.mxu0 0
      %790 = vmatpush2.bf16.msra.mxu0 0
      %791 = vmatprep.subr.bf16.mxu0 0
      %792 = vmatpush2.bf16.msra.mxu0 0
      %793 = vmatprep.subr.bf16.mxu0 0
      %794 = vmatpush2.bf16.msra.mxu0 0
      %795 = vmatprep.subr.bf16.mxu0 0
      %796 = vmatpush2.bf16.msra.mxu0 0
      %797 = vmatprep.subr.bf16.mxu0 0
      %798 = vmatpush2.bf16.msra.mxu0 0
      %799 = vmatprep.mubr.bf16.mxu0 0
      %800 = vmatmul.mubr.bf16.gmra.mxu0 %v626
      %v801 = vpop.f32.mrf.mxu0
      %v802 = vadd.f32 %v737, %v801
      %v803 = vpop.f32.mrf.mxu0
      %v804 = vpop.f32.mrf.mxu0
      %v805 = vadd.f32 %v740, %v804
      %v806 = vpop.f32.mrf.mxu0
      %807 = vmatprep.mubr.bf16.mxu0 0
      %808 = vmatmul.mubr.bf16.gmra.mxu0 %v629
      %v809 = vpop.f32.mrf.mxu0
      %v810 = vadd.f32 %v745, %v809
      %v811 = vpop.f32.mrf.mxu0
      %v812 = vpop.f32.mrf.mxu0
      %v813 = vadd.f32 %v748, %v812
      %v814 = vpop.f32.mrf.mxu0
      %815 = vmatprep.mubr.bf16.mxu0 0
      %816 = vmatmul.mubr.bf16.gmra.mxu0 %v632
      %v817 = vpop.f32.mrf.mxu0
      %v818 = vadd.f32 %v753, %v817
      %v819 = vpop.f32.mrf.mxu0
      %v820 = vpop.f32.mrf.mxu0
      %v821 = vadd.f32 %v756, %v820
      %v822 = vpop.f32.mrf.mxu0
      %823 = vmatprep.mubr.bf16.mxu0 0
      %824 = vmatmul.mubr.bf16.gmra.mxu0 %v635
      %v825 = vpop.f32.mrf.mxu0
      %v826 = vadd.f32 %v761, %v825
      %v827 = vpop.f32.mrf.mxu0
      %v828 = vpop.f32.mrf.mxu0
      %v829 = vadd.f32 %v764, %v828
      %v830 = vpop.f32.mrf.mxu0
      %831 = vdwg.mxu0
      %vm832 = vcmp.gt.f32.partialorder %v802, 0.0
      %vm833 = vcmp.gt.f32.partialorder %v805, 0.0
      %vm834 = vcmp.gt.f32.partialorder %v810, 0.0
      %vm835 = vcmp.gt.f32.partialorder %v813, 0.0
      %vm836 = vcmp.gt.f32.partialorder %v818, 0.0
      %vm837 = vcmp.gt.f32.partialorder %v821, 0.0
      %vm838 = vcmp.gt.f32.partialorder %v826, 0.0
      %vm839 = vcmp.gt.f32.partialorder %v829, 0.0
      %v840 = vld [vmem:[%s3] sm:$0x1]
      %v842 = vlaneseq
      %v843 = vshrl.u32 %v842, 7
      %v844 = vsub.s32 0, %v843
      %v845 = vrot.slane %v840, %v844
      %v847 = vmul.f32 %v845, %v802
      %v848 = vmul.f32 %v845, %v805
      %v849 = vmul.f32 %v845, %v810
      %v850 = vmul.f32 %v845, %v813
      %v851 = vmul.f32 %v845, %v818
      %v852 = vmul.f32 %v845, %v821
      %v853 = vmul.f32 %v845, %v826
      %v854 = vmul.f32 %v845, %v829
      %v855 = vsel %vm832, %v802, %v847
      %v856 = vsel %vm833, %v805, %v848
      %v857 = vsel %vm834, %v810, %v849
      %v858 = vsel %vm835, %v813, %v850
      %v859 = vsel %vm836, %v818, %v851
      %v860 = vsel %vm837, %v821, %v852
      %v861 = vsel %vm838, %v826, %v853
      %v862 = vsel %vm839, %v829, %v854
      %v863 = vpack.c.bf16 %v856, %v855
      %v864 = vpack.c.bf16 %v858, %v857
      %v865 = vpack.c.bf16 %v860, %v859
      %v866 = vpack.c.bf16 %v862, %v861
      %v871 = vunpack.c.l.b16 %v863
      %v872 = vunpack.c.h.b16 %v863
      %v873 = vunpack.c.l.b16 %v864
      %v874 = vunpack.c.h.b16 %v864
      %v875 = vunpack.c.l.b16 %v865
      %v876 = vunpack.c.h.b16 %v865
      %v877 = vunpack.c.l.b16 %v866
      %v878 = vunpack.c.h.b16 %v866
      %v879 = vpack.c.b16 %v871, %v871
      %v880 = vpack.c.b16 %v872, %v872
      %v881 = vpack.c.b16 %v873, %v873
      %v882 = vpack.c.b16 %v874, %v874
      %v883 = vpack.c.b16 %v875, %v875
      %v884 = vpack.c.b16 %v876, %v876
      %v885 = vpack.c.b16 %v877, %v877
      %v886 = vpack.c.b16 %v878, %v878
      %vm895 = vcmask 519168
      %896 = vst.msk [vmem:[%s202] sm:$0xf] %vm895, %v879
      %897 = vst.msk [vmem:[%s202 + $0x4] sm:$0xf] %vm895, %v880
      %898 = vst.msk [vmem:[%s202 + $0x8] sm:$0xf] %vm895, %v881
      %899 = vst.msk [vmem:[%s202 + $0xc] sm:$0xf] %vm895, %v882
      %900 = vst.msk [vmem:[%s202 + $0x10] sm:$0xf] %vm895, %v883
      %901 = vst.msk [vmem:[%s202 + $0x14] sm:$0xf] %vm895, %v884
      %902 = vst.msk [vmem:[%s202 + $0x18] sm:$0xf] %vm895, %v885
      %903 = vst.msk [vmem:[%s202 + $0x1c] sm:$0xf] %vm895, %v886
      %s904 = smul.u32 8, %s15
      %p905 = scmp.lt.s32.totalorder %s904, 15
      %s906 = scalar_select %p905, %s904, 15
      %s907 = smul.addr %s906, 4
      %s908 = scalar_lea.vmem %s4, %s907
      // Predicated region
      $region37: #{onet_forward.7} parent=35 // pred_check
        %p909 = pneg %p122
      $region38: #{onet_forward.7} parent=35 // pred_check_branch
        %911 = sbr.rel (%p909) target = $region40
      $region39: #{onet_forward.7} parent=35 // pred_region
        %s912 = smul.u32 8, %s15
      $region40: #{onet_forward.7} parent=35 // pred_fallthru
        _
    $region36: #{onet_forward.7} parent=5 // pred_fallthru
      _
    %p913 = scmp.le.s32.totalorder 2, %s10
    // Predicated region
    $region41: #{onet_forward.7} parent=5 // pred_check
      %p914 = pneg %p913
    $region42: #{onet_forward.7} parent=5 // pred_check_branch
      %916 = sbr.rel (%p914) target = $region44
    $region43: #{onet_forward.7} parent=5 // pred_region
      %s917 = ssub.s32 %s10, 2
      // Predicated region
      $region45: #{onet_forward.7} parent=43 // pred_check
        %p918 = pneg %p128
      $region46: #{onet_forward.7} parent=43 // pred_check_branch
        %920 = sbr.rel (%p918) target = $region48
      $region47: #{onet_forward.7} parent=43 // pred_region
        %s921 = smul.u32 8, %s16
        %p922 = scmp.lt.s32.totalorder %s921, 15
        %s923 = scalar_select %p922, %s921, 15
        %s924 = smul.addr %s923, 4
        %s925 = scalar_lea.vmem %s4, %s924
      $region48: #{onet_forward.7} parent=43 // pred_fallthru
        _
    $region44: #{onet_forward.7} parent=5 // pred_fallthru
      _
  $region6: #{onet_forward.7} parent=0 // loop_footer
    %s14 = sadd.s32 1, %s10
  $region7: #{onet_forward.7} parent=0 // loop_footer_branch
    %9 = sbr.rel target = $region3
  $region8: #{onet_forward.7} parent=0 // loop_exit
    _

// kernel: onet_forward.8
$region0: #{onet_forward.8}
  #allocation0 [shape = 'u32[]', space=smem, size = 0x4, offset = 0x4, fixed_abs, tag = 'smem constant byte address 0x4 - core index']
  #allocation1 [shape = 'u32[144,128]{1,0:T(1,128)}', space=vmem, size = 0x12000, scoped, tag = 'internal scratch']
  %s0 = inlined_call_operand.vmem [shape: bf16[32,256], index: 0, kind: input, shape index: {}]
  %s1 = inlined_call_operand.vmem [shape: bf16[256,128], index: 1, kind: input, shape index: {}]
  %s2 = inlined_call_operand.vmem [shape: f32[1,128], index: 2, kind: input, shape index: {}]
  %s3 = inlined_call_operand.vmem [shape: f32[1,128], index: 3, kind: input, shape index: {}]
  %s4 = inlined_call_operand.vmem [shape: bf16[32,128], index: 4, kind: output, shape index: {}]
  %s5 = sld [smem:[#allocation0]]
  $region49: #{onet_forward.8} parent=0
    _
  %s7 = ssub.s32 1, %s5
  %s8 = scalar_select 0, %s7, %s5
  loop: start=0, step=1, limit=4
  $region2: #{onet_forward.8} parent=0 // loop_pre_header
    _
  $region3: #{onet_forward.8} parent=0 // loop_header
    %s10 = sphi 0, %s14
    %p11 = scmp.ge.s32.totalorder %s10, 4
    %s20 = sphi 0, %s22
    %s23 = sphi 0, %s20
    %s24 = sphi 0, %s23
    %s40 = sphi 0, %s24
    %s44 = sphi 0, %s44
    %s46 = sphi 0, %s44
    %s47 = sphi 0, %s46
    %s61 = sphi 0, %s47
    %s65 = sphi 0, %s65
    %s67 = sphi 0, %s65
    %s68 = sphi 0, %s67
    %s82 = sphi 0, %s68
    %s86 = sphi 0, %s86
    %s88 = sphi 0, %s86
    %s89 = sphi 0, %s88
    %s103 = sphi 0, %s89
    %s109 = sphi 0, %s111
    %s112 = sphi 0, %s109
    %s113 = sphi 0, %s112
    %s129 = sphi 0, %s113
  $region4: #{onet_forward.8} parent=0 // loop_header_branch
    %13 = sbr.rel (%p11) target = $region8
  $region5: #{onet_forward.8} parent=0 // loop_body
    %s15 = ssub.s32 %s10, 1
    %s16 = ssub.s32 %s10, 2
    %s17 = sadd.s32 %s10, 1
    %s18 = ssub.s32 %s10, %s17
    %p19 = scmp.eq.s32.totalorder %s18, 0
    %s21 = sadd.s32 %s20, 1
    %s22 = scalar_select %p19, %s20, %s21
    %p25 = pneg %p19
    %p26 = scmp.eq.s32.totalorder %s10, 1
    %p27 = por %p25, %p26
    %p28 = scmp.ne.s32.totalorder %s20, %s23
    %p29 = scmp.eq.s32.totalorder %s10, 0
    %p30 = por %p28, %p29
    %p31 = scmp.ne.s32.totalorder %s20, %s23
    %p32 = scmp.eq.s32.totalorder %s15, 1
    %p33 = por %p31, %p32
    %p34 = scmp.ne.s32.totalorder %s23, %s24
    %p35 = scmp.eq.s32.totalorder %s15, 0
    %p36 = por %p34, %p35
    %p37 = scmp.ne.s32.totalorder %s23, %s24
    %p38 = scmp.eq.s32.totalorder %s16, 1
    %p39 = por %p37, %p38
    %p41 = scmp.ne.s32.totalorder %s24, %s40
    %p42 = scmp.eq.s32.totalorder %s16, 0
    %p43 = por %p41, %p42
    %s45 = sadd.s32 %s44, 1
    %p48 = scmp.eq.s32.totalorder %s10, 1
    %p49 = scmp.ne.s32.totalorder %s44, %s46
    %p50 = scmp.eq.s32.totalorder %s10, 0
    %p51 = por %p49, %p50
    %p52 = scmp.ne.s32.totalorder %s44, %s46
    %p53 = scmp.eq.s32.totalorder %s15, 1
    %p54 = por %p52, %p53
    %p55 = scmp.ne.s32.totalorder %s46, %s47
    %p56 = scmp.eq.s32.totalorder %s15, 0
    %p57 = por %p55, %p56
    %p58 = scmp.ne.s32.totalorder %s46, %s47
    %p59 = scmp.eq.s32.totalorder %s16, 1
    %p60 = por %p58, %p59
    %p62 = scmp.ne.s32.totalorder %s47, %s61
    %p63 = scmp.eq.s32.totalorder %s16, 0
    %p64 = por %p62, %p63
    %s66 = sadd.s32 %s65, 1
    %p69 = scmp.eq.s32.totalorder %s10, 1
    %p70 = scmp.ne.s32.totalorder %s65, %s67
    %p71 = scmp.eq.s32.totalorder %s10, 0
    %p72 = por %p70, %p71
    %p73 = scmp.ne.s32.totalorder %s65, %s67
    %p74 = scmp.eq.s32.totalorder %s15, 1
    %p75 = por %p73, %p74
    %p76 = scmp.ne.s32.totalorder %s67, %s68
    %p77 = scmp.eq.s32.totalorder %s15, 0
    %p78 = por %p76, %p77
    %p79 = scmp.ne.s32.totalorder %s67, %s68
    %p80 = scmp.eq.s32.totalorder %s16, 1
    %p81 = por %p79, %p80
    %p83 = scmp.ne.s32.totalorder %s68, %s82
    %p84 = scmp.eq.s32.totalorder %s16, 0
    %p85 = por %p83, %p84
    %s87 = sadd.s32 %s86, 1
    %p90 = scmp.eq.s32.totalorder %s10, 1
    %p91 = scmp.ne.s32.totalorder %s86, %s88
    %p92 = scmp.eq.s32.totalorder %s10, 0
    %p93 = por %p91, %p92
    %p94 = scmp.ne.s32.totalorder %s86, %s88
    %p95 = scmp.eq.s32.totalorder %s15, 1
    %p96 = por %p94, %p95
    %p97 = scmp.ne.s32.totalorder %s88, %s89
    %p98 = scmp.eq.s32.totalorder %s15, 0
    %p99 = por %p97, %p98
    %p100 = scmp.ne.s32.totalorder %s88, %s89
    %p101 = scmp.eq.s32.totalorder %s16, 1
    %p102 = por %p100, %p101
    %p104 = scmp.ne.s32.totalorder %s89, %s103
    %p105 = scmp.eq.s32.totalorder %s16, 0
    %p106 = por %p104, %p105
    %s107 = ssub.s32 %s10, %s17
    %p108 = scmp.eq.s32.totalorder %s107, 0
    %s110 = sadd.s32 %s109, 1
    %s111 = scalar_select %p108, %s109, %s110
    %p114 = pneg %p108
    %p115 = scmp.eq.s32.totalorder %s10, 1
    %p116 = por %p114, %p115
    %p117 = scmp.ne.s32.totalorder %s109, %s112
    %p118 = scmp.eq.s32.totalorder %s10, 0
    %p119 = por %p117, %p118
    %p120 = scmp.ne.s32.totalorder %s109, %s112
    %p121 = scmp.eq.s32.totalorder %s15, 1
    %p122 = por %p120, %p121
    %p123 = scmp.ne.s32.totalorder %s112, %s113
    %p124 = scmp.eq.s32.totalorder %s15, 0
    %p125 = por %p123, %p124
    %p126 = scmp.ne.s32.totalorder %s112, %s113
    %p127 = scmp.eq.s32.totalorder %s16, 1
    %p128 = por %p126, %p127
    %p130 = scmp.ne.s32.totalorder %s113, %s129
    %p131 = scmp.eq.s32.totalorder %s16, 0
    %p132 = por %p130, %p131
    %p133 = scmp.le.s32.totalorder 1, %s10
    %p134 = scmp.lt.s32.totalorder %s10, 3
    %p135 = pnand %p133, %p134
    %p136 = pneg %p135
    // Predicated region
    $region9: #{onet_forward.8} parent=5 // pred_check
      _
    $region10: #{onet_forward.8} parent=5 // pred_check_branch
      %138 = sbr.rel (%p135) target = $region12
    $region11: #{onet_forward.8} parent=5 // pred_region
      %s139 = ssub.s32 %s10, 1
      // Predicated region
      $region13: #{onet_forward.8} parent=11 // pred_check
        %p140 = pneg %p57
      $region14: #{onet_forward.8} parent=11 // pred_check_branch
        %142 = sbr.rel (%p140) target = $region16
      $region15: #{onet_forward.8} parent=11 // pred_region
        _
      $region16: #{onet_forward.8} parent=11 // pred_fallthru
        _
      // Predicated region
      $region17: #{onet_forward.8} parent=11 // pred_check
        %p143 = pneg %p78
      $region18: #{onet_forward.8} parent=11 // pred_check_branch
        %145 = sbr.rel (%p143) target = $region20
      $region19: #{onet_forward.8} parent=11 // pred_region
        _
      $region20: #{onet_forward.8} parent=11 // pred_fallthru
        _
      // Predicated region
      $region21: #{onet_forward.8} parent=11 // pred_check
        %p146 = pneg %p99
      $region22: #{onet_forward.8} parent=11 // pred_check_branch
        %148 = sbr.rel (%p146) target = $region24
      $region23: #{onet_forward.8} parent=11 // pred_region
        _
      $region24: #{onet_forward.8} parent=11 // pred_fallthru
        _
    $region12: #{onet_forward.8} parent=5 // pred_fallthru
      _
    %p149 = scmp.lt.s32.totalorder %s10, 2
    // Predicated region
    $region25: #{onet_forward.8} parent=5 // pred_check
      %p150 = pneg %p149
    $region26: #{onet_forward.8} parent=5 // pred_check_branch
      %152 = sbr.rel (%p150) target = $region28
    $region27: #{onet_forward.8} parent=5 // pred_region
      // Predicated region
      $region29: #{onet_forward.8} parent=27 // pred_check
        %p153 = pneg %p30
      $region30: #{onet_forward.8} parent=27 // pred_check_branch
        %155 = sbr.rel (%p153) target = $region32
      $region31: #{onet_forward.8} parent=27 // pred_region
        %s156 = smul.u32 2, %s10
        %p157 = scmp.lt.s32.totalorder %s156, 3
        %s158 = scalar_select %p157, %s156, 3
        %s159 = smul.addr %s158, 2
        %s160 = smul.addr %s159, 4
        %s161 = scalar_lea.vmem %s0, %s160
        %s162 = smul.u32 2, %s10
      $region32: #{onet_forward.8} parent=27 // pred_fallthru
        _
    $region28: #{onet_forward.8} parent=5 // pred_fallthru
      _
    %p163 = scmp.le.s32.totalorder 1, %s10
    %p164 = scmp.lt.s32.totalorder %s10, 3
    %p165 = pnand %p163, %p164
    %p166 = pneg %p165
    // Predicated region
    $region33: #{onet_forward.8} parent=5 // pred_check
      _
    $region34: #{onet_forward.8} parent=5 // pred_check_branch
      %168 = sbr.rel (%p165) target = $region36
    $region35: #{onet_forward.8} parent=5 // pred_region
      %s169 = ssub.s32 %s10, 1
      %s170 = smul.u32 2, %s15
      %p171 = scmp.lt.s32.totalorder %s170, 3
      %s172 = scalar_select %p171, %s170, 3
      %s173 = smul.addr %s172, 2
      %s174 = smul.addr %s173, 4
      %s175 = scalar_lea.vmem %s0, %s174
      %p176 = pneg %p36
      %p177 = pneg %p33
      %p178 = pneg %p57
      %p179 = pneg %p54
      %p180 = pneg %p78
      %p181 = pneg %p75
      %p182 = pneg %p99
      %p183 = pneg %p96
      %p184 = pneg %p125
      %p185 = pneg %p122
      %s186 = smul.u32 2, %s15
      %p187 = scmp.lt.s32.totalorder %s186, 3
      %s188 = scalar_select %p187, %s186, 3
      %s189 = smul.addr %s188, 4
      %s190 = scalar_lea.vmem %s4, %s189
      %s191 = smul.u32 2, %s15
      %p192 = scmp.lt.s32.totalorder %s191, 3
      %s193 = scalar_select %p192, %s191, 3
      %s194 = smul.addr %s193, 2
      %s195 = smul.addr %s194, 4
      %s196 = scalar_lea.vmem %s0, %s195
      %s197 = smul.u32 2, %s15
      %s198 = smul.u32 2, %s15
      %p199 = scmp.lt.s32.totalorder %s198, 3
      %s200 = scalar_select %p199, %s198, 3
      %s201 = smul.addr %s200, 4
      %s202 = scalar_lea.vmem %s4, %s201
      %s203 = smul.u32 2, %s15
      %v205 = vld [vmem:[%s196] sm:$0xff]
      %v206 = vld [vmem:[%s196 + $0x8] sm:$0xff]
      %v207 = vld [vmem:[%s1] sm:$0xf]
      %v208 = vld [vmem:[%s1 + $0x4] sm:$0xf]
      %v209 = vld [vmem:[%s1 + $0x8] sm:$0xf]
      %v210 = vld [vmem:[%s1 + $0xc] sm:$0xf]
      %v211 = vld [vmem:[%s1 + $0x10] sm:$0xf]
      %v212 = vld [vmem:[%s1 + $0x14] sm:$0xf]
      %v213 = vld [vmem:[%s1 + $0x18] sm:$0xf]
      %v214 = vld [vmem:[%s1 + $0x1c] sm:$0xf]
      %v215 = vld [vmem:[%s1 + $0x20] sm:$0xf]
      %v216 = vld [vmem:[%s1 + $0x24] sm:$0xf]
      %v217 = vld [vmem:[%s1 + $0x28] sm:$0xf]
      %v218 = vld [vmem:[%s1 + $0x2c] sm:$0xf]
      %v219 = vld [vmem:[%s1 + $0x30] sm:$0xf]
      %v220 = vld [vmem:[%s1 + $0x34] sm:$0xf]
      %v221 = vld [vmem:[%s1 + $0x38] sm:$0xf]
      %v222 = vld [vmem:[%s1 + $0x3c] sm:$0xf]
      %v223 = vld [vmem:[%s1 + $0x40] sm:$0xf]
      %v224 = vld [vmem:[%s1 + $0x44] sm:$0xf]
      %v225 = vld [vmem:[%s1 + $0x48] sm:$0xf]
      %v226 = vld [vmem:[%s1 + $0x4c] sm:$0xf]
      %v227 = vld [vmem:[%s1 + $0x50] sm:$0xf]
      %v228 = vld [vmem:[%s1 + $0x54] sm:$0xf]
      %v229 = vld [vmem:[%s1 + $0x58] sm:$0xf]
      %v230 = vld [vmem:[%s1 + $0x5c] sm:$0xf]
      %v231 = vld [vmem:[%s1 + $0x60] sm:$0xf]
      %v232 = vld [vmem:[%s1 + $0x64] sm:$0xf]
      %v233 = vld [vmem:[%s1 + $0x68] sm:$0xf]
      %v234 = vld [vmem:[%s1 + $0x6c] sm:$0xf]
      %v235 = vld [vmem:[%s1 + $0x70] sm:$0xf]
      %v236 = vld [vmem:[%s1 + $0x74] sm:$0xf]
      %v237 = vld [vmem:[%s1 + $0x78] sm:$0xf]
      %v238 = vld [vmem:[%s1 + $0x7c] sm:$0xf]
      %v239 = vld [vmem:[%s2] sm:$0x1]
      %v241 = vlaneseq
      %v242 = vshrl.u32 %v241, 7
      %v243 = vsub.s32 0, %v242
      %v244 = vrot.slane %v239, %v243
      %v248 = vunpack.c.l.b16 %v205
      %v249 = vunpack.c.h.b16 %v205
      %v250 = vunpack.c.l.b16 %v206
      %v251 = vunpack.c.h.b16 %v206
      %v252 = vpack.c.b16 %v250, %v248
      %v253 = vpack.c.b16 %v251, %v249
      %v288 = vunpack.c.l.b16 %v207
      %v289 = vunpack.c.l.b16 %v208
      %v290 = vunpack.c.l.b16 %v209
      %v291 = vunpack.c.l.b16 %v210
      %v292 = vunpack.c.l.b16 %v211
      %v293 = vunpack.c.l.b16 %v212
      %v294 = vunpack.c.l.b16 %v213
      %v295 = vunpack.c.l.b16 %v214
      %v296 = vunpack.c.l.b16 %v215
      %v297 = vunpack.c.l.b16 %v216
      %v298 = vunpack.c.l.b16 %v217
      %v299 = vunpack.c.l.b16 %v218
      %v300 = vunpack.c.l.b16 %v219
      %v301 = vunpack.c.l.b16 %v220
      %v302 = vunpack.c.l.b16 %v221
      %v303 = vunpack.c.l.b16 %v222
      %v304 = vunpack.c.l.b16 %v223
      %v305 = vunpack.c.l.b16 %v224
      %v306 = vunpack.c.l.b16 %v225
      %v307 = vunpack.c.l.b16 %v226
      %v308 = vunpack.c.l.b16 %v227
      %v309 = vunpack.c.l.b16 %v228
      %v310 = vunpack.c.l.b16 %v229
      %v311 = vunpack.c.l.b16 %v230
      %v312 = vunpack.c.l.b16 %v231
      %v313 = vunpack.c.l.b16 %v232
      %v314 = vunpack.c.l.b16 %v233
      %v315 = vunpack.c.l.b16 %v234
      %v316 = vunpack.c.l.b16 %v235
      %v317 = vunpack.c.l.b16 %v236
      %v318 = vunpack.c.l.b16 %v237
      %v319 = vunpack.c.l.b16 %v238
      %v320 = vpack.c.b16 %v289, %v288
      %v321 = vpack.c.b16 %v291, %v290
      %v322 = vpack.c.b16 %v293, %v292
      %v323 = vpack.c.b16 %v295, %v294
      %v324 = vpack.c.b16 %v297, %v296
      %v325 = vpack.c.b16 %v299, %v298
      %v326 = vpack.c.b16 %v301, %v300
      %v327 = vpack.c.b16 %v303, %v302
      %v328 = vpack.c.b16 %v305, %v304
      %v329 = vpack.c.b16 %v307, %v306
      %v330 = vpack.c.b16 %v309, %v308
      %v331 = vpack.c.b16 %v311, %v310
      %v332 = vpack.c.b16 %v313, %v312
      %v333 = vpack.c.b16 %v315, %v314
      %v334 = vpack.c.b16 %v317, %v316
      %v335 = vpack.c.b16 %v319, %v318
      %352 = vmatprep.subr.bf16.mxu0 0
      %353 = vmatpush1.bf16.msra.mxu0 %v327
      %354 = vmatprep.subr.bf16.mxu0 0
      %355 = vmatpush1.bf16.msra.mxu0 %v326
      %356 = vmatprep.subr.bf16.mxu0 0
      %357 = vmatpush1.bf16.msra.mxu0 %v325
      %358 = vmatprep.subr.bf16.mxu0 0
      %359 = vmatpush1.bf16.msra.mxu0 %v324
      %360 = vmatprep.subr.bf16.mxu0 0
      %361 = vmatpush1.bf16.msra.mxu0 %v323
      %362 = vmatprep.subr.bf16.mxu0 0
      %363 = vmatpush1.bf16.msra.mxu0 %v322
      %364 = vmatprep.subr.bf16.mxu0 0
      %365 = vmatpush1.bf16.msra.mxu0 %v321
      %366 = vmatprep.subr.bf16.mxu0 0
      %367 = vmatpush1.bf16.msra.mxu0 %v320
      %368 = vmatprep.subr.bf16.mxu0 0
      %369 = vmatpush2.bf16.msra.mxu0 %v335
      %370 = vmatprep.subr.bf16.mxu0 0
      %371 = vmatpush2.bf16.msra.mxu0 %v334
      %372 = vmatprep.subr.bf16.mxu0 0
      %373 = vmatpush2.bf16.msra.mxu0 %v333
      %374 = vmatprep.subr.bf16.mxu0 0
      %375 = vmatpush2.bf16.msra.mxu0 %v332
      %376 = vmatprep.subr.bf16.mxu0 0
      %377 = vmatpush2.bf16.msra.mxu0 %v331
      %378 = vmatprep.subr.bf16.mxu0 0
      %379 = vmatpush2.bf16.msra.mxu0 %v330
      %380 = vmatprep.subr.bf16.mxu0 0
      %381 = vmatpush2.bf16.msra.mxu0 %v329
      %382 = vmatprep.subr.bf16.mxu0 0
      %383 = vmatpush2.bf16.msra.mxu0 %v328
      %384 = vmatprep.mubr.bf16.mxu0 %v253
      %385 = vmatmul.mubr.bf16.gmra.mxu0 %v252
      %v386 = vpop.f32.mrf.mxu0
      %v387 = vadd.f32 %v244, %v386
      %v388 = vpop.f32.mrf.mxu0
      %v389 = vpop.f32.mrf.mxu0
      %v390 = vadd.f32 %v244, %v389
      %v391 = vpop.f32.mrf.mxu0
      %392 = vdwg.mxu0
      %vm393 = vcmp.gt.f32.partialorder %v387, 0.0
      %vm394 = vcmp.gt.f32.partialorder %v390, 0.0
      %v395 = vld [vmem:[%s3] sm:$0x1]
      %v397 = vlaneseq
      %v398 = vshrl.u32 %v397, 7
      %v399 = vsub.s32 0, %v398
      %v400 = vrot.slane %v395, %v399
      %v402 = vmul.f32 %v400, %v387
      %v403 = vmul.f32 %v400, %v390
      %v404 = vsel %vm393, %v387, %v402
      %v405 = vsel %vm394, %v390, %v403
      %v406 = vpack.c.bf16 %v405, %v404
      %v408 = vunpack.c.l.b16 %v406
      %v409 = vunpack.c.h.b16 %v406
      %v410 = vpack.c.b16 %v408, %v408
      %v411 = vpack.c.b16 %v409, %v409
      %414 = vst [vmem:[%s202] sm:$0xf] %v410
      %415 = vst [vmem:[%s202 + $0x4] sm:$0xf] %v411
      %s416 = smul.u32 2, %s15
      %p417 = scmp.lt.s32.totalorder %s416, 3
      %s418 = scalar_select %p417, %s416, 3
      %s419 = smul.addr %s418, 4
      %s420 = scalar_lea.vmem %s4, %s419
      // Predicated region
      $region37: #{onet_forward.8} parent=35 // pred_check
        %p421 = pneg %p122
      $region38: #{onet_forward.8} parent=35 // pred_check_branch
        %423 = sbr.rel (%p421) target = $region40
      $region39: #{onet_forward.8} parent=35 // pred_region
        %s424 = smul.u32 2, %s15
      $region40: #{onet_forward.8} parent=35 // pred_fallthru
        _
    $region36: #{onet_forward.8} parent=5 // pred_fallthru
      _
    %p425 = scmp.le.s32.totalorder 2, %s10
    // Predicated region
    $region41: #{onet_forward.8} parent=5 // pred_check
      %p426 = pneg %p425
    $region42: #{onet_forward.8} parent=5 // pred_check_branch
      %428 = sbr.rel (%p426) target = $region44
    $region43: #{onet_forward.8} parent=5 // pred_region
      %s429 = ssub.s32 %s10, 2
      // Predicated region
      $region45: #{onet_forward.8} parent=43 // pred_check
        %p430 = pneg %p128
      $region46: #{onet_forward.8} parent=43 // pred_check_branch
        %432 = sbr.rel (%p430) target = $region48
      $region47: #{onet_forward.8} parent=43 // pred_region
        %s433 = smul.u32 2, %s16
        %p434 = scmp.lt.s32.totalorder %s433, 3
        %s435 = scalar_select %p434, %s433, 3
        %s436 = smul.addr %s435, 4
        %s437 = scalar_lea.vmem %s4, %s436
      $region48: #{onet_forward.8} parent=43 // pred_fallthru
        _
    $region44: #{onet_forward.8} parent=5 // pred_fallthru
      _
  $region6: #{onet_forward.8} parent=0 // loop_footer
    %s14 = sadd.s32 1, %s10
  $region7: #{onet_forward.8} parent=0 // loop_footer_branch
    %9 = sbr.rel target = $region3
  $region8: #{onet_forward.8} parent=0 // loop_exit
    _

// kernel: onet_forward.9
$region0: #{onet_forward.9}
  #allocation0 [shape = 'u32[]', space=smem, size = 0x4, offset = 0x4, fixed_abs, tag = 'smem constant byte address 0x4 - core index']
  #allocation1 [shape = 'u32[144,128]{1,0:T(1,128)}', space=vmem, size = 0x12000, scoped, tag = 'internal scratch']
  %s0 = inlined_call_operand.vmem [shape: bf16[8,1152], index: 0, kind: input, shape index: {}]
  %s1 = inlined_call_operand.vmem [shape: bf16[1152,256], index: 1, kind: input, shape index: {}]
  %s2 = inlined_call_operand.vmem [shape: f32[1,256], index: 2, kind: input, shape index: {}]
  %s3 = inlined_call_operand.vmem [shape: f32[1,256], index: 3, kind: input, shape index: {}]
  %s4 = inlined_call_operand.vmem [shape: bf16[256,16], index: 4, kind: input, shape index: {}]
  %s5 = inlined_call_operand.vmem [shape: f32[1,16], index: 5, kind: input, shape index: {}]
  %s6 = inlined_call_operand.vmem [shape: f32[8,16], index: 6, kind: output, shape index: {}]
  %s7 = sld [smem:[#allocation0]]
  $region34: #{onet_forward.9} parent=0
    _
  %s9 = ssub.s32 1, %s7
  %s10 = scalar_select 0, %s9, %s7
  // Predicated region
  $region2: #{onet_forward.9} parent=0 // pred_check
    _
  $region3: #{onet_forward.9} parent=0 // pred_check_branch
    %12 = sbr.rel (0) target = $region5
  $region4: #{onet_forward.9} parent=0 // pred_region
    _
  $region5: #{onet_forward.9} parent=0 // pred_fallthru
    _
  // Predicated region
  $region6: #{onet_forward.9} parent=0 // pred_check
    _
  $region7: #{onet_forward.9} parent=0 // pred_check_branch
    %14 = sbr.rel (0) target = $region9
  $region8: #{onet_forward.9} parent=0 // pred_region
    _
  $region9: #{onet_forward.9} parent=0 // pred_fallthru
    _
  // Predicated region
  $region10: #{onet_forward.9} parent=0 // pred_check
    _
  $region11: #{onet_forward.9} parent=0 // pred_check_branch
    %16 = sbr.rel (0) target = $region13
  $region12: #{onet_forward.9} parent=0 // pred_region
    _
  $region13: #{onet_forward.9} parent=0 // pred_fallthru
    _
  // Predicated region
  $region14: #{onet_forward.9} parent=0 // pred_check
    _
  $region15: #{onet_forward.9} parent=0 // pred_check_branch
    %18 = sbr.rel (0) target = $region17
  $region16: #{onet_forward.9} parent=0 // pred_region
    _
  $region17: #{onet_forward.9} parent=0 // pred_fallthru
    _
  // Predicated region
  $region18: #{onet_forward.9} parent=0 // pred_check
    _
  $region19: #{onet_forward.9} parent=0 // pred_check_branch
    %20 = sbr.rel (0) target = $region21
  $region20: #{onet_forward.9} parent=0 // pred_region
    _
  $region21: #{onet_forward.9} parent=0 // pred_fallthru
    _
  // Predicated region
  $region22: #{onet_forward.9} parent=0 // pred_check
    _
  $region23: #{onet_forward.9} parent=0 // pred_check_branch
    %22 = sbr.rel (0) target = $region25
  $region24: #{onet_forward.9} parent=0 // pred_region
    _
  $region25: #{onet_forward.9} parent=0 // pred_fallthru
    _
  %v24 = vld [vmem:[%s0] sm:$0xff]
  %v25 = vld [vmem:[%s0 + $0x8] sm:$0xff]
  %v26 = vld [vmem:[%s0 + $0x10] sm:$0xff]
  %v27 = vld [vmem:[%s0 + $0x18] sm:$0xff]
  %v28 = vld [vmem:[%s0 + $0x20] sm:$0xf]
  %v29 = vld [vmem:[%s1] sm:$0xff]
  %v30 = vld [vmem:[%s1 + $0x8] sm:$0xff]
  %v31 = vld [vmem:[%s1 + $0x10] sm:$0xff]
  %v32 = vld [vmem:[%s1 + $0x18] sm:$0xff]
  %v33 = vld [vmem:[%s1 + $0x20] sm:$0xff]
  %v34 = vld [vmem:[%s1 + $0x28] sm:$0xff]
  %v35 = vld [vmem:[%s1 + $0x30] sm:$0xff]
  %v36 = vld [vmem:[%s1 + $0x38] sm:$0xff]
  %v37 = vld [vmem:[%s1 + $0x40] sm:$0xff]
  %v38 = vld [vmem:[%s1 + $0x48] sm:$0xff]
  %v39 = vld [vmem:[%s1 + $0x50] sm:$0xff]
  %v40 = vld [vmem:[%s1 + $0x58] sm:$0xff]
  %v41 = vld [vmem:[%s1 + $0x60] sm:$0xff]
  %v42 = vld [vmem:[%s1 + $0x68] sm:$0xff]
  %v43 = vld [vmem:[%s1 + $0x70] sm:$0xff]
  %v44 = vld [vmem:[%s1 + $0x78] sm:$0xff]
  %v45 = vld [vmem:[%s1 + $0x80] sm:$0xff]
  %v46 = vld [vmem:[%s1 + $0x88] sm:$0xff]
  %v47 = vld [vmem:[%s1 + $0x90] sm:$0xff]
  %v48 = vld [vmem:[%s1 + $0x98] sm:$0xff]
  %v49 = vld [vmem:[%s1 + $0xa0] sm:$0xff]
  %v50 = vld [vmem:[%s1 + $0xa8] sm:$0xff]
  %v51 = vld [vmem:[%s1 + $0xb0] sm:$0xff]
  %v52 = vld [vmem:[%s1 + $0xb8] sm:$0xff]
  %v53 = vld [vmem:[%s1 + $0xc0] sm:$0xff]
  %v54 = vld [vmem:[%s1 + $0xc8] sm:$0xff]
  %v55 = vld [vmem:[%s1 + $0xd0] sm:$0xff]
  %v56 = vld [vmem:[%s1 + $0xd8] sm:$0xff]
  %v57 = vld [vmem:[%s1 + $0xe0] sm:$0xff]
  %v58 = vld [vmem:[%s1 + $0xe8] sm:$0xff]
  %v59 = vld [vmem:[%s1 + $0xf0] sm:$0xff]
  %v60 = vld [vmem:[%s1 + $0xf8] sm:$0xff]
  %v61 = vld [vmem:[%s1 + $0x100] sm:$0xff]
  %v62 = vld [vmem:[%s1 + $0x108] sm:$0xff]
  %v63 = vld [vmem:[%s1 + $0x110] sm:$0xff]
  %v64 = vld [vmem:[%s1 + $0x118] sm:$0xff]
  %v65 = vld [vmem:[%s1 + $0x120] sm:$0xff]
  %v66 = vld [vmem:[%s1 + $0x128] sm:$0xff]
  %v67 = vld [vmem:[%s1 + $0x130] sm:$0xff]
  %v68 = vld [vmem:[%s1 + $0x138] sm:$0xff]
  %v69 = vld [vmem:[%s1 + $0x140] sm:$0xff]
  %v70 = vld [vmem:[%s1 + $0x148] sm:$0xff]
  %v71 = vld [vmem:[%s1 + $0x150] sm:$0xff]
  %v72 = vld [vmem:[%s1 + $0x158] sm:$0xff]
  %v73 = vld [vmem:[%s1 + $0x160] sm:$0xff]
  %v74 = vld [vmem:[%s1 + $0x168] sm:$0xff]
  %v75 = vld [vmem:[%s1 + $0x170] sm:$0xff]
  %v76 = vld [vmem:[%s1 + $0x178] sm:$0xff]
  %v77 = vld [vmem:[%s1 + $0x180] sm:$0xff]
  %v78 = vld [vmem:[%s1 + $0x188] sm:$0xff]
  %v79 = vld [vmem:[%s1 + $0x190] sm:$0xff]
  %v80 = vld [vmem:[%s1 + $0x198] sm:$0xff]
  %v81 = vld [vmem:[%s1 + $0x1a0] sm:$0xff]
  %v82 = vld [vmem:[%s1 + $0x1a8] sm:$0xff]
  %v83 = vld [vmem:[%s1 + $0x1b0] sm:$0xff]
  %v84 = vld [vmem:[%s1 + $0x1b8] sm:$0xff]
  %v85 = vld [vmem:[%s1 + $0x1c0] sm:$0xff]
  %v86 = vld [vmem:[%s1 + $0x1c8] sm:$0xff]
  %v87 = vld [vmem:[%s1 + $0x1d0] sm:$0xff]
  %v88 = vld [vmem:[%s1 + $0x1d8] sm:$0xff]
  %v89 = vld [vmem:[%s1 + $0x1e0] sm:$0xff]
  %v90 = vld [vmem:[%s1 + $0x1e8] sm:$0xff]
  %v91 = vld [vmem:[%s1 + $0x1f0] sm:$0xff]
  %v92 = vld [vmem:[%s1 + $0x1f8] sm:$0xff]
  %v93 = vld [vmem:[%s1 + $0x200] sm:$0xff]
  %v94 = vld [vmem:[%s1 + $0x208] sm:$0xff]
  %v95 = vld [vmem:[%s1 + $0x210] sm:$0xff]
  %v96 = vld [vmem:[%s1 + $0x218] sm:$0xff]
  %v97 = vld [vmem:[%s1 + $0x220] sm:$0xff]
  %v98 = vld [vmem:[%s1 + $0x228] sm:$0xff]
  %v99 = vld [vmem:[%s1 + $0x230] sm:$0xff]
  %v100 = vld [vmem:[%s1 + $0x238] sm:$0xff]
  %v101 = vld [vmem:[%s1 + $0x240] sm:$0xff]
  %v102 = vld [vmem:[%s1 + $0x248] sm:$0xff]
  %v103 = vld [vmem:[%s1 + $0x250] sm:$0xff]
  %v104 = vld [vmem:[%s1 + $0x258] sm:$0xff]
  %v105 = vld [vmem:[%s1 + $0x260] sm:$0xff]
  %v106 = vld [vmem:[%s1 + $0x268] sm:$0xff]
  %v107 = vld [vmem:[%s1 + $0x270] sm:$0xff]
  %v108 = vld [vmem:[%s1 + $0x278] sm:$0xff]
  %v109 = vld [vmem:[%s1 + $0x280] sm:$0xff]
  %v110 = vld [vmem:[%s1 + $0x288] sm:$0xff]
  %v111 = vld [vmem:[%s1 + $0x290] sm:$0xff]
  %v112 = vld [vmem:[%s1 + $0x298] sm:$0xff]
  %v113 = vld [vmem:[%s1 + $0x2a0] sm:$0xff]
  %v114 = vld [vmem:[%s1 + $0x2a8] sm:$0xff]
  %v115 = vld [vmem:[%s1 + $0x2b0] sm:$0xff]
  %v116 = vld [vmem:[%s1 + $0x2b8] sm:$0xff]
  %v117 = vld [vmem:[%s1 + $0x2c0] sm:$0xff]
  %v118 = vld [vmem:[%s1 + $0x2c8] sm:$0xff]
  %v119 = vld [vmem:[%s1 + $0x2d0] sm:$0xff]
  %v120 = vld [vmem:[%s1 + $0x2d8] sm:$0xff]
  %v121 = vld [vmem:[%s1 + $0x2e0] sm:$0xff]
  %v122 = vld [vmem:[%s1 + $0x2e8] sm:$0xff]
  %v123 = vld [vmem:[%s1 + $0x2f0] sm:$0xff]
  %v124 = vld [vmem:[%s1 + $0x2f8] sm:$0xff]
  %v125 = vld [vmem:[%s1 + $0x300] sm:$0xff]
  %v126 = vld [vmem:[%s1 + $0x308] sm:$0xff]
  %v127 = vld [vmem:[%s1 + $0x310] sm:$0xff]
  %v128 = vld [vmem:[%s1 + $0x318] sm:$0xff]
  %v129 = vld [vmem:[%s1 + $0x320] sm:$0xff]
  %v130 = vld [vmem:[%s1 + $0x328] sm:$0xff]
  %v131 = vld [vmem:[%s1 + $0x330] sm:$0xff]
  %v132 = vld [vmem:[%s1 + $0x338] sm:$0xff]
  %v133 = vld [vmem:[%s1 + $0x340] sm:$0xff]
  %v134 = vld [vmem:[%s1 + $0x348] sm:$0xff]
  %v135 = vld [vmem:[%s1 + $0x350] sm:$0xff]
  %v136 = vld [vmem:[%s1 + $0x358] sm:$0xff]
  %v137 = vld [vmem:[%s1 + $0x360] sm:$0xff]
  %v138 = vld [vmem:[%s1 + $0x368] sm:$0xff]
  %v139 = vld [vmem:[%s1 + $0x370] sm:$0xff]
  %v140 = vld [vmem:[%s1 + $0x378] sm:$0xff]
  %v141 = vld [vmem:[%s1 + $0x380] sm:$0xff]
  %v142 = vld [vmem:[%s1 + $0x388] sm:$0xff]
  %v143 = vld [vmem:[%s1 + $0x390] sm:$0xff]
  %v144 = vld [vmem:[%s1 + $0x398] sm:$0xff]
  %v145 = vld [vmem:[%s1 + $0x3a0] sm:$0xff]
  %v146 = vld [vmem:[%s1 + $0x3a8] sm:$0xff]
  %v147 = vld [vmem:[%s1 + $0x3b0] sm:$0xff]
  %v148 = vld [vmem:[%s1 + $0x3b8] sm:$0xff]
  %v149 = vld [vmem:[%s1 + $0x3c0] sm:$0xff]
  %v150 = vld [vmem:[%s1 + $0x3c8] sm:$0xff]
  %v151 = vld [vmem:[%s1 + $0x3d0] sm:$0xff]
  %v152 = vld [vmem:[%s1 + $0x3d8] sm:$0xff]
  %v153 = vld [vmem:[%s1 + $0x3e0] sm:$0xff]
  %v154 = vld [vmem:[%s1 + $0x3e8] sm:$0xff]
  %v155 = vld [vmem:[%s1 + $0x3f0] sm:$0xff]
  %v156 = vld [vmem:[%s1 + $0x3f8] sm:$0xff]
  %v157 = vld [vmem:[%s1 + $0x400] sm:$0xff]
  %v158 = vld [vmem:[%s1 + $0x408] sm:$0xff]
  %v159 = vld [vmem:[%s1 + $0x410] sm:$0xff]
  %v160 = vld [vmem:[%s1 + $0x418] sm:$0xff]
  %v161 = vld [vmem:[%s1 + $0x420] sm:$0xff]
  %v162 = vld [vmem:[%s1 + $0x428] sm:$0xff]
  %v163 = vld [vmem:[%s1 + $0x430] sm:$0xff]
  %v164 = vld [vmem:[%s1 + $0x438] sm:$0xff]
  %v165 = vld [vmem:[%s1 + $0x440] sm:$0xff]
  %v166 = vld [vmem:[%s1 + $0x448] sm:$0xff]
  %v167 = vld [vmem:[%s1 + $0x450] sm:$0xff]
  %v168 = vld [vmem:[%s1 + $0x458] sm:$0xff]
  %v169 = vld [vmem:[%s1 + $0x460] sm:$0xff]
  %v170 = vld [vmem:[%s1 + $0x468] sm:$0xff]
  %v171 = vld [vmem:[%s1 + $0x470] sm:$0xff]
  %v172 = vld [vmem:[%s1 + $0x478] sm:$0xff]
  %v173 = vld [vmem:[%s2] sm:$0x3]
  %v175 = vlaneseq
  %v176 = vshrl.u32 %v175, 7
  %v177 = vsub.s32 0, %v176
  %v178 = vrot.slane %v173, %v177
  %v179 = vlaneseq
  %v180 = vshrl.u32 %v179, 7
  %v181 = vsub.s32 1, %v180
  %v182 = vrot.slane %v173, %v181
  %v190 = vunpack.c.l.b16 %v24
  %v191 = vunpack.c.h.b16 %v24
  %v192 = vunpack.c.l.b16 %v25
  %v193 = vunpack.c.h.b16 %v25
  %v194 = vunpack.c.l.b16 %v26
  %v195 = vunpack.c.h.b16 %v26
  %v196 = vunpack.c.l.b16 %v27
  %v197 = vunpack.c.h.b16 %v27
  %v198 = vunpack.c.l.b16 %v28
  %v199 = vpack.c.b16 %v190, %v190
  %v200 = vpack.c.b16 %v191, %v191
  %v201 = vpack.c.b16 %v192, %v192
  %v202 = vpack.c.b16 %v193, %v193
  %v203 = vpack.c.b16 %v194, %v194
  %v204 = vpack.c.b16 %v195, %v195
  %v205 = vpack.c.b16 %v196, %v196
  %v206 = vpack.c.b16 %v197, %v197
  %v207 = vpack.c.b16 %v198, %v198
  %v361 = vunpack.c.l.b16 %v29
  %v362 = vunpack.c.h.b16 %v29
  %v363 = vunpack.c.l.b16 %v30
  %v364 = vunpack.c.h.b16 %v30
  %v365 = vunpack.c.l.b16 %v31
  %v366 = vunpack.c.h.b16 %v31
  %v367 = vunpack.c.l.b16 %v32
  %v368 = vunpack.c.h.b16 %v32
  %v369 = vunpack.c.l.b16 %v33
  %v370 = vunpack.c.h.b16 %v33
  %v371 = vunpack.c.l.b16 %v34
  %v372 = vunpack.c.h.b16 %v34
  %v373 = vunpack.c.l.b16 %v35
  %v374 = vunpack.c.h.b16 %v35
  %v375 = vunpack.c.l.b16 %v36
  %v376 = vunpack.c.h.b16 %v36
  %v377 = vunpack.c.l.b16 %v37
  %v378 = vunpack.c.h.b16 %v37
  %v379 = vunpack.c.l.b16 %v38
  %v380 = vunpack.c.h.b16 %v38
  %v381 = vunpack.c.l.b16 %v39
  %v382 = vunpack.c.h.b16 %v39
  %v383 = vunpack.c.l.b16 %v40
  %v384 = vunpack.c.h.b16 %v40
  %v385 = vunpack.c.l.b16 %v41
  %v386 = vunpack.c.h.b16 %v41
  %v387 = vunpack.c.l.b16 %v42
  %v388 = vunpack.c.h.b16 %v42
  %v389 = vunpack.c.l.b16 %v43
  %v390 = vunpack.c.h.b16 %v43
  %v391 = vunpack.c.l.b16 %v44
  %v392 = vunpack.c.h.b16 %v44
  %v393 = vunpack.c.l.b16 %v45
  %v394 = vunpack.c.h.b16 %v45
  %v395 = vunpack.c.l.b16 %v46
  %v396 = vunpack.c.h.b16 %v46
  %v397 = vunpack.c.l.b16 %v47
  %v398 = vunpack.c.h.b16 %v47
  %v399 = vunpack.c.l.b16 %v48
  %v400 = vunpack.c.h.b16 %v48
  %v401 = vunpack.c.l.b16 %v49
  %v402 = vunpack.c.h.b16 %v49
  %v403 = vunpack.c.l.b16 %v50
  %v404 = vunpack.c.h.b16 %v50
  %v405 = vunpack.c.l.b16 %v51
  %v406 = vunpack.c.h.b16 %v51
  %v407 = vunpack.c.l.b16 %v52
  %v408 = vunpack.c.h.b16 %v52
  %v409 = vunpack.c.l.b16 %v53
  %v410 = vunpack.c.h.b16 %v53
  %v411 = vunpack.c.l.b16 %v54
  %v412 = vunpack.c.h.b16 %v54
  %v413 = vunpack.c.l.b16 %v55
  %v414 = vunpack.c.h.b16 %v55
  %v415 = vunpack.c.l.b16 %v56
  %v416 = vunpack.c.h.b16 %v56
  %v417 = vunpack.c.l.b16 %v57
  %v418 = vunpack.c.h.b16 %v57
  %v419 = vunpack.c.l.b16 %v58
  %v420 = vunpack.c.h.b16 %v58
  %v421 = vunpack.c.l.b16 %v59
  %v422 = vunpack.c.h.b16 %v59
  %v423 = vunpack.c.l.b16 %v60
  %v424 = vunpack.c.h.b16 %v60
  %v425 = vunpack.c.l.b16 %v61
  %v426 = vunpack.c.h.b16 %v61
  %v427 = vunpack.c.l.b16 %v62
  %v428 = vunpack.c.h.b16 %v62
  %v429 = vunpack.c.l.b16 %v63
  %v430 = vunpack.c.h.b16 %v63
  %v431 = vunpack.c.l.b16 %v64
  %v432 = vunpack.c.h.b16 %v64
  %v433 = vunpack.c.l.b16 %v65
  %v434 = vunpack.c.h.b16 %v65
  %v435 = vunpack.c.l.b16 %v66
  %v436 = vunpack.c.h.b16 %v66
  %v437 = vunpack.c.l.b16 %v67
  %v438 = vunpack.c.h.b16 %v67
  %v439 = vunpack.c.l.b16 %v68
  %v440 = vunpack.c.h.b16 %v68
  %v441 = vunpack.c.l.b16 %v69
  %v442 = vunpack.c.h.b16 %v69
  %v443 = vunpack.c.l.b16 %v70
  %v444 = vunpack.c.h.b16 %v70
  %v445 = vunpack.c.l.b16 %v71
  %v446 = vunpack.c.h.b16 %v71
  %v447 = vunpack.c.l.b16 %v72
  %v448 = vunpack.c.h.b16 %v72
  %v449 = vunpack.c.l.b16 %v73
  %v450 = vunpack.c.h.b16 %v73
  %v451 = vunpack.c.l.b16 %v74
  %v452 = vunpack.c.h.b16 %v74
  %v453 = vunpack.c.l.b16 %v75
  %v454 = vunpack.c.h.b16 %v75
  %v455 = vunpack.c.l.b16 %v76
  %v456 = vunpack.c.h.b16 %v76
  %v457 = vunpack.c.l.b16 %v77
  %v458 = vunpack.c.h.b16 %v77
  %v459 = vunpack.c.l.b16 %v78
  %v460 = vunpack.c.h.b16 %v78
  %v461 = vunpack.c.l.b16 %v79
  %v462 = vunpack.c.h.b16 %v79
  %v463 = vunpack.c.l.b16 %v80
  %v464 = vunpack.c.h.b16 %v80
  %v465 = vunpack.c.l.b16 %v81
  %v466 = vunpack.c.h.b16 %v81
  %v467 = vunpack.c.l.b16 %v82
  %v468 = vunpack.c.h.b16 %v82
  %v469 = vunpack.c.l.b16 %v83
  %v470 = vunpack.c.h.b16 %v83
  %v471 = vunpack.c.l.b16 %v84
  %v472 = vunpack.c.h.b16 %v84
  %v473 = vunpack.c.l.b16 %v85
  %v474 = vunpack.c.h.b16 %v85
  %v475 = vunpack.c.l.b16 %v86
  %v476 = vunpack.c.h.b16 %v86
  %v477 = vunpack.c.l.b16 %v87
  %v478 = vunpack.c.h.b16 %v87
  %v479 = vunpack.c.l.b16 %v88
  %v480 = vunpack.c.h.b16 %v88
  %v481 = vunpack.c.l.b16 %v89
  %v482 = vunpack.c.h.b16 %v89
  %v483 = vunpack.c.l.b16 %v90
  %v484 = vunpack.c.h.b16 %v90
  %v485 = vunpack.c.l.b16 %v91
  %v486 = vunpack.c.h.b16 %v91
  %v487 = vunpack.c.l.b16 %v92
  %v488 = vunpack.c.h.b16 %v92
  %v489 = vunpack.c.l.b16 %v93
  %v490 = vunpack.c.h.b16 %v93
  %v491 = vunpack.c.l.b16 %v94
  %v492 = vunpack.c.h.b16 %v94
  %v493 = vunpack.c.l.b16 %v95
  %v494 = vunpack.c.h.b16 %v95
  %v495 = vunpack.c.l.b16 %v96
  %v496 = vunpack.c.h.b16 %v96
  %v497 = vunpack.c.l.b16 %v97
  %v498 = vunpack.c.h.b16 %v97
  %v499 = vunpack.c.l.b16 %v98
  %v500 = vunpack.c.h.b16 %v98
  %v501 = vunpack.c.l.b16 %v99
  %v502 = vunpack.c.h.b16 %v99
  %v503 = vunpack.c.l.b16 %v100
  %v504 = vunpack.c.h.b16 %v100
  %v505 = vunpack.c.l.b16 %v101
  %v506 = vunpack.c.h.b16 %v101
  %v507 = vunpack.c.l.b16 %v102
  %v508 = vunpack.c.h.b16 %v102
  %v509 = vunpack.c.l.b16 %v103
  %v510 = vunpack.c.h.b16 %v103
  %v511 = vunpack.c.l.b16 %v104
  %v512 = vunpack.c.h.b16 %v104
  %v513 = vunpack.c.l.b16 %v105
  %v514 = vunpack.c.h.b16 %v105
  %v515 = vunpack.c.l.b16 %v106
  %v516 = vunpack.c.h.b16 %v106
  %v517 = vunpack.c.l.b16 %v107
  %v518 = vunpack.c.h.b16 %v107
  %v519 = vunpack.c.l.b16 %v108
  %v520 = vunpack.c.h.b16 %v108
  %v521 = vunpack.c.l.b16 %v109
  %v522 = vunpack.c.h.b16 %v109
  %v523 = vunpack.c.l.b16 %v110
  %v524 = vunpack.c.h.b16 %v110
  %v525 = vunpack.c.l.b16 %v111
  %v526 = vunpack.c.h.b16 %v111
  %v527 = vunpack.c.l.b16 %v112
  %v528 = vunpack.c.h.b16 %v112
  %v529 = vunpack.c.l.b16 %v113
  %v530 = vunpack.c.h.b16 %v113
  %v531 = vunpack.c.l.b16 %v114
  %v532 = vunpack.c.h.b16 %v114
  %v533 = vunpack.c.l.b16 %v115
  %v534 = vunpack.c.h.b16 %v115
  %v535 = vunpack.c.l.b16 %v116
  %v536 = vunpack.c.h.b16 %v116
  %v537 = vunpack.c.l.b16 %v117
  %v538 = vunpack.c.h.b16 %v117
  %v539 = vunpack.c.l.b16 %v118
  %v540 = vunpack.c.h.b16 %v118
  %v541 = vunpack.c.l.b16 %v119
  %v542 = vunpack.c.h.b16 %v119
  %v543 = vunpack.c.l.b16 %v120
  %v544 = vunpack.c.h.b16 %v120
  %v545 = vunpack.c.l.b16 %v121
  %v546 = vunpack.c.h.b16 %v121
  %v547 = vunpack.c.l.b16 %v122
  %v548 = vunpack.c.h.b16 %v122
  %v549 = vunpack.c.l.b16 %v123
  %v550 = vunpack.c.h.b16 %v123
  %v551 = vunpack.c.l.b16 %v124
  %v552 = vunpack.c.h.b16 %v124
  %v553 = vunpack.c.l.b16 %v125
  %v554 = vunpack.c.h.b16 %v125
  %v555 = vunpack.c.l.b16 %v126
  %v556 = vunpack.c.h.b16 %v126
  %v557 = vunpack.c.l.b16 %v127
  %v558 = vunpack.c.h.b16 %v127
  %v559 = vunpack.c.l.b16 %v128
  %v560 = vunpack.c.h.b16 %v128
  %v561 = vunpack.c.l.b16 %v129
  %v562 = vunpack.c.h.b16 %v129
  %v563 = vunpack.c.l.b16 %v130
  %v564 = vunpack.c.h.b16 %v130
  %v565 = vunpack.c.l.b16 %v131
  %v566 = vunpack.c.h.b16 %v131
  %v567 = vunpack.c.l.b16 %v132
  %v568 = vunpack.c.h.b16 %v132
  %v569 = vunpack.c.l.b16 %v133
  %v570 = vunpack.c.h.b16 %v133
  %v571 = vunpack.c.l.b16 %v134
  %v572 = vunpack.c.h.b16 %v134
  %v573 = vunpack.c.l.b16 %v135
  %v574 = vunpack.c.h.b16 %v135
  %v575 = vunpack.c.l.b16 %v136
  %v576 = vunpack.c.h.b16 %v136
  %v577 = vunpack.c.l.b16 %v137
  %v578 = vunpack.c.h.b16 %v137
  %v579 = vunpack.c.l.b16 %v138
  %v580 = vunpack.c.h.b16 %v138
  %v581 = vunpack.c.l.b16 %v139
  %v582 = vunpack.c.h.b16 %v139
  %v583 = vunpack.c.l.b16 %v140
  %v584 = vunpack.c.h.b16 %v140
  %v585 = vunpack.c.l.b16 %v141
  %v586 = vunpack.c.h.b16 %v141
  %v587 = vunpack.c.l.b16 %v142
  %v588 = vunpack.c.h.b16 %v142
  %v589 = vunpack.c.l.b16 %v143
  %v590 = vunpack.c.h.b16 %v143
  %v591 = vunpack.c.l.b16 %v144
  %v592 = vunpack.c.h.b16 %v144
  %v593 = vunpack.c.l.b16 %v145
  %v594 = vunpack.c.h.b16 %v145
  %v595 = vunpack.c.l.b16 %v146
  %v596 = vunpack.c.h.b16 %v146
  %v597 = vunpack.c.l.b16 %v147
  %v598 = vunpack.c.h.b16 %v147
  %v599 = vunpack.c.l.b16 %v148
  %v600 = vunpack.c.h.b16 %v148
  %v601 = vunpack.c.l.b16 %v149
  %v602 = vunpack.c.h.b16 %v149
  %v603 = vunpack.c.l.b16 %v150
  %v604 = vunpack.c.h.b16 %v150
  %v605 = vunpack.c.l.b16 %v151
  %v606 = vunpack.c.h.b16 %v151
  %v607 = vunpack.c.l.b16 %v152
  %v608 = vunpack.c.h.b16 %v152
  %v609 = vunpack.c.l.b16 %v153
  %v610 = vunpack.c.h.b16 %v153
  %v611 = vunpack.c.l.b16 %v154
  %v612 = vunpack.c.h.b16 %v154
  %v613 = vunpack.c.l.b16 %v155
  %v614 = vunpack.c.h.b16 %v155
  %v615 = vunpack.c.l.b16 %v156
  %v616 = vunpack.c.h.b16 %v156
  %v617 = vunpack.c.l.b16 %v157
  %v618 = vunpack.c.h.b16 %v157
  %v619 = vunpack.c.l.b16 %v158
  %v620 = vunpack.c.h.b16 %v158
  %v621 = vunpack.c.l.b16 %v159
  %v622 = vunpack.c.h.b16 %v159
  %v623 = vunpack.c.l.b16 %v160
  %v624 = vunpack.c.h.b16 %v160
  %v625 = vunpack.c.l.b16 %v161
  %v626 = vunpack.c.h.b16 %v161
  %v627 = vunpack.c.l.b16 %v162
  %v628 = vunpack.c.h.b16 %v162
  %v629 = vunpack.c.l.b16 %v163
  %v630 = vunpack.c.h.b16 %v163
  %v631 = vunpack.c.l.b16 %v164
  %v632 = vunpack.c.h.b16 %v164
  %v633 = vunpack.c.l.b16 %v165
  %v634 = vunpack.c.h.b16 %v165
  %v635 = vunpack.c.l.b16 %v166
  %v636 = vunpack.c.h.b16 %v166
  %v637 = vunpack.c.l.b16 %v167
  %v638 = vunpack.c.h.b16 %v167
  %v639 = vunpack.c.l.b16 %v168
  %v640 = vunpack.c.h.b16 %v168
  %v641 = vunpack.c.l.b16 %v169
  %v642 = vunpack.c.h.b16 %v169
  %v643 = vunpack.c.l.b16 %v170
  %v644 = vunpack.c.h.b16 %v170
  %v645 = vunpack.c.l.b16 %v171
  %v646 = vunpack.c.h.b16 %v171
  %v647 = vunpack.c.l.b16 %v172
  %v648 = vunpack.c.h.b16 %v172
  %v649 = vpack.c.b16 %v363, %v361
  %v650 = vpack.c.b16 %v364, %v362
  %v651 = vpack.c.b16 %v367, %v365
  %v652 = vpack.c.b16 %v368, %v366
  %v653 = vpack.c.b16 %v371, %v369
  %v654 = vpack.c.b16 %v372, %v370
  %v655 = vpack.c.b16 %v375, %v373
  %v656 = vpack.c.b16 %v376, %v374
  %v657 = vpack.c.b16 %v379, %v377
  %v658 = vpack.c.b16 %v380, %v378
  %v659 = vpack.c.b16 %v383, %v381
  %v660 = vpack.c.b16 %v384, %v382
  %v661 = vpack.c.b16 %v387, %v385
  %v662 = vpack.c.b16 %v388, %v386
  %v663 = vpack.c.b16 %v391, %v389
  %v664 = vpack.c.b16 %v392, %v390
  %v665 = vpack.c.b16 %v395, %v393
  %v666 = vpack.c.b16 %v396, %v394
  %v667 = vpack.c.b16 %v399, %v397
  %v668 = vpack.c.b16 %v400, %v398
  %v669 = vpack.c.b16 %v403, %v401
  %v670 = vpack.c.b16 %v404, %v402
  %v671 = vpack.c.b16 %v407, %v405
  %v672 = vpack.c.b16 %v408, %v406
  %v673 = vpack.c.b16 %v411, %v409
  %v674 = vpack.c.b16 %v412, %v410
  %v675 = vpack.c.b16 %v415, %v413
  %v676 = vpack.c.b16 %v416, %v414
  %v677 = vpack.c.b16 %v419, %v417
  %v678 = vpack.c.b16 %v420, %v418
  %v679 = vpack.c.b16 %v423, %v421
  %v680 = vpack.c.b16 %v424, %v422
  %v681 = vpack.c.b16 %v427, %v425
  %v682 = vpack.c.b16 %v428, %v426
  %v683 = vpack.c.b16 %v431, %v429
  %v684 = vpack.c.b16 %v432, %v430
  %v685 = vpack.c.b16 %v435, %v433
  %v686 = vpack.c.b16 %v436, %v434
  %v687 = vpack.c.b16 %v439, %v437
  %v688 = vpack.c.b16 %v440, %v438
  %v689 = vpack.c.b16 %v443, %v441
  %v690 = vpack.c.b16 %v444, %v442
  %v691 = vpack.c.b16 %v447, %v445
  %v692 = vpack.c.b16 %v448, %v446
  %v693 = vpack.c.b16 %v451, %v449
  %v694 = vpack.c.b16 %v452, %v450
  %v695 = vpack.c.b16 %v455, %v453
  %v696 = vpack.c.b16 %v456, %v454
  %v697 = vpack.c.b16 %v459, %v457
  %v698 = vpack.c.b16 %v460, %v458
  %v699 = vpack.c.b16 %v463, %v461
  %v700 = vpack.c.b16 %v464, %v462
  %v701 = vpack.c.b16 %v467, %v465
  %v702 = vpack.c.b16 %v468, %v466
  %v703 = vpack.c.b16 %v471, %v469
  %v704 = vpack.c.b16 %v472, %v470
  %v705 = vpack.c.b16 %v475, %v473
  %v706 = vpack.c.b16 %v476, %v474
  %v707 = vpack.c.b16 %v479, %v477
  %v708 = vpack.c.b16 %v480, %v478
  %v709 = vpack.c.b16 %v483, %v481
  %v710 = vpack.c.b16 %v484, %v482
  %v711 = vpack.c.b16 %v487, %v485
  %v712 = vpack.c.b16 %v488, %v486
  %v713 = vpack.c.b16 %v491, %v489
  %v714 = vpack.c.b16 %v492, %v490
  %v715 = vpack.c.b16 %v495, %v493
  %v716 = vpack.c.b16 %v496, %v494
  %v717 = vpack.c.b16 %v499, %v497
  %v718 = vpack.c.b16 %v500, %v498
  %v719 = vpack.c.b16 %v503, %v501
  %v720 = vpack.c.b16 %v504, %v502
  %v721 = vpack.c.b16 %v507, %v505
  %v722 = vpack.c.b16 %v508, %v506
  %v723 = vpack.c.b16 %v511, %v509
  %v724 = vpack.c.b16 %v512, %v510
  %v725 = vpack.c.b16 %v515, %v513
  %v726 = vpack.c.b16 %v516, %v514
  %v727 = vpack.c.b16 %v519, %v517
  %v728 = vpack.c.b16 %v520, %v518
  %v729 = vpack.c.b16 %v523, %v521
  %v730 = vpack.c.b16 %v524, %v522
  %v731 = vpack.c.b16 %v527, %v525
  %v732 = vpack.c.b16 %v528, %v526
  %v733 = vpack.c.b16 %v531, %v529
  %v734 = vpack.c.b16 %v532, %v530
  %v735 = vpack.c.b16 %v535, %v533
  %v736 = vpack.c.b16 %v536, %v534
  %v737 = vpack.c.b16 %v539, %v537
  %v738 = vpack.c.b16 %v540, %v538
  %v739 = vpack.c.b16 %v543, %v541
  %v740 = vpack.c.b16 %v544, %v542
  %v741 = vpack.c.b16 %v547, %v545
  %v742 = vpack.c.b16 %v548, %v546
  %v743 = vpack.c.b16 %v551, %v549
  %v744 = vpack.c.b16 %v552, %v550
  %v745 = vpack.c.b16 %v555, %v553
  %v746 = vpack.c.b16 %v556, %v554
  %v747 = vpack.c.b16 %v559, %v557
  %v748 = vpack.c.b16 %v560, %v558
  %v749 = vpack.c.b16 %v563, %v561
  %v750 = vpack.c.b16 %v564, %v562
  %v751 = vpack.c.b16 %v567, %v565
  %v752 = vpack.c.b16 %v568, %v566
  %v753 = vpack.c.b16 %v571, %v569
  %v754 = vpack.c.b16 %v572, %v570
  %v755 = vpack.c.b16 %v575, %v573
  %v756 = vpack.c.b16 %v576, %v574
  %v757 = vpack.c.b16 %v579, %v577
  %v758 = vpack.c.b16 %v580, %v578
  %v759 = vpack.c.b16 %v583, %v581
  %v760 = vpack.c.b16 %v584, %v582
  %v761 = vpack.c.b16 %v587, %v585
  %v762 = vpack.c.b16 %v588, %v586
  %v763 = vpack.c.b16 %v591, %v589
  %v764 = vpack.c.b16 %v592, %v590
  %v765 = vpack.c.b16 %v595, %v593
  %v766 = vpack.c.b16 %v596, %v594
  %v767 = vpack.c.b16 %v599, %v597
  %v768 = vpack.c.b16 %v600, %v598
  %v769 = vpack.c.b16 %v603, %v601
  %v770 = vpack.c.b16 %v604, %v602
  %v771 = vpack.c.b16 %v607, %v605
  %v772 = vpack.c.b16 %v608, %v606
  %v773 = vpack.c.b16 %v611, %v609
  %v774 = vpack.c.b16 %v612, %v610
  %v775 = vpack.c.b16 %v615, %v613
  %v776 = vpack.c.b16 %v616, %v614
  %v777 = vpack.c.b16 %v619, %v617
  %v778 = vpack.c.b16 %v620, %v618
  %v779 = vpack.c.b16 %v623, %v621
  %v780 = vpack.c.b16 %v624, %v622
  %v781 = vpack.c.b16 %v627, %v625
  %v782 = vpack.c.b16 %v628, %v626
  %v783 = vpack.c.b16 %v631, %v629
  %v784 = vpack.c.b16 %v632, %v630
  %v785 = vpack.c.b16 %v635, %v633
  %v786 = vpack.c.b16 %v636, %v634
  %v787 = vpack.c.b16 %v639, %v637
  %v788 = vpack.c.b16 %v640, %v638
  %v789 = vpack.c.b16 %v643, %v641
  %v790 = vpack.c.b16 %v644, %v642
  %v791 = vpack.c.b16 %v647, %v645
  %v792 = vpack.c.b16 %v648, %v646
  %937 = vmatprep.subr.bf16.mxu0 %v664
  %938 = vmatpush1.bf16.msra.mxu0 %v663
  %939 = vmatprep.subr.bf16.mxu0 %v662
  %940 = vmatpush1.bf16.msra.mxu0 %v661
  %941 = vmatprep.subr.bf16.mxu0 %v660
  %942 = vmatpush1.bf16.msra.mxu0 %v659
  %943 = vmatprep.subr.bf16.mxu0 %v658
  %944 = vmatpush1.bf16.msra.mxu0 %v657
  %945 = vmatprep.subr.bf16.mxu0 %v656
  %946 = vmatpush1.bf16.msra.mxu0 %v655
  %947 = vmatprep.subr.bf16.mxu0 %v654
  %948 = vmatpush1.bf16.msra.mxu0 %v653
  %949 = vmatprep.subr.bf16.mxu0 %v652
  %950 = vmatpush1.bf16.msra.mxu0 %v651
  %951 = vmatprep.subr.bf16.mxu0 %v650
  %952 = vmatpush1.bf16.msra.mxu0 %v649
  %953 = vmatprep.subr.bf16.mxu0 %v680
  %954 = vmatpush2.bf16.msra.mxu0 %v679
  %955 = vmatprep.subr.bf16.mxu0 %v678
  %956 = vmatpush2.bf16.msra.mxu0 %v677
  %957 = vmatprep.subr.bf16.mxu0 %v676
  %958 = vmatpush2.bf16.msra.mxu0 %v675
  %959 = vmatprep.subr.bf16.mxu0 %v674
  %960 = vmatpush2.bf16.msra.mxu0 %v673
  %961 = vmatprep.subr.bf16.mxu0 %v672
  %962 = vmatpush2.bf16.msra.mxu0 %v671
  %963 = vmatprep.subr.bf16.mxu0 %v670
  %964 = vmatpush2.bf16.msra.mxu0 %v669
  %965 = vmatprep.subr.bf16.mxu0 %v668
  %966 = vmatpush2.bf16.msra.mxu0 %v667
  %967 = vmatprep.subr.bf16.mxu0 %v666
  %968 = vmatpush2.bf16.msra.mxu0 %v665
  %969 = vmatprep.mubr.bf16.mxu0 %v200
  %970 = vmatmul.mubr.bf16.gmra.mxu0 %v199
  %v971 = vpop.f32.mrf.mxu0
  %v972 = vadd.f32 %v178, %v971
  %v973 = vpop.f32.mrf.mxu0
  %v974 = vadd.f32 %v182, %v973
  %v975 = vpop.f32.mrf.mxu0
  %v976 = vpop.f32.mrf.mxu0
  %977 = vdwg.mxu0
  %978 = vmatprep.subr.bf16.mxu0 %v696
  %979 = vmatpush1.bf16.msra.mxu0 %v695
  %980 = vmatprep.subr.bf16.mxu0 %v694
  %981 = vmatpush1.bf16.msra.mxu0 %v693
  %982 = vmatprep.subr.bf16.mxu0 %v692
  %983 = vmatpush1.bf16.msra.mxu0 %v691
  %984 = vmatprep.subr.bf16.mxu0 %v690
  %985 = vmatpush1.bf16.msra.mxu0 %v689
  %986 = vmatprep.subr.bf16.mxu0 %v688
  %987 = vmatpush1.bf16.msra.mxu0 %v687
  %988 = vmatprep.subr.bf16.mxu0 %v686
  %989 = vmatpush1.bf16.msra.mxu0 %v685
  %990 = vmatprep.subr.bf16.mxu0 %v684
  %991 = vmatpush1.bf16.msra.mxu0 %v683
  %992 = vmatprep.subr.bf16.mxu0 %v682
  %993 = vmatpush1.bf16.msra.mxu0 %v681
  %994 = vmatprep.subr.bf16.mxu0 %v712
  %995 = vmatpush2.bf16.msra.mxu0 %v711
  %996 = vmatprep.subr.bf16.mxu0 %v710
  %997 = vmatpush2.bf16.msra.mxu0 %v709
  %998 = vmatprep.subr.bf16.mxu0 %v708
  %999 = vmatpush2.bf16.msra.mxu0 %v707
  %1000 = vmatprep.subr.bf16.mxu0 %v706
  %1001 = vmatpush2.bf16.msra.mxu0 %v705
  %1002 = vmatprep.subr.bf16.mxu0 %v704
  %1003 = vmatpush2.bf16.msra.mxu0 %v703
  %1004 = vmatprep.subr.bf16.mxu0 %v702
  %1005 = vmatpush2.bf16.msra.mxu0 %v701
  %1006 = vmatprep.subr.bf16.mxu0 %v700
  %1007 = vmatpush2.bf16.msra.mxu0 %v699
  %1008 = vmatprep.subr.bf16.mxu0 %v698
  %1009 = vmatpush2.bf16.msra.mxu0 %v697
  %1010 = vmatprep.mubr.bf16.mxu0 %v202
  %1011 = vmatmul.mubr.bf16.gmra.mxu0 %v201
  %v1012 = vpop.f32.mrf.mxu0
  %v1013 = vadd.f32 %v972, %v1012
  %v1014 = vpop.f32.mrf.mxu0
  %v1015 = vadd.f32 %v974, %v1014
  %v1016 = vpop.f32.mrf.mxu0
  %v1017 = vpop.f32.mrf.mxu0
  %1018 = vdwg.mxu0
  %1019 = vmatprep.subr.bf16.mxu0 %v728
  %1020 = vmatpush1.bf16.msra.mxu0 %v727
  %1021 = vmatprep.subr.bf16.mxu0 %v726
  %1022 = vmatpush1.bf16.msra.mxu0 %v725
  %1023 = vmatprep.subr.bf16.mxu0 %v724
  %1024 = vmatpush1.bf16.msra.mxu0 %v723
  %1025 = vmatprep.subr.bf16.mxu0 %v722
  %1026 = vmatpush1.bf16.msra.mxu0 %v721
  %1027 = vmatprep.subr.bf16.mxu0 %v720
  %1028 = vmatpush1.bf16.msra.mxu0 %v719
  %1029 = vmatprep.subr.bf16.mxu0 %v718
  %1030 = vmatpush1.bf16.msra.mxu0 %v717
  %1031 = vmatprep.subr.bf16.mxu0 %v716
  %1032 = vmatpush1.bf16.msra.mxu0 %v715
  %1033 = vmatprep.subr.bf16.mxu0 %v714
  %1034 = vmatpush1.bf16.msra.mxu0 %v713
  %1035 = vmatprep.subr.bf16.mxu0 %v744
  %1036 = vmatpush2.bf16.msra.mxu0 %v743
  %1037 = vmatprep.subr.bf16.mxu0 %v742
  %1038 = vmatpush2.bf16.msra.mxu0 %v741
  %1039 = vmatprep.subr.bf16.mxu0 %v740
  %1040 = vmatpush2.bf16.msra.mxu0 %v739
  %1041 = vmatprep.subr.bf16.mxu0 %v738
  %1042 = vmatpush2.bf16.msra.mxu0 %v737
  %1043 = vmatprep.subr.bf16.mxu0 %v736
  %1044 = vmatpush2.bf16.msra.mxu0 %v735
  %1045 = vmatprep.subr.bf16.mxu0 %v734
  %1046 = vmatpush2.bf16.msra.mxu0 %v733
  %1047 = vmatprep.subr.bf16.mxu0 %v732
  %1048 = vmatpush2.bf16.msra.mxu0 %v731
  %1049 = vmatprep.subr.bf16.mxu0 %v730
  %1050 = vmatpush2.bf16.msra.mxu0 %v729
  %1051 = vmatprep.mubr.bf16.mxu0 %v204
  %1052 = vmatmul.mubr.bf16.gmra.mxu0 %v203
  %v1053 = vpop.f32.mrf.mxu0
  %v1054 = vadd.f32 %v1013, %v1053
  %v1055 = vpop.f32.mrf.mxu0
  %v1056 = vadd.f32 %v1015, %v1055
  %v1057 = vpop.f32.mrf.mxu0
  %v1058 = vpop.f32.mrf.mxu0
  %1059 = vdwg.mxu0
  %1060 = vmatprep.subr.bf16.mxu0 %v760
  %1061 = vmatpush1.bf16.msra.mxu0 %v759
  %1062 = vmatprep.subr.bf16.mxu0 %v758
  %1063 = vmatpush1.bf16.msra.mxu0 %v757
  %1064 = vmatprep.subr.bf16.mxu0 %v756
  %1065 = vmatpush1.bf16.msra.mxu0 %v755
  %1066 = vmatprep.subr.bf16.mxu0 %v754
  %1067 = vmatpush1.bf16.msra.mxu0 %v753
  %1068 = vmatprep.subr.bf16.mxu0 %v752
  %1069 = vmatpush1.bf16.msra.mxu0 %v751
  %1070 = vmatprep.subr.bf16.mxu0 %v750
  %1071 = vmatpush1.bf16.msra.mxu0 %v749
  %1072 = vmatprep.subr.bf16.mxu0 %v748
  %1073 = vmatpush1.bf16.msra.mxu0 %v747
  %1074 = vmatprep.subr.bf16.mxu0 %v746
  %1075 = vmatpush1.bf16.msra.mxu0 %v745
  %1076 = vmatprep.subr.bf16.mxu0 %v776
  %1077 = vmatpush2.bf16.msra.mxu0 %v775
  %1078 = vmatprep.subr.bf16.mxu0 %v774
  %1079 = vmatpush2.bf16.msra.mxu0 %v773
  %1080 = vmatprep.subr.bf16.mxu0 %v772
  %1081 = vmatpush2.bf16.msra.mxu0 %v771
  %1082 = vmatprep.subr.bf16.mxu0 %v770
  %1083 = vmatpush2.bf16.msra.mxu0 %v769
  %1084 = vmatprep.subr.bf16.mxu0 %v768
  %1085 = vmatpush2.bf16.msra.mxu0 %v767
  %1086 = vmatprep.subr.bf16.mxu0 %v766
  %1087 = vmatpush2.bf16.msra.mxu0 %v765
  %1088 = vmatprep.subr.bf16.mxu0 %v764
  %1089 = vmatpush2.bf16.msra.mxu0 %v763
  %1090 = vmatprep.subr.bf16.mxu0 %v762
  %1091 = vmatpush2.bf16.msra.mxu0 %v761
  %1092 = vmatprep.mubr.bf16.mxu0 %v206
  %1093 = vmatmul.mubr.bf16.gmra.mxu0 %v205
  %v1094 = vpop.f32.mrf.mxu0
  %v1095 = vadd.f32 %v1054, %v1094
  %v1096 = vpop.f32.mrf.mxu0
  %v1097 = vadd.f32 %v1056, %v1096
  %v1098 = vpop.f32.mrf.mxu0
  %v1099 = vpop.f32.mrf.mxu0
  %1100 = vdwg.mxu0
  %1101 = vmatprep.subr.bf16.mxu0 %v792
  %1102 = vmatpush1.bf16.msra.mxu0 %v791
  %1103 = vmatprep.subr.bf16.mxu0 %v790
  %1104 = vmatpush1.bf16.msra.mxu0 %v789
  %1105 = vmatprep.subr.bf16.mxu0 %v788
  %1106 = vmatpush1.bf16.msra.mxu0 %v787
  %1107 = vmatprep.subr.bf16.mxu0 %v786
  %1108 = vmatpush1.bf16.msra.mxu0 %v785
  %1109 = vmatprep.subr.bf16.mxu0 %v784
  %1110 = vmatpush1.bf16.msra.mxu0 %v783
  %1111 = vmatprep.subr.bf16.mxu0 %v782
  %1112 = vmatpush1.bf16.msra.mxu0 %v781
  %1113 = vmatprep.subr.bf16.mxu0 %v780
  %1114 = vmatpush1.bf16.msra.mxu0 %v779
  %1115 = vmatprep.subr.bf16.mxu0 %v778
  %1116 = vmatpush1.bf16.msra.mxu0 %v777
  %1117 = vmatprep.subr.bf16.mxu0 0
  %1118 = vmatpush2.bf16.msra.mxu0 0
  %1119 = vmatprep.subr.bf16.mxu0 0
  %1120 = vmatpush2.bf16.msra.mxu0 0
  %1121 = vmatprep.subr.bf16.mxu0 0
  %1122 = vmatpush2.bf16.msra.mxu0 0
  %1123 = vmatprep.subr.bf16.mxu0 0
  %1124 = vmatpush2.bf16.msra.mxu0 0
  %1125 = vmatprep.subr.bf16.mxu0 0
  %1126 = vmatpush2.bf16.msra.mxu0 0
  %1127 = vmatprep.subr.bf16.mxu0 0
  %1128 = vmatpush2.bf16.msra.mxu0 0
  %1129 = vmatprep.subr.bf16.mxu0 0
  %1130 = vmatpush2.bf16.msra.mxu0 0
  %1131 = vmatprep.subr.bf16.mxu0 0
  %1132 = vmatpush2.bf16.msra.mxu0 0
  %1133 = vmatprep.mubr.bf16.mxu0 0
  %1134 = vmatmul.mubr.bf16.gmra.mxu0 %v207
  %v1135 = vpop.f32.mrf.mxu0
  %v1136 = vadd.f32 %v1095, %v1135
  %v1137 = vpop.f32.mrf.mxu0
  %v1138 = vadd.f32 %v1097, %v1137
  %v1139 = vpop.f32.mrf.mxu0
  %v1140 = vpop.f32.mrf.mxu0
  %1141 = vdwg.mxu0
  %vm1142 = vcmp.gt.f32.partialorder %v1136, 0.0
  %vm1143 = vcmp.gt.f32.partialorder %v1138, 0.0
  %v1144 = vld [vmem:[%s3] sm:$0x3]
  %v1146 = vlaneseq
  %v1147 = vshrl.u32 %v1146, 7
  %v1148 = vsub.s32 0, %v1147
  %v1149 = vrot.slane %v1144, %v1148
  %v1150 = vlaneseq
  %v1151 = vshrl.u32 %v1150, 7
  %v1152 = vsub.s32 1, %v1151
  %v1153 = vrot.slane %v1144, %v1152
  %v1156 = vmul.f32 %v1149, %v1136
  %v1157 = vmul.f32 %v1153, %v1138
  %v1158 = vsel %vm1142, %v1136, %v1156
  %v1159 = vsel %vm1143, %v1138, %v1157
  %v1160 = vpack.c.bf16 %v1158, %v1158
  %v1161 = vpack.c.bf16 %v1159, %v1159
  %v1162 = vld [vmem:[%s4] sm:$0xf]
  %v1163 = vld [vmem:[%s4 + $0x4] sm:$0xf]
  %v1164 = vld [vmem:[%s4 + $0x8] sm:$0xf]
  %v1165 = vld [vmem:[%s4 + $0xc] sm:$0xf]
  %v1166 = vld [vmem:[%s4 + $0x10] sm:$0xf]
  %v1167 = vld [vmem:[%s4 + $0x14] sm:$0xf]
  %v1168 = vld [vmem:[%s4 + $0x18] sm:$0xf]
  %v1169 = vld [vmem:[%s4 + $0x1c] sm:$0xf]
  %v1170 = vld [vmem:[%s4 + $0x20] sm:$0xf]
  %v1171 = vld [vmem:[%s4 + $0x24] sm:$0xf]
  %v1172 = vld [vmem:[%s4 + $0x28] sm:$0xf]
  %v1173 = vld [vmem:[%s4 + $0x2c] sm:$0xf]
  %v1174 = vld [vmem:[%s4 + $0x30] sm:$0xf]
  %v1175 = vld [vmem:[%s4 + $0x34] sm:$0xf]
  %v1176 = vld [vmem:[%s4 + $0x38] sm:$0xf]
  %v1177 = vld [vmem:[%s4 + $0x3c] sm:$0xf]
  %v1178 = vld [vmem:[%s4 + $0x40] sm:$0xf]
  %v1179 = vld [vmem:[%s4 + $0x44] sm:$0xf]
  %v1180 = vld [vmem:[%s4 + $0x48] sm:$0xf]
  %v1181 = vld [vmem:[%s4 + $0x4c] sm:$0xf]
  %v1182 = vld [vmem:[%s4 + $0x50] sm:$0xf]
  %v1183 = vld [vmem:[%s4 + $0x54] sm:$0xf]
  %v1184 = vld [vmem:[%s4 + $0x58] sm:$0xf]
  %v1185 = vld [vmem:[%s4 + $0x5c] sm:$0xf]
  %v1186 = vld [vmem:[%s4 + $0x60] sm:$0xf]
  %v1187 = vld [vmem:[%s4 + $0x64] sm:$0xf]
  %v1188 = vld [vmem:[%s4 + $0x68] sm:$0xf]
  %v1189 = vld [vmem:[%s4 + $0x6c] sm:$0xf]
  %v1190 = vld [vmem:[%s4 + $0x70] sm:$0xf]
  %v1191 = vld [vmem:[%s4 + $0x74] sm:$0xf]
  %v1192 = vld [vmem:[%s4 + $0x78] sm:$0xf]
  %v1193 = vld [vmem:[%s4 + $0x7c] sm:$0xf]
  %v1194 = vld [vmem:[%s5] sm:$0x1]
  %v1196 = vlaneseq
  %v1197 = vshrl.u32 %v1196, 7
  %v1198 = vsub.s32 0, %v1197
  %v1199 = vrot.slane %v1194, %v1198
  %v1233 = vunpack.c.l.b16 %v1162
  %v1234 = vunpack.c.l.b16 %v1163
  %v1235 = vunpack.c.l.b16 %v1164
  %v1236 = vunpack.c.l.b16 %v1165
  %v1237 = vunpack.c.l.b16 %v1166
  %v1238 = vunpack.c.l.b16 %v1167
  %v1239 = vunpack.c.l.b16 %v1168
  %v1240 = vunpack.c.l.b16 %v1169
  %v1241 = vunpack.c.l.b16 %v1170
  %v1242 = vunpack.c.l.b16 %v1171
  %v1243 = vunpack.c.l.b16 %v1172
  %v1244 = vunpack.c.l.b16 %v1173
  %v1245 = vunpack.c.l.b16 %v1174
  %v1246 = vunpack.c.l.b16 %v1175
  %v1247 = vunpack.c.l.b16 %v1176
  %v1248 = vunpack.c.l.b16 %v1177
  %v1249 = vunpack.c.l.b16 %v1178
  %v1250 = vunpack.c.l.b16 %v1179
  %v1251 = vunpack.c.l.b16 %v1180
  %v1252 = vunpack.c.l.b16 %v1181
  %v1253 = vunpack.c.l.b16 %v1182
  %v1254 = vunpack.c.l.b16 %v1183
  %v1255 = vunpack.c.l.b16 %v1184
  %v1256 = vunpack.c.l.b16 %v1185
  %v1257 = vunpack.c.l.b16 %v1186
  %v1258 = vunpack.c.l.b16 %v1187
  %v1259 = vunpack.c.l.b16 %v1188
  %v1260 = vunpack.c.l.b16 %v1189
  %v1261 = vunpack.c.l.b16 %v1190
  %v1262 = vunpack.c.l.b16 %v1191
  %v1263 = vunpack.c.l.b16 %v1192
  %v1264 = vunpack.c.l.b16 %v1193
  %v1265 = vpack.c.b16 %v1234, %v1233
  %v1266 = vpack.c.b16 %v1236, %v1235
  %v1267 = vpack.c.b16 %v1238, %v1237
  %v1268 = vpack.c.b16 %v1240, %v1239
  %v1269 = vpack.c.b16 %v1242, %v1241
  %v1270 = vpack.c.b16 %v1244, %v1243
  %v1271 = vpack.c.b16 %v1246, %v1245
  %v1272 = vpack.c.b16 %v1248, %v1247
  %v1273 = vpack.c.b16 %v1250, %v1249
  %v1274 = vpack.c.b16 %v1252, %v1251
  %v1275 = vpack.c.b16 %v1254, %v1253
  %v1276 = vpack.c.b16 %v1256, %v1255
  %v1277 = vpack.c.b16 %v1258, %v1257
  %v1278 = vpack.c.b16 %v1260, %v1259
  %v1279 = vpack.c.b16 %v1262, %v1261
  %v1280 = vpack.c.b16 %v1264, %v1263
  %1297 = vmatprep.subr.bf16.mxu0 0
  %1298 = vmatpush1.bf16.msra.mxu0 %v1272
  %1299 = vmatprep.subr.bf16.mxu0 0
  %1300 = vmatpush1.bf16.msra.mxu0 %v1271
  %1301 = vmatprep.subr.bf16.mxu0 0
  %1302 = vmatpush1.bf16.msra.mxu0 %v1270
  %1303 = vmatprep.subr.bf16.mxu0 0
  %1304 = vmatpush1.bf16.msra.mxu0 %v1269
  %1305 = vmatprep.subr.bf16.mxu0 0
  %1306 = vmatpush1.bf16.msra.mxu0 %v1268
  %1307 = vmatprep.subr.bf16.mxu0 0
  %1308 = vmatpush1.bf16.msra.mxu0 %v1267
  %1309 = vmatprep.subr.bf16.mxu0 0
  %1310 = vmatpush1.bf16.msra.mxu0 %v1266
  %1311 = vmatprep.subr.bf16.mxu0 0
  %1312 = vmatpush1.bf16.msra.mxu0 %v1265
  %1313 = vmatprep.subr.bf16.mxu0 0
  %1314 = vmatpush2.bf16.msra.mxu0 %v1280
  %1315 = vmatprep.subr.bf16.mxu0 0
  %1316 = vmatpush2.bf16.msra.mxu0 %v1279
  %1317 = vmatprep.subr.bf16.mxu0 0
  %1318 = vmatpush2.bf16.msra.mxu0 %v1278
  %1319 = vmatprep.subr.bf16.mxu0 0
  %1320 = vmatpush2.bf16.msra.mxu0 %v1277
  %1321 = vmatprep.subr.bf16.mxu0 0
  %1322 = vmatpush2.bf16.msra.mxu0 %v1276
  %1323 = vmatprep.subr.bf16.mxu0 0
  %1324 = vmatpush2.bf16.msra.mxu0 %v1275
  %1325 = vmatprep.subr.bf16.mxu0 0
  %1326 = vmatpush2.bf16.msra.mxu0 %v1274
  %1327 = vmatprep.subr.bf16.mxu0 0
  %1328 = vmatpush2.bf16.msra.mxu0 %v1273
  %1329 = vmatprep.mubr.bf16.mxu0 %v1161
  %1330 = vmatmul.mubr.bf16.gmra.mxu0 %v1160
  %v1331 = vpop.f32.mrf.mxu0
  %v1332 = vadd.f32 %v1199, %v1331
  %v1333 = vpop.f32.mrf.mxu0
  %v1334 = vpop.f32.mrf.mxu0
  %v1335 = vpop.f32.mrf.mxu0
  %1336 = vdwg.mxu0
  %v1337 = vlaneseq
  %v1338 = vand.u32 %v1337, 127
  %vm1339 = vcmp.lt.s32.totalorder %v1338, 2
  %v1340 = vsel %vm1339, %v1332, -inf
  %vm1341 = vcmask 130048
  %v1342 = vsel %vm1341, %v1340, -inf
  %1343 = vmax.xlane.f32.xlu0 %v1342
  %v1344 = vpop.xlane.xlu0 %1343
  %v1345 = vsub.f32 %v1340, %v1344
  %v1346 = vmul.f32 %v1345, 1.442695
  %v1347 = vpow.pop %v1346
  %v1348 = vsel %vm1341, %v1347, 0.0
  %1349 = vadd.xlane.f32.xlu0 %v1348
  %v1350 = vpop.xlane.xlu0 %1349
  %v1351 = vrcp.pop %v1350
  %v1352 = vmul.f32 %v1347, %v1351
  %v1353 = vsel %vm1339, %v1352, %v1332
  %1354 = vst.msk [vmem:[%s6] sm:$0xff] %vm1341, %v1353
  // Predicated region
  $region26: #{onet_forward.9} parent=0 // pred_check
    _
  $region27: #{onet_forward.9} parent=0 // pred_check_branch
    %1356 = sbr.rel (0) target = $region29
  $region28: #{onet_forward.9} parent=0 // pred_region
    _
  $region29: #{onet_forward.9} parent=0 // pred_fallthru
    _
  // Predicated region
  $region30: #{onet_forward.9} parent=0 // pred_check
    _
  $region31: #{onet_forward.9} parent=0 // pred_check_branch
    %1358 = sbr.rel (0) target = $region33
  $region32: #{onet_forward.9} parent=0 // pred_region
    _
  $region33: #{onet_forward.9} parent=0 // pred_fallthru
    _

</llo_original>
